<compile_context>
chip_gen: v7x
topology: tpu7x:2x2x1
jax: 0.10.0
libtpu: 0.0.40
codegen_flags: <defaults>
</compile_context>

<pallas_src>
import jax
import jax.numpy as jnp
from jax.experimental import pallas as pl
from jax.experimental.pallas import tpu as pltpu

# ----------------------------- config ---------------------------------------
NBITS = 8
INPUT_SIZE = NBITS + 2          # 10
UNITS = 32                      # cfg.num_units
NLOC = 32                       # cfg.num_memory_locations
MSIZE = 16                      # cfg.memory_size
NREAD = 1
NWRITE = 1
SHIFT = 1                       # cfg.conv_shift_range
CLIP = 20.0                     # cfg.clip_value

HEAD_R = MSIZE + 1 + 1 + (2 * SHIFT + 1) + 1          # 22 addressing params per head
HEAD_W = HEAD_R + 2 * MSIZE                            # 54
PROJ_W = 2 * HEAD_R + 2 * MSIZE + UNITS                # 108 fused projection width
HR = UNITS + MSIZE                                     # 48 = [H | R] slab prefix
SLAB = 2 * UNITS + MSIZE + 2 * NLOC                    # 144 = [H | R | C | Ar | Aw]
MAX_CHUNK = 8                                          # timesteps per grid step


# ------------------------- in-kernel math helpers ----------------------------
def _sigmoid(x):
    # EUP tanh form; numerically stable, no divide.
    return 0.5 * (jnp.tanh(0.5 * x) + 1.0)


def _softplus(x):
    return jnp.maximum(x, 0.0) + jnp.log(1.0 + jnp.exp(-jnp.abs(x)))


def _addressing2(head2, a2_tm1, m_tm1, shift_mat):
    """NTM content + location addressing for the stacked (read; write) heads.

    head2:  (2B, HEAD_R)   stacked addressing parameters
    a2_tm1: (2B, NLOC)     stacked previous attentions
    m_tm1:  (B, NLOC, MSIZE) memory (shared by both heads)
    """
    k = jnp.tanh(head2[:, 0:MSIZE])                                   # (2B, M)
    beta = _softplus(head2[:, MSIZE:MSIZE + 1])                       # (2B, 1)
    g = _sigmoid(head2[:, MSIZE + 1:MSIZE + 2])                       # (2B, 1)
    s_raw = head2[:, MSIZE + 2:MSIZE + 2 + 2 * SHIFT + 1]             # (2B, 2S+1)
    gidx = MSIZE + 2 + 2 * SHIFT + 1
    gamma = _softplus(head2[:, gidx:gidx + 1])                        # (2B, 1)

    # shift softmax (exact division: feeds the recurrent state)
    s_e = jnp.exp(s_raw - jnp.max(s_raw, axis=-1, keepdims=True))
    s = s_e / jnp.sum(s_e, axis=-1, keepdims=True)

    # cosine-similarity content addressing (both heads at once)
    m2 = jnp.concatenate([m_tm1, m_tm1], axis=0)                      # (2B, N, M)
    inner = jnp.sum(m2 * k[:, None, :], axis=2)                       # (2B, N)
    ksq = jnp.sum(k * k, axis=1, keepdims=True)                       # (2B, 1)
    msq1 = jnp.sum(m_tm1 * m_tm1, axis=2)                             # (B, N)
    msq = jnp.concatenate([msq1, msq1], axis=0)                       # (2B, N)
    # single rsqrt on the critical path; (1e-8)^2 keeps the torch epsilon scale
    K = inner * jax.lax.rsqrt(ksq * msq + 1e-16)                      # (2B, N)

    K_exp = jnp.exp(beta * K)
    w_c = K_exp / jnp.sum(K_exp, axis=1, keepdims=True)               # exact

    # interpolation with previous attention
    w_g = g * w_c + (1.0 - g) * a2_tm1                                # (2B, N)

    # circular +-1 shift of BOTH heads with one constant-permutation matmul:
    # shift_mat[:, :N] = roll-right-by-1, shift_mat[:, N:] = roll-left-by-1.
    rolled = jnp.dot(w_g, shift_mat, preferred_element_type=jnp.float32)   # (2B, 2N)
    w_conv = (s[:, 0:1] * w_g
              + s[:, 1:2] * rolled[:, 0:NLOC]
              + s[:, 2:3] * rolled[:, NLOC:2 * NLOC])

    # sharpening: w_conv ** gamma (epsilon-clamped log; w_conv >= 0)
    w_sharp = jnp.exp(gamma * jnp.log(jnp.maximum(w_conv, 1e-30)))
    return w_sharp / jnp.sum(w_sharp, axis=1, keepdims=True)          # exact


# ------------------------------ Pallas kernel --------------------------------
def ntm_chunk_kernel(
    # streamed pre-projected gate inputs + initial state + constants
    gx_ref, s0_ref, m0_ref, shift_ref,
    # fused weights
    wrec_ref, wbig_ref, bbig_ref, wor_ref,
    # outputs: per-step y chunk, carried packed state, carried memory
    y_ref, s_ref, m_ref,
):
    chunk = pl.program_id(0)

    @pl.when(chunk == 0)
    def _init():
        s_ref[...] = s0_ref[...]
        m_ref[...] = m0_ref[...]

    bsz = s_ref.shape[0]
    n_steps = y_ref.shape[0]

    # ---- unpack carried state (resident VMEM output blocks) ----
    slab = s_ref[...]
    hr0 = slab[:, 0:HR]                                   # [H | R]
    c0 = slab[:, HR:HR + UNITS]
    a2_0 = jnp.concatenate([slab[:, HR + UNITS:HR + UNITS + NLOC],
                            slab[:, HR + UNITS + NLOC:SLAB]], axis=0)   # (2B, N)
    m_0 = m_ref[...]

    shift_mat = shift_ref[...]
    w_rec = wrec_ref[...]                                 # (48, 4U)
    w_big = wbig_ref[...]                                 # (U, 108)
    b_big = bbig_ref[...]                                 # (1, 108)
    w_or = wor_ref[...]                                   # (M, U)

    def step(i, carry):
        hr, c_tm1, a2_tm1, m_tm1 = carry

        # ---- controller LSTM (layer 0); x-projection + biases were hoisted into gx ----
        # TODO(synk): repo's custom LSTMCell is not provided; standard LSTM equations
        # with PyTorch [i,f,g,o] gate layout assumed (pre-permuted here to [i|f|o|g]).
        gates = gx_ref[i] + jnp.dot(hr, w_rec, preferred_element_type=jnp.float32)
        sig = _sigmoid(gates[:, 0:3 * UNITS])
        i_g = sig[:, 0:UNITS]
        f_g = sig[:, UNITS:2 * UNITS]
        o_g = sig[:, 2 * UNITS:3 * UNITS]
        g_g = jnp.tanh(gates[:, 3 * UNITS:4 * UNITS])
        c_t = f_g * c_tm1 + i_g * g_g
        h_t = o_g * jnp.tanh(c_t)                          # carried un-clamped (as in torch)
        hc = jnp.clip(h_t, -CLIP, CLIP)

        # ---- fused projections: [r_addr(22) | w_addr(22) | del(16) | add(16) | y_h(32)] ----
        proj = jnp.dot(hc, w_big, preferred_element_type=jnp.float32) + b_big
        head2 = jnp.concatenate([proj[:, 0:HEAD_R],
                                 proj[:, HEAD_R:2 * HEAD_R]], axis=0)   # (2B, 22)
        del_v = _sigmoid(proj[:, 2 * HEAD_R:2 * HEAD_R + MSIZE])        # (B, M)
        add_v = jnp.tanh(proj[:, 2 * HEAD_R + MSIZE:2 * HEAD_R + 2 * MSIZE])
        y_h = proj[:, 2 * HEAD_R + 2 * MSIZE:PROJ_W]                    # (B, U), bo folded in

        # ---- both heads' addressing, one stacked pass ----
        a2_t = _addressing2(head2, a2_tm1, m_tm1, shift_mat)            # (2B, N)
        a_r = a2_t[0:bsz]
        a_w = a2_t[bsz:2 * bsz]

        # ---- read ----
        r_t = jnp.sum(a_r[:, :, None] * m_tm1, axis=1)                  # (B, M)

        # ---- write (erase + add, fused) ----
        w3 = a_w[:, :, None]
        m_t = m_tm1 * (1.0 - w3 * del_v[:, None, :]) + w3 * add_v[:, None, :]

        # ---- output projection ----
        y = y_h + jnp.dot(r_t, w_or, preferred_element_type=jnp.float32)
        y_ref[i] = jnp.clip(y, -CLIP, CLIP)

        hr_t = jnp.concatenate([h_t, r_t], axis=1)                      # next [H | R]
        return hr_t, c_t, a2_t, m_t

    hr_f, c_f, a2_f, m_f = jax.lax.fori_loop(
        0, n_steps, step, (hr0, c0, a2_0, m_0), unroll=True)

    # ---- write carried state back once per chunk (slice stores, no concat) ----
    s_ref[:, 0:HR] = hr_f
    s_ref[:, HR:HR + UNITS] = c_f
    s_ref[:, HR + UNITS:HR + UNITS + NLOC] = a2_f[0:bsz]
    s_ref[:, HR + UNITS + NLOC:SLAB] = a2_f[bsz:2 * bsz]
    m_ref[...] = m_f


# ------------------------------ wrappers --------------------------------------
def prepare_params(params):
    """One-time weight prep: transpose, permute gates to [i|f|o|g], fold line_prep into
    the recurrent weight, fuse head + output(h-part) projections, build shift matrix."""
    f32 = jnp.float32

    def reorder_gates(w, axis=0):          # rows in [i,f,g,o] -> [i,f,o,g]
        i, f, g, o = jnp.split(w, 4, axis=axis)
        return jnp.concatenate([i, f, o, g], axis=axis)

    wih = reorder_gates(params["wih"])                      # (4U, LSTM_IN)
    whh = reorder_gates(params["whh"])                      # (4U, U)
    b_lstm = reorder_gates(params["bih"] + params["bhh"])   # (4U,)

    wih_x = wih[:, :INPUT_SIZE].T.astype(f32)               # (IN, 4U)  -> hoisted matmul
    wih_h = wih[:, INPUT_SIZE:].T.astype(f32)               # (U, 4U)

    # fold line_prep: h_prep = r @ wp.T + bp only feeds the gates matmul
    wp_fused = params["wp"].T @ wih_h                        # (M, 4U)
    b_x = (b_lstm + params["bp"] @ wih_h)[None, :].astype(f32)   # all biases folded into gx

    # recurrent weight over the [H | R] slab prefix
    w_rec = jnp.concatenate([whh.T, wp_fused], axis=0).astype(f32)      # (48, 4U)

    # fused head + output(h-part) projection: (U, 22 + 54 + U) = (32, 108)
    w_big = jnp.concatenate(
        [params["wr"].T, params["ww"].T, params["wo"][:, :UNITS].T], axis=1).astype(f32)
    b_big = jnp.concatenate(
        [params["br"], params["bw"], params["bo"]])[None, :].astype(f32)

    wo_r = params["wo"][:, UNITS:].T.astype(f32)             # (M, U)

    # constant circular-shift permutation matrices (roll right / left by 1)
    idx = jnp.arange(NLOC)
    p_right = ((idx[:, None] + 1) % NLOC == idx[None, :]).astype(f32)
    p_left = ((idx[:, None] + NLOC - 1) % NLOC == idx[None, :]).astype(f32)
    shift_mat = jnp.concatenate([p_right, p_left], axis=1)   # (N, 2N)

    return dict(wih_x=wih_x, b_x=b_x, w_rec=w_rec, w_big=w_big, b_big=b_big,
                wo_r=wo_r, shift_mat=shift_mat)


def _pick_chunk(T, max_chunk=MAX_CHUNK):
    tc = min(T, max_chunk)
    while T % tc:
        tc -= 1
    return tc


@jax.jit
def ntm_forward_sequence(x_seq, state0, kp):
    """Run the NTM cell over a whole sequence in one pallas_call.
    Returns per-step outputs y (T,B,UNITS) and the final state dict."""
    T, B, _ = x_seq.shape
    f32 = jnp.float32
    tc = _pick_chunk(T)

    # hoisted input projection (+ all LSTM biases), one throughput-friendly matmul
    gx = (jnp.dot(x_seq.reshape(T * B, INPUT_SIZE).astype(f32), kp["wih_x"],
                  preferred_element_type=f32) + kp["b_x"]).reshape(T, B, 4 * UNITS)

    # packed carried state slab: [H | R | C | Ar | Aw]
    s0 = jnp.concatenate(
        [state0["H"][0], state0["R"][0], state0["C"][0],
         state0["A"][0], state0["A"][1]], axis=1).astype(f32)        # (B, SLAB)
    m0 = state0["m"].astype(f32)

    args = [gx, s0, m0, kp["shift_mat"], kp["w_rec"],
            kp["w_big"], kp["b_big"], kp["wo_r"]]

    def resident(a):
        zeros = (0,) * a.ndim
        return pl.BlockSpec(a.shape, lambda c, z=zeros: z)

    in_specs = ([pl.BlockSpec((tc, B, 4 * UNITS), lambda c: (c, 0, 0))]
                + [resident(a) for a in args[1:]])

    out_shape = (
        jax.ShapeDtypeStruct((T, B, UNITS), f32),       # y per timestep
        jax.ShapeDtypeStruct((B, SLAB), f32),           # final packed state
        jax.ShapeDtypeStruct((B, NLOC, MSIZE), f32),    # final memory
    )
    out_specs = (
        pl.BlockSpec((tc, B, UNITS), lambda c: (c, 0, 0)),
        pl.BlockSpec((B, SLAB), lambda c: (0, 0)),
        pl.BlockSpec((B, NLOC, MSIZE), lambda c: (0, 0, 0)),
    )

    y_seq, s_fin, m_fin = pl.pallas_call(
        ntm_chunk_kernel,
        grid=(T // tc,),
        out_shape=out_shape,
        in_specs=in_specs,
        out_specs=out_specs,
        compiler_params=pltpu.CompilerParams(
            dimension_semantics=("arbitrary",)),         # carried recurrence over time
    )(*args)

    state = {
        "H": [s_fin[:, 0:UNITS]],
        "R": [s_fin[:, UNITS:HR]],
        "C": [s_fin[:, HR:HR + UNITS]],
        "m": m_fin,
        "A": [s_fin[:, HR + UNITS:HR + UNITS + NLOC],
              s_fin[:, HR + UNITS + NLOC:SLAB]],
    }
    return y_seq, state


def init_t0(bs):
    """cfg.init_mode == 'constant' initial state."""
    f32 = jnp.float32
    H0 = jnp.broadcast_to(jnp.full((1, UNITS), 1e-6, f32), (bs, UNITS))
    C0 = jnp.broadcast_to(jnp.full((1, UNITS), 1e-6, f32), (bs, UNITS))
    m0 = jnp.broadcast_to(jnp.full((1, NLOC, MSIZE), 1e-6, f32), (bs, NLOC, MSIZE))
    R0 = jnp.broadcast_to(jnp.tanh(jnp.full((1, MSIZE), 1e-6, f32)), (bs, MSIZE))
    a_raw = jnp.concatenate([jnp.array([[100.0]], f32),
                             jnp.full((1, NLOC - 1), 1e-6, f32)], axis=1)
    A0 = jnp.broadcast_to(jax.nn.softmax(a_raw, axis=1), (bs, NLOC))
    return {"H": [H0], "C": [C0], "m": m0, "R": [R0],
            "A": [A0 for _ in range(NREAD + NWRITE)]}


def init_params(key):
    """Deterministic PyTorch-style uniform(-1/sqrt(fan_in)) init (weights in (out, in) layout)."""
    def linear(k, in_dim, out_dim):
        k1, k2 = jax.random.split(k)
        bound = 1.0 / (float(in_dim) ** 0.5)
        w = jax.random.uniform(k1, (out_dim, in_dim), jnp.float32, -bound, bound)
        b = jax.random.uniform(k2, (out_dim,), jnp.float32, -bound, bound)
        return w, b

    keys = jax.random.split(key, 5)
    wp, bp = linear(keys[0], MSIZE * NREAD, UNITS)                   # line_prep

    k1, k2, k3, k4 = jax.random.split(keys[1], 4)
    bound = 1.0 / (float(UNITS) ** 0.5)
    lstm_in = INPUT_SIZE + UNITS
    wih = jax.random.uniform(k1, (4 * UNITS, lstm_in), jnp.float32, -bound, bound)
    whh = jax.random.uniform(k2, (4 * UNITS, UNITS), jnp.float32, -bound, bound)
    bih = jax.random.uniform(k3, (4 * UNITS,), jnp.float32, -bound, bound)
    bhh = jax.random.uniform(k4, (4 * UNITS,), jnp.float32, -bound, bound)

    wr, br = linear(keys[2], UNITS, NREAD * HEAD_R)                  # r_heads
    ww, bw = linear(keys[3], UNITS, NWRITE * HEAD_W)                 # w_heads
    wo, bo = linear(keys[4], UNITS + NREAD * MSIZE, UNITS)           # line_ou

    return dict(wp=wp, bp=bp, wih=wih, whh=whh, bih=bih, bhh=bhh,
                wr=wr, br=br, ww=ww, bw=bw, wo=wo, bo=bo)


if __name__ == "__main__":
    B, T = 2, 8
    key = jax.random.PRNGKey(0)
    k_x, k_p = jax.random.split(key)

    x_seq = jax.random.normal(k_x, (T, B, INPUT_SIZE), jnp.float32)
    params = init_params(k_p)
    kparams = prepare_params(params)          # one-time weight prep (hoisted out of the loop)
    state0 = init_t0(B)

    y_seq, final_state = ntm_forward_sequence(x_seq, state0, kparams)
    jax.block_until_ready(y_seq)
    jax.block_until_ready(final_state["m"])

    assert y_seq.shape == (T, B, UNITS)
    assert final_state["H"][0].shape == (B, UNITS)
    assert final_state["m"].shape == (B, NLOC, MSIZE)
    assert final_state["A"][0].shape == (B, NLOC)
    assert bool(jnp.all(jnp.isfinite(y_seq)))
    print("KERNEL_OK")
</pallas_src>

<mosaic_0001>
module attributes {stable_mosaic.version = 11 : i64} {
  func.func @ntm_chunk_kernel(%arg0: i32, %arg1: memref<8x2x128xf32, #tpu.memory_space<vmem>>, %arg2: memref<2x144xf32, #tpu.memory_space<vmem>>, %arg3: memref<2x32x16xf32, #tpu.memory_space<vmem>>, %arg4: memref<32x64xf32, #tpu.memory_space<vmem>>, %arg5: memref<48x128xf32, #tpu.memory_space<vmem>>, %arg6: memref<32x108xf32, #tpu.memory_space<vmem>>, %arg7: memref<1x108xf32, #tpu.memory_space<vmem>>, %arg8: memref<16x32xf32, #tpu.memory_space<vmem>>, %arg9: memref<8x2x32xf32, #tpu.memory_space<vmem>>, %arg10: memref<2x144xf32, #tpu.memory_space<vmem>>, %arg11: memref<2x32x16xf32, #tpu.memory_space<vmem>>) attributes {dimension_semantics = [#tpu.dimension_semantics<arbitrary>], iteration_bounds = array<i64: 1>, scalar_prefetch = 0 : i64, scratch_operands = 0 : i64, tpu.core_type = #tpu.core_type<tc>, window_params = [{transform_indices = @transform_0, window_bounds = array<i64: 8, 2, 128>}, {pipeline_mode = #tpu.pipeline_mode<synchronous>, transform_indices = @transform_1, window_bounds = array<i64: 2, 144>}, {pipeline_mode = #tpu.pipeline_mode<synchronous>, transform_indices = @transform_2, window_bounds = array<i64: 2, 32, 16>}, {pipeline_mode = #tpu.pipeline_mode<synchronous>, transform_indices = @transform_3, window_bounds = array<i64: 32, 64>}, {pipeline_mode = #tpu.pipeline_mode<synchronous>, transform_indices = @transform_4, window_bounds = array<i64: 48, 128>}, {pipeline_mode = #tpu.pipeline_mode<synchronous>, transform_indices = @transform_5, window_bounds = array<i64: 32, 108>}, {pipeline_mode = #tpu.pipeline_mode<synchronous>, transform_indices = @transform_6, window_bounds = array<i64: 1, 108>}, {pipeline_mode = #tpu.pipeline_mode<synchronous>, transform_indices = @transform_7, window_bounds = array<i64: 16, 32>}, {transform_indices = @transform_8, window_bounds = array<i64: 8, 2, 32>}, {pipeline_mode = #tpu.pipeline_mode<synchronous>, transform_indices = @transform_9, window_bounds = array<i64: 2, 144>}, {pipeline_mode = #tpu.pipeline_mode<synchronous>, transform_indices = @transform_10, window_bounds = array<i64: 2, 32, 16>}]} {
    %c0_i32 = arith.constant 0 : i32
    %0 = arith.cmpi eq, %arg0, %c0_i32 : i32
    %1 = arith.extui %0 : i1 to i32
    %c0_i32_0 = arith.constant 0 : i32
    %2 = arith.cmpi ne, %1, %c0_i32_0 : i32
    scf.if %2 {
      %c0_335 = arith.constant 0 : index
      %c0_336 = arith.constant 0 : index
      %1390 = vector.load %arg2[%c0_335, %c0_336] : memref<2x144xf32, #tpu.memory_space<vmem>>, vector<2x144xf32>
      %c0_337 = arith.constant 0 : index
      %c0_338 = arith.constant 0 : index
      %1391 = vector.load %arg10[%c0_337, %c0_338] : memref<2x144xf32, #tpu.memory_space<vmem>>, vector<2x144xf32>
      tpu.vector_store %arg10[%c0_337, %c0_338], %1390 {strides = array<i32>} : memref<2x144xf32, #tpu.memory_space<vmem>>, vector<2x144xf32>,
      %c0_339 = arith.constant 0 : index
      %c0_340 = arith.constant 0 : index
      %c0_341 = arith.constant 0 : index
      %1392 = vector.load %arg3[%c0_339, %c0_340, %c0_341] : memref<2x32x16xf32, #tpu.memory_space<vmem>>, vector<2x32x16xf32>
      %c0_342 = arith.constant 0 : index
      %c0_343 = arith.constant 0 : index
      %c0_344 = arith.constant 0 : index
      %1393 = vector.load %arg11[%c0_342, %c0_343, %c0_344] : memref<2x32x16xf32, #tpu.memory_space<vmem>>, vector<2x32x16xf32>
      tpu.vector_store %arg11[%c0_342, %c0_343, %c0_344], %1392 {strides = array<i32>} : memref<2x32x16xf32, #tpu.memory_space<vmem>>, vector<2x32x16xf32>,
    } else {
    }
    %c0 = arith.constant 0 : index
    %c0_1 = arith.constant 0 : index
    %3 = vector.load %arg10[%c0, %c0_1] : memref<2x144xf32, #tpu.memory_space<vmem>>, vector<2x144xf32>
    %4 = vector.extract_strided_slice %3 {offsets = [0, 0], sizes = [2, 48], strides = [1, 1]} : vector<2x144xf32> to vector<2x48xf32>
    %5 = vector.extract_strided_slice %3 {offsets = [0, 48], sizes = [2, 32], strides = [1, 1]} : vector<2x144xf32> to vector<2x32xf32>
    %6 = vector.extract_strided_slice %3 {offsets = [0, 80], sizes = [2, 32], strides = [1, 1]} : vector<2x144xf32> to vector<2x32xf32>
    %7 = vector.extract_strided_slice %3 {offsets = [0, 112], sizes = [2, 32], strides = [1, 1]} : vector<2x144xf32> to vector<2x32xf32>
    %8 = tpu.concatenate %6, %7 in 0 : vector<2x32xf32>, vector<2x32xf32> -> vector<4x32xf32>
    %c0_2 = arith.constant 0 : index
    %c0_3 = arith.constant 0 : index
    %c0_4 = arith.constant 0 : index
    %9 = vector.load %arg11[%c0_2, %c0_3, %c0_4] : memref<2x32x16xf32, #tpu.memory_space<vmem>>, vector<2x32x16xf32>
    %c0_5 = arith.constant 0 : index
    %c0_6 = arith.constant 0 : index
    %10 = vector.load %arg4[%c0_5, %c0_6] : memref<32x64xf32, #tpu.memory_space<vmem>>, vector<32x64xf32>
    %c0_7 = arith.constant 0 : index
    %c0_8 = arith.constant 0 : index
    %11 = vector.load %arg5[%c0_7, %c0_8] : memref<48x128xf32, #tpu.memory_space<vmem>>, vector<48x128xf32>
    %c0_9 = arith.constant 0 : index
    %c0_10 = arith.constant 0 : index
    %12 = vector.load %arg6[%c0_9, %c0_10] : memref<32x108xf32, #tpu.memory_space<vmem>>, vector<32x108xf32>
    %c0_11 = arith.constant 0 : index
    %c0_12 = arith.constant 0 : index
    %13 = vector.load %arg7[%c0_11, %c0_12] : memref<1x108xf32, #tpu.memory_space<vmem>>, vector<1x108xf32>
    %c0_13 = arith.constant 0 : index
    %c0_14 = arith.constant 0 : index
    %14 = vector.load %arg8[%c0_13, %c0_14] : memref<16x32xf32, #tpu.memory_space<vmem>>, vector<16x32xf32>
    %c0_i32_15 = arith.constant 0 : i32
    %15 = arith.index_cast %c0_i32_15 : i32 to index
    %c0_16 = arith.constant 0 : index
    %c0_17 = arith.constant 0 : index
    %16 = vector.load %arg1[%15, %c0_16, %c0_17] : memref<8x2x128xf32, #tpu.memory_space<vmem>>, vector<1x2x128xf32>
    %17 = vector.shape_cast %16 : vector<1x2x128xf32> to vector<2x128xf32>
    %cst = arith.constant dense<0.000000e+00> : vector<2x128xf32>
    %18 = tpu.matmul %4, %11, %cst {dimension_numbers = #tpu.dot_dimension_numbers<[1], [0], [0], [1], [0, 0, 1, 1], [], []>} : vector<2x48xf32>, vector<48x128xf32>, vector<2x128xf32> -> vector<2x128xf32>
    %19 = arith.addf %17, %18 : vector<2x128xf32>
    %20 = vector.extract_strided_slice %19 {offsets = [0, 0], sizes = [2, 96], strides = [1, 1]} : vector<2x128xf32> to vector<2x96xf32>
    %cst_18 = arith.constant 5.000000e-01 : f32
    %21 = vector.broadcast %cst_18 : f32 to vector<2x96xf32>
    %22 = arith.mulf %21, %20 : vector<2x96xf32>
    %23 = math.tanh %22 : vector<2x96xf32>
    %cst_19 = arith.constant 1.000000e+00 : f32
    %24 = vector.broadcast %cst_19 : f32 to vector<2x96xf32>
    %25 = arith.addf %23, %24 : vector<2x96xf32>
    %cst_20 = arith.constant 5.000000e-01 : f32
    %26 = vector.broadcast %cst_20 : f32 to vector<2x96xf32>
    %27 = arith.mulf %26, %25 : vector<2x96xf32>
    %28 = vector.extract_strided_slice %27 {offsets = [0, 0], sizes = [2, 32], strides = [1, 1]} : vector<2x96xf32> to vector<2x32xf32>
    %29 = vector.extract_strided_slice %27 {offsets = [0, 32], sizes = [2, 32], strides = [1, 1]} : vector<2x96xf32> to vector<2x32xf32>
    %30 = vector.extract_strided_slice %27 {offsets = [0, 64], sizes = [2, 32], strides = [1, 1]} : vector<2x96xf32> to vector<2x32xf32>
    %31 = vector.extract_strided_slice %19 {offsets = [0, 96], sizes = [2, 32], strides = [1, 1]} : vector<2x128xf32> to vector<2x32xf32>
    %32 = math.tanh %31 : vector<2x32xf32>
    %33 = arith.mulf %29, %5 : vector<2x32xf32>
    %34 = arith.mulf %28, %32 : vector<2x32xf32>
    %35 = arith.addf %33, %34 : vector<2x32xf32>
    %36 = math.tanh %35 : vector<2x32xf32>
    %37 = arith.mulf %30, %36 : vector<2x32xf32>
    %cst_21 = arith.constant -2.000000e+01 : f32
    %cst_22 = arith.constant 2.000000e+01 : f32
    %38 = vector.broadcast %cst_21 : f32 to vector<2x32xf32>
    %39 = arith.maximumf %38, %37 : vector<2x32xf32>
    %40 = vector.broadcast %cst_22 : f32 to vector<2x32xf32>
    %41 = arith.minimumf %40, %39 : vector<2x32xf32>
    %cst_23 = arith.constant dense<0.000000e+00> : vector<2x108xf32>
    %42 = tpu.matmul %41, %12, %cst_23 {dimension_numbers = #tpu.dot_dimension_numbers<[1], [0], [0], [1], [0, 0, 1, 1], [], []>} : vector<2x32xf32>, vector<32x108xf32>, vector<2x108xf32> -> vector<2x108xf32>
    %43 = vector.broadcast %13 : vector<1x108xf32> to vector<2x108xf32>
    %44 = arith.addf %42, %43 : vector<2x108xf32>
    %45 = vector.extract_strided_slice %44 {offsets = [0, 0], sizes = [2, 22], strides = [1, 1]} : vector<2x108xf32> to vector<2x22xf32>
    %46 = vector.extract_strided_slice %44 {offsets = [0, 22], sizes = [2, 22], strides = [1, 1]} : vector<2x108xf32> to vector<2x22xf32>
    %47 = tpu.concatenate %45, %46 in 0 : vector<2x22xf32>, vector<2x22xf32> -> vector<4x22xf32>
    %48 = vector.extract_strided_slice %44 {offsets = [0, 44], sizes = [2, 16], strides = [1, 1]} : vector<2x108xf32> to vector<2x16xf32>
    %cst_24 = arith.constant 5.000000e-01 : f32
    %49 = vector.broadcast %cst_24 : f32 to vector<2x16xf32>
    %50 = arith.mulf %49, %48 : vector<2x16xf32>
    %51 = math.tanh %50 : vector<2x16xf32>
    %cst_25 = arith.constant 1.000000e+00 : f32
    %52 = vector.broadcast %cst_25 : f32 to vector<2x16xf32>
    %53 = arith.addf %51, %52 : vector<2x16xf32>
    %cst_26 = arith.constant 5.000000e-01 : f32
    %54 = vector.broadcast %cst_26 : f32 to vector<2x16xf32>
    %55 = arith.mulf %54, %53 : vector<2x16xf32>
    %56 = vector.extract_strided_slice %44 {offsets = [0, 60], sizes = [2, 16], strides = [1, 1]} : vector<2x108xf32> to vector<2x16xf32>
    %57 = math.tanh %56 : vector<2x16xf32>
    %58 = vector.extract_strided_slice %44 {offsets = [0, 76], sizes = [2, 32], strides = [1, 1]} : vector<2x108xf32> to vector<2x32xf32>
    %59 = vector.extract_strided_slice %47 {offsets = [0, 0], sizes = [4, 16], strides = [1, 1]} : vector<4x22xf32> to vector<4x16xf32>
    %60 = math.tanh %59 : vector<4x16xf32>
    %61 = vector.extract_strided_slice %47 {offsets = [0, 16], sizes = [4, 1], strides = [1, 1]} : vector<4x22xf32> to vector<4x1xf32>
    %cst_27 = arith.constant 0.000000e+00 : f32
    %62 = vector.broadcast %cst_27 : f32 to vector<4x1xf32>
    %63 = arith.maximumf %61, %62 : vector<4x1xf32>
    %64 = math.absf %61 : vector<4x1xf32>
    %cst_28 = arith.constant 0.000000e+00 : f32
    %65 = vector.broadcast %cst_28 : f32 to vector<4x1xf32>
    %66 = arith.subf %65, %64 : vector<4x1xf32>
    %67 = math.exp %66 : vector<4x1xf32>
    %cst_29 = arith.constant 1.000000e+00 : f32
    %68 = vector.broadcast %cst_29 : f32 to vector<4x1xf32>
    %69 = arith.addf %68, %67 : vector<4x1xf32>
    %70 = math.log %69 : vector<4x1xf32>
    %71 = arith.addf %63, %70 : vector<4x1xf32>
    %72 = vector.extract_strided_slice %47 {offsets = [0, 17], sizes = [4, 1], strides = [1, 1]} : vector<4x22xf32> to vector<4x1xf32>
    %cst_30 = arith.constant 5.000000e-01 : f32
    %73 = vector.broadcast %cst_30 : f32 to vector<4x1xf32>
    %74 = arith.mulf %73, %72 : vector<4x1xf32>
    %75 = math.tanh %74 : vector<4x1xf32>
    %cst_31 = arith.constant 1.000000e+00 : f32
    %76 = vector.broadcast %cst_31 : f32 to vector<4x1xf32>
    %77 = arith.addf %75, %76 : vector<4x1xf32>
    %cst_32 = arith.constant 5.000000e-01 : f32
    %78 = vector.broadcast %cst_32 : f32 to vector<4x1xf32>
    %79 = arith.mulf %78, %77 : vector<4x1xf32>
    %80 = vector.extract_strided_slice %47 {offsets = [0, 18], sizes = [4, 3], strides = [1, 1]} : vector<4x22xf32> to vector<4x3xf32>
    %81 = vector.extract_strided_slice %47 {offsets = [0, 21], sizes = [4, 1], strides = [1, 1]} : vector<4x22xf32> to vector<4x1xf32>
    %cst_33 = arith.constant 0.000000e+00 : f32
    %82 = vector.broadcast %cst_33 : f32 to vector<4x1xf32>
    %83 = arith.maximumf %81, %82 : vector<4x1xf32>
    %84 = math.absf %81 : vector<4x1xf32>
    %cst_34 = arith.constant 0.000000e+00 : f32
    %85 = vector.broadcast %cst_34 : f32 to vector<4x1xf32>
    %86 = arith.subf %85, %84 : vector<4x1xf32>
    %87 = math.exp %86 : vector<4x1xf32>
    %cst_35 = arith.constant 1.000000e+00 : f32
    %88 = vector.broadcast %cst_35 : f32 to vector<4x1xf32>
    %89 = arith.addf %88, %87 : vector<4x1xf32>
    %90 = math.log %89 : vector<4x1xf32>
    %91 = arith.addf %83, %90 : vector<4x1xf32>
    %cst_36 = arith.constant dense<0xFF800000> : vector<4xf32>
    %92 = vector.multi_reduction <maximumf>, %80, %cst_36 [1] : vector<4x3xf32> to vector<4xf32>
    %93 = vector.shape_cast %92 : vector<4xf32> to vector<4x1xf32>
    %94 = vector.broadcast %93 : vector<4x1xf32> to vector<4x3xf32>
    %95 = arith.subf %80, %94 : vector<4x3xf32>
    %96 = math.exp %95 : vector<4x3xf32>
    %cst_37 = arith.constant dense<0.000000e+00> : vector<4xf32>
    %97 = vector.multi_reduction <add>, %96, %cst_37 [1] : vector<4x3xf32> to vector<4xf32>
    %98 = vector.shape_cast %97 : vector<4xf32> to vector<4x1xf32>
    %99 = vector.broadcast %98 : vector<4x1xf32> to vector<4x3xf32>
    %100 = arith.divf %96, %99 : vector<4x3xf32>
    %101 = tpu.concatenate %9, %9 in 0 : vector<2x32x16xf32>, vector<2x32x16xf32> -> vector<4x32x16xf32>
    %102 = vector.shape_cast %60 : vector<4x16xf32> to vector<4x1x16xf32>
    %103 = vector.broadcast %102 : vector<4x1x16xf32> to vector<4x32x16xf32>
    %104 = arith.mulf %101, %103 : vector<4x32x16xf32>
    %cst_38 = arith.constant dense<0.000000e+00> : vector<4x32xf32>
    %105 = vector.multi_reduction <add>, %104, %cst_38 [2] : vector<4x32x16xf32> to vector<4x32xf32>
    %106 = arith.mulf %60, %60 : vector<4x16xf32>
    %cst_39 = arith.constant dense<0.000000e+00> : vector<4xf32>
    %107 = vector.multi_reduction <add>, %106, %cst_39 [1] : vector<4x16xf32> to vector<4xf32>
    %108 = vector.shape_cast %107 : vector<4xf32> to vector<4x1xf32>
    %109 = arith.mulf %9, %9 : vector<2x32x16xf32>
    %cst_40 = arith.constant dense<0.000000e+00> : vector<2x32xf32>
    %110 = vector.multi_reduction <add>, %109, %cst_40 [2] : vector<2x32x16xf32> to vector<2x32xf32>
    %111 = tpu.concatenate %110, %110 in 0 : vector<2x32xf32>, vector<2x32xf32> -> vector<4x32xf32>
    %112 = vector.broadcast %108 : vector<4x1xf32> to vector<4x32xf32>
    %113 = arith.mulf %112, %111 : vector<4x32xf32>
    %cst_41 = arith.constant 1.000000e-16 : f32
    %114 = vector.broadcast %cst_41 : f32 to vector<4x32xf32>
    %115 = arith.addf %113, %114 : vector<4x32xf32>
    %116 = math.rsqrt %115 : vector<4x32xf32>
    %117 = arith.mulf %105, %116 : vector<4x32xf32>
    %118 = vector.broadcast %71 : vector<4x1xf32> to vector<4x32xf32>
    %119 = arith.mulf %118, %117 : vector<4x32xf32>
    %120 = math.exp %119 : vector<4x32xf32>
    %cst_42 = arith.constant dense<0.000000e+00> : vector<4xf32>
    %121 = vector.multi_reduction <add>, %120, %cst_42 [1] : vector<4x32xf32> to vector<4xf32>
    %122 = vector.shape_cast %121 : vector<4xf32> to vector<4x1xf32>
    %123 = vector.broadcast %122 : vector<4x1xf32> to vector<4x32xf32>
    %124 = arith.divf %120, %123 : vector<4x32xf32>
    %125 = vector.broadcast %79 : vector<4x1xf32> to vector<4x32xf32>
    %126 = arith.mulf %125, %124 : vector<4x32xf32>
    %cst_43 = arith.constant 1.000000e+00 : f32
    %127 = vector.broadcast %cst_43 : f32 to vector<4x1xf32>
    %128 = arith.subf %127, %79 : vector<4x1xf32>
    %129 = vector.broadcast %128 : vector<4x1xf32> to vector<4x32xf32>
    %130 = arith.mulf %129, %8 : vector<4x32xf32>
    %131 = arith.addf %126, %130 : vector<4x32xf32>
    %cst_44 = arith.constant dense<0.000000e+00> : vector<4x64xf32>
    %132 = tpu.matmul %131, %10, %cst_44 {dimension_numbers = #tpu.dot_dimension_numbers<[1], [0], [0], [1], [0, 0, 1, 1], [], []>} : vector<4x32xf32>, vector<32x64xf32>, vector<4x64xf32> -> vector<4x64xf32>
    %133 = vector.extract_strided_slice %100 {offsets = [0, 0], sizes = [4, 1], strides = [1, 1]} : vector<4x3xf32> to vector<4x1xf32>
    %134 = vector.broadcast %133 : vector<4x1xf32> to vector<4x32xf32>
    %135 = arith.mulf %134, %131 : vector<4x32xf32>
    %136 = vector.extract_strided_slice %100 {offsets = [0, 1], sizes = [4, 1], strides = [1, 1]} : vector<4x3xf32> to vector<4x1xf32>
    %137 = vector.extract_strided_slice %132 {offsets = [0, 0], sizes = [4, 32], strides = [1, 1]} : vector<4x64xf32> to vector<4x32xf32>
    %138 = vector.broadcast %136 : vector<4x1xf32> to vector<4x32xf32>
    %139 = arith.mulf %138, %137 : vector<4x32xf32>
    %140 = arith.addf %135, %139 : vector<4x32xf32>
    %141 = vector.extract_strided_slice %100 {offsets = [0, 2], sizes = [4, 1], strides = [1, 1]} : vector<4x3xf32> to vector<4x1xf32>
    %142 = vector.extract_strided_slice %132 {offsets = [0, 32], sizes = [4, 32], strides = [1, 1]} : vector<4x64xf32> to vector<4x32xf32>
    %143 = vector.broadcast %141 : vector<4x1xf32> to vector<4x32xf32>
    %144 = arith.mulf %143, %142 : vector<4x32xf32>
    %145 = arith.addf %140, %144 : vector<4x32xf32>
    %cst_45 = arith.constant 1.000000e-30 : f32
    %146 = vector.broadcast %cst_45 : f32 to vector<4x32xf32>
    %147 = arith.maximumf %145, %146 : vector<4x32xf32>
    %148 = math.log %147 : vector<4x32xf32>
    %149 = vector.broadcast %91 : vector<4x1xf32> to vector<4x32xf32>
    %150 = arith.mulf %149, %148 : vector<4x32xf32>
    %151 = math.exp %150 : vector<4x32xf32>
    %cst_46 = arith.constant dense<0.000000e+00> : vector<4xf32>
    %152 = vector.multi_reduction <add>, %151, %cst_46 [1] : vector<4x32xf32> to vector<4xf32>
    %153 = vector.shape_cast %152 : vector<4xf32> to vector<4x1xf32>
    %154 = vector.broadcast %153 : vector<4x1xf32> to vector<4x32xf32>
    %155 = arith.divf %151, %154 : vector<4x32xf32>
    %156 = vector.extract_strided_slice %155 {offsets = [0, 0], sizes = [2, 32], strides = [1, 1]} : vector<4x32xf32> to vector<2x32xf32>
    %157 = vector.extract_strided_slice %155 {offsets = [2, 0], sizes = [2, 32], strides = [1, 1]} : vector<4x32xf32> to vector<2x32xf32>
    %158 = vector.shape_cast %156 : vector<2x32xf32> to vector<2x32x1xf32>
    %159 = vector.broadcast %158 : vector<2x32x1xf32> to vector<2x32x16xf32>
    %160 = arith.mulf %159, %9 : vector<2x32x16xf32>
    %cst_47 = arith.constant dense<0.000000e+00> : vector<2x16xf32>
    %161 = vector.multi_reduction <add>, %160, %cst_47 [1] : vector<2x32x16xf32> to vector<2x16xf32>
    %162 = vector.shape_cast %157 : vector<2x32xf32> to vector<2x32x1xf32>
    %163 = vector.shape_cast %55 : vector<2x16xf32> to vector<2x1x16xf32>
    %164 = vector.broadcast %162 : vector<2x32x1xf32> to vector<2x32x16xf32>
    %165 = vector.broadcast %163 : vector<2x1x16xf32> to vector<2x32x16xf32>
    %166 = arith.mulf %164, %165 : vector<2x32x16xf32>
    %cst_48 = arith.constant 1.000000e+00 : f32
    %167 = vector.broadcast %cst_48 : f32 to vector<2x32x16xf32>
    %168 = arith.subf %167, %166 : vector<2x32x16xf32>
    %169 = arith.mulf %9, %168 : vector<2x32x16xf32>
    %170 = vector.shape_cast %57 : vector<2x16xf32> to vector<2x1x16xf32>
    %171 = vector.broadcast %162 : vector<2x32x1xf32> to vector<2x32x16xf32>
    %172 = vector.broadcast %170 : vector<2x1x16xf32> to vector<2x32x16xf32>
    %173 = arith.mulf %171, %172 : vector<2x32x16xf32>
    %174 = arith.addf %169, %173 : vector<2x32x16xf32>
    %cst_49 = arith.constant dense<0.000000e+00> : vector<2x32xf32>
    %175 = tpu.matmul %161, %14, %cst_49 {dimension_numbers = #tpu.dot_dimension_numbers<[1], [0], [0], [1], [0, 0, 1, 1], [], []>} : vector<2x16xf32>, vector<16x32xf32>, vector<2x32xf32> -> vector<2x32xf32>
    %176 = arith.addf %58, %175 : vector<2x32xf32>
    %cst_50 = arith.constant -2.000000e+01 : f32
    %cst_51 = arith.constant 2.000000e+01 : f32
    %177 = vector.broadcast %cst_50 : f32 to vector<2x32xf32>
    %178 = arith.maximumf %177, %176 : vector<2x32xf32>
    %179 = vector.broadcast %cst_51 : f32 to vector<2x32xf32>
    %180 = arith.minimumf %179, %178 : vector<2x32xf32>
    %181 = arith.index_cast %c0_i32_15 : i32 to index
    %c0_52 = arith.constant 0 : index
    %c0_53 = arith.constant 0 : index
    %182 = vector.load %arg9[%181, %c0_52, %c0_53] : memref<8x2x32xf32, #tpu.memory_space<vmem>>, vector<1x2x32xf32>
    %183 = vector.shape_cast %182 : vector<1x2x32xf32> to vector<2x32xf32>
    %184 = vector.shape_cast %180 : vector<2x32xf32> to vector<1x2x32xf32>
    tpu.vector_store %arg9[%181, %c0_52, %c0_53], %184 {strides = array<i32>} : memref<8x2x32xf32, #tpu.memory_space<vmem>>, vector<1x2x32xf32>,
    %185 = tpu.concatenate %37, %161 in 1 : vector<2x32xf32>, vector<2x16xf32> -> vector<2x48xf32>
    %c1_i32 = arith.constant 1 : i32
    %186 = arith.index_cast %c1_i32 : i32 to index
    %c0_54 = arith.constant 0 : index
    %c0_55 = arith.constant 0 : index
    %187 = vector.load %arg1[%186, %c0_54, %c0_55] : memref<8x2x128xf32, #tpu.memory_space<vmem>>, vector<1x2x128xf32>
    %188 = vector.shape_cast %187 : vector<1x2x128xf32> to vector<2x128xf32>
    %cst_56 = arith.constant dense<0.000000e+00> : vector<2x128xf32>
    %189 = tpu.matmul %185, %11, %cst_56 {dimension_numbers = #tpu.dot_dimension_numbers<[1], [0], [0], [1], [0, 0, 1, 1], [], []>} : vector<2x48xf32>, vector<48x128xf32>, vector<2x128xf32> -> vector<2x128xf32>
    %190 = arith.addf %188, %189 : vector<2x128xf32>
    %191 = vector.extract_strided_slice %190 {offsets = [0, 0], sizes = [2, 96], strides = [1, 1]} : vector<2x128xf32> to vector<2x96xf32>
    %cst_57 = arith.constant 5.000000e-01 : f32
    %192 = vector.broadcast %cst_57 : f32 to vector<2x96xf32>
    %193 = arith.mulf %192, %191 : vector<2x96xf32>
    %194 = math.tanh %193 : vector<2x96xf32>
    %cst_58 = arith.constant 1.000000e+00 : f32
    %195 = vector.broadcast %cst_58 : f32 to vector<2x96xf32>
    %196 = arith.addf %194, %195 : vector<2x96xf32>
    %cst_59 = arith.constant 5.000000e-01 : f32
    %197 = vector.broadcast %cst_59 : f32 to vector<2x96xf32>
    %198 = arith.mulf %197, %196 : vector<2x96xf32>
    %199 = vector.extract_strided_slice %198 {offsets = [0, 0], sizes = [2, 32], strides = [1, 1]} : vector<2x96xf32> to vector<2x32xf32>
    %200 = vector.extract_strided_slice %198 {offsets = [0, 32], sizes = [2, 32], strides = [1, 1]} : vector<2x96xf32> to vector<2x32xf32>
    %201 = vector.extract_strided_slice %198 {offsets = [0, 64], sizes = [2, 32], strides = [1, 1]} : vector<2x96xf32> to vector<2x32xf32>
    %202 = vector.extract_strided_slice %190 {offsets = [0, 96], sizes = [2, 32], strides = [1, 1]} : vector<2x128xf32> to vector<2x32xf32>
    %203 = math.tanh %202 : vector<2x32xf32>
    %204 = arith.mulf %200, %35 : vector<2x32xf32>
    %205 = arith.mulf %199, %203 : vector<2x32xf32>
    %206 = arith.addf %204, %205 : vector<2x32xf32>
    %207 = math.tanh %206 : vector<2x32xf32>
    %208 = arith.mulf %201, %207 : vector<2x32xf32>
    %cst_60 = arith.constant -2.000000e+01 : f32
    %cst_61 = arith.constant 2.000000e+01 : f32
    %209 = vector.broadcast %cst_60 : f32 to vector<2x32xf32>
    %210 = arith.maximumf %209, %208 : vector<2x32xf32>
    %211 = vector.broadcast %cst_61 : f32 to vector<2x32xf32>
    %212 = arith.minimumf %211, %210 : vector<2x32xf32>
    %cst_62 = arith.constant dense<0.000000e+00> : vector<2x108xf32>
    %213 = tpu.matmul %212, %12, %cst_62 {dimension_numbers = #tpu.dot_dimension_numbers<[1], [0], [0], [1], [0, 0, 1, 1], [], []>} : vector<2x32xf32>, vector<32x108xf32>, vector<2x108xf32> -> vector<2x108xf32>
    %214 = vector.broadcast %13 : vector<1x108xf32> to vector<2x108xf32>
    %215 = arith.addf %213, %214 : vector<2x108xf32>
    %216 = vector.extract_strided_slice %215 {offsets = [0, 0], sizes = [2, 22], strides = [1, 1]} : vector<2x108xf32> to vector<2x22xf32>
    %217 = vector.extract_strided_slice %215 {offsets = [0, 22], sizes = [2, 22], strides = [1, 1]} : vector<2x108xf32> to vector<2x22xf32>
    %218 = tpu.concatenate %216, %217 in 0 : vector<2x22xf32>, vector<2x22xf32> -> vector<4x22xf32>
    %219 = vector.extract_strided_slice %215 {offsets = [0, 44], sizes = [2, 16], strides = [1, 1]} : vector<2x108xf32> to vector<2x16xf32>
    %cst_63 = arith.constant 5.000000e-01 : f32
    %220 = vector.broadcast %cst_63 : f32 to vector<2x16xf32>
    %221 = arith.mulf %220, %219 : vector<2x16xf32>
    %222 = math.tanh %221 : vector<2x16xf32>
    %cst_64 = arith.constant 1.000000e+00 : f32
    %223 = vector.broadcast %cst_64 : f32 to vector<2x16xf32>
    %224 = arith.addf %222, %223 : vector<2x16xf32>
    %cst_65 = arith.constant 5.000000e-01 : f32
    %225 = vector.broadcast %cst_65 : f32 to vector<2x16xf32>
    %226 = arith.mulf %225, %224 : vector<2x16xf32>
    %227 = vector.extract_strided_slice %215 {offsets = [0, 60], sizes = [2, 16], strides = [1, 1]} : vector<2x108xf32> to vector<2x16xf32>
    %228 = math.tanh %227 : vector<2x16xf32>
    %229 = vector.extract_strided_slice %215 {offsets = [0, 76], sizes = [2, 32], strides = [1, 1]} : vector<2x108xf32> to vector<2x32xf32>
    %230 = vector.extract_strided_slice %218 {offsets = [0, 0], sizes = [4, 16], strides = [1, 1]} : vector<4x22xf32> to vector<4x16xf32>
    %231 = math.tanh %230 : vector<4x16xf32>
    %232 = vector.extract_strided_slice %218 {offsets = [0, 16], sizes = [4, 1], strides = [1, 1]} : vector<4x22xf32> to vector<4x1xf32>
    %cst_66 = arith.constant 0.000000e+00 : f32
    %233 = vector.broadcast %cst_66 : f32 to vector<4x1xf32>
    %234 = arith.maximumf %232, %233 : vector<4x1xf32>
    %235 = math.absf %232 : vector<4x1xf32>
    %cst_67 = arith.constant 0.000000e+00 : f32
    %236 = vector.broadcast %cst_67 : f32 to vector<4x1xf32>
    %237 = arith.subf %236, %235 : vector<4x1xf32>
    %238 = math.exp %237 : vector<4x1xf32>
    %cst_68 = arith.constant 1.000000e+00 : f32
    %239 = vector.broadcast %cst_68 : f32 to vector<4x1xf32>
    %240 = arith.addf %239, %238 : vector<4x1xf32>
    %241 = math.log %240 : vector<4x1xf32>
    %242 = arith.addf %234, %241 : vector<4x1xf32>
    %243 = vector.extract_strided_slice %218 {offsets = [0, 17], sizes = [4, 1], strides = [1, 1]} : vector<4x22xf32> to vector<4x1xf32>
    %cst_69 = arith.constant 5.000000e-01 : f32
    %244 = vector.broadcast %cst_69 : f32 to vector<4x1xf32>
    %245 = arith.mulf %244, %243 : vector<4x1xf32>
    %246 = math.tanh %245 : vector<4x1xf32>
    %cst_70 = arith.constant 1.000000e+00 : f32
    %247 = vector.broadcast %cst_70 : f32 to vector<4x1xf32>
    %248 = arith.addf %246, %247 : vector<4x1xf32>
    %cst_71 = arith.constant 5.000000e-01 : f32
    %249 = vector.broadcast %cst_71 : f32 to vector<4x1xf32>
    %250 = arith.mulf %249, %248 : vector<4x1xf32>
    %251 = vector.extract_strided_slice %218 {offsets = [0, 18], sizes = [4, 3], strides = [1, 1]} : vector<4x22xf32> to vector<4x3xf32>
    %252 = vector.extract_strided_slice %218 {offsets = [0, 21], sizes = [4, 1], strides = [1, 1]} : vector<4x22xf32> to vector<4x1xf32>
    %cst_72 = arith.constant 0.000000e+00 : f32
    %253 = vector.broadcast %cst_72 : f32 to vector<4x1xf32>
    %254 = arith.maximumf %252, %253 : vector<4x1xf32>
    %255 = math.absf %252 : vector<4x1xf32>
    %cst_73 = arith.constant 0.000000e+00 : f32
    %256 = vector.broadcast %cst_73 : f32 to vector<4x1xf32>
    %257 = arith.subf %256, %255 : vector<4x1xf32>
    %258 = math.exp %257 : vector<4x1xf32>
    %cst_74 = arith.constant 1.000000e+00 : f32
    %259 = vector.broadcast %cst_74 : f32 to vector<4x1xf32>
    %260 = arith.addf %259, %258 : vector<4x1xf32>
    %261 = math.log %260 : vector<4x1xf32>
    %262 = arith.addf %254, %261 : vector<4x1xf32>
    %cst_75 = arith.constant dense<0xFF800000> : vector<4xf32>
    %263 = vector.multi_reduction <maximumf>, %251, %cst_75 [1] : vector<4x3xf32> to vector<4xf32>
    %264 = vector.shape_cast %263 : vector<4xf32> to vector<4x1xf32>
    %265 = vector.broadcast %264 : vector<4x1xf32> to vector<4x3xf32>
    %266 = arith.subf %251, %265 : vector<4x3xf32>
    %267 = math.exp %266 : vector<4x3xf32>
    %cst_76 = arith.constant dense<0.000000e+00> : vector<4xf32>
    %268 = vector.multi_reduction <add>, %267, %cst_76 [1] : vector<4x3xf32> to vector<4xf32>
    %269 = vector.shape_cast %268 : vector<4xf32> to vector<4x1xf32>
    %270 = vector.broadcast %269 : vector<4x1xf32> to vector<4x3xf32>
    %271 = arith.divf %267, %270 : vector<4x3xf32>
    %272 = tpu.concatenate %174, %174 in 0 : vector<2x32x16xf32>, vector<2x32x16xf32> -> vector<4x32x16xf32>
    %273 = vector.shape_cast %231 : vector<4x16xf32> to vector<4x1x16xf32>
    %274 = vector.broadcast %273 : vector<4x1x16xf32> to vector<4x32x16xf32>
    %275 = arith.mulf %272, %274 : vector<4x32x16xf32>
    %cst_77 = arith.constant dense<0.000000e+00> : vector<4x32xf32>
    %276 = vector.multi_reduction <add>, %275, %cst_77 [2] : vector<4x32x16xf32> to vector<4x32xf32>
    %277 = arith.mulf %231, %231 : vector<4x16xf32>
    %cst_78 = arith.constant dense<0.000000e+00> : vector<4xf32>
    %278 = vector.multi_reduction <add>, %277, %cst_78 [1] : vector<4x16xf32> to vector<4xf32>
    %279 = vector.shape_cast %278 : vector<4xf32> to vector<4x1xf32>
    %280 = arith.mulf %174, %174 : vector<2x32x16xf32>
    %cst_79 = arith.constant dense<0.000000e+00> : vector<2x32xf32>
    %281 = vector.multi_reduction <add>, %280, %cst_79 [2] : vector<2x32x16xf32> to vector<2x32xf32>
    %282 = tpu.concatenate %281, %281 in 0 : vector<2x32xf32>, vector<2x32xf32> -> vector<4x32xf32>
    %283 = vector.broadcast %279 : vector<4x1xf32> to vector<4x32xf32>
    %284 = arith.mulf %283, %282 : vector<4x32xf32>
    %cst_80 = arith.constant 1.000000e-16 : f32
    %285 = vector.broadcast %cst_80 : f32 to vector<4x32xf32>
    %286 = arith.addf %284, %285 : vector<4x32xf32>
    %287 = math.rsqrt %286 : vector<4x32xf32>
    %288 = arith.mulf %276, %287 : vector<4x32xf32>
    %289 = vector.broadcast %242 : vector<4x1xf32> to vector<4x32xf32>
    %290 = arith.mulf %289, %288 : vector<4x32xf32>
    %291 = math.exp %290 : vector<4x32xf32>
    %cst_81 = arith.constant dense<0.000000e+00> : vector<4xf32>
    %292 = vector.multi_reduction <add>, %291, %cst_81 [1] : vector<4x32xf32> to vector<4xf32>
    %293 = vector.shape_cast %292 : vector<4xf32> to vector<4x1xf32>
    %294 = vector.broadcast %293 : vector<4x1xf32> to vector<4x32xf32>
    %295 = arith.divf %291, %294 : vector<4x32xf32>
    %296 = vector.broadcast %250 : vector<4x1xf32> to vector<4x32xf32>
    %297 = arith.mulf %296, %295 : vector<4x32xf32>
    %cst_82 = arith.constant 1.000000e+00 : f32
    %298 = vector.broadcast %cst_82 : f32 to vector<4x1xf32>
    %299 = arith.subf %298, %250 : vector<4x1xf32>
    %300 = vector.broadcast %299 : vector<4x1xf32> to vector<4x32xf32>
    %301 = arith.mulf %300, %155 : vector<4x32xf32>
    %302 = arith.addf %297, %301 : vector<4x32xf32>
    %cst_83 = arith.constant dense<0.000000e+00> : vector<4x64xf32>
    %303 = tpu.matmul %302, %10, %cst_83 {dimension_numbers = #tpu.dot_dimension_numbers<[1], [0], [0], [1], [0, 0, 1, 1], [], []>} : vector<4x32xf32>, vector<32x64xf32>, vector<4x64xf32> -> vector<4x64xf32>
    %304 = vector.extract_strided_slice %271 {offsets = [0, 0], sizes = [4, 1], strides = [1, 1]} : vector<4x3xf32> to vector<4x1xf32>
    %305 = vector.broadcast %304 : vector<4x1xf32> to vector<4x32xf32>
    %306 = arith.mulf %305, %302 : vector<4x32xf32>
    %307 = vector.extract_strided_slice %271 {offsets = [0, 1], sizes = [4, 1], strides = [1, 1]} : vector<4x3xf32> to vector<4x1xf32>
    %308 = vector.extract_strided_slice %303 {offsets = [0, 0], sizes = [4, 32], strides = [1, 1]} : vector<4x64xf32> to vector<4x32xf32>
    %309 = vector.broadcast %307 : vector<4x1xf32> to vector<4x32xf32>
    %310 = arith.mulf %309, %308 : vector<4x32xf32>
    %311 = arith.addf %306, %310 : vector<4x32xf32>
    %312 = vector.extract_strided_slice %271 {offsets = [0, 2], sizes = [4, 1], strides = [1, 1]} : vector<4x3xf32> to vector<4x1xf32>
    %313 = vector.extract_strided_slice %303 {offsets = [0, 32], sizes = [4, 32], strides = [1, 1]} : vector<4x64xf32> to vector<4x32xf32>
    %314 = vector.broadcast %312 : vector<4x1xf32> to vector<4x32xf32>
    %315 = arith.mulf %314, %313 : vector<4x32xf32>
    %316 = arith.addf %311, %315 : vector<4x32xf32>
    %cst_84 = arith.constant 1.000000e-30 : f32
    %317 = vector.broadcast %cst_84 : f32 to vector<4x32xf32>
    %318 = arith.maximumf %316, %317 : vector<4x32xf32>
    %319 = math.log %318 : vector<4x32xf32>
    %320 = vector.broadcast %262 : vector<4x1xf32> to vector<4x32xf32>
    %321 = arith.mulf %320, %319 : vector<4x32xf32>
    %322 = math.exp %321 : vector<4x32xf32>
    %cst_85 = arith.constant dense<0.000000e+00> : vector<4xf32>
    %323 = vector.multi_reduction <add>, %322, %cst_85 [1] : vector<4x32xf32> to vector<4xf32>
    %324 = vector.shape_cast %323 : vector<4xf32> to vector<4x1xf32>
    %325 = vector.broadcast %324 : vector<4x1xf32> to vector<4x32xf32>
    %326 = arith.divf %322, %325 : vector<4x32xf32>
    %327 = vector.extract_strided_slice %326 {offsets = [0, 0], sizes = [2, 32], strides = [1, 1]} : vector<4x32xf32> to vector<2x32xf32>
    %328 = vector.extract_strided_slice %326 {offsets = [2, 0], sizes = [2, 32], strides = [1, 1]} : vector<4x32xf32> to vector<2x32xf32>
    %329 = vector.shape_cast %327 : vector<2x32xf32> to vector<2x32x1xf32>
    %330 = vector.broadcast %329 : vector<2x32x1xf32> to vector<2x32x16xf32>
    %331 = arith.mulf %330, %174 : vector<2x32x16xf32>
    %cst_86 = arith.constant dense<0.000000e+00> : vector<2x16xf32>
    %332 = vector.multi_reduction <add>, %331, %cst_86 [1] : vector<2x32x16xf32> to vector<2x16xf32>
    %333 = vector.shape_cast %328 : vector<2x32xf32> to vector<2x32x1xf32>
    %334 = vector.shape_cast %226 : vector<2x16xf32> to vector<2x1x16xf32>
    %335 = vector.broadcast %333 : vector<2x32x1xf32> to vector<2x32x16xf32>
    %336 = vector.broadcast %334 : vector<2x1x16xf32> to vector<2x32x16xf32>
    %337 = arith.mulf %335, %336 : vector<2x32x16xf32>
    %cst_87 = arith.constant 1.000000e+00 : f32
    %338 = vector.broadcast %cst_87 : f32 to vector<2x32x16xf32>
    %339 = arith.subf %338, %337 : vector<2x32x16xf32>
    %340 = arith.mulf %174, %339 : vector<2x32x16xf32>
    %341 = vector.shape_cast %228 : vector<2x16xf32> to vector<2x1x16xf32>
    %342 = vector.broadcast %333 : vector<2x32x1xf32> to vector<2x32x16xf32>
    %343 = vector.broadcast %341 : vector<2x1x16xf32> to vector<2x32x16xf32>
    %344 = arith.mulf %342, %343 : vector<2x32x16xf32>
    %345 = arith.addf %340, %344 : vector<2x32x16xf32>
    %cst_88 = arith.constant dense<0.000000e+00> : vector<2x32xf32>
    %346 = tpu.matmul %332, %14, %cst_88 {dimension_numbers = #tpu.dot_dimension_numbers<[1], [0], [0], [1], [0, 0, 1, 1], [], []>} : vector<2x16xf32>, vector<16x32xf32>, vector<2x32xf32> -> vector<2x32xf32>
    %347 = arith.addf %229, %346 : vector<2x32xf32>
    %cst_89 = arith.constant -2.000000e+01 : f32
    %cst_90 = arith.constant 2.000000e+01 : f32
    %348 = vector.broadcast %cst_89 : f32 to vector<2x32xf32>
    %349 = arith.maximumf %348, %347 : vector<2x32xf32>
    %350 = vector.broadcast %cst_90 : f32 to vector<2x32xf32>
    %351 = arith.minimumf %350, %349 : vector<2x32xf32>
    %352 = arith.index_cast %c1_i32 : i32 to index
    %c0_91 = arith.constant 0 : index
    %c0_92 = arith.constant 0 : index
    %353 = vector.load %arg9[%352, %c0_91, %c0_92] : memref<8x2x32xf32, #tpu.memory_space<vmem>>, vector<1x2x32xf32>
    %354 = vector.shape_cast %353 : vector<1x2x32xf32> to vector<2x32xf32>
    %355 = vector.shape_cast %351 : vector<2x32xf32> to vector<1x2x32xf32>
    tpu.vector_store %arg9[%352, %c0_91, %c0_92], %355 {strides = array<i32>} : memref<8x2x32xf32, #tpu.memory_space<vmem>>, vector<1x2x32xf32>,
    %356 = tpu.concatenate %208, %332 in 1 : vector<2x32xf32>, vector<2x16xf32> -> vector<2x48xf32>
    %c2_i32 = arith.constant 2 : i32
    %357 = arith.index_cast %c2_i32 : i32 to index
    %c0_93 = arith.constant 0 : index
    %c0_94 = arith.constant 0 : index
    %358 = vector.load %arg1[%357, %c0_93, %c0_94] : memref<8x2x128xf32, #tpu.memory_space<vmem>>, vector<1x2x128xf32>
    %359 = vector.shape_cast %358 : vector<1x2x128xf32> to vector<2x128xf32>
    %cst_95 = arith.constant dense<0.000000e+00> : vector<2x128xf32>
    %360 = tpu.matmul %356, %11, %cst_95 {dimension_numbers = #tpu.dot_dimension_numbers<[1], [0], [0], [1], [0, 0, 1, 1], [], []>} : vector<2x48xf32>, vector<48x128xf32>, vector<2x128xf32> -> vector<2x128xf32>
    %361 = arith.addf %359, %360 : vector<2x128xf32>
    %362 = vector.extract_strided_slice %361 {offsets = [0, 0], sizes = [2, 96], strides = [1, 1]} : vector<2x128xf32> to vector<2x96xf32>
    %cst_96 = arith.constant 5.000000e-01 : f32
    %363 = vector.broadcast %cst_96 : f32 to vector<2x96xf32>
    %364 = arith.mulf %363, %362 : vector<2x96xf32>
    %365 = math.tanh %364 : vector<2x96xf32>
    %cst_97 = arith.constant 1.000000e+00 : f32
    %366 = vector.broadcast %cst_97 : f32 to vector<2x96xf32>
    %367 = arith.addf %365, %366 : vector<2x96xf32>
    %cst_98 = arith.constant 5.000000e-01 : f32
    %368 = vector.broadcast %cst_98 : f32 to vector<2x96xf32>
    %369 = arith.mulf %368, %367 : vector<2x96xf32>
    %370 = vector.extract_strided_slice %369 {offsets = [0, 0], sizes = [2, 32], strides = [1, 1]} : vector<2x96xf32> to vector<2x32xf32>
    %371 = vector.extract_strided_slice %369 {offsets = [0, 32], sizes = [2, 32], strides = [1, 1]} : vector<2x96xf32> to vector<2x32xf32>
    %372 = vector.extract_strided_slice %369 {offsets = [0, 64], sizes = [2, 32], strides = [1, 1]} : vector<2x96xf32> to vector<2x32xf32>
    %373 = vector.extract_strided_slice %361 {offsets = [0, 96], sizes = [2, 32], strides = [1, 1]} : vector<2x128xf32> to vector<2x32xf32>
    %374 = math.tanh %373 : vector<2x32xf32>
    %375 = arith.mulf %371, %206 : vector<2x32xf32>
    %376 = arith.mulf %370, %374 : vector<2x32xf32>
    %377 = arith.addf %375, %376 : vector<2x32xf32>
    %378 = math.tanh %377 : vector<2x32xf32>
    %379 = arith.mulf %372, %378 : vector<2x32xf32>
    %cst_99 = arith.constant -2.000000e+01 : f32
    %cst_100 = arith.constant 2.000000e+01 : f32
    %380 = vector.broadcast %cst_99 : f32 to vector<2x32xf32>
    %381 = arith.maximumf %380, %379 : vector<2x32xf32>
    %382 = vector.broadcast %cst_100 : f32 to vector<2x32xf32>
    %383 = arith.minimumf %382, %381 : vector<2x32xf32>
    %cst_101 = arith.constant dense<0.000000e+00> : vector<2x108xf32>
    %384 = tpu.matmul %383, %12, %cst_101 {dimension_numbers = #tpu.dot_dimension_numbers<[1], [0], [0], [1], [0, 0, 1, 1], [], []>} : vector<2x32xf32>, vector<32x108xf32>, vector<2x108xf32> -> vector<2x108xf32>
    %385 = vector.broadcast %13 : vector<1x108xf32> to vector<2x108xf32>
    %386 = arith.addf %384, %385 : vector<2x108xf32>
    %387 = vector.extract_strided_slice %386 {offsets = [0, 0], sizes = [2, 22], strides = [1, 1]} : vector<2x108xf32> to vector<2x22xf32>
    %388 = vector.extract_strided_slice %386 {offsets = [0, 22], sizes = [2, 22], strides = [1, 1]} : vector<2x108xf32> to vector<2x22xf32>
    %389 = tpu.concatenate %387, %388 in 0 : vector<2x22xf32>, vector<2x22xf32> -> vector<4x22xf32>
    %390 = vector.extract_strided_slice %386 {offsets = [0, 44], sizes = [2, 16], strides = [1, 1]} : vector<2x108xf32> to vector<2x16xf32>
    %cst_102 = arith.constant 5.000000e-01 : f32
    %391 = vector.broadcast %cst_102 : f32 to vector<2x16xf32>
    %392 = arith.mulf %391, %390 : vector<2x16xf32>
    %393 = math.tanh %392 : vector<2x16xf32>
    %cst_103 = arith.constant 1.000000e+00 : f32
    %394 = vector.broadcast %cst_103 : f32 to vector<2x16xf32>
    %395 = arith.addf %393, %394 : vector<2x16xf32>
    %cst_104 = arith.constant 5.000000e-01 : f32
    %396 = vector.broadcast %cst_104 : f32 to vector<2x16xf32>
    %397 = arith.mulf %396, %395 : vector<2x16xf32>
    %398 = vector.extract_strided_slice %386 {offsets = [0, 60], sizes = [2, 16], strides = [1, 1]} : vector<2x108xf32> to vector<2x16xf32>
    %399 = math.tanh %398 : vector<2x16xf32>
    %400 = vector.extract_strided_slice %386 {offsets = [0, 76], sizes = [2, 32], strides = [1, 1]} : vector<2x108xf32> to vector<2x32xf32>
    %401 = vector.extract_strided_slice %389 {offsets = [0, 0], sizes = [4, 16], strides = [1, 1]} : vector<4x22xf32> to vector<4x16xf32>
    %402 = math.tanh %401 : vector<4x16xf32>
    %403 = vector.extract_strided_slice %389 {offsets = [0, 16], sizes = [4, 1], strides = [1, 1]} : vector<4x22xf32> to vector<4x1xf32>
    %cst_105 = arith.constant 0.000000e+00 : f32
    %404 = vector.broadcast %cst_105 : f32 to vector<4x1xf32>
    %405 = arith.maximumf %403, %404 : vector<4x1xf32>
    %406 = math.absf %403 : vector<4x1xf32>
    %cst_106 = arith.constant 0.000000e+00 : f32
    %407 = vector.broadcast %cst_106 : f32 to vector<4x1xf32>
    %408 = arith.subf %407, %406 : vector<4x1xf32>
    %409 = math.exp %408 : vector<4x1xf32>
    %cst_107 = arith.constant 1.000000e+00 : f32
    %410 = vector.broadcast %cst_107 : f32 to vector<4x1xf32>
    %411 = arith.addf %410, %409 : vector<4x1xf32>
    %412 = math.log %411 : vector<4x1xf32>
    %413 = arith.addf %405, %412 : vector<4x1xf32>
    %414 = vector.extract_strided_slice %389 {offsets = [0, 17], sizes = [4, 1], strides = [1, 1]} : vector<4x22xf32> to vector<4x1xf32>
    %cst_108 = arith.constant 5.000000e-01 : f32
    %415 = vector.broadcast %cst_108 : f32 to vector<4x1xf32>
    %416 = arith.mulf %415, %414 : vector<4x1xf32>
    %417 = math.tanh %416 : vector<4x1xf32>
    %cst_109 = arith.constant 1.000000e+00 : f32
    %418 = vector.broadcast %cst_109 : f32 to vector<4x1xf32>
    %419 = arith.addf %417, %418 : vector<4x1xf32>
    %cst_110 = arith.constant 5.000000e-01 : f32
    %420 = vector.broadcast %cst_110 : f32 to vector<4x1xf32>
    %421 = arith.mulf %420, %419 : vector<4x1xf32>
    %422 = vector.extract_strided_slice %389 {offsets = [0, 18], sizes = [4, 3], strides = [1, 1]} : vector<4x22xf32> to vector<4x3xf32>
    %423 = vector.extract_strided_slice %389 {offsets = [0, 21], sizes = [4, 1], strides = [1, 1]} : vector<4x22xf32> to vector<4x1xf32>
    %cst_111 = arith.constant 0.000000e+00 : f32
    %424 = vector.broadcast %cst_111 : f32 to vector<4x1xf32>
    %425 = arith.maximumf %423, %424 : vector<4x1xf32>
    %426 = math.absf %423 : vector<4x1xf32>
    %cst_112 = arith.constant 0.000000e+00 : f32
    %427 = vector.broadcast %cst_112 : f32 to vector<4x1xf32>
    %428 = arith.subf %427, %426 : vector<4x1xf32>
    %429 = math.exp %428 : vector<4x1xf32>
    %cst_113 = arith.constant 1.000000e+00 : f32
    %430 = vector.broadcast %cst_113 : f32 to vector<4x1xf32>
    %431 = arith.addf %430, %429 : vector<4x1xf32>
    %432 = math.log %431 : vector<4x1xf32>
    %433 = arith.addf %425, %432 : vector<4x1xf32>
    %cst_114 = arith.constant dense<0xFF800000> : vector<4xf32>
    %434 = vector.multi_reduction <maximumf>, %422, %cst_114 [1] : vector<4x3xf32> to vector<4xf32>
    %435 = vector.shape_cast %434 : vector<4xf32> to vector<4x1xf32>
    %436 = vector.broadcast %435 : vector<4x1xf32> to vector<4x3xf32>
    %437 = arith.subf %422, %436 : vector<4x3xf32>
    %438 = math.exp %437 : vector<4x3xf32>
    %cst_115 = arith.constant dense<0.000000e+00> : vector<4xf32>
    %439 = vector.multi_reduction <add>, %438, %cst_115 [1] : vector<4x3xf32> to vector<4xf32>
    %440 = vector.shape_cast %439 : vector<4xf32> to vector<4x1xf32>
    %441 = vector.broadcast %440 : vector<4x1xf32> to vector<4x3xf32>
    %442 = arith.divf %438, %441 : vector<4x3xf32>
    %443 = tpu.concatenate %345, %345 in 0 : vector<2x32x16xf32>, vector<2x32x16xf32> -> vector<4x32x16xf32>
    %444 = vector.shape_cast %402 : vector<4x16xf32> to vector<4x1x16xf32>
    %445 = vector.broadcast %444 : vector<4x1x16xf32> to vector<4x32x16xf32>
    %446 = arith.mulf %443, %445 : vector<4x32x16xf32>
    %cst_116 = arith.constant dense<0.000000e+00> : vector<4x32xf32>
    %447 = vector.multi_reduction <add>, %446, %cst_116 [2] : vector<4x32x16xf32> to vector<4x32xf32>
    %448 = arith.mulf %402, %402 : vector<4x16xf32>
    %cst_117 = arith.constant dense<0.000000e+00> : vector<4xf32>
    %449 = vector.multi_reduction <add>, %448, %cst_117 [1] : vector<4x16xf32> to vector<4xf32>
    %450 = vector.shape_cast %449 : vector<4xf32> to vector<4x1xf32>
    %451 = arith.mulf %345, %345 : vector<2x32x16xf32>
    %cst_118 = arith.constant dense<0.000000e+00> : vector<2x32xf32>
    %452 = vector.multi_reduction <add>, %451, %cst_118 [2] : vector<2x32x16xf32> to vector<2x32xf32>
    %453 = tpu.concatenate %452, %452 in 0 : vector<2x32xf32>, vector<2x32xf32> -> vector<4x32xf32>
    %454 = vector.broadcast %450 : vector<4x1xf32> to vector<4x32xf32>
    %455 = arith.mulf %454, %453 : vector<4x32xf32>
    %cst_119 = arith.constant 1.000000e-16 : f32
    %456 = vector.broadcast %cst_119 : f32 to vector<4x32xf32>
    %457 = arith.addf %455, %456 : vector<4x32xf32>
    %458 = math.rsqrt %457 : vector<4x32xf32>
    %459 = arith.mulf %447, %458 : vector<4x32xf32>
    %460 = vector.broadcast %413 : vector<4x1xf32> to vector<4x32xf32>
    %461 = arith.mulf %460, %459 : vector<4x32xf32>
    %462 = math.exp %461 : vector<4x32xf32>
    %cst_120 = arith.constant dense<0.000000e+00> : vector<4xf32>
    %463 = vector.multi_reduction <add>, %462, %cst_120 [1] : vector<4x32xf32> to vector<4xf32>
    %464 = vector.shape_cast %463 : vector<4xf32> to vector<4x1xf32>
    %465 = vector.broadcast %464 : vector<4x1xf32> to vector<4x32xf32>
    %466 = arith.divf %462, %465 : vector<4x32xf32>
    %467 = vector.broadcast %421 : vector<4x1xf32> to vector<4x32xf32>
    %468 = arith.mulf %467, %466 : vector<4x32xf32>
    %cst_121 = arith.constant 1.000000e+00 : f32
    %469 = vector.broadcast %cst_121 : f32 to vector<4x1xf32>
    %470 = arith.subf %469, %421 : vector<4x1xf32>
    %471 = vector.broadcast %470 : vector<4x1xf32> to vector<4x32xf32>
    %472 = arith.mulf %471, %326 : vector<4x32xf32>
    %473 = arith.addf %468, %472 : vector<4x32xf32>
    %cst_122 = arith.constant dense<0.000000e+00> : vector<4x64xf32>
    %474 = tpu.matmul %473, %10, %cst_122 {dimension_numbers = #tpu.dot_dimension_numbers<[1], [0], [0], [1], [0, 0, 1, 1], [], []>} : vector<4x32xf32>, vector<32x64xf32>, vector<4x64xf32> -> vector<4x64xf32>
    %475 = vector.extract_strided_slice %442 {offsets = [0, 0], sizes = [4, 1], strides = [1, 1]} : vector<4x3xf32> to vector<4x1xf32>
    %476 = vector.broadcast %475 : vector<4x1xf32> to vector<4x32xf32>
    %477 = arith.mulf %476, %473 : vector<4x32xf32>
    %478 = vector.extract_strided_slice %442 {offsets = [0, 1], sizes = [4, 1], strides = [1, 1]} : vector<4x3xf32> to vector<4x1xf32>
    %479 = vector.extract_strided_slice %474 {offsets = [0, 0], sizes = [4, 32], strides = [1, 1]} : vector<4x64xf32> to vector<4x32xf32>
    %480 = vector.broadcast %478 : vector<4x1xf32> to vector<4x32xf32>
    %481 = arith.mulf %480, %479 : vector<4x32xf32>
    %482 = arith.addf %477, %481 : vector<4x32xf32>
    %483 = vector.extract_strided_slice %442 {offsets = [0, 2], sizes = [4, 1], strides = [1, 1]} : vector<4x3xf32> to vector<4x1xf32>
    %484 = vector.extract_strided_slice %474 {offsets = [0, 32], sizes = [4, 32], strides = [1, 1]} : vector<4x64xf32> to vector<4x32xf32>
    %485 = vector.broadcast %483 : vector<4x1xf32> to vector<4x32xf32>
    %486 = arith.mulf %485, %484 : vector<4x32xf32>
    %487 = arith.addf %482, %486 : vector<4x32xf32>
    %cst_123 = arith.constant 1.000000e-30 : f32
    %488 = vector.broadcast %cst_123 : f32 to vector<4x32xf32>
    %489 = arith.maximumf %487, %488 : vector<4x32xf32>
    %490 = math.log %489 : vector<4x32xf32>
    %491 = vector.broadcast %433 : vector<4x1xf32> to vector<4x32xf32>
    %492 = arith.mulf %491, %490 : vector<4x32xf32>
    %493 = math.exp %492 : vector<4x32xf32>
    %cst_124 = arith.constant dense<0.000000e+00> : vector<4xf32>
    %494 = vector.multi_reduction <add>, %493, %cst_124 [1] : vector<4x32xf32> to vector<4xf32>
    %495 = vector.shape_cast %494 : vector<4xf32> to vector<4x1xf32>
    %496 = vector.broadcast %495 : vector<4x1xf32> to vector<4x32xf32>
    %497 = arith.divf %493, %496 : vector<4x32xf32>
    %498 = vector.extract_strided_slice %497 {offsets = [0, 0], sizes = [2, 32], strides = [1, 1]} : vector<4x32xf32> to vector<2x32xf32>
    %499 = vector.extract_strided_slice %497 {offsets = [2, 0], sizes = [2, 32], strides = [1, 1]} : vector<4x32xf32> to vector<2x32xf32>
    %500 = vector.shape_cast %498 : vector<2x32xf32> to vector<2x32x1xf32>
    %501 = vector.broadcast %500 : vector<2x32x1xf32> to vector<2x32x16xf32>
    %502 = arith.mulf %501, %345 : vector<2x32x16xf32>
    %cst_125 = arith.constant dense<0.000000e+00> : vector<2x16xf32>
    %503 = vector.multi_reduction <add>, %502, %cst_125 [1] : vector<2x32x16xf32> to vector<2x16xf32>
    %504 = vector.shape_cast %499 : vector<2x32xf32> to vector<2x32x1xf32>
    %505 = vector.shape_cast %397 : vector<2x16xf32> to vector<2x1x16xf32>
    %506 = vector.broadcast %504 : vector<2x32x1xf32> to vector<2x32x16xf32>
    %507 = vector.broadcast %505 : vector<2x1x16xf32> to vector<2x32x16xf32>
    %508 = arith.mulf %506, %507 : vector<2x32x16xf32>
    %cst_126 = arith.constant 1.000000e+00 : f32
    %509 = vector.broadcast %cst_126 : f32 to vector<2x32x16xf32>
    %510 = arith.subf %509, %508 : vector<2x32x16xf32>
    %511 = arith.mulf %345, %510 : vector<2x32x16xf32>
    %512 = vector.shape_cast %399 : vector<2x16xf32> to vector<2x1x16xf32>
    %513 = vector.broadcast %504 : vector<2x32x1xf32> to vector<2x32x16xf32>
    %514 = vector.broadcast %512 : vector<2x1x16xf32> to vector<2x32x16xf32>
    %515 = arith.mulf %513, %514 : vector<2x32x16xf32>
    %516 = arith.addf %511, %515 : vector<2x32x16xf32>
    %cst_127 = arith.constant dense<0.000000e+00> : vector<2x32xf32>
    %517 = tpu.matmul %503, %14, %cst_127 {dimension_numbers = #tpu.dot_dimension_numbers<[1], [0], [0], [1], [0, 0, 1, 1], [], []>} : vector<2x16xf32>, vector<16x32xf32>, vector<2x32xf32> -> vector<2x32xf32>
    %518 = arith.addf %400, %517 : vector<2x32xf32>
    %cst_128 = arith.constant -2.000000e+01 : f32
    %cst_129 = arith.constant 2.000000e+01 : f32
    %519 = vector.broadcast %cst_128 : f32 to vector<2x32xf32>
    %520 = arith.maximumf %519, %518 : vector<2x32xf32>
    %521 = vector.broadcast %cst_129 : f32 to vector<2x32xf32>
    %522 = arith.minimumf %521, %520 : vector<2x32xf32>
    %523 = arith.index_cast %c2_i32 : i32 to index
    %c0_130 = arith.constant 0 : index
    %c0_131 = arith.constant 0 : index
    %524 = vector.load %arg9[%523, %c0_130, %c0_131] : memref<8x2x32xf32, #tpu.memory_space<vmem>>, vector<1x2x32xf32>
    %525 = vector.shape_cast %524 : vector<1x2x32xf32> to vector<2x32xf32>
    %526 = vector.shape_cast %522 : vector<2x32xf32> to vector<1x2x32xf32>
    tpu.vector_store %arg9[%523, %c0_130, %c0_131], %526 {strides = array<i32>} : memref<8x2x32xf32, #tpu.memory_space<vmem>>, vector<1x2x32xf32>,
    %527 = tpu.concatenate %379, %503 in 1 : vector<2x32xf32>, vector<2x16xf32> -> vector<2x48xf32>
    %c3_i32 = arith.constant 3 : i32
    %528 = arith.index_cast %c3_i32 : i32 to index
    %c0_132 = arith.constant 0 : index
    %c0_133 = arith.constant 0 : index
    %529 = vector.load %arg1[%528, %c0_132, %c0_133] : memref<8x2x128xf32, #tpu.memory_space<vmem>>, vector<1x2x128xf32>
    %530 = vector.shape_cast %529 : vector<1x2x128xf32> to vector<2x128xf32>
    %cst_134 = arith.constant dense<0.000000e+00> : vector<2x128xf32>
    %531 = tpu.matmul %527, %11, %cst_134 {dimension_numbers = #tpu.dot_dimension_numbers<[1], [0], [0], [1], [0, 0, 1, 1], [], []>} : vector<2x48xf32>, vector<48x128xf32>, vector<2x128xf32> -> vector<2x128xf32>
    %532 = arith.addf %530, %531 : vector<2x128xf32>
    %533 = vector.extract_strided_slice %532 {offsets = [0, 0], sizes = [2, 96], strides = [1, 1]} : vector<2x128xf32> to vector<2x96xf32>
    %cst_135 = arith.constant 5.000000e-01 : f32
    %534 = vector.broadcast %cst_135 : f32 to vector<2x96xf32>
    %535 = arith.mulf %534, %533 : vector<2x96xf32>
    %536 = math.tanh %535 : vector<2x96xf32>
    %cst_136 = arith.constant 1.000000e+00 : f32
    %537 = vector.broadcast %cst_136 : f32 to vector<2x96xf32>
    %538 = arith.addf %536, %537 : vector<2x96xf32>
    %cst_137 = arith.constant 5.000000e-01 : f32
    %539 = vector.broadcast %cst_137 : f32 to vector<2x96xf32>
    %540 = arith.mulf %539, %538 : vector<2x96xf32>
    %541 = vector.extract_strided_slice %540 {offsets = [0, 0], sizes = [2, 32], strides = [1, 1]} : vector<2x96xf32> to vector<2x32xf32>
    %542 = vector.extract_strided_slice %540 {offsets = [0, 32], sizes = [2, 32], strides = [1, 1]} : vector<2x96xf32> to vector<2x32xf32>
    %543 = vector.extract_strided_slice %540 {offsets = [0, 64], sizes = [2, 32], strides = [1, 1]} : vector<2x96xf32> to vector<2x32xf32>
    %544 = vector.extract_strided_slice %532 {offsets = [0, 96], sizes = [2, 32], strides = [1, 1]} : vector<2x128xf32> to vector<2x32xf32>
    %545 = math.tanh %544 : vector<2x32xf32>
    %546 = arith.mulf %542, %377 : vector<2x32xf32>
    %547 = arith.mulf %541, %545 : vector<2x32xf32>
    %548 = arith.addf %546, %547 : vector<2x32xf32>
    %549 = math.tanh %548 : vector<2x32xf32>
    %550 = arith.mulf %543, %549 : vector<2x32xf32>
    %cst_138 = arith.constant -2.000000e+01 : f32
    %cst_139 = arith.constant 2.000000e+01 : f32
    %551 = vector.broadcast %cst_138 : f32 to vector<2x32xf32>
    %552 = arith.maximumf %551, %550 : vector<2x32xf32>
    %553 = vector.broadcast %cst_139 : f32 to vector<2x32xf32>
    %554 = arith.minimumf %553, %552 : vector<2x32xf32>
    %cst_140 = arith.constant dense<0.000000e+00> : vector<2x108xf32>
    %555 = tpu.matmul %554, %12, %cst_140 {dimension_numbers = #tpu.dot_dimension_numbers<[1], [0], [0], [1], [0, 0, 1, 1], [], []>} : vector<2x32xf32>, vector<32x108xf32>, vector<2x108xf32> -> vector<2x108xf32>
    %556 = vector.broadcast %13 : vector<1x108xf32> to vector<2x108xf32>
    %557 = arith.addf %555, %556 : vector<2x108xf32>
    %558 = vector.extract_strided_slice %557 {offsets = [0, 0], sizes = [2, 22], strides = [1, 1]} : vector<2x108xf32> to vector<2x22xf32>
    %559 = vector.extract_strided_slice %557 {offsets = [0, 22], sizes = [2, 22], strides = [1, 1]} : vector<2x108xf32> to vector<2x22xf32>
    %560 = tpu.concatenate %558, %559 in 0 : vector<2x22xf32>, vector<2x22xf32> -> vector<4x22xf32>
    %561 = vector.extract_strided_slice %557 {offsets = [0, 44], sizes = [2, 16], strides = [1, 1]} : vector<2x108xf32> to vector<2x16xf32>
    %cst_141 = arith.constant 5.000000e-01 : f32
    %562 = vector.broadcast %cst_141 : f32 to vector<2x16xf32>
    %563 = arith.mulf %562, %561 : vector<2x16xf32>
    %564 = math.tanh %563 : vector<2x16xf32>
    %cst_142 = arith.constant 1.000000e+00 : f32
    %565 = vector.broadcast %cst_142 : f32 to vector<2x16xf32>
    %566 = arith.addf %564, %565 : vector<2x16xf32>
    %cst_143 = arith.constant 5.000000e-01 : f32
    %567 = vector.broadcast %cst_143 : f32 to vector<2x16xf32>
    %568 = arith.mulf %567, %566 : vector<2x16xf32>
    %569 = vector.extract_strided_slice %557 {offsets = [0, 60], sizes = [2, 16], strides = [1, 1]} : vector<2x108xf32> to vector<2x16xf32>
    %570 = math.tanh %569 : vector<2x16xf32>
    %571 = vector.extract_strided_slice %557 {offsets = [0, 76], sizes = [2, 32], strides = [1, 1]} : vector<2x108xf32> to vector<2x32xf32>
    %572 = vector.extract_strided_slice %560 {offsets = [0, 0], sizes = [4, 16], strides = [1, 1]} : vector<4x22xf32> to vector<4x16xf32>
    %573 = math.tanh %572 : vector<4x16xf32>
    %574 = vector.extract_strided_slice %560 {offsets = [0, 16], sizes = [4, 1], strides = [1, 1]} : vector<4x22xf32> to vector<4x1xf32>
    %cst_144 = arith.constant 0.000000e+00 : f32
    %575 = vector.broadcast %cst_144 : f32 to vector<4x1xf32>
    %576 = arith.maximumf %574, %575 : vector<4x1xf32>
    %577 = math.absf %574 : vector<4x1xf32>
    %cst_145 = arith.constant 0.000000e+00 : f32
    %578 = vector.broadcast %cst_145 : f32 to vector<4x1xf32>
    %579 = arith.subf %578, %577 : vector<4x1xf32>
    %580 = math.exp %579 : vector<4x1xf32>
    %cst_146 = arith.constant 1.000000e+00 : f32
    %581 = vector.broadcast %cst_146 : f32 to vector<4x1xf32>
    %582 = arith.addf %581, %580 : vector<4x1xf32>
    %583 = math.log %582 : vector<4x1xf32>
    %584 = arith.addf %576, %583 : vector<4x1xf32>
    %585 = vector.extract_strided_slice %560 {offsets = [0, 17], sizes = [4, 1], strides = [1, 1]} : vector<4x22xf32> to vector<4x1xf32>
    %cst_147 = arith.constant 5.000000e-01 : f32
    %586 = vector.broadcast %cst_147 : f32 to vector<4x1xf32>
    %587 = arith.mulf %586, %585 : vector<4x1xf32>
    %588 = math.tanh %587 : vector<4x1xf32>
    %cst_148 = arith.constant 1.000000e+00 : f32
    %589 = vector.broadcast %cst_148 : f32 to vector<4x1xf32>
    %590 = arith.addf %588, %589 : vector<4x1xf32>
    %cst_149 = arith.constant 5.000000e-01 : f32
    %591 = vector.broadcast %cst_149 : f32 to vector<4x1xf32>
    %592 = arith.mulf %591, %590 : vector<4x1xf32>
    %593 = vector.extract_strided_slice %560 {offsets = [0, 18], sizes = [4, 3], strides = [1, 1]} : vector<4x22xf32> to vector<4x3xf32>
    %594 = vector.extract_strided_slice %560 {offsets = [0, 21], sizes = [4, 1], strides = [1, 1]} : vector<4x22xf32> to vector<4x1xf32>
    %cst_150 = arith.constant 0.000000e+00 : f32
    %595 = vector.broadcast %cst_150 : f32 to vector<4x1xf32>
    %596 = arith.maximumf %594, %595 : vector<4x1xf32>
    %597 = math.absf %594 : vector<4x1xf32>
    %cst_151 = arith.constant 0.000000e+00 : f32
    %598 = vector.broadcast %cst_151 : f32 to vector<4x1xf32>
    %599 = arith.subf %598, %597 : vector<4x1xf32>
    %600 = math.exp %599 : vector<4x1xf32>
    %cst_152 = arith.constant 1.000000e+00 : f32
    %601 = vector.broadcast %cst_152 : f32 to vector<4x1xf32>
    %602 = arith.addf %601, %600 : vector<4x1xf32>
    %603 = math.log %602 : vector<4x1xf32>
    %604 = arith.addf %596, %603 : vector<4x1xf32>
    %cst_153 = arith.constant dense<0xFF800000> : vector<4xf32>
    %605 = vector.multi_reduction <maximumf>, %593, %cst_153 [1] : vector<4x3xf32> to vector<4xf32>
    %606 = vector.shape_cast %605 : vector<4xf32> to vector<4x1xf32>
    %607 = vector.broadcast %606 : vector<4x1xf32> to vector<4x3xf32>
    %608 = arith.subf %593, %607 : vector<4x3xf32>
    %609 = math.exp %608 : vector<4x3xf32>
    %cst_154 = arith.constant dense<0.000000e+00> : vector<4xf32>
    %610 = vector.multi_reduction <add>, %609, %cst_154 [1] : vector<4x3xf32> to vector<4xf32>
    %611 = vector.shape_cast %610 : vector<4xf32> to vector<4x1xf32>
    %612 = vector.broadcast %611 : vector<4x1xf32> to vector<4x3xf32>
    %613 = arith.divf %609, %612 : vector<4x3xf32>
    %614 = tpu.concatenate %516, %516 in 0 : vector<2x32x16xf32>, vector<2x32x16xf32> -> vector<4x32x16xf32>
    %615 = vector.shape_cast %573 : vector<4x16xf32> to vector<4x1x16xf32>
    %616 = vector.broadcast %615 : vector<4x1x16xf32> to vector<4x32x16xf32>
    %617 = arith.mulf %614, %616 : vector<4x32x16xf32>
    %cst_155 = arith.constant dense<0.000000e+00> : vector<4x32xf32>
    %618 = vector.multi_reduction <add>, %617, %cst_155 [2] : vector<4x32x16xf32> to vector<4x32xf32>
    %619 = arith.mulf %573, %573 : vector<4x16xf32>
    %cst_156 = arith.constant dense<0.000000e+00> : vector<4xf32>
    %620 = vector.multi_reduction <add>, %619, %cst_156 [1] : vector<4x16xf32> to vector<4xf32>
    %621 = vector.shape_cast %620 : vector<4xf32> to vector<4x1xf32>
    %622 = arith.mulf %516, %516 : vector<2x32x16xf32>
    %cst_157 = arith.constant dense<0.000000e+00> : vector<2x32xf32>
    %623 = vector.multi_reduction <add>, %622, %cst_157 [2] : vector<2x32x16xf32> to vector<2x32xf32>
    %624 = tpu.concatenate %623, %623 in 0 : vector<2x32xf32>, vector<2x32xf32> -> vector<4x32xf32>
    %625 = vector.broadcast %621 : vector<4x1xf32> to vector<4x32xf32>
    %626 = arith.mulf %625, %624 : vector<4x32xf32>
    %cst_158 = arith.constant 1.000000e-16 : f32
    %627 = vector.broadcast %cst_158 : f32 to vector<4x32xf32>
    %628 = arith.addf %626, %627 : vector<4x32xf32>
    %629 = math.rsqrt %628 : vector<4x32xf32>
    %630 = arith.mulf %618, %629 : vector<4x32xf32>
    %631 = vector.broadcast %584 : vector<4x1xf32> to vector<4x32xf32>
    %632 = arith.mulf %631, %630 : vector<4x32xf32>
    %633 = math.exp %632 : vector<4x32xf32>
    %cst_159 = arith.constant dense<0.000000e+00> : vector<4xf32>
    %634 = vector.multi_reduction <add>, %633, %cst_159 [1] : vector<4x32xf32> to vector<4xf32>
    %635 = vector.shape_cast %634 : vector<4xf32> to vector<4x1xf32>
    %636 = vector.broadcast %635 : vector<4x1xf32> to vector<4x32xf32>
    %637 = arith.divf %633, %636 : vector<4x32xf32>
    %638 = vector.broadcast %592 : vector<4x1xf32> to vector<4x32xf32>
    %639 = arith.mulf %638, %637 : vector<4x32xf32>
    %cst_160 = arith.constant 1.000000e+00 : f32
    %640 = vector.broadcast %cst_160 : f32 to vector<4x1xf32>
    %641 = arith.subf %640, %592 : vector<4x1xf32>
    %642 = vector.broadcast %641 : vector<4x1xf32> to vector<4x32xf32>
    %643 = arith.mulf %642, %497 : vector<4x32xf32>
    %644 = arith.addf %639, %643 : vector<4x32xf32>
    %cst_161 = arith.constant dense<0.000000e+00> : vector<4x64xf32>
    %645 = tpu.matmul %644, %10, %cst_161 {dimension_numbers = #tpu.dot_dimension_numbers<[1], [0], [0], [1], [0, 0, 1, 1], [], []>} : vector<4x32xf32>, vector<32x64xf32>, vector<4x64xf32> -> vector<4x64xf32>
    %646 = vector.extract_strided_slice %613 {offsets = [0, 0], sizes = [4, 1], strides = [1, 1]} : vector<4x3xf32> to vector<4x1xf32>
    %647 = vector.broadcast %646 : vector<4x1xf32> to vector<4x32xf32>
    %648 = arith.mulf %647, %644 : vector<4x32xf32>
    %649 = vector.extract_strided_slice %613 {offsets = [0, 1], sizes = [4, 1], strides = [1, 1]} : vector<4x3xf32> to vector<4x1xf32>
    %650 = vector.extract_strided_slice %645 {offsets = [0, 0], sizes = [4, 32], strides = [1, 1]} : vector<4x64xf32> to vector<4x32xf32>
    %651 = vector.broadcast %649 : vector<4x1xf32> to vector<4x32xf32>
    %652 = arith.mulf %651, %650 : vector<4x32xf32>
    %653 = arith.addf %648, %652 : vector<4x32xf32>
    %654 = vector.extract_strided_slice %613 {offsets = [0, 2], sizes = [4, 1], strides = [1, 1]} : vector<4x3xf32> to vector<4x1xf32>
    %655 = vector.extract_strided_slice %645 {offsets = [0, 32], sizes = [4, 32], strides = [1, 1]} : vector<4x64xf32> to vector<4x32xf32>
    %656 = vector.broadcast %654 : vector<4x1xf32> to vector<4x32xf32>
    %657 = arith.mulf %656, %655 : vector<4x32xf32>
    %658 = arith.addf %653, %657 : vector<4x32xf32>
    %cst_162 = arith.constant 1.000000e-30 : f32
    %659 = vector.broadcast %cst_162 : f32 to vector<4x32xf32>
    %660 = arith.maximumf %658, %659 : vector<4x32xf32>
    %661 = math.log %660 : vector<4x32xf32>
    %662 = vector.broadcast %604 : vector<4x1xf32> to vector<4x32xf32>
    %663 = arith.mulf %662, %661 : vector<4x32xf32>
    %664 = math.exp %663 : vector<4x32xf32>
    %cst_163 = arith.constant dense<0.000000e+00> : vector<4xf32>
    %665 = vector.multi_reduction <add>, %664, %cst_163 [1] : vector<4x32xf32> to vector<4xf32>
    %666 = vector.shape_cast %665 : vector<4xf32> to vector<4x1xf32>
    %667 = vector.broadcast %666 : vector<4x1xf32> to vector<4x32xf32>
    %668 = arith.divf %664, %667 : vector<4x32xf32>
    %669 = vector.extract_strided_slice %668 {offsets = [0, 0], sizes = [2, 32], strides = [1, 1]} : vector<4x32xf32> to vector<2x32xf32>
    %670 = vector.extract_strided_slice %668 {offsets = [2, 0], sizes = [2, 32], strides = [1, 1]} : vector<4x32xf32> to vector<2x32xf32>
    %671 = vector.shape_cast %669 : vector<2x32xf32> to vector<2x32x1xf32>
    %672 = vector.broadcast %671 : vector<2x32x1xf32> to vector<2x32x16xf32>
    %673 = arith.mulf %672, %516 : vector<2x32x16xf32>
    %cst_164 = arith.constant dense<0.000000e+00> : vector<2x16xf32>
    %674 = vector.multi_reduction <add>, %673, %cst_164 [1] : vector<2x32x16xf32> to vector<2x16xf32>
    %675 = vector.shape_cast %670 : vector<2x32xf32> to vector<2x32x1xf32>
    %676 = vector.shape_cast %568 : vector<2x16xf32> to vector<2x1x16xf32>
    %677 = vector.broadcast %675 : vector<2x32x1xf32> to vector<2x32x16xf32>
    %678 = vector.broadcast %676 : vector<2x1x16xf32> to vector<2x32x16xf32>
    %679 = arith.mulf %677, %678 : vector<2x32x16xf32>
    %cst_165 = arith.constant 1.000000e+00 : f32
    %680 = vector.broadcast %cst_165 : f32 to vector<2x32x16xf32>
    %681 = arith.subf %680, %679 : vector<2x32x16xf32>
    %682 = arith.mulf %516, %681 : vector<2x32x16xf32>
    %683 = vector.shape_cast %570 : vector<2x16xf32> to vector<2x1x16xf32>
    %684 = vector.broadcast %675 : vector<2x32x1xf32> to vector<2x32x16xf32>
    %685 = vector.broadcast %683 : vector<2x1x16xf32> to vector<2x32x16xf32>
    %686 = arith.mulf %684, %685 : vector<2x32x16xf32>
    %687 = arith.addf %682, %686 : vector<2x32x16xf32>
    %cst_166 = arith.constant dense<0.000000e+00> : vector<2x32xf32>
    %688 = tpu.matmul %674, %14, %cst_166 {dimension_numbers = #tpu.dot_dimension_numbers<[1], [0], [0], [1], [0, 0, 1, 1], [], []>} : vector<2x16xf32>, vector<16x32xf32>, vector<2x32xf32> -> vector<2x32xf32>
    %689 = arith.addf %571, %688 : vector<2x32xf32>
    %cst_167 = arith.constant -2.000000e+01 : f32
    %cst_168 = arith.constant 2.000000e+01 : f32
    %690 = vector.broadcast %cst_167 : f32 to vector<2x32xf32>
    %691 = arith.maximumf %690, %689 : vector<2x32xf32>
    %692 = vector.broadcast %cst_168 : f32 to vector<2x32xf32>
    %693 = arith.minimumf %692, %691 : vector<2x32xf32>
    %694 = arith.index_cast %c3_i32 : i32 to index
    %c0_169 = arith.constant 0 : index
    %c0_170 = arith.constant 0 : index
    %695 = vector.load %arg9[%694, %c0_169, %c0_170] : memref<8x2x32xf32, #tpu.memory_space<vmem>>, vector<1x2x32xf32>
    %696 = vector.shape_cast %695 : vector<1x2x32xf32> to vector<2x32xf32>
    %697 = vector.shape_cast %693 : vector<2x32xf32> to vector<1x2x32xf32>
    tpu.vector_store %arg9[%694, %c0_169, %c0_170], %697 {strides = array<i32>} : memref<8x2x32xf32, #tpu.memory_space<vmem>>, vector<1x2x32xf32>,
    %698 = tpu.concatenate %550, %674 in 1 : vector<2x32xf32>, vector<2x16xf32> -> vector<2x48xf32>
    %c4_i32 = arith.constant 4 : i32
    %699 = arith.index_cast %c4_i32 : i32 to index
    %c0_171 = arith.constant 0 : index
    %c0_172 = arith.constant 0 : index
    %700 = vector.load %arg1[%699, %c0_171, %c0_172] : memref<8x2x128xf32, #tpu.memory_space<vmem>>, vector<1x2x128xf32>
    %701 = vector.shape_cast %700 : vector<1x2x128xf32> to vector<2x128xf32>
    %cst_173 = arith.constant dense<0.000000e+00> : vector<2x128xf32>
    %702 = tpu.matmul %698, %11, %cst_173 {dimension_numbers = #tpu.dot_dimension_numbers<[1], [0], [0], [1], [0, 0, 1, 1], [], []>} : vector<2x48xf32>, vector<48x128xf32>, vector<2x128xf32> -> vector<2x128xf32>
    %703 = arith.addf %701, %702 : vector<2x128xf32>
    %704 = vector.extract_strided_slice %703 {offsets = [0, 0], sizes = [2, 96], strides = [1, 1]} : vector<2x128xf32> to vector<2x96xf32>
    %cst_174 = arith.constant 5.000000e-01 : f32
    %705 = vector.broadcast %cst_174 : f32 to vector<2x96xf32>
    %706 = arith.mulf %705, %704 : vector<2x96xf32>
    %707 = math.tanh %706 : vector<2x96xf32>
    %cst_175 = arith.constant 1.000000e+00 : f32
    %708 = vector.broadcast %cst_175 : f32 to vector<2x96xf32>
    %709 = arith.addf %707, %708 : vector<2x96xf32>
    %cst_176 = arith.constant 5.000000e-01 : f32
    %710 = vector.broadcast %cst_176 : f32 to vector<2x96xf32>
    %711 = arith.mulf %710, %709 : vector<2x96xf32>
    %712 = vector.extract_strided_slice %711 {offsets = [0, 0], sizes = [2, 32], strides = [1, 1]} : vector<2x96xf32> to vector<2x32xf32>
    %713 = vector.extract_strided_slice %711 {offsets = [0, 32], sizes = [2, 32], strides = [1, 1]} : vector<2x96xf32> to vector<2x32xf32>
    %714 = vector.extract_strided_slice %711 {offsets = [0, 64], sizes = [2, 32], strides = [1, 1]} : vector<2x96xf32> to vector<2x32xf32>
    %715 = vector.extract_strided_slice %703 {offsets = [0, 96], sizes = [2, 32], strides = [1, 1]} : vector<2x128xf32> to vector<2x32xf32>
    %716 = math.tanh %715 : vector<2x32xf32>
    %717 = arith.mulf %713, %548 : vector<2x32xf32>
    %718 = arith.mulf %712, %716 : vector<2x32xf32>
    %719 = arith.addf %717, %718 : vector<2x32xf32>
    %720 = math.tanh %719 : vector<2x32xf32>
    %721 = arith.mulf %714, %720 : vector<2x32xf32>
    %cst_177 = arith.constant -2.000000e+01 : f32
    %cst_178 = arith.constant 2.000000e+01 : f32
    %722 = vector.broadcast %cst_177 : f32 to vector<2x32xf32>
    %723 = arith.maximumf %722, %721 : vector<2x32xf32>
    %724 = vector.broadcast %cst_178 : f32 to vector<2x32xf32>
    %725 = arith.minimumf %724, %723 : vector<2x32xf32>
    %cst_179 = arith.constant dense<0.000000e+00> : vector<2x108xf32>
    %726 = tpu.matmul %725, %12, %cst_179 {dimension_numbers = #tpu.dot_dimension_numbers<[1], [0], [0], [1], [0, 0, 1, 1], [], []>} : vector<2x32xf32>, vector<32x108xf32>, vector<2x108xf32> -> vector<2x108xf32>
    %727 = vector.broadcast %13 : vector<1x108xf32> to vector<2x108xf32>
    %728 = arith.addf %726, %727 : vector<2x108xf32>
    %729 = vector.extract_strided_slice %728 {offsets = [0, 0], sizes = [2, 22], strides = [1, 1]} : vector<2x108xf32> to vector<2x22xf32>
    %730 = vector.extract_strided_slice %728 {offsets = [0, 22], sizes = [2, 22], strides = [1, 1]} : vector<2x108xf32> to vector<2x22xf32>
    %731 = tpu.concatenate %729, %730 in 0 : vector<2x22xf32>, vector<2x22xf32> -> vector<4x22xf32>
    %732 = vector.extract_strided_slice %728 {offsets = [0, 44], sizes = [2, 16], strides = [1, 1]} : vector<2x108xf32> to vector<2x16xf32>
    %cst_180 = arith.constant 5.000000e-01 : f32
    %733 = vector.broadcast %cst_180 : f32 to vector<2x16xf32>
    %734 = arith.mulf %733, %732 : vector<2x16xf32>
    %735 = math.tanh %734 : vector<2x16xf32>
    %cst_181 = arith.constant 1.000000e+00 : f32
    %736 = vector.broadcast %cst_181 : f32 to vector<2x16xf32>
    %737 = arith.addf %735, %736 : vector<2x16xf32>
    %cst_182 = arith.constant 5.000000e-01 : f32
    %738 = vector.broadcast %cst_182 : f32 to vector<2x16xf32>
    %739 = arith.mulf %738, %737 : vector<2x16xf32>
    %740 = vector.extract_strided_slice %728 {offsets = [0, 60], sizes = [2, 16], strides = [1, 1]} : vector<2x108xf32> to vector<2x16xf32>
    %741 = math.tanh %740 : vector<2x16xf32>
    %742 = vector.extract_strided_slice %728 {offsets = [0, 76], sizes = [2, 32], strides = [1, 1]} : vector<2x108xf32> to vector<2x32xf32>
    %743 = vector.extract_strided_slice %731 {offsets = [0, 0], sizes = [4, 16], strides = [1, 1]} : vector<4x22xf32> to vector<4x16xf32>
    %744 = math.tanh %743 : vector<4x16xf32>
    %745 = vector.extract_strided_slice %731 {offsets = [0, 16], sizes = [4, 1], strides = [1, 1]} : vector<4x22xf32> to vector<4x1xf32>
    %cst_183 = arith.constant 0.000000e+00 : f32
    %746 = vector.broadcast %cst_183 : f32 to vector<4x1xf32>
    %747 = arith.maximumf %745, %746 : vector<4x1xf32>
    %748 = math.absf %745 : vector<4x1xf32>
    %cst_184 = arith.constant 0.000000e+00 : f32
    %749 = vector.broadcast %cst_184 : f32 to vector<4x1xf32>
    %750 = arith.subf %749, %748 : vector<4x1xf32>
    %751 = math.exp %750 : vector<4x1xf32>
    %cst_185 = arith.constant 1.000000e+00 : f32
    %752 = vector.broadcast %cst_185 : f32 to vector<4x1xf32>
    %753 = arith.addf %752, %751 : vector<4x1xf32>
    %754 = math.log %753 : vector<4x1xf32>
    %755 = arith.addf %747, %754 : vector<4x1xf32>
    %756 = vector.extract_strided_slice %731 {offsets = [0, 17], sizes = [4, 1], strides = [1, 1]} : vector<4x22xf32> to vector<4x1xf32>
    %cst_186 = arith.constant 5.000000e-01 : f32
    %757 = vector.broadcast %cst_186 : f32 to vector<4x1xf32>
    %758 = arith.mulf %757, %756 : vector<4x1xf32>
    %759 = math.tanh %758 : vector<4x1xf32>
    %cst_187 = arith.constant 1.000000e+00 : f32
    %760 = vector.broadcast %cst_187 : f32 to vector<4x1xf32>
    %761 = arith.addf %759, %760 : vector<4x1xf32>
    %cst_188 = arith.constant 5.000000e-01 : f32
    %762 = vector.broadcast %cst_188 : f32 to vector<4x1xf32>
    %763 = arith.mulf %762, %761 : vector<4x1xf32>
    %764 = vector.extract_strided_slice %731 {offsets = [0, 18], sizes = [4, 3], strides = [1, 1]} : vector<4x22xf32> to vector<4x3xf32>
    %765 = vector.extract_strided_slice %731 {offsets = [0, 21], sizes = [4, 1], strides = [1, 1]} : vector<4x22xf32> to vector<4x1xf32>
    %cst_189 = arith.constant 0.000000e+00 : f32
    %766 = vector.broadcast %cst_189 : f32 to vector<4x1xf32>
    %767 = arith.maximumf %765, %766 : vector<4x1xf32>
    %768 = math.absf %765 : vector<4x1xf32>
    %cst_190 = arith.constant 0.000000e+00 : f32
    %769 = vector.broadcast %cst_190 : f32 to vector<4x1xf32>
    %770 = arith.subf %769, %768 : vector<4x1xf32>
    %771 = math.exp %770 : vector<4x1xf32>
    %cst_191 = arith.constant 1.000000e+00 : f32
    %772 = vector.broadcast %cst_191 : f32 to vector<4x1xf32>
    %773 = arith.addf %772, %771 : vector<4x1xf32>
    %774 = math.log %773 : vector<4x1xf32>
    %775 = arith.addf %767, %774 : vector<4x1xf32>
    %cst_192 = arith.constant dense<0xFF800000> : vector<4xf32>
    %776 = vector.multi_reduction <maximumf>, %764, %cst_192 [1] : vector<4x3xf32> to vector<4xf32>
    %777 = vector.shape_cast %776 : vector<4xf32> to vector<4x1xf32>
    %778 = vector.broadcast %777 : vector<4x1xf32> to vector<4x3xf32>
    %779 = arith.subf %764, %778 : vector<4x3xf32>
    %780 = math.exp %779 : vector<4x3xf32>
    %cst_193 = arith.constant dense<0.000000e+00> : vector<4xf32>
    %781 = vector.multi_reduction <add>, %780, %cst_193 [1] : vector<4x3xf32> to vector<4xf32>
    %782 = vector.shape_cast %781 : vector<4xf32> to vector<4x1xf32>
    %783 = vector.broadcast %782 : vector<4x1xf32> to vector<4x3xf32>
    %784 = arith.divf %780, %783 : vector<4x3xf32>
    %785 = tpu.concatenate %687, %687 in 0 : vector<2x32x16xf32>, vector<2x32x16xf32> -> vector<4x32x16xf32>
    %786 = vector.shape_cast %744 : vector<4x16xf32> to vector<4x1x16xf32>
    %787 = vector.broadcast %786 : vector<4x1x16xf32> to vector<4x32x16xf32>
    %788 = arith.mulf %785, %787 : vector<4x32x16xf32>
    %cst_194 = arith.constant dense<0.000000e+00> : vector<4x32xf32>
    %789 = vector.multi_reduction <add>, %788, %cst_194 [2] : vector<4x32x16xf32> to vector<4x32xf32>
    %790 = arith.mulf %744, %744 : vector<4x16xf32>
    %cst_195 = arith.constant dense<0.000000e+00> : vector<4xf32>
    %791 = vector.multi_reduction <add>, %790, %cst_195 [1] : vector<4x16xf32> to vector<4xf32>
    %792 = vector.shape_cast %791 : vector<4xf32> to vector<4x1xf32>
    %793 = arith.mulf %687, %687 : vector<2x32x16xf32>
    %cst_196 = arith.constant dense<0.000000e+00> : vector<2x32xf32>
    %794 = vector.multi_reduction <add>, %793, %cst_196 [2] : vector<2x32x16xf32> to vector<2x32xf32>
    %795 = tpu.concatenate %794, %794 in 0 : vector<2x32xf32>, vector<2x32xf32> -> vector<4x32xf32>
    %796 = vector.broadcast %792 : vector<4x1xf32> to vector<4x32xf32>
    %797 = arith.mulf %796, %795 : vector<4x32xf32>
    %cst_197 = arith.constant 1.000000e-16 : f32
    %798 = vector.broadcast %cst_197 : f32 to vector<4x32xf32>
    %799 = arith.addf %797, %798 : vector<4x32xf32>
    %800 = math.rsqrt %799 : vector<4x32xf32>
    %801 = arith.mulf %789, %800 : vector<4x32xf32>
    %802 = vector.broadcast %755 : vector<4x1xf32> to vector<4x32xf32>
    %803 = arith.mulf %802, %801 : vector<4x32xf32>
    %804 = math.exp %803 : vector<4x32xf32>
    %cst_198 = arith.constant dense<0.000000e+00> : vector<4xf32>
    %805 = vector.multi_reduction <add>, %804, %cst_198 [1] : vector<4x32xf32> to vector<4xf32>
    %806 = vector.shape_cast %805 : vector<4xf32> to vector<4x1xf32>
    %807 = vector.broadcast %806 : vector<4x1xf32> to vector<4x32xf32>
    %808 = arith.divf %804, %807 : vector<4x32xf32>
    %809 = vector.broadcast %763 : vector<4x1xf32> to vector<4x32xf32>
    %810 = arith.mulf %809, %808 : vector<4x32xf32>
    %cst_199 = arith.constant 1.000000e+00 : f32
    %811 = vector.broadcast %cst_199 : f32 to vector<4x1xf32>
    %812 = arith.subf %811, %763 : vector<4x1xf32>
    %813 = vector.broadcast %812 : vector<4x1xf32> to vector<4x32xf32>
    %814 = arith.mulf %813, %668 : vector<4x32xf32>
    %815 = arith.addf %810, %814 : vector<4x32xf32>
    %cst_200 = arith.constant dense<0.000000e+00> : vector<4x64xf32>
    %816 = tpu.matmul %815, %10, %cst_200 {dimension_numbers = #tpu.dot_dimension_numbers<[1], [0], [0], [1], [0, 0, 1, 1], [], []>} : vector<4x32xf32>, vector<32x64xf32>, vector<4x64xf32> -> vector<4x64xf32>
    %817 = vector.extract_strided_slice %784 {offsets = [0, 0], sizes = [4, 1], strides = [1, 1]} : vector<4x3xf32> to vector<4x1xf32>
    %818 = vector.broadcast %817 : vector<4x1xf32> to vector<4x32xf32>
    %819 = arith.mulf %818, %815 : vector<4x32xf32>
    %820 = vector.extract_strided_slice %784 {offsets = [0, 1], sizes = [4, 1], strides = [1, 1]} : vector<4x3xf32> to vector<4x1xf32>
    %821 = vector.extract_strided_slice %816 {offsets = [0, 0], sizes = [4, 32], strides = [1, 1]} : vector<4x64xf32> to vector<4x32xf32>
    %822 = vector.broadcast %820 : vector<4x1xf32> to vector<4x32xf32>
    %823 = arith.mulf %822, %821 : vector<4x32xf32>
    %824 = arith.addf %819, %823 : vector<4x32xf32>
    %825 = vector.extract_strided_slice %784 {offsets = [0, 2], sizes = [4, 1], strides = [1, 1]} : vector<4x3xf32> to vector<4x1xf32>
    %826 = vector.extract_strided_slice %816 {offsets = [0, 32], sizes = [4, 32], strides = [1, 1]} : vector<4x64xf32> to vector<4x32xf32>
    %827 = vector.broadcast %825 : vector<4x1xf32> to vector<4x32xf32>
    %828 = arith.mulf %827, %826 : vector<4x32xf32>
    %829 = arith.addf %824, %828 : vector<4x32xf32>
    %cst_201 = arith.constant 1.000000e-30 : f32
    %830 = vector.broadcast %cst_201 : f32 to vector<4x32xf32>
    %831 = arith.maximumf %829, %830 : vector<4x32xf32>
    %832 = math.log %831 : vector<4x32xf32>
    %833 = vector.broadcast %775 : vector<4x1xf32> to vector<4x32xf32>
    %834 = arith.mulf %833, %832 : vector<4x32xf32>
    %835 = math.exp %834 : vector<4x32xf32>
    %cst_202 = arith.constant dense<0.000000e+00> : vector<4xf32>
    %836 = vector.multi_reduction <add>, %835, %cst_202 [1] : vector<4x32xf32> to vector<4xf32>
    %837 = vector.shape_cast %836 : vector<4xf32> to vector<4x1xf32>
    %838 = vector.broadcast %837 : vector<4x1xf32> to vector<4x32xf32>
    %839 = arith.divf %835, %838 : vector<4x32xf32>
    %840 = vector.extract_strided_slice %839 {offsets = [0, 0], sizes = [2, 32], strides = [1, 1]} : vector<4x32xf32> to vector<2x32xf32>
    %841 = vector.extract_strided_slice %839 {offsets = [2, 0], sizes = [2, 32], strides = [1, 1]} : vector<4x32xf32> to vector<2x32xf32>
    %842 = vector.shape_cast %840 : vector<2x32xf32> to vector<2x32x1xf32>
    %843 = vector.broadcast %842 : vector<2x32x1xf32> to vector<2x32x16xf32>
    %844 = arith.mulf %843, %687 : vector<2x32x16xf32>
    %cst_203 = arith.constant dense<0.000000e+00> : vector<2x16xf32>
    %845 = vector.multi_reduction <add>, %844, %cst_203 [1] : vector<2x32x16xf32> to vector<2x16xf32>
    %846 = vector.shape_cast %841 : vector<2x32xf32> to vector<2x32x1xf32>
    %847 = vector.shape_cast %739 : vector<2x16xf32> to vector<2x1x16xf32>
    %848 = vector.broadcast %846 : vector<2x32x1xf32> to vector<2x32x16xf32>
    %849 = vector.broadcast %847 : vector<2x1x16xf32> to vector<2x32x16xf32>
    %850 = arith.mulf %848, %849 : vector<2x32x16xf32>
    %cst_204 = arith.constant 1.000000e+00 : f32
    %851 = vector.broadcast %cst_204 : f32 to vector<2x32x16xf32>
    %852 = arith.subf %851, %850 : vector<2x32x16xf32>
    %853 = arith.mulf %687, %852 : vector<2x32x16xf32>
    %854 = vector.shape_cast %741 : vector<2x16xf32> to vector<2x1x16xf32>
    %855 = vector.broadcast %846 : vector<2x32x1xf32> to vector<2x32x16xf32>
    %856 = vector.broadcast %854 : vector<2x1x16xf32> to vector<2x32x16xf32>
    %857 = arith.mulf %855, %856 : vector<2x32x16xf32>
    %858 = arith.addf %853, %857 : vector<2x32x16xf32>
    %cst_205 = arith.constant dense<0.000000e+00> : vector<2x32xf32>
    %859 = tpu.matmul %845, %14, %cst_205 {dimension_numbers = #tpu.dot_dimension_numbers<[1], [0], [0], [1], [0, 0, 1, 1], [], []>} : vector<2x16xf32>, vector<16x32xf32>, vector<2x32xf32> -> vector<2x32xf32>
    %860 = arith.addf %742, %859 : vector<2x32xf32>
    %cst_206 = arith.constant -2.000000e+01 : f32
    %cst_207 = arith.constant 2.000000e+01 : f32
    %861 = vector.broadcast %cst_206 : f32 to vector<2x32xf32>
    %862 = arith.maximumf %861, %860 : vector<2x32xf32>
    %863 = vector.broadcast %cst_207 : f32 to vector<2x32xf32>
    %864 = arith.minimumf %863, %862 : vector<2x32xf32>
    %865 = arith.index_cast %c4_i32 : i32 to index
    %c0_208 = arith.constant 0 : index
    %c0_209 = arith.constant 0 : index
    %866 = vector.load %arg9[%865, %c0_208, %c0_209] : memref<8x2x32xf32, #tpu.memory_space<vmem>>, vector<1x2x32xf32>
    %867 = vector.shape_cast %866 : vector<1x2x32xf32> to vector<2x32xf32>
    %868 = vector.shape_cast %864 : vector<2x32xf32> to vector<1x2x32xf32>
    tpu.vector_store %arg9[%865, %c0_208, %c0_209], %868 {strides = array<i32>} : memref<8x2x32xf32, #tpu.memory_space<vmem>>, vector<1x2x32xf32>,
    %869 = tpu.concatenate %721, %845 in 1 : vector<2x32xf32>, vector<2x16xf32> -> vector<2x48xf32>
    %c5_i32 = arith.constant 5 : i32
    %870 = arith.index_cast %c5_i32 : i32 to index
    %c0_210 = arith.constant 0 : index
    %c0_211 = arith.constant 0 : index
    %871 = vector.load %arg1[%870, %c0_210, %c0_211] : memref<8x2x128xf32, #tpu.memory_space<vmem>>, vector<1x2x128xf32>
    %872 = vector.shape_cast %871 : vector<1x2x128xf32> to vector<2x128xf32>
    %cst_212 = arith.constant dense<0.000000e+00> : vector<2x128xf32>
    %873 = tpu.matmul %869, %11, %cst_212 {dimension_numbers = #tpu.dot_dimension_numbers<[1], [0], [0], [1], [0, 0, 1, 1], [], []>} : vector<2x48xf32>, vector<48x128xf32>, vector<2x128xf32> -> vector<2x128xf32>
    %874 = arith.addf %872, %873 : vector<2x128xf32>
    %875 = vector.extract_strided_slice %874 {offsets = [0, 0], sizes = [2, 96], strides = [1, 1]} : vector<2x128xf32> to vector<2x96xf32>
    %cst_213 = arith.constant 5.000000e-01 : f32
    %876 = vector.broadcast %cst_213 : f32 to vector<2x96xf32>
    %877 = arith.mulf %876, %875 : vector<2x96xf32>
    %878 = math.tanh %877 : vector<2x96xf32>
    %cst_214 = arith.constant 1.000000e+00 : f32
    %879 = vector.broadcast %cst_214 : f32 to vector<2x96xf32>
    %880 = arith.addf %878, %879 : vector<2x96xf32>
    %cst_215 = arith.constant 5.000000e-01 : f32
    %881 = vector.broadcast %cst_215 : f32 to vector<2x96xf32>
    %882 = arith.mulf %881, %880 : vector<2x96xf32>
    %883 = vector.extract_strided_slice %882 {offsets = [0, 0], sizes = [2, 32], strides = [1, 1]} : vector<2x96xf32> to vector<2x32xf32>
    %884 = vector.extract_strided_slice %882 {offsets = [0, 32], sizes = [2, 32], strides = [1, 1]} : vector<2x96xf32> to vector<2x32xf32>
    %885 = vector.extract_strided_slice %882 {offsets = [0, 64], sizes = [2, 32], strides = [1, 1]} : vector<2x96xf32> to vector<2x32xf32>
    %886 = vector.extract_strided_slice %874 {offsets = [0, 96], sizes = [2, 32], strides = [1, 1]} : vector<2x128xf32> to vector<2x32xf32>
    %887 = math.tanh %886 : vector<2x32xf32>
    %888 = arith.mulf %884, %719 : vector<2x32xf32>
    %889 = arith.mulf %883, %887 : vector<2x32xf32>
    %890 = arith.addf %888, %889 : vector<2x32xf32>
    %891 = math.tanh %890 : vector<2x32xf32>
    %892 = arith.mulf %885, %891 : vector<2x32xf32>
    %cst_216 = arith.constant -2.000000e+01 : f32
    %cst_217 = arith.constant 2.000000e+01 : f32
    %893 = vector.broadcast %cst_216 : f32 to vector<2x32xf32>
    %894 = arith.maximumf %893, %892 : vector<2x32xf32>
    %895 = vector.broadcast %cst_217 : f32 to vector<2x32xf32>
    %896 = arith.minimumf %895, %894 : vector<2x32xf32>
    %cst_218 = arith.constant dense<0.000000e+00> : vector<2x108xf32>
    %897 = tpu.matmul %896, %12, %cst_218 {dimension_numbers = #tpu.dot_dimension_numbers<[1], [0], [0], [1], [0, 0, 1, 1], [], []>} : vector<2x32xf32>, vector<32x108xf32>, vector<2x108xf32> -> vector<2x108xf32>
    %898 = vector.broadcast %13 : vector<1x108xf32> to vector<2x108xf32>
    %899 = arith.addf %897, %898 : vector<2x108xf32>
    %900 = vector.extract_strided_slice %899 {offsets = [0, 0], sizes = [2, 22], strides = [1, 1]} : vector<2x108xf32> to vector<2x22xf32>
    %901 = vector.extract_strided_slice %899 {offsets = [0, 22], sizes = [2, 22], strides = [1, 1]} : vector<2x108xf32> to vector<2x22xf32>
    %902 = tpu.concatenate %900, %901 in 0 : vector<2x22xf32>, vector<2x22xf32> -> vector<4x22xf32>
    %903 = vector.extract_strided_slice %899 {offsets = [0, 44], sizes = [2, 16], strides = [1, 1]} : vector<2x108xf32> to vector<2x16xf32>
    %cst_219 = arith.constant 5.000000e-01 : f32
    %904 = vector.broadcast %cst_219 : f32 to vector<2x16xf32>
    %905 = arith.mulf %904, %903 : vector<2x16xf32>
    %906 = math.tanh %905 : vector<2x16xf32>
    %cst_220 = arith.constant 1.000000e+00 : f32
    %907 = vector.broadcast %cst_220 : f32 to vector<2x16xf32>
    %908 = arith.addf %906, %907 : vector<2x16xf32>
    %cst_221 = arith.constant 5.000000e-01 : f32
    %909 = vector.broadcast %cst_221 : f32 to vector<2x16xf32>
    %910 = arith.mulf %909, %908 : vector<2x16xf32>
    %911 = vector.extract_strided_slice %899 {offsets = [0, 60], sizes = [2, 16], strides = [1, 1]} : vector<2x108xf32> to vector<2x16xf32>
    %912 = math.tanh %911 : vector<2x16xf32>
    %913 = vector.extract_strided_slice %899 {offsets = [0, 76], sizes = [2, 32], strides = [1, 1]} : vector<2x108xf32> to vector<2x32xf32>
    %914 = vector.extract_strided_slice %902 {offsets = [0, 0], sizes = [4, 16], strides = [1, 1]} : vector<4x22xf32> to vector<4x16xf32>
    %915 = math.tanh %914 : vector<4x16xf32>
    %916 = vector.extract_strided_slice %902 {offsets = [0, 16], sizes = [4, 1], strides = [1, 1]} : vector<4x22xf32> to vector<4x1xf32>
    %cst_222 = arith.constant 0.000000e+00 : f32
    %917 = vector.broadcast %cst_222 : f32 to vector<4x1xf32>
    %918 = arith.maximumf %916, %917 : vector<4x1xf32>
    %919 = math.absf %916 : vector<4x1xf32>
    %cst_223 = arith.constant 0.000000e+00 : f32
    %920 = vector.broadcast %cst_223 : f32 to vector<4x1xf32>
    %921 = arith.subf %920, %919 : vector<4x1xf32>
    %922 = math.exp %921 : vector<4x1xf32>
    %cst_224 = arith.constant 1.000000e+00 : f32
    %923 = vector.broadcast %cst_224 : f32 to vector<4x1xf32>
    %924 = arith.addf %923, %922 : vector<4x1xf32>
    %925 = math.log %924 : vector<4x1xf32>
    %926 = arith.addf %918, %925 : vector<4x1xf32>
    %927 = vector.extract_strided_slice %902 {offsets = [0, 17], sizes = [4, 1], strides = [1, 1]} : vector<4x22xf32> to vector<4x1xf32>
    %cst_225 = arith.constant 5.000000e-01 : f32
    %928 = vector.broadcast %cst_225 : f32 to vector<4x1xf32>
    %929 = arith.mulf %928, %927 : vector<4x1xf32>
    %930 = math.tanh %929 : vector<4x1xf32>
    %cst_226 = arith.constant 1.000000e+00 : f32
    %931 = vector.broadcast %cst_226 : f32 to vector<4x1xf32>
    %932 = arith.addf %930, %931 : vector<4x1xf32>
    %cst_227 = arith.constant 5.000000e-01 : f32
    %933 = vector.broadcast %cst_227 : f32 to vector<4x1xf32>
    %934 = arith.mulf %933, %932 : vector<4x1xf32>
    %935 = vector.extract_strided_slice %902 {offsets = [0, 18], sizes = [4, 3], strides = [1, 1]} : vector<4x22xf32> to vector<4x3xf32>
    %936 = vector.extract_strided_slice %902 {offsets = [0, 21], sizes = [4, 1], strides = [1, 1]} : vector<4x22xf32> to vector<4x1xf32>
    %cst_228 = arith.constant 0.000000e+00 : f32
    %937 = vector.broadcast %cst_228 : f32 to vector<4x1xf32>
    %938 = arith.maximumf %936, %937 : vector<4x1xf32>
    %939 = math.absf %936 : vector<4x1xf32>
    %cst_229 = arith.constant 0.000000e+00 : f32
    %940 = vector.broadcast %cst_229 : f32 to vector<4x1xf32>
    %941 = arith.subf %940, %939 : vector<4x1xf32>
    %942 = math.exp %941 : vector<4x1xf32>
    %cst_230 = arith.constant 1.000000e+00 : f32
    %943 = vector.broadcast %cst_230 : f32 to vector<4x1xf32>
    %944 = arith.addf %943, %942 : vector<4x1xf32>
    %945 = math.log %944 : vector<4x1xf32>
    %946 = arith.addf %938, %945 : vector<4x1xf32>
    %cst_231 = arith.constant dense<0xFF800000> : vector<4xf32>
    %947 = vector.multi_reduction <maximumf>, %935, %cst_231 [1] : vector<4x3xf32> to vector<4xf32>
    %948 = vector.shape_cast %947 : vector<4xf32> to vector<4x1xf32>
    %949 = vector.broadcast %948 : vector<4x1xf32> to vector<4x3xf32>
    %950 = arith.subf %935, %949 : vector<4x3xf32>
    %951 = math.exp %950 : vector<4x3xf32>
    %cst_232 = arith.constant dense<0.000000e+00> : vector<4xf32>
    %952 = vector.multi_reduction <add>, %951, %cst_232 [1] : vector<4x3xf32> to vector<4xf32>
    %953 = vector.shape_cast %952 : vector<4xf32> to vector<4x1xf32>
    %954 = vector.broadcast %953 : vector<4x1xf32> to vector<4x3xf32>
    %955 = arith.divf %951, %954 : vector<4x3xf32>
    %956 = tpu.concatenate %858, %858 in 0 : vector<2x32x16xf32>, vector<2x32x16xf32> -> vector<4x32x16xf32>
    %957 = vector.shape_cast %915 : vector<4x16xf32> to vector<4x1x16xf32>
    %958 = vector.broadcast %957 : vector<4x1x16xf32> to vector<4x32x16xf32>
    %959 = arith.mulf %956, %958 : vector<4x32x16xf32>
    %cst_233 = arith.constant dense<0.000000e+00> : vector<4x32xf32>
    %960 = vector.multi_reduction <add>, %959, %cst_233 [2] : vector<4x32x16xf32> to vector<4x32xf32>
    %961 = arith.mulf %915, %915 : vector<4x16xf32>
    %cst_234 = arith.constant dense<0.000000e+00> : vector<4xf32>
    %962 = vector.multi_reduction <add>, %961, %cst_234 [1] : vector<4x16xf32> to vector<4xf32>
    %963 = vector.shape_cast %962 : vector<4xf32> to vector<4x1xf32>
    %964 = arith.mulf %858, %858 : vector<2x32x16xf32>
    %cst_235 = arith.constant dense<0.000000e+00> : vector<2x32xf32>
    %965 = vector.multi_reduction <add>, %964, %cst_235 [2] : vector<2x32x16xf32> to vector<2x32xf32>
    %966 = tpu.concatenate %965, %965 in 0 : vector<2x32xf32>, vector<2x32xf32> -> vector<4x32xf32>
    %967 = vector.broadcast %963 : vector<4x1xf32> to vector<4x32xf32>
    %968 = arith.mulf %967, %966 : vector<4x32xf32>
    %cst_236 = arith.constant 1.000000e-16 : f32
    %969 = vector.broadcast %cst_236 : f32 to vector<4x32xf32>
    %970 = arith.addf %968, %969 : vector<4x32xf32>
    %971 = math.rsqrt %970 : vector<4x32xf32>
    %972 = arith.mulf %960, %971 : vector<4x32xf32>
    %973 = vector.broadcast %926 : vector<4x1xf32> to vector<4x32xf32>
    %974 = arith.mulf %973, %972 : vector<4x32xf32>
    %975 = math.exp %974 : vector<4x32xf32>
    %cst_237 = arith.constant dense<0.000000e+00> : vector<4xf32>
    %976 = vector.multi_reduction <add>, %975, %cst_237 [1] : vector<4x32xf32> to vector<4xf32>
    %977 = vector.shape_cast %976 : vector<4xf32> to vector<4x1xf32>
    %978 = vector.broadcast %977 : vector<4x1xf32> to vector<4x32xf32>
    %979 = arith.divf %975, %978 : vector<4x32xf32>
    %980 = vector.broadcast %934 : vector<4x1xf32> to vector<4x32xf32>
    %981 = arith.mulf %980, %979 : vector<4x32xf32>
    %cst_238 = arith.constant 1.000000e+00 : f32
    %982 = vector.broadcast %cst_238 : f32 to vector<4x1xf32>
    %983 = arith.subf %982, %934 : vector<4x1xf32>
    %984 = vector.broadcast %983 : vector<4x1xf32> to vector<4x32xf32>
    %985 = arith.mulf %984, %839 : vector<4x32xf32>
    %986 = arith.addf %981, %985 : vector<4x32xf32>
    %cst_239 = arith.constant dense<0.000000e+00> : vector<4x64xf32>
    %987 = tpu.matmul %986, %10, %cst_239 {dimension_numbers = #tpu.dot_dimension_numbers<[1], [0], [0], [1], [0, 0, 1, 1], [], []>} : vector<4x32xf32>, vector<32x64xf32>, vector<4x64xf32> -> vector<4x64xf32>
    %988 = vector.extract_strided_slice %955 {offsets = [0, 0], sizes = [4, 1], strides = [1, 1]} : vector<4x3xf32> to vector<4x1xf32>
    %989 = vector.broadcast %988 : vector<4x1xf32> to vector<4x32xf32>
    %990 = arith.mulf %989, %986 : vector<4x32xf32>
    %991 = vector.extract_strided_slice %955 {offsets = [0, 1], sizes = [4, 1], strides = [1, 1]} : vector<4x3xf32> to vector<4x1xf32>
    %992 = vector.extract_strided_slice %987 {offsets = [0, 0], sizes = [4, 32], strides = [1, 1]} : vector<4x64xf32> to vector<4x32xf32>
    %993 = vector.broadcast %991 : vector<4x1xf32> to vector<4x32xf32>
    %994 = arith.mulf %993, %992 : vector<4x32xf32>
    %995 = arith.addf %990, %994 : vector<4x32xf32>
    %996 = vector.extract_strided_slice %955 {offsets = [0, 2], sizes = [4, 1], strides = [1, 1]} : vector<4x3xf32> to vector<4x1xf32>
    %997 = vector.extract_strided_slice %987 {offsets = [0, 32], sizes = [4, 32], strides = [1, 1]} : vector<4x64xf32> to vector<4x32xf32>
    %998 = vector.broadcast %996 : vector<4x1xf32> to vector<4x32xf32>
    %999 = arith.mulf %998, %997 : vector<4x32xf32>
    %1000 = arith.addf %995, %999 : vector<4x32xf32>
    %cst_240 = arith.constant 1.000000e-30 : f32
    %1001 = vector.broadcast %cst_240 : f32 to vector<4x32xf32>
    %1002 = arith.maximumf %1000, %1001 : vector<4x32xf32>
    %1003 = math.log %1002 : vector<4x32xf32>
    %1004 = vector.broadcast %946 : vector<4x1xf32> to vector<4x32xf32>
    %1005 = arith.mulf %1004, %1003 : vector<4x32xf32>
    %1006 = math.exp %1005 : vector<4x32xf32>
    %cst_241 = arith.constant dense<0.000000e+00> : vector<4xf32>
    %1007 = vector.multi_reduction <add>, %1006, %cst_241 [1] : vector<4x32xf32> to vector<4xf32>
    %1008 = vector.shape_cast %1007 : vector<4xf32> to vector<4x1xf32>
    %1009 = vector.broadcast %1008 : vector<4x1xf32> to vector<4x32xf32>
    %1010 = arith.divf %1006, %1009 : vector<4x32xf32>
    %1011 = vector.extract_strided_slice %1010 {offsets = [0, 0], sizes = [2, 32], strides = [1, 1]} : vector<4x32xf32> to vector<2x32xf32>
    %1012 = vector.extract_strided_slice %1010 {offsets = [2, 0], sizes = [2, 32], strides = [1, 1]} : vector<4x32xf32> to vector<2x32xf32>
    %1013 = vector.shape_cast %1011 : vector<2x32xf32> to vector<2x32x1xf32>
    %1014 = vector.broadcast %1013 : vector<2x32x1xf32> to vector<2x32x16xf32>
    %1015 = arith.mulf %1014, %858 : vector<2x32x16xf32>
    %cst_242 = arith.constant dense<0.000000e+00> : vector<2x16xf32>
    %1016 = vector.multi_reduction <add>, %1015, %cst_242 [1] : vector<2x32x16xf32> to vector<2x16xf32>
    %1017 = vector.shape_cast %1012 : vector<2x32xf32> to vector<2x32x1xf32>
    %1018 = vector.shape_cast %910 : vector<2x16xf32> to vector<2x1x16xf32>
    %1019 = vector.broadcast %1017 : vector<2x32x1xf32> to vector<2x32x16xf32>
    %1020 = vector.broadcast %1018 : vector<2x1x16xf32> to vector<2x32x16xf32>
    %1021 = arith.mulf %1019, %1020 : vector<2x32x16xf32>
    %cst_243 = arith.constant 1.000000e+00 : f32
    %1022 = vector.broadcast %cst_243 : f32 to vector<2x32x16xf32>
    %1023 = arith.subf %1022, %1021 : vector<2x32x16xf32>
    %1024 = arith.mulf %858, %1023 : vector<2x32x16xf32>
    %1025 = vector.shape_cast %912 : vector<2x16xf32> to vector<2x1x16xf32>
    %1026 = vector.broadcast %1017 : vector<2x32x1xf32> to vector<2x32x16xf32>
    %1027 = vector.broadcast %1025 : vector<2x1x16xf32> to vector<2x32x16xf32>
    %1028 = arith.mulf %1026, %1027 : vector<2x32x16xf32>
    %1029 = arith.addf %1024, %1028 : vector<2x32x16xf32>
    %cst_244 = arith.constant dense<0.000000e+00> : vector<2x32xf32>
    %1030 = tpu.matmul %1016, %14, %cst_244 {dimension_numbers = #tpu.dot_dimension_numbers<[1], [0], [0], [1], [0, 0, 1, 1], [], []>} : vector<2x16xf32>, vector<16x32xf32>, vector<2x32xf32> -> vector<2x32xf32>
    %1031 = arith.addf %913, %1030 : vector<2x32xf32>
    %cst_245 = arith.constant -2.000000e+01 : f32
    %cst_246 = arith.constant 2.000000e+01 : f32
    %1032 = vector.broadcast %cst_245 : f32 to vector<2x32xf32>
    %1033 = arith.maximumf %1032, %1031 : vector<2x32xf32>
    %1034 = vector.broadcast %cst_246 : f32 to vector<2x32xf32>
    %1035 = arith.minimumf %1034, %1033 : vector<2x32xf32>
    %1036 = arith.index_cast %c5_i32 : i32 to index
    %c0_247 = arith.constant 0 : index
    %c0_248 = arith.constant 0 : index
    %1037 = vector.load %arg9[%1036, %c0_247, %c0_248] : memref<8x2x32xf32, #tpu.memory_space<vmem>>, vector<1x2x32xf32>
    %1038 = vector.shape_cast %1037 : vector<1x2x32xf32> to vector<2x32xf32>
    %1039 = vector.shape_cast %1035 : vector<2x32xf32> to vector<1x2x32xf32>
    tpu.vector_store %arg9[%1036, %c0_247, %c0_248], %1039 {strides = array<i32>} : memref<8x2x32xf32, #tpu.memory_space<vmem>>, vector<1x2x32xf32>,
    %1040 = tpu.concatenate %892, %1016 in 1 : vector<2x32xf32>, vector<2x16xf32> -> vector<2x48xf32>
    %c6_i32 = arith.constant 6 : i32
    %1041 = arith.index_cast %c6_i32 : i32 to index
    %c0_249 = arith.constant 0 : index
    %c0_250 = arith.constant 0 : index
    %1042 = vector.load %arg1[%1041, %c0_249, %c0_250] : memref<8x2x128xf32, #tpu.memory_space<vmem>>, vector<1x2x128xf32>
    %1043 = vector.shape_cast %1042 : vector<1x2x128xf32> to vector<2x128xf32>
    %cst_251 = arith.constant dense<0.000000e+00> : vector<2x128xf32>
    %1044 = tpu.matmul %1040, %11, %cst_251 {dimension_numbers = #tpu.dot_dimension_numbers<[1], [0], [0], [1], [0, 0, 1, 1], [], []>} : vector<2x48xf32>, vector<48x128xf32>, vector<2x128xf32> -> vector<2x128xf32>
    %1045 = arith.addf %1043, %1044 : vector<2x128xf32>
    %1046 = vector.extract_strided_slice %1045 {offsets = [0, 0], sizes = [2, 96], strides = [1, 1]} : vector<2x128xf32> to vector<2x96xf32>
    %cst_252 = arith.constant 5.000000e-01 : f32
    %1047 = vector.broadcast %cst_252 : f32 to vector<2x96xf32>
    %1048 = arith.mulf %1047, %1046 : vector<2x96xf32>
    %1049 = math.tanh %1048 : vector<2x96xf32>
    %cst_253 = arith.constant 1.000000e+00 : f32
    %1050 = vector.broadcast %cst_253 : f32 to vector<2x96xf32>
    %1051 = arith.addf %1049, %1050 : vector<2x96xf32>
    %cst_254 = arith.constant 5.000000e-01 : f32
    %1052 = vector.broadcast %cst_254 : f32 to vector<2x96xf32>
    %1053 = arith.mulf %1052, %1051 : vector<2x96xf32>
    %1054 = vector.extract_strided_slice %1053 {offsets = [0, 0], sizes = [2, 32], strides = [1, 1]} : vector<2x96xf32> to vector<2x32xf32>
    %1055 = vector.extract_strided_slice %1053 {offsets = [0, 32], sizes = [2, 32], strides = [1, 1]} : vector<2x96xf32> to vector<2x32xf32>
    %1056 = vector.extract_strided_slice %1053 {offsets = [0, 64], sizes = [2, 32], strides = [1, 1]} : vector<2x96xf32> to vector<2x32xf32>
    %1057 = vector.extract_strided_slice %1045 {offsets = [0, 96], sizes = [2, 32], strides = [1, 1]} : vector<2x128xf32> to vector<2x32xf32>
    %1058 = math.tanh %1057 : vector<2x32xf32>
    %1059 = arith.mulf %1055, %890 : vector<2x32xf32>
    %1060 = arith.mulf %1054, %1058 : vector<2x32xf32>
    %1061 = arith.addf %1059, %1060 : vector<2x32xf32>
    %1062 = math.tanh %1061 : vector<2x32xf32>
    %1063 = arith.mulf %1056, %1062 : vector<2x32xf32>
    %cst_255 = arith.constant -2.000000e+01 : f32
    %cst_256 = arith.constant 2.000000e+01 : f32
    %1064 = vector.broadcast %cst_255 : f32 to vector<2x32xf32>
    %1065 = arith.maximumf %1064, %1063 : vector<2x32xf32>
    %1066 = vector.broadcast %cst_256 : f32 to vector<2x32xf32>
    %1067 = arith.minimumf %1066, %1065 : vector<2x32xf32>
    %cst_257 = arith.constant dense<0.000000e+00> : vector<2x108xf32>
    %1068 = tpu.matmul %1067, %12, %cst_257 {dimension_numbers = #tpu.dot_dimension_numbers<[1], [0], [0], [1], [0, 0, 1, 1], [], []>} : vector<2x32xf32>, vector<32x108xf32>, vector<2x108xf32> -> vector<2x108xf32>
    %1069 = vector.broadcast %13 : vector<1x108xf32> to vector<2x108xf32>
    %1070 = arith.addf %1068, %1069 : vector<2x108xf32>
    %1071 = vector.extract_strided_slice %1070 {offsets = [0, 0], sizes = [2, 22], strides = [1, 1]} : vector<2x108xf32> to vector<2x22xf32>
    %1072 = vector.extract_strided_slice %1070 {offsets = [0, 22], sizes = [2, 22], strides = [1, 1]} : vector<2x108xf32> to vector<2x22xf32>
    %1073 = tpu.concatenate %1071, %1072 in 0 : vector<2x22xf32>, vector<2x22xf32> -> vector<4x22xf32>
    %1074 = vector.extract_strided_slice %1070 {offsets = [0, 44], sizes = [2, 16], strides = [1, 1]} : vector<2x108xf32> to vector<2x16xf32>
    %cst_258 = arith.constant 5.000000e-01 : f32
    %1075 = vector.broadcast %cst_258 : f32 to vector<2x16xf32>
    %1076 = arith.mulf %1075, %1074 : vector<2x16xf32>
    %1077 = math.tanh %1076 : vector<2x16xf32>
    %cst_259 = arith.constant 1.000000e+00 : f32
    %1078 = vector.broadcast %cst_259 : f32 to vector<2x16xf32>
    %1079 = arith.addf %1077, %1078 : vector<2x16xf32>
    %cst_260 = arith.constant 5.000000e-01 : f32
    %1080 = vector.broadcast %cst_260 : f32 to vector<2x16xf32>
    %1081 = arith.mulf %1080, %1079 : vector<2x16xf32>
    %1082 = vector.extract_strided_slice %1070 {offsets = [0, 60], sizes = [2, 16], strides = [1, 1]} : vector<2x108xf32> to vector<2x16xf32>
    %1083 = math.tanh %1082 : vector<2x16xf32>
    %1084 = vector.extract_strided_slice %1070 {offsets = [0, 76], sizes = [2, 32], strides = [1, 1]} : vector<2x108xf32> to vector<2x32xf32>
    %1085 = vector.extract_strided_slice %1073 {offsets = [0, 0], sizes = [4, 16], strides = [1, 1]} : vector<4x22xf32> to vector<4x16xf32>
    %1086 = math.tanh %1085 : vector<4x16xf32>
    %1087 = vector.extract_strided_slice %1073 {offsets = [0, 16], sizes = [4, 1], strides = [1, 1]} : vector<4x22xf32> to vector<4x1xf32>
    %cst_261 = arith.constant 0.000000e+00 : f32
    %1088 = vector.broadcast %cst_261 : f32 to vector<4x1xf32>
    %1089 = arith.maximumf %1087, %1088 : vector<4x1xf32>
    %1090 = math.absf %1087 : vector<4x1xf32>
    %cst_262 = arith.constant 0.000000e+00 : f32
    %1091 = vector.broadcast %cst_262 : f32 to vector<4x1xf32>
    %1092 = arith.subf %1091, %1090 : vector<4x1xf32>
    %1093 = math.exp %1092 : vector<4x1xf32>
    %cst_263 = arith.constant 1.000000e+00 : f32
    %1094 = vector.broadcast %cst_263 : f32 to vector<4x1xf32>
    %1095 = arith.addf %1094, %1093 : vector<4x1xf32>
    %1096 = math.log %1095 : vector<4x1xf32>
    %1097 = arith.addf %1089, %1096 : vector<4x1xf32>
    %1098 = vector.extract_strided_slice %1073 {offsets = [0, 17], sizes = [4, 1], strides = [1, 1]} : vector<4x22xf32> to vector<4x1xf32>
    %cst_264 = arith.constant 5.000000e-01 : f32
    %1099 = vector.broadcast %cst_264 : f32 to vector<4x1xf32>
    %1100 = arith.mulf %1099, %1098 : vector<4x1xf32>
    %1101 = math.tanh %1100 : vector<4x1xf32>
    %cst_265 = arith.constant 1.000000e+00 : f32
    %1102 = vector.broadcast %cst_265 : f32 to vector<4x1xf32>
    %1103 = arith.addf %1101, %1102 : vector<4x1xf32>
    %cst_266 = arith.constant 5.000000e-01 : f32
    %1104 = vector.broadcast %cst_266 : f32 to vector<4x1xf32>
    %1105 = arith.mulf %1104, %1103 : vector<4x1xf32>
    %1106 = vector.extract_strided_slice %1073 {offsets = [0, 18], sizes = [4, 3], strides = [1, 1]} : vector<4x22xf32> to vector<4x3xf32>
    %1107 = vector.extract_strided_slice %1073 {offsets = [0, 21], sizes = [4, 1], strides = [1, 1]} : vector<4x22xf32> to vector<4x1xf32>
    %cst_267 = arith.constant 0.000000e+00 : f32
    %1108 = vector.broadcast %cst_267 : f32 to vector<4x1xf32>
    %1109 = arith.maximumf %1107, %1108 : vector<4x1xf32>
    %1110 = math.absf %1107 : vector<4x1xf32>
    %cst_268 = arith.constant 0.000000e+00 : f32
    %1111 = vector.broadcast %cst_268 : f32 to vector<4x1xf32>
    %1112 = arith.subf %1111, %1110 : vector<4x1xf32>
    %1113 = math.exp %1112 : vector<4x1xf32>
    %cst_269 = arith.constant 1.000000e+00 : f32
    %1114 = vector.broadcast %cst_269 : f32 to vector<4x1xf32>
    %1115 = arith.addf %1114, %1113 : vector<4x1xf32>
    %1116 = math.log %1115 : vector<4x1xf32>
    %1117 = arith.addf %1109, %1116 : vector<4x1xf32>
    %cst_270 = arith.constant dense<0xFF800000> : vector<4xf32>
    %1118 = vector.multi_reduction <maximumf>, %1106, %cst_270 [1] : vector<4x3xf32> to vector<4xf32>
    %1119 = vector.shape_cast %1118 : vector<4xf32> to vector<4x1xf32>
    %1120 = vector.broadcast %1119 : vector<4x1xf32> to vector<4x3xf32>
    %1121 = arith.subf %1106, %1120 : vector<4x3xf32>
    %1122 = math.exp %1121 : vector<4x3xf32>
    %cst_271 = arith.constant dense<0.000000e+00> : vector<4xf32>
    %1123 = vector.multi_reduction <add>, %1122, %cst_271 [1] : vector<4x3xf32> to vector<4xf32>
    %1124 = vector.shape_cast %1123 : vector<4xf32> to vector<4x1xf32>
    %1125 = vector.broadcast %1124 : vector<4x1xf32> to vector<4x3xf32>
    %1126 = arith.divf %1122, %1125 : vector<4x3xf32>
    %1127 = tpu.concatenate %1029, %1029 in 0 : vector<2x32x16xf32>, vector<2x32x16xf32> -> vector<4x32x16xf32>
    %1128 = vector.shape_cast %1086 : vector<4x16xf32> to vector<4x1x16xf32>
    %1129 = vector.broadcast %1128 : vector<4x1x16xf32> to vector<4x32x16xf32>
    %1130 = arith.mulf %1127, %1129 : vector<4x32x16xf32>
    %cst_272 = arith.constant dense<0.000000e+00> : vector<4x32xf32>
    %1131 = vector.multi_reduction <add>, %1130, %cst_272 [2] : vector<4x32x16xf32> to vector<4x32xf32>
    %1132 = arith.mulf %1086, %1086 : vector<4x16xf32>
    %cst_273 = arith.constant dense<0.000000e+00> : vector<4xf32>
    %1133 = vector.multi_reduction <add>, %1132, %cst_273 [1] : vector<4x16xf32> to vector<4xf32>
    %1134 = vector.shape_cast %1133 : vector<4xf32> to vector<4x1xf32>
    %1135 = arith.mulf %1029, %1029 : vector<2x32x16xf32>
    %cst_274 = arith.constant dense<0.000000e+00> : vector<2x32xf32>
    %1136 = vector.multi_reduction <add>, %1135, %cst_274 [2] : vector<2x32x16xf32> to vector<2x32xf32>
    %1137 = tpu.concatenate %1136, %1136 in 0 : vector<2x32xf32>, vector<2x32xf32> -> vector<4x32xf32>
    %1138 = vector.broadcast %1134 : vector<4x1xf32> to vector<4x32xf32>
    %1139 = arith.mulf %1138, %1137 : vector<4x32xf32>
    %cst_275 = arith.constant 1.000000e-16 : f32
    %1140 = vector.broadcast %cst_275 : f32 to vector<4x32xf32>
    %1141 = arith.addf %1139, %1140 : vector<4x32xf32>
    %1142 = math.rsqrt %1141 : vector<4x32xf32>
    %1143 = arith.mulf %1131, %1142 : vector<4x32xf32>
    %1144 = vector.broadcast %1097 : vector<4x1xf32> to vector<4x32xf32>
    %1145 = arith.mulf %1144, %1143 : vector<4x32xf32>
    %1146 = math.exp %1145 : vector<4x32xf32>
    %cst_276 = arith.constant dense<0.000000e+00> : vector<4xf32>
    %1147 = vector.multi_reduction <add>, %1146, %cst_276 [1] : vector<4x32xf32> to vector<4xf32>
    %1148 = vector.shape_cast %1147 : vector<4xf32> to vector<4x1xf32>
    %1149 = vector.broadcast %1148 : vector<4x1xf32> to vector<4x32xf32>
    %1150 = arith.divf %1146, %1149 : vector<4x32xf32>
    %1151 = vector.broadcast %1105 : vector<4x1xf32> to vector<4x32xf32>
    %1152 = arith.mulf %1151, %1150 : vector<4x32xf32>
    %cst_277 = arith.constant 1.000000e+00 : f32
    %1153 = vector.broadcast %cst_277 : f32 to vector<4x1xf32>
    %1154 = arith.subf %1153, %1105 : vector<4x1xf32>
    %1155 = vector.broadcast %1154 : vector<4x1xf32> to vector<4x32xf32>
    %1156 = arith.mulf %1155, %1010 : vector<4x32xf32>
    %1157 = arith.addf %1152, %1156 : vector<4x32xf32>
    %cst_278 = arith.constant dense<0.000000e+00> : vector<4x64xf32>
    %1158 = tpu.matmul %1157, %10, %cst_278 {dimension_numbers = #tpu.dot_dimension_numbers<[1], [0], [0], [1], [0, 0, 1, 1], [], []>} : vector<4x32xf32>, vector<32x64xf32>, vector<4x64xf32> -> vector<4x64xf32>
    %1159 = vector.extract_strided_slice %1126 {offsets = [0, 0], sizes = [4, 1], strides = [1, 1]} : vector<4x3xf32> to vector<4x1xf32>
    %1160 = vector.broadcast %1159 : vector<4x1xf32> to vector<4x32xf32>
    %1161 = arith.mulf %1160, %1157 : vector<4x32xf32>
    %1162 = vector.extract_strided_slice %1126 {offsets = [0, 1], sizes = [4, 1], strides = [1, 1]} : vector<4x3xf32> to vector<4x1xf32>
    %1163 = vector.extract_strided_slice %1158 {offsets = [0, 0], sizes = [4, 32], strides = [1, 1]} : vector<4x64xf32> to vector<4x32xf32>
    %1164 = vector.broadcast %1162 : vector<4x1xf32> to vector<4x32xf32>
    %1165 = arith.mulf %1164, %1163 : vector<4x32xf32>
    %1166 = arith.addf %1161, %1165 : vector<4x32xf32>
    %1167 = vector.extract_strided_slice %1126 {offsets = [0, 2], sizes = [4, 1], strides = [1, 1]} : vector<4x3xf32> to vector<4x1xf32>
    %1168 = vector.extract_strided_slice %1158 {offsets = [0, 32], sizes = [4, 32], strides = [1, 1]} : vector<4x64xf32> to vector<4x32xf32>
    %1169 = vector.broadcast %1167 : vector<4x1xf32> to vector<4x32xf32>
    %1170 = arith.mulf %1169, %1168 : vector<4x32xf32>
    %1171 = arith.addf %1166, %1170 : vector<4x32xf32>
    %cst_279 = arith.constant 1.000000e-30 : f32
    %1172 = vector.broadcast %cst_279 : f32 to vector<4x32xf32>
    %1173 = arith.maximumf %1171, %1172 : vector<4x32xf32>
    %1174 = math.log %1173 : vector<4x32xf32>
    %1175 = vector.broadcast %1117 : vector<4x1xf32> to vector<4x32xf32>
    %1176 = arith.mulf %1175, %1174 : vector<4x32xf32>
    %1177 = math.exp %1176 : vector<4x32xf32>
    %cst_280 = arith.constant dense<0.000000e+00> : vector<4xf32>
    %1178 = vector.multi_reduction <add>, %1177, %cst_280 [1] : vector<4x32xf32> to vector<4xf32>
    %1179 = vector.shape_cast %1178 : vector<4xf32> to vector<4x1xf32>
    %1180 = vector.broadcast %1179 : vector<4x1xf32> to vector<4x32xf32>
    %1181 = arith.divf %1177, %1180 : vector<4x32xf32>
    %1182 = vector.extract_strided_slice %1181 {offsets = [0, 0], sizes = [2, 32], strides = [1, 1]} : vector<4x32xf32> to vector<2x32xf32>
    %1183 = vector.extract_strided_slice %1181 {offsets = [2, 0], sizes = [2, 32], strides = [1, 1]} : vector<4x32xf32> to vector<2x32xf32>
    %1184 = vector.shape_cast %1182 : vector<2x32xf32> to vector<2x32x1xf32>
    %1185 = vector.broadcast %1184 : vector<2x32x1xf32> to vector<2x32x16xf32>
    %1186 = arith.mulf %1185, %1029 : vector<2x32x16xf32>
    %cst_281 = arith.constant dense<0.000000e+00> : vector<2x16xf32>
    %1187 = vector.multi_reduction <add>, %1186, %cst_281 [1] : vector<2x32x16xf32> to vector<2x16xf32>
    %1188 = vector.shape_cast %1183 : vector<2x32xf32> to vector<2x32x1xf32>
    %1189 = vector.shape_cast %1081 : vector<2x16xf32> to vector<2x1x16xf32>
    %1190 = vector.broadcast %1188 : vector<2x32x1xf32> to vector<2x32x16xf32>
    %1191 = vector.broadcast %1189 : vector<2x1x16xf32> to vector<2x32x16xf32>
    %1192 = arith.mulf %1190, %1191 : vector<2x32x16xf32>
    %cst_282 = arith.constant 1.000000e+00 : f32
    %1193 = vector.broadcast %cst_282 : f32 to vector<2x32x16xf32>
    %1194 = arith.subf %1193, %1192 : vector<2x32x16xf32>
    %1195 = arith.mulf %1029, %1194 : vector<2x32x16xf32>
    %1196 = vector.shape_cast %1083 : vector<2x16xf32> to vector<2x1x16xf32>
    %1197 = vector.broadcast %1188 : vector<2x32x1xf32> to vector<2x32x16xf32>
    %1198 = vector.broadcast %1196 : vector<2x1x16xf32> to vector<2x32x16xf32>
    %1199 = arith.mulf %1197, %1198 : vector<2x32x16xf32>
    %1200 = arith.addf %1195, %1199 : vector<2x32x16xf32>
    %cst_283 = arith.constant dense<0.000000e+00> : vector<2x32xf32>
    %1201 = tpu.matmul %1187, %14, %cst_283 {dimension_numbers = #tpu.dot_dimension_numbers<[1], [0], [0], [1], [0, 0, 1, 1], [], []>} : vector<2x16xf32>, vector<16x32xf32>, vector<2x32xf32> -> vector<2x32xf32>
    %1202 = arith.addf %1084, %1201 : vector<2x32xf32>
    %cst_284 = arith.constant -2.000000e+01 : f32
    %cst_285 = arith.constant 2.000000e+01 : f32
    %1203 = vector.broadcast %cst_284 : f32 to vector<2x32xf32>
    %1204 = arith.maximumf %1203, %1202 : vector<2x32xf32>
    %1205 = vector.broadcast %cst_285 : f32 to vector<2x32xf32>
    %1206 = arith.minimumf %1205, %1204 : vector<2x32xf32>
    %1207 = arith.index_cast %c6_i32 : i32 to index
    %c0_286 = arith.constant 0 : index
    %c0_287 = arith.constant 0 : index
    %1208 = vector.load %arg9[%1207, %c0_286, %c0_287] : memref<8x2x32xf32, #tpu.memory_space<vmem>>, vector<1x2x32xf32>
    %1209 = vector.shape_cast %1208 : vector<1x2x32xf32> to vector<2x32xf32>
    %1210 = vector.shape_cast %1206 : vector<2x32xf32> to vector<1x2x32xf32>
    tpu.vector_store %arg9[%1207, %c0_286, %c0_287], %1210 {strides = array<i32>} : memref<8x2x32xf32, #tpu.memory_space<vmem>>, vector<1x2x32xf32>,
    %1211 = tpu.concatenate %1063, %1187 in 1 : vector<2x32xf32>, vector<2x16xf32> -> vector<2x48xf32>
    %c7_i32 = arith.constant 7 : i32
    %1212 = arith.index_cast %c7_i32 : i32 to index
    %c0_288 = arith.constant 0 : index
    %c0_289 = arith.constant 0 : index
    %1213 = vector.load %arg1[%1212, %c0_288, %c0_289] : memref<8x2x128xf32, #tpu.memory_space<vmem>>, vector<1x2x128xf32>
    %1214 = vector.shape_cast %1213 : vector<1x2x128xf32> to vector<2x128xf32>
    %cst_290 = arith.constant dense<0.000000e+00> : vector<2x128xf32>
    %1215 = tpu.matmul %1211, %11, %cst_290 {dimension_numbers = #tpu.dot_dimension_numbers<[1], [0], [0], [1], [0, 0, 1, 1], [], []>} : vector<2x48xf32>, vector<48x128xf32>, vector<2x128xf32> -> vector<2x128xf32>
    %1216 = arith.addf %1214, %1215 : vector<2x128xf32>
    %1217 = vector.extract_strided_slice %1216 {offsets = [0, 0], sizes = [2, 96], strides = [1, 1]} : vector<2x128xf32> to vector<2x96xf32>
    %cst_291 = arith.constant 5.000000e-01 : f32
    %1218 = vector.broadcast %cst_291 : f32 to vector<2x96xf32>
    %1219 = arith.mulf %1218, %1217 : vector<2x96xf32>
    %1220 = math.tanh %1219 : vector<2x96xf32>
    %cst_292 = arith.constant 1.000000e+00 : f32
    %1221 = vector.broadcast %cst_292 : f32 to vector<2x96xf32>
    %1222 = arith.addf %1220, %1221 : vector<2x96xf32>
    %cst_293 = arith.constant 5.000000e-01 : f32
    %1223 = vector.broadcast %cst_293 : f32 to vector<2x96xf32>
    %1224 = arith.mulf %1223, %1222 : vector<2x96xf32>
    %1225 = vector.extract_strided_slice %1224 {offsets = [0, 0], sizes = [2, 32], strides = [1, 1]} : vector<2x96xf32> to vector<2x32xf32>
    %1226 = vector.extract_strided_slice %1224 {offsets = [0, 32], sizes = [2, 32], strides = [1, 1]} : vector<2x96xf32> to vector<2x32xf32>
    %1227 = vector.extract_strided_slice %1224 {offsets = [0, 64], sizes = [2, 32], strides = [1, 1]} : vector<2x96xf32> to vector<2x32xf32>
    %1228 = vector.extract_strided_slice %1216 {offsets = [0, 96], sizes = [2, 32], strides = [1, 1]} : vector<2x128xf32> to vector<2x32xf32>
    %1229 = math.tanh %1228 : vector<2x32xf32>
    %1230 = arith.mulf %1226, %1061 : vector<2x32xf32>
    %1231 = arith.mulf %1225, %1229 : vector<2x32xf32>
    %1232 = arith.addf %1230, %1231 : vector<2x32xf32>
    %1233 = math.tanh %1232 : vector<2x32xf32>
    %1234 = arith.mulf %1227, %1233 : vector<2x32xf32>
    %cst_294 = arith.constant -2.000000e+01 : f32
    %cst_295 = arith.constant 2.000000e+01 : f32
    %1235 = vector.broadcast %cst_294 : f32 to vector<2x32xf32>
    %1236 = arith.maximumf %1235, %1234 : vector<2x32xf32>
    %1237 = vector.broadcast %cst_295 : f32 to vector<2x32xf32>
    %1238 = arith.minimumf %1237, %1236 : vector<2x32xf32>
    %cst_296 = arith.constant dense<0.000000e+00> : vector<2x108xf32>
    %1239 = tpu.matmul %1238, %12, %cst_296 {dimension_numbers = #tpu.dot_dimension_numbers<[1], [0], [0], [1], [0, 0, 1, 1], [], []>} : vector<2x32xf32>, vector<32x108xf32>, vector<2x108xf32> -> vector<2x108xf32>
    %1240 = vector.broadcast %13 : vector<1x108xf32> to vector<2x108xf32>
    %1241 = arith.addf %1239, %1240 : vector<2x108xf32>
    %1242 = vector.extract_strided_slice %1241 {offsets = [0, 0], sizes = [2, 22], strides = [1, 1]} : vector<2x108xf32> to vector<2x22xf32>
    %1243 = vector.extract_strided_slice %1241 {offsets = [0, 22], sizes = [2, 22], strides = [1, 1]} : vector<2x108xf32> to vector<2x22xf32>
    %1244 = tpu.concatenate %1242, %1243 in 0 : vector<2x22xf32>, vector<2x22xf32> -> vector<4x22xf32>
    %1245 = vector.extract_strided_slice %1241 {offsets = [0, 44], sizes = [2, 16], strides = [1, 1]} : vector<2x108xf32> to vector<2x16xf32>
    %cst_297 = arith.constant 5.000000e-01 : f32
    %1246 = vector.broadcast %cst_297 : f32 to vector<2x16xf32>
    %1247 = arith.mulf %1246, %1245 : vector<2x16xf32>
    %1248 = math.tanh %1247 : vector<2x16xf32>
    %cst_298 = arith.constant 1.000000e+00 : f32
    %1249 = vector.broadcast %cst_298 : f32 to vector<2x16xf32>
    %1250 = arith.addf %1248, %1249 : vector<2x16xf32>
    %cst_299 = arith.constant 5.000000e-01 : f32
    %1251 = vector.broadcast %cst_299 : f32 to vector<2x16xf32>
    %1252 = arith.mulf %1251, %1250 : vector<2x16xf32>
    %1253 = vector.extract_strided_slice %1241 {offsets = [0, 60], sizes = [2, 16], strides = [1, 1]} : vector<2x108xf32> to vector<2x16xf32>
    %1254 = math.tanh %1253 : vector<2x16xf32>
    %1255 = vector.extract_strided_slice %1241 {offsets = [0, 76], sizes = [2, 32], strides = [1, 1]} : vector<2x108xf32> to vector<2x32xf32>
    %1256 = vector.extract_strided_slice %1244 {offsets = [0, 0], sizes = [4, 16], strides = [1, 1]} : vector<4x22xf32> to vector<4x16xf32>
    %1257 = math.tanh %1256 : vector<4x16xf32>
    %1258 = vector.extract_strided_slice %1244 {offsets = [0, 16], sizes = [4, 1], strides = [1, 1]} : vector<4x22xf32> to vector<4x1xf32>
    %cst_300 = arith.constant 0.000000e+00 : f32
    %1259 = vector.broadcast %cst_300 : f32 to vector<4x1xf32>
    %1260 = arith.maximumf %1258, %1259 : vector<4x1xf32>
    %1261 = math.absf %1258 : vector<4x1xf32>
    %cst_301 = arith.constant 0.000000e+00 : f32
    %1262 = vector.broadcast %cst_301 : f32 to vector<4x1xf32>
    %1263 = arith.subf %1262, %1261 : vector<4x1xf32>
    %1264 = math.exp %1263 : vector<4x1xf32>
    %cst_302 = arith.constant 1.000000e+00 : f32
    %1265 = vector.broadcast %cst_302 : f32 to vector<4x1xf32>
    %1266 = arith.addf %1265, %1264 : vector<4x1xf32>
    %1267 = math.log %1266 : vector<4x1xf32>
    %1268 = arith.addf %1260, %1267 : vector<4x1xf32>
    %1269 = vector.extract_strided_slice %1244 {offsets = [0, 17], sizes = [4, 1], strides = [1, 1]} : vector<4x22xf32> to vector<4x1xf32>
    %cst_303 = arith.constant 5.000000e-01 : f32
    %1270 = vector.broadcast %cst_303 : f32 to vector<4x1xf32>
    %1271 = arith.mulf %1270, %1269 : vector<4x1xf32>
    %1272 = math.tanh %1271 : vector<4x1xf32>
    %cst_304 = arith.constant 1.000000e+00 : f32
    %1273 = vector.broadcast %cst_304 : f32 to vector<4x1xf32>
    %1274 = arith.addf %1272, %1273 : vector<4x1xf32>
    %cst_305 = arith.constant 5.000000e-01 : f32
    %1275 = vector.broadcast %cst_305 : f32 to vector<4x1xf32>
    %1276 = arith.mulf %1275, %1274 : vector<4x1xf32>
    %1277 = vector.extract_strided_slice %1244 {offsets = [0, 18], sizes = [4, 3], strides = [1, 1]} : vector<4x22xf32> to vector<4x3xf32>
    %1278 = vector.extract_strided_slice %1244 {offsets = [0, 21], sizes = [4, 1], strides = [1, 1]} : vector<4x22xf32> to vector<4x1xf32>
    %cst_306 = arith.constant 0.000000e+00 : f32
    %1279 = vector.broadcast %cst_306 : f32 to vector<4x1xf32>
    %1280 = arith.maximumf %1278, %1279 : vector<4x1xf32>
    %1281 = math.absf %1278 : vector<4x1xf32>
    %cst_307 = arith.constant 0.000000e+00 : f32
    %1282 = vector.broadcast %cst_307 : f32 to vector<4x1xf32>
    %1283 = arith.subf %1282, %1281 : vector<4x1xf32>
    %1284 = math.exp %1283 : vector<4x1xf32>
    %cst_308 = arith.constant 1.000000e+00 : f32
    %1285 = vector.broadcast %cst_308 : f32 to vector<4x1xf32>
    %1286 = arith.addf %1285, %1284 : vector<4x1xf32>
    %1287 = math.log %1286 : vector<4x1xf32>
    %1288 = arith.addf %1280, %1287 : vector<4x1xf32>
    %cst_309 = arith.constant dense<0xFF800000> : vector<4xf32>
    %1289 = vector.multi_reduction <maximumf>, %1277, %cst_309 [1] : vector<4x3xf32> to vector<4xf32>
    %1290 = vector.shape_cast %1289 : vector<4xf32> to vector<4x1xf32>
    %1291 = vector.broadcast %1290 : vector<4x1xf32> to vector<4x3xf32>
    %1292 = arith.subf %1277, %1291 : vector<4x3xf32>
    %1293 = math.exp %1292 : vector<4x3xf32>
    %cst_310 = arith.constant dense<0.000000e+00> : vector<4xf32>
    %1294 = vector.multi_reduction <add>, %1293, %cst_310 [1] : vector<4x3xf32> to vector<4xf32>
    %1295 = vector.shape_cast %1294 : vector<4xf32> to vector<4x1xf32>
    %1296 = vector.broadcast %1295 : vector<4x1xf32> to vector<4x3xf32>
    %1297 = arith.divf %1293, %1296 : vector<4x3xf32>
    %1298 = tpu.concatenate %1200, %1200 in 0 : vector<2x32x16xf32>, vector<2x32x16xf32> -> vector<4x32x16xf32>
    %1299 = vector.shape_cast %1257 : vector<4x16xf32> to vector<4x1x16xf32>
    %1300 = vector.broadcast %1299 : vector<4x1x16xf32> to vector<4x32x16xf32>
    %1301 = arith.mulf %1298, %1300 : vector<4x32x16xf32>
    %cst_311 = arith.constant dense<0.000000e+00> : vector<4x32xf32>
    %1302 = vector.multi_reduction <add>, %1301, %cst_311 [2] : vector<4x32x16xf32> to vector<4x32xf32>
    %1303 = arith.mulf %1257, %1257 : vector<4x16xf32>
    %cst_312 = arith.constant dense<0.000000e+00> : vector<4xf32>
    %1304 = vector.multi_reduction <add>, %1303, %cst_312 [1] : vector<4x16xf32> to vector<4xf32>
    %1305 = vector.shape_cast %1304 : vector<4xf32> to vector<4x1xf32>
    %1306 = arith.mulf %1200, %1200 : vector<2x32x16xf32>
    %cst_313 = arith.constant dense<0.000000e+00> : vector<2x32xf32>
    %1307 = vector.multi_reduction <add>, %1306, %cst_313 [2] : vector<2x32x16xf32> to vector<2x32xf32>
    %1308 = tpu.concatenate %1307, %1307 in 0 : vector<2x32xf32>, vector<2x32xf32> -> vector<4x32xf32>
    %1309 = vector.broadcast %1305 : vector<4x1xf32> to vector<4x32xf32>
    %1310 = arith.mulf %1309, %1308 : vector<4x32xf32>
    %cst_314 = arith.constant 1.000000e-16 : f32
    %1311 = vector.broadcast %cst_314 : f32 to vector<4x32xf32>
    %1312 = arith.addf %1310, %1311 : vector<4x32xf32>
    %1313 = math.rsqrt %1312 : vector<4x32xf32>
    %1314 = arith.mulf %1302, %1313 : vector<4x32xf32>
    %1315 = vector.broadcast %1268 : vector<4x1xf32> to vector<4x32xf32>
    %1316 = arith.mulf %1315, %1314 : vector<4x32xf32>
    %1317 = math.exp %1316 : vector<4x32xf32>
    %cst_315 = arith.constant dense<0.000000e+00> : vector<4xf32>
    %1318 = vector.multi_reduction <add>, %1317, %cst_315 [1] : vector<4x32xf32> to vector<4xf32>
    %1319 = vector.shape_cast %1318 : vector<4xf32> to vector<4x1xf32>
    %1320 = vector.broadcast %1319 : vector<4x1xf32> to vector<4x32xf32>
    %1321 = arith.divf %1317, %1320 : vector<4x32xf32>
    %1322 = vector.broadcast %1276 : vector<4x1xf32> to vector<4x32xf32>
    %1323 = arith.mulf %1322, %1321 : vector<4x32xf32>
    %cst_316 = arith.constant 1.000000e+00 : f32
    %1324 = vector.broadcast %cst_316 : f32 to vector<4x1xf32>
    %1325 = arith.subf %1324, %1276 : vector<4x1xf32>
    %1326 = vector.broadcast %1325 : vector<4x1xf32> to vector<4x32xf32>
    %1327 = arith.mulf %1326, %1181 : vector<4x32xf32>
    %1328 = arith.addf %1323, %1327 : vector<4x32xf32>
    %cst_317 = arith.constant dense<0.000000e+00> : vector<4x64xf32>
    %1329 = tpu.matmul %1328, %10, %cst_317 {dimension_numbers = #tpu.dot_dimension_numbers<[1], [0], [0], [1], [0, 0, 1, 1], [], []>} : vector<4x32xf32>, vector<32x64xf32>, vector<4x64xf32> -> vector<4x64xf32>
    %1330 = vector.extract_strided_slice %1297 {offsets = [0, 0], sizes = [4, 1], strides = [1, 1]} : vector<4x3xf32> to vector<4x1xf32>
    %1331 = vector.broadcast %1330 : vector<4x1xf32> to vector<4x32xf32>
    %1332 = arith.mulf %1331, %1328 : vector<4x32xf32>
    %1333 = vector.extract_strided_slice %1297 {offsets = [0, 1], sizes = [4, 1], strides = [1, 1]} : vector<4x3xf32> to vector<4x1xf32>
    %1334 = vector.extract_strided_slice %1329 {offsets = [0, 0], sizes = [4, 32], strides = [1, 1]} : vector<4x64xf32> to vector<4x32xf32>
    %1335 = vector.broadcast %1333 : vector<4x1xf32> to vector<4x32xf32>
    %1336 = arith.mulf %1335, %1334 : vector<4x32xf32>
    %1337 = arith.addf %1332, %1336 : vector<4x32xf32>
    %1338 = vector.extract_strided_slice %1297 {offsets = [0, 2], sizes = [4, 1], strides = [1, 1]} : vector<4x3xf32> to vector<4x1xf32>
    %1339 = vector.extract_strided_slice %1329 {offsets = [0, 32], sizes = [4, 32], strides = [1, 1]} : vector<4x64xf32> to vector<4x32xf32>
    %1340 = vector.broadcast %1338 : vector<4x1xf32> to vector<4x32xf32>
    %1341 = arith.mulf %1340, %1339 : vector<4x32xf32>
    %1342 = arith.addf %1337, %1341 : vector<4x32xf32>
    %cst_318 = arith.constant 1.000000e-30 : f32
    %1343 = vector.broadcast %cst_318 : f32 to vector<4x32xf32>
    %1344 = arith.maximumf %1342, %1343 : vector<4x32xf32>
    %1345 = math.log %1344 : vector<4x32xf32>
    %1346 = vector.broadcast %1288 : vector<4x1xf32> to vector<4x32xf32>
    %1347 = arith.mulf %1346, %1345 : vector<4x32xf32>
    %1348 = math.exp %1347 : vector<4x32xf32>
    %cst_319 = arith.constant dense<0.000000e+00> : vector<4xf32>
    %1349 = vector.multi_reduction <add>, %1348, %cst_319 [1] : vector<4x32xf32> to vector<4xf32>
    %1350 = vector.shape_cast %1349 : vector<4xf32> to vector<4x1xf32>
    %1351 = vector.broadcast %1350 : vector<4x1xf32> to vector<4x32xf32>
    %1352 = arith.divf %1348, %1351 : vector<4x32xf32>
    %1353 = vector.extract_strided_slice %1352 {offsets = [0, 0], sizes = [2, 32], strides = [1, 1]} : vector<4x32xf32> to vector<2x32xf32>
    %1354 = vector.extract_strided_slice %1352 {offsets = [2, 0], sizes = [2, 32], strides = [1, 1]} : vector<4x32xf32> to vector<2x32xf32>
    %1355 = vector.shape_cast %1353 : vector<2x32xf32> to vector<2x32x1xf32>
    %1356 = vector.broadcast %1355 : vector<2x32x1xf32> to vector<2x32x16xf32>
    %1357 = arith.mulf %1356, %1200 : vector<2x32x16xf32>
    %cst_320 = arith.constant dense<0.000000e+00> : vector<2x16xf32>
    %1358 = vector.multi_reduction <add>, %1357, %cst_320 [1] : vector<2x32x16xf32> to vector<2x16xf32>
    %1359 = vector.shape_cast %1354 : vector<2x32xf32> to vector<2x32x1xf32>
    %1360 = vector.shape_cast %1252 : vector<2x16xf32> to vector<2x1x16xf32>
    %1361 = vector.broadcast %1359 : vector<2x32x1xf32> to vector<2x32x16xf32>
    %1362 = vector.broadcast %1360 : vector<2x1x16xf32> to vector<2x32x16xf32>
    %1363 = arith.mulf %1361, %1362 : vector<2x32x16xf32>
    %cst_321 = arith.constant 1.000000e+00 : f32
    %1364 = vector.broadcast %cst_321 : f32 to vector<2x32x16xf32>
    %1365 = arith.subf %1364, %1363 : vector<2x32x16xf32>
    %1366 = arith.mulf %1200, %1365 : vector<2x32x16xf32>
    %1367 = vector.shape_cast %1254 : vector<2x16xf32> to vector<2x1x16xf32>
    %1368 = vector.broadcast %1359 : vector<2x32x1xf32> to vector<2x32x16xf32>
    %1369 = vector.broadcast %1367 : vector<2x1x16xf32> to vector<2x32x16xf32>
    %1370 = arith.mulf %1368, %1369 : vector<2x32x16xf32>
    %1371 = arith.addf %1366, %1370 : vector<2x32x16xf32>
    %cst_322 = arith.constant dense<0.000000e+00> : vector<2x32xf32>
    %1372 = tpu.matmul %1358, %14, %cst_322 {dimension_numbers = #tpu.dot_dimension_numbers<[1], [0], [0], [1], [0, 0, 1, 1], [], []>} : vector<2x16xf32>, vector<16x32xf32>, vector<2x32xf32> -> vector<2x32xf32>
    %1373 = arith.addf %1255, %1372 : vector<2x32xf32>
    %cst_323 = arith.constant -2.000000e+01 : f32
    %cst_324 = arith.constant 2.000000e+01 : f32
    %1374 = vector.broadcast %cst_323 : f32 to vector<2x32xf32>
    %1375 = arith.maximumf %1374, %1373 : vector<2x32xf32>
    %1376 = vector.broadcast %cst_324 : f32 to vector<2x32xf32>
    %1377 = arith.minimumf %1376, %1375 : vector<2x32xf32>
    %1378 = arith.index_cast %c7_i32 : i32 to index
    %c0_325 = arith.constant 0 : index
    %c0_326 = arith.constant 0 : index
    %1379 = vector.load %arg9[%1378, %c0_325, %c0_326] : memref<8x2x32xf32, #tpu.memory_space<vmem>>, vector<1x2x32xf32>
    %1380 = vector.shape_cast %1379 : vector<1x2x32xf32> to vector<2x32xf32>
    %1381 = vector.shape_cast %1377 : vector<2x32xf32> to vector<1x2x32xf32>
    tpu.vector_store %arg9[%1378, %c0_325, %c0_326], %1381 {strides = array<i32>} : memref<8x2x32xf32, #tpu.memory_space<vmem>>, vector<1x2x32xf32>,
    %1382 = tpu.concatenate %1234, %1358 in 1 : vector<2x32xf32>, vector<2x16xf32> -> vector<2x48xf32>
    %c8_i32 = arith.constant 8 : i32
    %c0_327 = arith.constant 0 : index
    %c0_328 = arith.constant 0 : index
    %1383 = vector.load %arg10[%c0_327, %c0_328] : memref<2x144xf32, #tpu.memory_space<vmem>>, vector<2x48xf32>
    tpu.vector_store %arg10[%c0_327, %c0_328], %1382 {strides = array<i32>} : memref<2x144xf32, #tpu.memory_space<vmem>>, vector<2x48xf32>,
    %c0_329 = arith.constant 0 : index
    %c48 = arith.constant 48 : index
    %1384 = vector.load %arg10[%c0_329, %c48] : memref<2x144xf32, #tpu.memory_space<vmem>>, vector<2x32xf32>
    tpu.vector_store %arg10[%c0_329, %c48], %1232 {strides = array<i32>} : memref<2x144xf32, #tpu.memory_space<vmem>>, vector<2x32xf32>,
    %1385 = vector.extract_strided_slice %1352 {offsets = [0, 0], sizes = [2, 32], strides = [1, 1]} : vector<4x32xf32> to vector<2x32xf32>
    %c0_330 = arith.constant 0 : index
    %c80 = arith.constant 80 : index
    %1386 = vector.load %arg10[%c0_330, %c80] : memref<2x144xf32, #tpu.memory_space<vmem>>, vector<2x32xf32>
    tpu.vector_store %arg10[%c0_330, %c80], %1385 {strides = array<i32>} : memref<2x144xf32, #tpu.memory_space<vmem>>, vector<2x32xf32>,
    %1387 = vector.extract_strided_slice %1352 {offsets = [2, 0], sizes = [2, 32], strides = [1, 1]} : vector<4x32xf32> to vector<2x32xf32>
    %c0_331 = arith.constant 0 : index
    %c112 = arith.constant 112 : index
    %1388 = vector.load %arg10[%c0_331, %c112] : memref<2x144xf32, #tpu.memory_space<vmem>>, vector<2x32xf32>
    tpu.vector_store %arg10[%c0_331, %c112], %1387 {strides = array<i32>} : memref<2x144xf32, #tpu.memory_space<vmem>>, vector<2x32xf32>,
    %c0_332 = arith.constant 0 : index
    %c0_333 = arith.constant 0 : index
    %c0_334 = arith.constant 0 : index
    %1389 = vector.load %arg11[%c0_332, %c0_333, %c0_334] : memref<2x32x16xf32, #tpu.memory_space<vmem>>, vector<2x32x16xf32>
    tpu.vector_store %arg11[%c0_332, %c0_333, %c0_334], %1371 {strides = array<i32>} : memref<2x32x16xf32, #tpu.memory_space<vmem>>, vector<2x32x16xf32>,
    return
  }
  func.func @transform_0(%arg0: i32) -> (i32, i32, i32) {
    %c0_i32 = arith.constant 0 : i32
    %c0_i32_0 = arith.constant 0 : i32
    %c0_i32_1 = arith.constant 0 : i32
    return %arg0, %c0_i32, %c0_i32_0 : i32, i32, i32
  }
  func.func @transform_1(%arg0: i32) -> (i32, i32) {
    %c0_i32 = arith.constant 0 : i32
    %c0_i32_0 = arith.constant 0 : i32
    %c0_i32_1 = arith.constant 0 : i32
    return %c0_i32, %c0_i32_0 : i32, i32
  }
  func.func @transform_2(%arg0: i32) -> (i32, i32, i32) {
    %c0_i32 = arith.constant 0 : i32
    %c0_i32_0 = arith.constant 0 : i32
    %c0_i32_1 = arith.constant 0 : i32
    %c0_i32_2 = arith.constant 0 : i32
    return %c0_i32, %c0_i32_0, %c0_i32_1 : i32, i32, i32
  }
  func.func @transform_3(%arg0: i32) -> (i32, i32) {
    %c0_i32 = arith.constant 0 : i32
    %c0_i32_0 = arith.constant 0 : i32
    %c0_i32_1 = arith.constant 0 : i32
    return %c0_i32, %c0_i32_0 : i32, i32
  }
  func.func @transform_4(%arg0: i32) -> (i32, i32) {
    %c0_i32 = arith.constant 0 : i32
    %c0_i32_0 = arith.constant 0 : i32
    %c0_i32_1 = arith.constant 0 : i32
    return %c0_i32, %c0_i32_0 : i32, i32
  }
  func.func @transform_5(%arg0: i32) -> (i32, i32) {
    %c0_i32 = arith.constant 0 : i32
    %c0_i32_0 = arith.constant 0 : i32
    %c0_i32_1 = arith.constant 0 : i32
    return %c0_i32, %c0_i32_0 : i32, i32
  }
  func.func @transform_6(%arg0: i32) -> (i32, i32) {
    %c0_i32 = arith.constant 0 : i32
    %c0_i32_0 = arith.constant 0 : i32
    %c0_i32_1 = arith.constant 0 : i32
    return %c0_i32, %c0_i32_0 : i32, i32
  }
  func.func @transform_7(%arg0: i32) -> (i32, i32) {
    %c0_i32 = arith.constant 0 : i32
    %c0_i32_0 = arith.constant 0 : i32
    %c0_i32_1 = arith.constant 0 : i32
    return %c0_i32, %c0_i32_0 : i32, i32
  }
  func.func @transform_8(%arg0: i32) -> (i32, i32, i32) {
    %c0_i32 = arith.constant 0 : i32
    %c0_i32_0 = arith.constant 0 : i32
    %c0_i32_1 = arith.constant 0 : i32
    return %arg0, %c0_i32, %c0_i32_0 : i32, i32, i32
  }
  func.func @transform_9(%arg0: i32) -> (i32, i32) {
    %c0_i32 = arith.constant 0 : i32
    %c0_i32_0 = arith.constant 0 : i32
    %c0_i32_1 = arith.constant 0 : i32
    return %c0_i32, %c0_i32_0 : i32, i32
  }
  func.func @transform_10(%arg0: i32) -> (i32, i32, i32) {
    %c0_i32 = arith.constant 0 : i32
    %c0_i32_0 = arith.constant 0 : i32
    %c0_i32_1 = arith.constant 0 : i32
    %c0_i32_2 = arith.constant 0 : i32
    return %c0_i32, %c0_i32_0, %c0_i32_1 : i32, i32, i32
  }
}

</mosaic_0001>

<llo_original>
// kernel: ntm_forward_sequence.1
$region0: #{ntm_forward_sequence.1}
  #allocation0 [shape = 'u32[]', space=smem, size = 0x4, offset = 0x4, fixed_abs, tag = 'smem constant byte address 0x4 - core index']
  #allocation1 [shape = 'u32[144,128]{1,0:T(1,128)}', space=vmem, size = 0x12000, scoped, tag = 'internal scratch']
  %s0 = inlined_call_operand.vmem [shape: f32[8,2,128], index: 0, kind: input, shape index: {}]
  %s1 = inlined_call_operand.vmem [shape: f32[2,144], index: 1, kind: input, shape index: {}]
  %s2 = inlined_call_operand.vmem [shape: f32[2,32,16], index: 2, kind: input, shape index: {}]
  %s3 = inlined_call_operand.vmem [shape: f32[32,64], index: 3, kind: input, shape index: {}]
  %s4 = inlined_call_operand.vmem [shape: f32[48,128], index: 4, kind: input, shape index: {}]
  %s5 = inlined_call_operand.vmem [shape: f32[32,108], index: 5, kind: input, shape index: {}]
  %s6 = inlined_call_operand.vmem [shape: f32[1,108], index: 6, kind: input, shape index: {}]
  %s7 = inlined_call_operand.vmem [shape: f32[16,32], index: 7, kind: input, shape index: {}]
  %s8 = inlined_call_operand.hbm [shape: f32[8,2,32], index: 8, kind: output, shape index: {0}]
  %s9 = inlined_call_operand.vmem [shape: f32[2,144], index: 9, kind: output, shape index: {1}]
  %s10 = inlined_call_operand.vmem [shape: f32[2,32,16], index: 10, kind: output, shape index: {2}]
  %11 = xla_tuple %s8, %s9, %s10
  %s12 = sld [smem:[#allocation0]]
  $region62: #{ntm_forward_sequence.1} parent=0
    _
  %s14 = ssub.s32 1, %s12
  %s15 = scalar_select 0, %s14, %s12
  $region1: #{ntm_forward_sequence.1} parent=0
    #allocation2 [shape = 'u8[8192]{0}', space=vmem, size = 0x2000, scoped, tag = 'output window, operand 0, single buffered']
    #allocation3 [shape = 's32[1]{0}', space=sflag, size = 0x4, scoped, tag = 'scoped memory for ntm_forward_sequence.1']
    %16 = vsyncpa [#allocation3], 0
    // Predicated region
    $region2: #{ntm_forward_sequence.1} parent=1 // pred_check
      _
    $region3: #{ntm_forward_sequence.1} parent=1 // pred_check_branch
      %18 = sbr.rel (0) target = $region5
    $region4: #{ntm_forward_sequence.1} parent=1 // pred_region
      _
    $region5: #{ntm_forward_sequence.1} parent=1 // pred_fallthru
      _
    // Predicated region
    $region6: #{ntm_forward_sequence.1} parent=1 // pred_check
      _
    $region7: #{ntm_forward_sequence.1} parent=1 // pred_check_branch
      %20 = sbr.rel (0) target = $region9
    $region8: #{ntm_forward_sequence.1} parent=1 // pred_region
      _
    $region9: #{ntm_forward_sequence.1} parent=1 // pred_fallthru
      _
    // Predicated region
    $region10: #{ntm_forward_sequence.1} parent=1 // pred_check
      _
    $region11: #{ntm_forward_sequence.1} parent=1 // pred_check_branch
      %22 = sbr.rel (0) target = $region13
    $region12: #{ntm_forward_sequence.1} parent=1 // pred_region
      _
    $region13: #{ntm_forward_sequence.1} parent=1 // pred_fallthru
      _
    // Predicated region
    $region14: #{ntm_forward_sequence.1} parent=1 // pred_check
      _
    $region15: #{ntm_forward_sequence.1} parent=1 // pred_check_branch
      %24 = sbr.rel (0) target = $region17
    $region16: #{ntm_forward_sequence.1} parent=1 // pred_region
      _
    $region17: #{ntm_forward_sequence.1} parent=1 // pred_fallthru
      _
    // Predicated region
    $region18: #{ntm_forward_sequence.1} parent=1 // pred_check
      _
    $region19: #{ntm_forward_sequence.1} parent=1 // pred_check_branch
      %26 = sbr.rel (0) target = $region21
    $region20: #{ntm_forward_sequence.1} parent=1 // pred_region
      _
    $region21: #{ntm_forward_sequence.1} parent=1 // pred_fallthru
      _
    // Predicated region
    $region22: #{ntm_forward_sequence.1} parent=1 // pred_check
      _
    $region23: #{ntm_forward_sequence.1} parent=1 // pred_check_branch
      %28 = sbr.rel (0) target = $region25
    $region24: #{ntm_forward_sequence.1} parent=1 // pred_region
      _
    $region25: #{ntm_forward_sequence.1} parent=1 // pred_fallthru
      _
    // Predicated region
    $region26: #{ntm_forward_sequence.1} parent=1 // pred_check
      _
    $region27: #{ntm_forward_sequence.1} parent=1 // pred_check_branch
      %30 = sbr.rel (0) target = $region29
    $region28: #{ntm_forward_sequence.1} parent=1 // pred_region
      _
    $region29: #{ntm_forward_sequence.1} parent=1 // pred_fallthru
      _
    // Predicated region
    $region30: #{ntm_forward_sequence.1} parent=1 // pred_check
      _
    $region31: #{ntm_forward_sequence.1} parent=1 // pred_check_branch
      %32 = sbr.rel (0) target = $region33
    $region32: #{ntm_forward_sequence.1} parent=1 // pred_region
      _
    $region33: #{ntm_forward_sequence.1} parent=1 // pred_fallthru
      _
    %p33 = scmp.eq.s32.totalorder 0, 0
    // Predicated region
    $region34: #{ntm_forward_sequence.1} parent=1 // pred_check
      %p34 = pneg %p33
    $region35: #{ntm_forward_sequence.1} parent=1 // pred_check_branch
      %36 = sbr.rel (%p34) target = $region37
    $region36: #{ntm_forward_sequence.1} parent=1 // pred_region
      %v37 = vld [vmem:[%s1] sm:$0xf]
      %vm38 = vcmask 1041408
      %vm39 = vcmask 125954
      %vm40 = vmor %vm39, %vm38
      %41 = vst.msk [vmem:[%s9] sm:$0xf] %vm40, %v37
      %v42 = vld [vmem:[%s2] sm:$0xff]
      %v43 = vld [vmem:[%s2 + $0x8] sm:$0xff]
      %v44 = vld [vmem:[%s2 + $0x10] sm:$0xff]
      %v45 = vld [vmem:[%s2 + $0x18] sm:$0xff]
      %v46 = vld [vmem:[%s2 + $0x20] sm:$0xff]
      %v47 = vld [vmem:[%s2 + $0x28] sm:$0xff]
      %v48 = vld [vmem:[%s2 + $0x30] sm:$0xff]
      %v49 = vld [vmem:[%s2 + $0x38] sm:$0xff]
      %vm50 = vcmask 130048
      %51 = vst.msk [vmem:[%s10] sm:$0xff] %vm50, %v42
      %52 = vst.msk [vmem:[%s10 + $0x8] sm:$0xff] %vm50, %v43
      %53 = vst.msk [vmem:[%s10 + $0x10] sm:$0xff] %vm50, %v44
      %54 = vst.msk [vmem:[%s10 + $0x18] sm:$0xff] %vm50, %v45
      %55 = vst.msk [vmem:[%s10 + $0x20] sm:$0xff] %vm50, %v46
      %56 = vst.msk [vmem:[%s10 + $0x28] sm:$0xff] %vm50, %v47
      %57 = vst.msk [vmem:[%s10 + $0x30] sm:$0xff] %vm50, %v48
      %58 = vst.msk [vmem:[%s10 + $0x38] sm:$0xff] %vm50, %v49
    $region37: #{ntm_forward_sequence.1} parent=1 // pred_fallthru
      _
    %v59 = vld [vmem:[%s9] sm:$0xf]
    %v61 = vcombine.low %v59, %v59
    %v63 = vunpack.c.l.s4 1983009808
    %v64 = vunpack.c.0.s8 %v63
    %v65 = vlaneseq
    %v66 = vshrl.u32 %v65, 7
    %v67 = vsub.s32 %v64, %v66
    %v68 = vrot.slane %v61, %v67
    %v70 = vunpack.c.l.s4 1983009808
    %v71 = vunpack.c.0.s8 %v70
    %v72 = vlaneseq
    %v73 = vshrl.u32 %v72, 7
    %v74 = vsub.s32 %v71, %v73
    %v75 = vrot.slane %v59, %v74
    %v76 = vcombine.high %v68, %v68
    %77 = vrot.lane.b32.xlu0 %v68, 96
    %v78 = vpop.permute.xlu0 %77
    %79 = vrot.lane.b32.xlu0 %v76, 96
    %v80 = vpop.permute.xlu0 %79
    %vm81 = vcmask 785408
    %v82 = vsel %vm81, %v78, %v80
    %vm84 = vcmask 1041408
    %v85 = vsel %vm84, %v59, %v82
    %v86 = vld [vmem:[%s10] sm:$0xff]
    %v87 = vld [vmem:[%s10 + $0x8] sm:$0xff]
    %v88 = vld [vmem:[%s10 + $0x10] sm:$0xff]
    %v89 = vld [vmem:[%s10 + $0x18] sm:$0xff]
    %v90 = vld [vmem:[%s10 + $0x20] sm:$0xff]
    %v91 = vld [vmem:[%s10 + $0x28] sm:$0xff]
    %v92 = vld [vmem:[%s10 + $0x30] sm:$0xff]
    %v93 = vld [vmem:[%s10 + $0x38] sm:$0xff]
    %v94 = vld [vmem:[%s3] sm:$0xff]
    %v95 = vld [vmem:[%s3 + $0x8] sm:$0xff]
    %v96 = vld [vmem:[%s3 + $0x10] sm:$0xff]
    %v97 = vld [vmem:[%s3 + $0x18] sm:$0xff]
    %v98 = vld [vmem:[%s4] sm:$0xff]
    %v99 = vld [vmem:[%s4 + $0x8] sm:$0xff]
    %v100 = vld [vmem:[%s4 + $0x10] sm:$0xff]
    %v101 = vld [vmem:[%s4 + $0x18] sm:$0xff]
    %v102 = vld [vmem:[%s4 + $0x20] sm:$0xff]
    %v103 = vld [vmem:[%s4 + $0x28] sm:$0xff]
    %v104 = vld [vmem:[%s5] sm:$0xff]
    %v105 = vld [vmem:[%s5 + $0x8] sm:$0xff]
    %v106 = vld [vmem:[%s5 + $0x10] sm:$0xff]
    %v107 = vld [vmem:[%s5 + $0x18] sm:$0xff]
    %v108 = vld [vmem:[%s6] sm:$0x1]
    %v109 = vld [vmem:[%s7] sm:$0xff]
    %v110 = vld [vmem:[%s7 + $0x8] sm:$0xff]
    %v111 = vld [vmem:[%s0] sm:$0x3]
    %vm112 = vcmask 392192
    %v113 = vsel %vm112, %v59, 0
    %115 = vmatprep.subr.mxu0 0.0
    %116 = vmatpush1.msra.mxu0 %v98
    %117 = vmatprep.subr.mxu0 0.0
    %118 = vmatpush1.msra.mxu0 %v99
    %119 = vmatprep.subr.mxu0 0.0
    %120 = vmatpush1.msra.mxu0 %v100
    %121 = vmatprep.subr.mxu0 0.0
    %122 = vmatpush1.msra.mxu0 %v101
    %123 = vmatprep.subr.mxu0 0.0
    %124 = vmatpush1.msra.mxu0 %v102
    %125 = vmatprep.subr.mxu0 0.0
    %126 = vmatpush1.msra.mxu0 %v103
    %127 = vmatprep.subr.mxu0 0.0
    %128 = vmatpush1.msra.mxu0 0.0
    %129 = vmatprep.subr.mxu0 0.0
    %130 = vmatpush1.msra.mxu0 0.0
    %131 = vmatprep.subr.mxu0 0.0
    %132 = vmatpush1.msra.mxu0 0.0
    %133 = vmatprep.subr.mxu0 0.0
    %134 = vmatpush1.msra.mxu0 0.0
    %135 = vmatprep.subr.mxu0 0.0
    %136 = vmatpush1.msra.mxu0 0.0
    %137 = vmatprep.subr.mxu0 0.0
    %138 = vmatpush1.msra.mxu0 0.0
    %139 = vmatprep.subr.mxu0 0.0
    %140 = vmatpush1.msra.mxu0 0.0
    %141 = vmatprep.subr.mxu0 0.0
    %142 = vmatpush1.msra.mxu0 0.0
    %143 = vmatprep.subr.mxu0 0.0
    %144 = vmatpush1.msra.mxu0 0.0
    %145 = vmatprep.subr.mxu0 0.0
    %146 = vmatpush1.msra.mxu0 0.0
    %147 = vmatprep.subr.mxu0 0.0
    %148 = vmatpush1.msra.mxu0 0.0
    %149 = vmatprep.subr.mxu0 0.0
    %150 = vmatpush1.msra.mxu0 0.0
    %151 = vmatprep.subr.mxu0 0.0
    %152 = vmatpush1.msra.mxu0 0.0
    %153 = vmatprep.subr.mxu0 0.0
    %154 = vmatpush1.msra.mxu0 0.0
    %155 = vmatprep.subr.mxu0 0.0
    %156 = vmatpush1.msra.mxu0 0.0
    %157 = vmatprep.subr.mxu0 0.0
    %158 = vmatpush1.msra.mxu0 0.0
    %159 = vmatprep.subr.mxu0 0.0
    %160 = vmatpush1.msra.mxu0 0.0
    %161 = vmatprep.subr.mxu0 0.0
    %162 = vmatpush1.msra.mxu0 0.0
    %163 = vmatprep.subr.mxu0 0.0
    %164 = vmatpush1.msra.mxu0 0.0
    %165 = vmatprep.subr.mxu0 0.0
    %166 = vmatpush1.msra.mxu0 0.0
    %167 = vmatprep.subr.mxu0 0.0
    %168 = vmatpush1.msra.mxu0 0.0
    %169 = vmatprep.subr.mxu0 0.0
    %170 = vmatpush1.msra.mxu0 0.0
    %171 = vmatprep.subr.mxu0 0.0
    %172 = vmatpush1.msra.mxu0 0.0
    %173 = vmatprep.subr.mxu0 0.0
    %174 = vmatpush1.msra.mxu0 0.0
    %175 = vmatprep.subr.mxu0 0.0
    %176 = vmatpush1.msra.mxu0 0.0
    %177 = vmatprep.subr.mxu0 0.0
    %178 = vmatpush1.msra.mxu0 0.0
    %179 = vmatprep.mubr.f32.mxu0 0.0
    %180 = vmatmul.mubr.f32.gmra.mrb[0].mxu0 %v113
    %v181 = vpop.f32.mrb[0].mxu0
    %v182 = vadd.f32 0.0, %v181
    %v183 = vpop.f32.mrb[0].mxu0
    %184 = vdwg.mxu0
    %v185 = vadd.f32 %v111, %v182
    %v186 = vmul.f32 %v185, 0.5
    %v187 = vtanh.pop %v186
    %v188 = vadd.f32 %v187, 1.0
    %v189 = vmul.f32 %v188, 0.5
    %v190 = vtanh.pop %v185
    %191 = vrot.lane.b32.xlu0 %v75, 112
    %v192 = vpop.permute.xlu0 %191
    %v194 = vmul.f32 %v189, %v192
    %196 = vrot.lane.b32.xlu0 %v190, 32
    %v197 = vpop.permute.xlu0 %196
    %v199 = vmul.f32 %v189, %v197
    %201 = vrot.lane.b32.xlu0 %v199, 32
    %v202 = vpop.permute.xlu0 %201
    %v204 = vadd.f32 %v194, %v202
    %v205 = vtanh.pop %v204
    %207 = vrot.lane.b32.xlu0 %v205, 32
    %v208 = vpop.permute.xlu0 %207
    %v210 = vmul.f32 %v189, %v208
    %v211 = vmax.f32 %v210, -20.0
    %v212 = vmin.f32 %v211, 20.0
    %v214 = vlaneseq
    %v215 = vshrl.u32 %v214, 7
    %v216 = vsub.s32 0, %v215
    %v217 = vrot.slane %v108, %v216
    %220 = vrot.lane.b32.xlu0 %v212, 64
    %v221 = vpop.permute.xlu0 %220
    %vm222 = vcmask 261120
    %v223 = vsel %vm222, %v221, 0
    %225 = vmatprep.subr.mxu0 0.0
    %226 = vmatpush1.msra.mxu0 %v104
    %227 = vmatprep.subr.mxu0 0.0
    %228 = vmatpush1.msra.mxu0 %v105
    %229 = vmatprep.subr.mxu0 0.0
    %230 = vmatpush1.msra.mxu0 %v106
    %231 = vmatprep.subr.mxu0 0.0
    %232 = vmatpush1.msra.mxu0 %v107
    %233 = vmatprep.subr.mxu0 0.0
    %234 = vmatpush1.msra.mxu0 0.0
    %235 = vmatprep.subr.mxu0 0.0
    %236 = vmatpush1.msra.mxu0 0.0
    %237 = vmatprep.subr.mxu0 0.0
    %238 = vmatpush1.msra.mxu0 0.0
    %239 = vmatprep.subr.mxu0 0.0
    %240 = vmatpush1.msra.mxu0 0.0
    %241 = vmatprep.subr.mxu0 0.0
    %242 = vmatpush1.msra.mxu0 0.0
    %243 = vmatprep.subr.mxu0 0.0
    %244 = vmatpush1.msra.mxu0 0.0
    %245 = vmatprep.subr.mxu0 0.0
    %246 = vmatpush1.msra.mxu0 0.0
    %247 = vmatprep.subr.mxu0 0.0
    %248 = vmatpush1.msra.mxu0 0.0
    %249 = vmatprep.subr.mxu0 0.0
    %250 = vmatpush1.msra.mxu0 0.0
    %251 = vmatprep.subr.mxu0 0.0
    %252 = vmatpush1.msra.mxu0 0.0
    %253 = vmatprep.subr.mxu0 0.0
    %254 = vmatpush1.msra.mxu0 0.0
    %255 = vmatprep.subr.mxu0 0.0
    %256 = vmatpush1.msra.mxu0 0.0
    %257 = vmatprep.subr.mxu0 0.0
    %258 = vmatpush1.msra.mxu0 0.0
    %259 = vmatprep.subr.mxu0 0.0
    %260 = vmatpush1.msra.mxu0 0.0
    %261 = vmatprep.subr.mxu0 0.0
    %262 = vmatpush1.msra.mxu0 0.0
    %263 = vmatprep.subr.mxu0 0.0
    %264 = vmatpush1.msra.mxu0 0.0
    %265 = vmatprep.subr.mxu0 0.0
    %266 = vmatpush1.msra.mxu0 0.0
    %267 = vmatprep.subr.mxu0 0.0
    %268 = vmatpush1.msra.mxu0 0.0
    %269 = vmatprep.subr.mxu0 0.0
    %270 = vmatpush1.msra.mxu0 0.0
    %271 = vmatprep.subr.mxu0 0.0
    %272 = vmatpush1.msra.mxu0 0.0
    %273 = vmatprep.subr.mxu0 0.0
    %274 = vmatpush1.msra.mxu0 0.0
    %275 = vmatprep.subr.mxu0 0.0
    %276 = vmatpush1.msra.mxu0 0.0
    %277 = vmatprep.subr.mxu0 0.0
    %278 = vmatpush1.msra.mxu0 0.0
    %279 = vmatprep.subr.mxu0 0.0
    %280 = vmatpush1.msra.mxu0 0.0
    %281 = vmatprep.subr.mxu0 0.0
    %282 = vmatpush1.msra.mxu0 0.0
    %283 = vmatprep.subr.mxu0 0.0
    %284 = vmatpush1.msra.mxu0 0.0
    %285 = vmatprep.subr.mxu0 0.0
    %286 = vmatpush1.msra.mxu0 0.0
    %287 = vmatprep.subr.mxu0 0.0
    %288 = vmatpush1.msra.mxu0 0.0
    %289 = vmatprep.mubr.f32.mxu0 0.0
    %290 = vmatmul.mubr.f32.gmra.mrb[0].mxu0 %v223
    %v291 = vpop.f32.mrb[0].mxu0
    %v292 = vadd.f32 %v217, %v291
    %v293 = vpop.f32.mrb[0].mxu0
    %294 = vdwg.mxu0
    %v296 = vrot.slane %v292, 6
    %297 = vrot.lane.b32.xlu0 %v296, 106
    %v298 = vpop.permute.xlu0 %297
    %v300 = vsel %vm84, %v292, %v298
    %v301 = vmul.f32 %v292, 0.5
    %v302 = vtanh.pop %v301
    %v303 = vadd.f32 %v302, 1.0
    %v304 = vmul.f32 %v303, 0.5
    %v305 = vtanh.pop %v292
    %v306 = vtanh.pop %v300
    %v307 = vmax.f32 %v300, 0.0
    %v308 = vand.u32 2147483647, %v300
    %v309 = vsub.f32 0.0, %v308
    %v310 = vmul.f32 %v309, 1.442695
    %v311 = vpow.pop %v310
    %v312 = vadd.f32 %v311, 1.0
    %v313 = vlog2.pop %v312
    %v314 = vmul.f32 %v313, 0.6931472
    %v315 = vadd.f32 %v307, %v314
    %v316 = vmul.f32 %v300, 0.5
    %v317 = vtanh.pop %v316
    %v318 = vadd.f32 %v317, 1.0
    %v319 = vmul.f32 %v318, 0.5
    %vm320 = vcmask 167056
    %v321 = vsel %vm320, %v300, -inf
    %322 = vmax.xlane.f32.xlu0 %v321
    %v323 = vpop.xlane.xlu0 %322
    %v324 = vsub.f32 %v300, %v323
    %v325 = vmul.f32 %v324, 1.442695
    %v326 = vpow.pop %v325
    %328 = vrot.lane.b32.xlu0 %v326, 110
    %v329 = vpop.permute.xlu0 %328
    %vm331 = vcmask 19456
    %v332 = vsel %vm331, %v329, 0.0
    %333 = vadd.xlane.f32.xlu0 %v332
    %v334 = vpop.xlane.xlu0 %333
    %v335 = vrcp.pop %v334
    %v336 = vmul.f32 %v326, %v335
    %v339 = vunpack.c.l.s4 1966171168
    %v340 = vunpack.c.0.s8 %v339
    %v341 = vlaneseq
    %v342 = vshrl.u32 %v341, 7
    %v343 = vsub.s32 %v340, %v342
    %v344 = vrot.slane %v306, %v343
    %v345 = vcombine.high %v344, %v344
    %v347 = vunpack.c.l.s4 1966171168
    %v348 = vunpack.c.0.s8 %v347
    %v349 = vlaneseq
    %v350 = vshrl.u32 %v349, 7
    %v351 = vsub.s32 %v348, %v350
    %v352 = vrot.slane %v344, %v351
    %v354 = vunpack.c.l.s4 1966171168
    %v355 = vunpack.c.0.s8 %v354
    %v356 = vlaneseq
    %v357 = vshrl.u32 %v356, 7
    %v358 = vsub.s32 %v355, %v357
    %v359 = vrot.slane %v345, %v358
    %v360 = vcombine.high %v352, %v352
    %v361 = vcombine.high %v359, %v359
    %v362 = vlaneseq
    %v363 = vshrl.u32 %v362, 7
    %v364 = vsub.s32 0, %v363
    %v365 = vrot.slane %v352, %v364
    %v366 = vlaneseq
    %v367 = vshrl.u32 %v366, 7
    %v368 = vsub.s32 0, %v367
    %v369 = vrot.slane %v359, %v368
    %v370 = vlaneseq
    %v371 = vshrl.u32 %v370, 7
    %v372 = vsub.s32 0, %v371
    %v373 = vrot.slane %v360, %v372
    %v374 = vlaneseq
    %v375 = vshrl.u32 %v374, 7
    %v376 = vsub.s32 0, %v375
    %v377 = vrot.slane %v361, %v376
    %v382 = vmul.f32 %v86, %v365
    %v383 = vmul.f32 %v87, %v365
    %v384 = vmul.f32 %v88, %v365
    %v385 = vmul.f32 %v89, %v365
    %v386 = vmul.f32 %v90, %v369
    %v387 = vmul.f32 %v91, %v369
    %v388 = vmul.f32 %v92, %v369
    %v389 = vmul.f32 %v93, %v369
    %v390 = vmul.f32 %v86, %v373
    %v391 = vmul.f32 %v87, %v373
    %v392 = vmul.f32 %v88, %v373
    %v393 = vmul.f32 %v89, %v373
    %v394 = vmul.f32 %v90, %v377
    %v395 = vmul.f32 %v91, %v377
    %v396 = vmul.f32 %v92, %v377
    %v397 = vmul.f32 %v93, %v377
    %vm398 = vcmask 130048
    %v399 = vsel %vm398, %v382, 0.0
    %400 = vadd.xlane.f32.xlu0 %v399
    %v401 = vpop.xlane.xlu0 %400
    %v402 = vsel %vm398, %v383, 0.0
    %403 = vadd.xlane.f32.xlu0 %v402
    %v404 = vpop.xlane.xlu0 %403
    %v405 = vsel %vm398, %v384, 0.0
    %406 = vadd.xlane.f32.xlu0 %v405
    %v407 = vpop.xlane.xlu0 %406
    %v408 = vsel %vm398, %v385, 0.0
    %409 = vadd.xlane.f32.xlu0 %v408
    %v410 = vpop.xlane.xlu0 %409
    %v411 = vsel %vm398, %v386, 0.0
    %412 = vadd.xlane.f32.xlu0 %v411
    %v413 = vpop.xlane.xlu0 %412
    %v414 = vsel %vm398, %v387, 0.0
    %415 = vadd.xlane.f32.xlu0 %v414
    %v416 = vpop.xlane.xlu0 %415
    %v417 = vsel %vm398, %v388, 0.0
    %418 = vadd.xlane.f32.xlu0 %v417
    %v419 = vpop.xlane.xlu0 %418
    %v420 = vsel %vm398, %v389, 0.0
    %421 = vadd.xlane.f32.xlu0 %v420
    %v422 = vpop.xlane.xlu0 %421
    %v423 = vsel %vm398, %v390, 0.0
    %424 = vadd.xlane.f32.xlu0 %v423
    %v425 = vpop.xlane.xlu0 %424
    %v426 = vsel %vm398, %v391, 0.0
    %427 = vadd.xlane.f32.xlu0 %v426
    %v428 = vpop.xlane.xlu0 %427
    %v429 = vsel %vm398, %v392, 0.0
    %430 = vadd.xlane.f32.xlu0 %v429
    %v431 = vpop.xlane.xlu0 %430
    %v432 = vsel %vm398, %v393, 0.0
    %433 = vadd.xlane.f32.xlu0 %v432
    %v434 = vpop.xlane.xlu0 %433
    %v435 = vsel %vm398, %v394, 0.0
    %436 = vadd.xlane.f32.xlu0 %v435
    %v437 = vpop.xlane.xlu0 %436
    %v438 = vsel %vm398, %v395, 0.0
    %439 = vadd.xlane.f32.xlu0 %v438
    %v440 = vpop.xlane.xlu0 %439
    %v441 = vsel %vm398, %v396, 0.0
    %442 = vadd.xlane.f32.xlu0 %v441
    %v443 = vpop.xlane.xlu0 %442
    %v444 = vsel %vm398, %v397, 0.0
    %445 = vadd.xlane.f32.xlu0 %v444
    %v446 = vpop.xlane.xlu0 %445
    %v447 = vmul.f32 %v306, %v306
    %vm448 = vcmask 125952
    %v449 = vsel %vm448, %v447, 0.0
    %450 = vadd.xlane.f32.xlu0 %v449
    %v451 = vpop.xlane.xlu0 %450
    %v452 = vmul.f32 %v86, %v86
    %v453 = vmul.f32 %v87, %v87
    %v454 = vmul.f32 %v88, %v88
    %v455 = vmul.f32 %v89, %v89
    %v456 = vmul.f32 %v90, %v90
    %v457 = vmul.f32 %v91, %v91
    %v458 = vmul.f32 %v92, %v92
    %v459 = vmul.f32 %v93, %v93
    %v460 = vsel %vm398, %v452, 0.0
    %461 = vadd.xlane.f32.xlu0 %v460
    %v462 = vpop.xlane.xlu0 %461
    %v463 = vsel %vm398, %v453, 0.0
    %464 = vadd.xlane.f32.xlu0 %v463
    %v465 = vpop.xlane.xlu0 %464
    %v466 = vsel %vm398, %v454, 0.0
    %467 = vadd.xlane.f32.xlu0 %v466
    %v468 = vpop.xlane.xlu0 %467
    %v469 = vsel %vm398, %v455, 0.0
    %470 = vadd.xlane.f32.xlu0 %v469
    %v471 = vpop.xlane.xlu0 %470
    %v472 = vsel %vm398, %v456, 0.0
    %473 = vadd.xlane.f32.xlu0 %v472
    %v474 = vpop.xlane.xlu0 %473
    %v475 = vsel %vm398, %v457, 0.0
    %476 = vadd.xlane.f32.xlu0 %v475
    %v477 = vpop.xlane.xlu0 %476
    %v478 = vsel %vm398, %v458, 0.0
    %479 = vadd.xlane.f32.xlu0 %v478
    %v480 = vpop.xlane.xlu0 %479
    %v481 = vsel %vm398, %v459, 0.0
    %482 = vadd.xlane.f32.xlu0 %v481
    %v483 = vpop.xlane.xlu0 %482
    %v492 = vlaneseq
    %v493 = vand.u32 %v492, 127
    %v494 = vlaneseq
    %v495 = vshrl.u32 %v494, 7
    %v496 = vsub.s32 %v493, %v495
    %v497 = vrot.slane %v462, %v496
    %v498 = vadd.s32 %v493, 4294967288
    %v499 = vlaneseq
    %v500 = vshrl.u32 %v499, 7
    %v501 = vsub.s32 %v498, %v500
    %v502 = vrot.slane %v465, %v501
    %vm503 = vcmask 130112
    %v504 = vsel %vm503, %v502, %v497
    %v505 = vadd.s32 %v493, 4294967280
    %v506 = vlaneseq
    %v507 = vshrl.u32 %v506, 7
    %v508 = vsub.s32 %v505, %v507
    %v509 = vrot.slane %v468, %v508
    %vm510 = vcmask 195712
    %v511 = vsel %vm510, %v509, %v504
    %v512 = vadd.s32 %v493, 4294967272
    %v513 = vlaneseq
    %v514 = vshrl.u32 %v513, 7
    %v515 = vsub.s32 %v512, %v514
    %v516 = vrot.slane %v471, %v515
    %vm517 = vcmask 261312
    %v518 = vsel %vm517, %v516, %v511
    %v519 = vlaneseq
    %v520 = vshrl.u32 %v519, 7
    %v521 = vsub.s32 %v493, %v520
    %v522 = vrot.slane %v474, %v521
    %v523 = vlaneseq
    %v524 = vshrl.u32 %v523, 7
    %v525 = vsub.s32 %v498, %v524
    %v526 = vrot.slane %v477, %v525
    %v527 = vsel %vm503, %v526, %v522
    %v528 = vlaneseq
    %v529 = vshrl.u32 %v528, 7
    %v530 = vsub.s32 %v505, %v529
    %v531 = vrot.slane %v480, %v530
    %v532 = vsel %vm510, %v531, %v527
    %v533 = vlaneseq
    %v534 = vshrl.u32 %v533, 7
    %v535 = vsub.s32 %v512, %v534
    %v536 = vrot.slane %v483, %v535
    %v537 = vsel %vm517, %v536, %v532
    %vm538 = vcmask 1041409
    %v539 = vsel %vm538, %v537, %v518
    %vm541 = vcmask 1043459
    %v542 = vsel %vm541, %v537, %v518
    %v544 = vsel %vm84, %v539, %v542
    %v545 = vmul.f32 %v451, %v544
    %v546 = vadd.f32 %v545, 1e-16
    %v547 = vrsqrt.pop %v546
    %v549 = vlaneseq
    %v550 = vshrl.u32 %v549, 7
    %v551 = vsub.s32 0, %v550
    %v552 = vrot.slane %v547, %v551
    %554 = vbcast.lane.b32.xlu0 %v552, 256
    %v555 = vpop.permute.xlu0 %554
    %s557 = sor.u32 256, 8
    %558 = vbcast.lane.b32.xlu0 %v552, %s557
    %v559 = vpop.permute.xlu0 %558
    %s561 = sor.u32 256, 16
    %562 = vbcast.lane.b32.xlu0 %v552, %s561
    %v563 = vpop.permute.xlu0 %562
    %s565 = sor.u32 256, 24
    %566 = vbcast.lane.b32.xlu0 %v552, %s565
    %v567 = vpop.permute.xlu0 %566
    %v568 = vlaneseq
    %v569 = vshrl.u32 %v568, 7
    %v570 = vsub.s32 1, %v569
    %v571 = vrot.slane %v547, %v570
    %573 = vbcast.lane.b32.xlu0 %v571, 256
    %v574 = vpop.permute.xlu0 %573
    %s576 = sor.u32 256, 8
    %577 = vbcast.lane.b32.xlu0 %v571, %s576
    %v578 = vpop.permute.xlu0 %577
    %s580 = sor.u32 256, 16
    %581 = vbcast.lane.b32.xlu0 %v571, %s580
    %v582 = vpop.permute.xlu0 %581
    %s584 = sor.u32 256, 24
    %585 = vbcast.lane.b32.xlu0 %v571, %s584
    %v586 = vpop.permute.xlu0 %585
    %v587 = vlaneseq
    %v588 = vshrl.u32 %v587, 7
    %v589 = vsub.s32 2, %v588
    %v590 = vrot.slane %v547, %v589
    %592 = vbcast.lane.b32.xlu0 %v590, 256
    %v593 = vpop.permute.xlu0 %592
    %s595 = sor.u32 256, 8
    %596 = vbcast.lane.b32.xlu0 %v590, %s595
    %v597 = vpop.permute.xlu0 %596
    %s599 = sor.u32 256, 16
    %600 = vbcast.lane.b32.xlu0 %v590, %s599
    %v601 = vpop.permute.xlu0 %600
    %s603 = sor.u32 256, 24
    %604 = vbcast.lane.b32.xlu0 %v590, %s603
    %v605 = vpop.permute.xlu0 %604
    %v606 = vlaneseq
    %v607 = vshrl.u32 %v606, 7
    %v608 = vsub.s32 3, %v607
    %v609 = vrot.slane %v547, %v608
    %611 = vbcast.lane.b32.xlu0 %v609, 256
    %v612 = vpop.permute.xlu0 %611
    %s614 = sor.u32 256, 8
    %615 = vbcast.lane.b32.xlu0 %v609, %s614
    %v616 = vpop.permute.xlu0 %615
    %s618 = sor.u32 256, 16
    %619 = vbcast.lane.b32.xlu0 %v609, %s618
    %v620 = vpop.permute.xlu0 %619
    %s622 = sor.u32 256, 24
    %623 = vbcast.lane.b32.xlu0 %v609, %s622
    %v624 = vpop.permute.xlu0 %623
    %v641 = vmul.f32 %v401, %v555
    %v642 = vmul.f32 %v404, %v559
    %v643 = vmul.f32 %v407, %v563
    %v644 = vmul.f32 %v410, %v567
    %v645 = vmul.f32 %v413, %v574
    %v646 = vmul.f32 %v416, %v578
    %v647 = vmul.f32 %v419, %v582
    %v648 = vmul.f32 %v422, %v586
    %v649 = vmul.f32 %v425, %v593
    %v650 = vmul.f32 %v428, %v597
    %v651 = vmul.f32 %v431, %v601
    %v652 = vmul.f32 %v434, %v605
    %v653 = vmul.f32 %v437, %v612
    %v654 = vmul.f32 %v440, %v616
    %v655 = vmul.f32 %v443, %v620
    %v656 = vmul.f32 %v446, %v624
    %658 = vset.pattern.permute.xlu0 16
    %659 = vperm.xlu0 %658, %v315
    %v660 = vpop.permute.xlu0 %659
    %678 = vset.pattern.permute.xlu0 0
    %679 = vperm.xlu0 %678, %v641
    %v680 = vpop.permute.xlu0 %679
    %681 = vset.pattern.permute.xlu0 0
    %682 = vperm.xlu0 %681, %v642
    %v683 = vpop.permute.xlu0 %682
    %684 = vset.pattern.permute.xlu0 0
    %685 = vperm.xlu0 %684, %v643
    %v686 = vpop.permute.xlu0 %685
    %687 = vset.pattern.permute.xlu0 0
    %688 = vperm.xlu0 %687, %v644
    %v689 = vpop.permute.xlu0 %688
    %690 = vset.pattern.permute.xlu0 0
    %691 = vperm.xlu0 %690, %v645
    %v692 = vpop.permute.xlu0 %691
    %693 = vset.pattern.permute.xlu0 0
    %694 = vperm.xlu0 %693, %v646
    %v695 = vpop.permute.xlu0 %694
    %696 = vset.pattern.permute.xlu0 0
    %697 = vperm.xlu0 %696, %v647
    %v698 = vpop.permute.xlu0 %697
    %699 = vset.pattern.permute.xlu0 0
    %700 = vperm.xlu0 %699, %v648
    %v701 = vpop.permute.xlu0 %700
    %702 = vset.pattern.permute.xlu0 0
    %703 = vperm.xlu0 %702, %v649
    %v704 = vpop.permute.xlu0 %703
    %705 = vset.pattern.permute.xlu0 0
    %706 = vperm.xlu0 %705, %v650
    %v707 = vpop.permute.xlu0 %706
    %708 = vset.pattern.permute.xlu0 0
    %709 = vperm.xlu0 %708, %v651
    %v710 = vpop.permute.xlu0 %709
    %711 = vset.pattern.permute.xlu0 0
    %712 = vperm.xlu0 %711, %v652
    %v713 = vpop.permute.xlu0 %712
    %714 = vset.pattern.permute.xlu0 0
    %715 = vperm.xlu0 %714, %v653
    %v716 = vpop.permute.xlu0 %715
    %717 = vset.pattern.permute.xlu0 0
    %718 = vperm.xlu0 %717, %v654
    %v719 = vpop.permute.xlu0 %718
    %720 = vset.pattern.permute.xlu0 0
    %721 = vperm.xlu0 %720, %v655
    %v722 = vpop.permute.xlu0 %721
    %723 = vset.pattern.permute.xlu0 0
    %724 = vperm.xlu0 %723, %v656
    %v725 = vpop.permute.xlu0 %724
    %v726 = vlaneseq
    %v727 = vshrl.u32 %v726, 7
    %v728 = vsub.s32 %v493, %v727
    %v729 = vrot.slane %v680, %v728
    %v730 = vlaneseq
    %v731 = vshrl.u32 %v730, 7
    %v732 = vsub.s32 %v498, %v731
    %v733 = vrot.slane %v683, %v732
    %v734 = vsel %vm503, %v733, %v729
    %v735 = vlaneseq
    %v736 = vshrl.u32 %v735, 7
    %v737 = vsub.s32 %v505, %v736
    %v738 = vrot.slane %v686, %v737
    %v739 = vsel %vm510, %v738, %v734
    %v740 = vlaneseq
    %v741 = vshrl.u32 %v740, 7
    %v742 = vsub.s32 %v512, %v741
    %v743 = vrot.slane %v689, %v742
    %v744 = vsel %vm517, %v743, %v739
    %v745 = vlaneseq
    %v746 = vshrl.u32 %v745, 7
    %v747 = vsub.s32 %v493, %v746
    %v748 = vrot.slane %v692, %v747
    %v749 = vlaneseq
    %v750 = vshrl.u32 %v749, 7
    %v751 = vsub.s32 %v498, %v750
    %v752 = vrot.slane %v695, %v751
    %v753 = vsel %vm503, %v752, %v748
    %v754 = vlaneseq
    %v755 = vshrl.u32 %v754, 7
    %v756 = vsub.s32 %v505, %v755
    %v757 = vrot.slane %v698, %v756
    %v758 = vsel %vm510, %v757, %v753
    %v759 = vlaneseq
    %v760 = vshrl.u32 %v759, 7
    %v761 = vsub.s32 %v512, %v760
    %v762 = vrot.slane %v701, %v761
    %v763 = vsel %vm517, %v762, %v758
    %v764 = vlaneseq
    %v765 = vshrl.u32 %v764, 7
    %v766 = vsub.s32 %v493, %v765
    %v767 = vrot.slane %v704, %v766
    %v768 = vlaneseq
    %v769 = vshrl.u32 %v768, 7
    %v770 = vsub.s32 %v498, %v769
    %v771 = vrot.slane %v707, %v770
    %v772 = vsel %vm503, %v771, %v767
    %v773 = vlaneseq
    %v774 = vshrl.u32 %v773, 7
    %v775 = vsub.s32 %v505, %v774
    %v776 = vrot.slane %v710, %v775
    %v777 = vsel %vm510, %v776, %v772
    %v778 = vlaneseq
    %v779 = vshrl.u32 %v778, 7
    %v780 = vsub.s32 %v512, %v779
    %v781 = vrot.slane %v713, %v780
    %v782 = vsel %vm517, %v781, %v777
    %v783 = vlaneseq
    %v784 = vshrl.u32 %v783, 7
    %v785 = vsub.s32 %v493, %v784
    %v786 = vrot.slane %v716, %v785
    %v787 = vlaneseq
    %v788 = vshrl.u32 %v787, 7
    %v789 = vsub.s32 %v498, %v788
    %v790 = vrot.slane %v719, %v789
    %v791 = vsel %vm503, %v790, %v786
    %v792 = vlaneseq
    %v793 = vshrl.u32 %v792, 7
    %v794 = vsub.s32 %v505, %v793
    %v795 = vrot.slane %v722, %v794
    %v796 = vsel %vm510, %v795, %v791
    %v797 = vlaneseq
    %v798 = vshrl.u32 %v797, 7
    %v799 = vsub.s32 %v512, %v798
    %v800 = vrot.slane %v725, %v799
    %v801 = vsel %vm517, %v800, %v796
    %v802 = vsel %vm538, %v763, %v744
    %vm803 = vcmask 1042434
    %v804 = vsel %vm803, %v782, %v802
    %v805 = vsel %vm541, %v801, %v804
    %v807 = vmul.f32 %v660, %v805
    %v808 = vmul.f32 %v807, 1.442695
    %v809 = vpow.pop %v808
    %vm810 = vcmask 257024
    %v811 = vsel %vm810, %v809, 0.0
    %812 = vadd.xlane.f32.xlu0 %v811
    %v813 = vpop.xlane.xlu0 %812
    %v814 = vrcp.pop %v813
    %v815 = vmul.f32 %v809, %v814
    %817 = vset.pattern.permute.xlu0 17
    %818 = vperm.xlu0 %817, %v319
    %v819 = vpop.permute.xlu0 %818
    %v821 = vmul.f32 %v819, %v815
    %v822 = vsub.f32 1.0, %v319
    %824 = vset.pattern.permute.xlu0 17
    %825 = vperm.xlu0 %824, %v822
    %v826 = vpop.permute.xlu0 %825
    %v828 = vmul.f32 %v826, %v85
    %830 = vrot.lane.b32.xlu0 %v828, 48
    %v831 = vpop.permute.xlu0 %830
    %v833 = vadd.f32 %v821, %v831
    %v835 = vsel %vm222, %v833, 0
    %837 = vmatprep.subr.mxu0 0.0
    %838 = vmatpush1.msra.mxu0 %v94
    %839 = vmatprep.subr.mxu0 0.0
    %840 = vmatpush1.msra.mxu0 %v95
    %841 = vmatprep.subr.mxu0 0.0
    %842 = vmatpush1.msra.mxu0 %v96
    %843 = vmatprep.subr.mxu0 0.0
    %844 = vmatpush1.msra.mxu0 %v97
    %845 = vmatprep.subr.mxu0 0.0
    %846 = vmatpush1.msra.mxu0 0.0
    %847 = vmatprep.subr.mxu0 0.0
    %848 = vmatpush1.msra.mxu0 0.0
    %849 = vmatprep.subr.mxu0 0.0
    %850 = vmatpush1.msra.mxu0 0.0
    %851 = vmatprep.subr.mxu0 0.0
    %852 = vmatpush1.msra.mxu0 0.0
    %853 = vmatprep.subr.mxu0 0.0
    %854 = vmatpush1.msra.mxu0 0.0
    %855 = vmatprep.subr.mxu0 0.0
    %856 = vmatpush1.msra.mxu0 0.0
    %857 = vmatprep.subr.mxu0 0.0
    %858 = vmatpush1.msra.mxu0 0.0
    %859 = vmatprep.subr.mxu0 0.0
    %860 = vmatpush1.msra.mxu0 0.0
    %861 = vmatprep.subr.mxu0 0.0
    %862 = vmatpush1.msra.mxu0 0.0
    %863 = vmatprep.subr.mxu0 0.0
    %864 = vmatpush1.msra.mxu0 0.0
    %865 = vmatprep.subr.mxu0 0.0
    %866 = vmatpush1.msra.mxu0 0.0
    %867 = vmatprep.subr.mxu0 0.0
    %868 = vmatpush1.msra.mxu0 0.0
    %869 = vmatprep.subr.mxu0 0.0
    %870 = vmatpush1.msra.mxu0 0.0
    %871 = vmatprep.subr.mxu0 0.0
    %872 = vmatpush1.msra.mxu0 0.0
    %873 = vmatprep.subr.mxu0 0.0
    %874 = vmatpush1.msra.mxu0 0.0
    %875 = vmatprep.subr.mxu0 0.0
    %876 = vmatpush1.msra.mxu0 0.0
    %877 = vmatprep.subr.mxu0 0.0
    %878 = vmatpush1.msra.mxu0 0.0
    %879 = vmatprep.subr.mxu0 0.0
    %880 = vmatpush1.msra.mxu0 0.0
    %881 = vmatprep.subr.mxu0 0.0
    %882 = vmatpush1.msra.mxu0 0.0
    %883 = vmatprep.subr.mxu0 0.0
    %884 = vmatpush1.msra.mxu0 0.0
    %885 = vmatprep.subr.mxu0 0.0
    %886 = vmatpush1.msra.mxu0 0.0
    %887 = vmatprep.subr.mxu0 0.0
    %888 = vmatpush1.msra.mxu0 0.0
    %889 = vmatprep.subr.mxu0 0.0
    %890 = vmatpush1.msra.mxu0 0.0
    %891 = vmatprep.subr.mxu0 0.0
    %892 = vmatpush1.msra.mxu0 0.0
    %893 = vmatprep.subr.mxu0 0.0
    %894 = vmatpush1.msra.mxu0 0.0
    %895 = vmatprep.subr.mxu0 0.0
    %896 = vmatpush1.msra.mxu0 0.0
    %897 = vmatprep.subr.mxu0 0.0
    %898 = vmatpush1.msra.mxu0 0.0
    %899 = vmatprep.subr.mxu0 0.0
    %900 = vmatpush1.msra.mxu0 0.0
    %901 = vmatprep.mubr.f32.mxu0 0.0
    %902 = vmatmul.mubr.f32.gmra.mrb[0].mxu0 %v835
    %v903 = vpop.f32.mrb[0].mxu0
    %v904 = vadd.f32 0.0, %v903
    %v905 = vpop.f32.mrb[0].mxu0
    %906 = vdwg.mxu0
    %908 = vset.pattern.permute.xlu0 18
    %909 = vperm.xlu0 %908, %v336
    %v910 = vpop.permute.xlu0 %909
    %v912 = vmul.f32 %v910, %v833
    %913 = vset.pattern.permute.xlu0 19
    %914 = vperm.xlu0 %913, %v336
    %v915 = vpop.permute.xlu0 %914
    %v917 = vmul.f32 %v915, %v904
    %v918 = vadd.f32 %v912, %v917
    %919 = vset.pattern.permute.xlu0 20
    %920 = vperm.xlu0 %919, %v336
    %v921 = vpop.permute.xlu0 %920
    %v923 = vmul.f32 %v921, %v904
    %925 = vrot.lane.b32.xlu0 %v923, 96
    %v926 = vpop.permute.xlu0 %925
    %v928 = vadd.f32 %v918, %v926
    %v929 = vmax.f32 %v928, 1e-30
    %v930 = vlog2.pop %v929
    %v931 = vmul.f32 %v930, 0.6931472
    %932 = vset.pattern.permute.xlu0 21
    %933 = vperm.xlu0 %932, %v315
    %v934 = vpop.permute.xlu0 %933
    %v936 = vmul.f32 %v934, %v931
    %v937 = vmul.f32 %v936, 1.442695
    %v938 = vpow.pop %v937
    %v939 = vsel %vm810, %v938, 0.0
    %940 = vadd.xlane.f32.xlu0 %v939
    %v941 = vpop.xlane.xlu0 %940
    %v942 = vrcp.pop %v941
    %v943 = vmul.f32 %v938, %v942
    %v944 = vlaneseq
    %v945 = vshrl.u32 %v944, 7
    %v946 = vsub.s32 0, %v945
    %v947 = vrot.slane %v943, %v946
    %949 = vbcast.lane.b32.xlu0 %v947, 256
    %v950 = vpop.permute.xlu0 %949
    %s952 = sor.u32 256, 8
    %953 = vbcast.lane.b32.xlu0 %v947, %s952
    %v954 = vpop.permute.xlu0 %953
    %s956 = sor.u32 256, 16
    %957 = vbcast.lane.b32.xlu0 %v947, %s956
    %v958 = vpop.permute.xlu0 %957
    %s960 = sor.u32 256, 24
    %961 = vbcast.lane.b32.xlu0 %v947, %s960
    %v962 = vpop.permute.xlu0 %961
    %v963 = vlaneseq
    %v964 = vshrl.u32 %v963, 7
    %v965 = vsub.s32 1, %v964
    %v966 = vrot.slane %v943, %v965
    %968 = vbcast.lane.b32.xlu0 %v966, 256
    %v969 = vpop.permute.xlu0 %968
    %s971 = sor.u32 256, 8
    %972 = vbcast.lane.b32.xlu0 %v966, %s971
    %v973 = vpop.permute.xlu0 %972
    %s975 = sor.u32 256, 16
    %976 = vbcast.lane.b32.xlu0 %v966, %s975
    %v977 = vpop.permute.xlu0 %976
    %s979 = sor.u32 256, 24
    %980 = vbcast.lane.b32.xlu0 %v966, %s979
    %v981 = vpop.permute.xlu0 %980
    %v982 = vmul.f32 %v950, %v86
    %v983 = vmul.f32 %v954, %v87
    %v984 = vmul.f32 %v958, %v88
    %v985 = vmul.f32 %v962, %v89
    %v986 = vmul.f32 %v969, %v90
    %v987 = vmul.f32 %v973, %v91
    %v988 = vmul.f32 %v977, %v92
    %v989 = vmul.f32 %v981, %v93
    %v990 = vsel %vm398, %v982, 0.0
    %v991 = vsel %vm398, %v983, 0.0
    %v992 = vadd.f32 %v990, %v991
    %v993 = vsel %vm398, %v984, 0.0
    %v994 = vadd.f32 %v992, %v993
    %v995 = vsel %vm398, %v985, 0.0
    %v996 = vadd.f32 %v994, %v995
    %v997 = vrot.slane %v996, 4
    %v998 = vadd.f32 %v996, %v997
    %v999 = vrot.slane %v998, 2
    %v1000 = vadd.f32 %v998, %v999
    %v1001 = vrot.slane %v1000, 1
    %v1002 = vadd.f32 %v1000, %v1001
    %v1003 = vsel %vm398, %v986, 0.0
    %v1004 = vsel %vm398, %v987, 0.0
    %v1005 = vadd.f32 %v1003, %v1004
    %v1006 = vsel %vm398, %v988, 0.0
    %v1007 = vadd.f32 %v1005, %v1006
    %v1008 = vsel %vm398, %v989, 0.0
    %v1009 = vadd.f32 %v1007, %v1008
    %v1010 = vrot.slane %v1009, 4
    %v1011 = vadd.f32 %v1009, %v1010
    %v1012 = vrot.slane %v1011, 2
    %v1013 = vadd.f32 %v1011, %v1012
    %v1014 = vrot.slane %v1013, 1
    %v1015 = vadd.f32 %v1013, %v1014
    %v1016 = vlaneseq
    %v1017 = vshrl.u32 %v1016, 7
    %v1018 = vsub.s32 2, %v1017
    %v1019 = vrot.slane %v943, %v1018
    %1021 = vbcast.lane.b32.xlu0 %v1019, 256
    %v1022 = vpop.permute.xlu0 %1021
    %s1024 = sor.u32 256, 8
    %1025 = vbcast.lane.b32.xlu0 %v1019, %s1024
    %v1026 = vpop.permute.xlu0 %1025
    %s1028 = sor.u32 256, 16
    %1029 = vbcast.lane.b32.xlu0 %v1019, %s1028
    %v1030 = vpop.permute.xlu0 %1029
    %s1032 = sor.u32 256, 24
    %1033 = vbcast.lane.b32.xlu0 %v1019, %s1032
    %v1034 = vpop.permute.xlu0 %1033
    %v1035 = vlaneseq
    %v1036 = vshrl.u32 %v1035, 7
    %v1037 = vsub.s32 3, %v1036
    %v1038 = vrot.slane %v943, %v1037
    %1040 = vbcast.lane.b32.xlu0 %v1038, 256
    %v1041 = vpop.permute.xlu0 %1040
    %s1043 = sor.u32 256, 8
    %1044 = vbcast.lane.b32.xlu0 %v1038, %s1043
    %v1045 = vpop.permute.xlu0 %1044
    %s1047 = sor.u32 256, 16
    %1048 = vbcast.lane.b32.xlu0 %v1038, %s1047
    %v1049 = vpop.permute.xlu0 %1048
    %s1051 = sor.u32 256, 24
    %1052 = vbcast.lane.b32.xlu0 %v1038, %s1051
    %v1053 = vpop.permute.xlu0 %1052
    %v1056 = vunpack.c.l.s4 1966171168
    %v1057 = vunpack.c.0.s8 %v1056
    %v1058 = vlaneseq
    %v1059 = vshrl.u32 %v1058, 7
    %v1060 = vsub.s32 %v1057, %v1059
    %v1061 = vrot.slane %v304, %v1060
    %v1062 = vcombine.high %v1061, %v1061
    %v1064 = vunpack.c.l.s4 1966171168
    %v1065 = vunpack.c.0.s8 %v1064
    %v1066 = vlaneseq
    %v1067 = vshrl.u32 %v1066, 7
    %v1068 = vsub.s32 %v1065, %v1067
    %v1069 = vrot.slane %v1061, %v1068
    %v1071 = vunpack.c.l.s4 1966171168
    %v1072 = vunpack.c.0.s8 %v1071
    %v1073 = vlaneseq
    %v1074 = vshrl.u32 %v1073, 7
    %v1075 = vsub.s32 %v1072, %v1074
    %v1076 = vrot.slane %v1062, %v1075
    %v1077 = vlaneseq
    %v1078 = vshrl.u32 %v1077, 7
    %v1079 = vsub.s32 0, %v1078
    %v1080 = vrot.slane %v1069, %v1079
    %v1081 = vlaneseq
    %v1082 = vshrl.u32 %v1081, 7
    %v1083 = vsub.s32 0, %v1082
    %v1084 = vrot.slane %v1076, %v1083
    %v1087 = vmul.f32 %v1022, %v1080
    %v1088 = vmul.f32 %v1026, %v1080
    %v1089 = vmul.f32 %v1030, %v1080
    %v1090 = vmul.f32 %v1034, %v1080
    %v1091 = vmul.f32 %v1041, %v1084
    %v1092 = vmul.f32 %v1045, %v1084
    %v1093 = vmul.f32 %v1049, %v1084
    %v1094 = vmul.f32 %v1053, %v1084
    %v1095 = vsub.f32 1.0, %v1087
    %v1096 = vsub.f32 1.0, %v1088
    %v1097 = vsub.f32 1.0, %v1089
    %v1098 = vsub.f32 1.0, %v1090
    %v1099 = vsub.f32 1.0, %v1091
    %v1100 = vsub.f32 1.0, %v1092
    %v1101 = vsub.f32 1.0, %v1093
    %v1102 = vsub.f32 1.0, %v1094
    %1111 = vrot.lane.b32.xlu0 %v1095, 84
    %v1112 = vpop.permute.xlu0 %1111
    %1113 = vrot.lane.b32.xlu0 %v1096, 84
    %v1114 = vpop.permute.xlu0 %1113
    %1115 = vrot.lane.b32.xlu0 %v1097, 84
    %v1116 = vpop.permute.xlu0 %1115
    %1117 = vrot.lane.b32.xlu0 %v1098, 84
    %v1118 = vpop.permute.xlu0 %1117
    %1119 = vrot.lane.b32.xlu0 %v1099, 84
    %v1120 = vpop.permute.xlu0 %1119
    %1121 = vrot.lane.b32.xlu0 %v1100, 84
    %v1122 = vpop.permute.xlu0 %1121
    %1123 = vrot.lane.b32.xlu0 %v1101, 84
    %v1124 = vpop.permute.xlu0 %1123
    %1125 = vrot.lane.b32.xlu0 %v1102, 84
    %v1126 = vpop.permute.xlu0 %1125
    %v1135 = vmul.f32 %v86, %v1112
    %v1136 = vmul.f32 %v87, %v1114
    %v1137 = vmul.f32 %v88, %v1116
    %v1138 = vmul.f32 %v89, %v1118
    %v1139 = vmul.f32 %v90, %v1120
    %v1140 = vmul.f32 %v91, %v1122
    %v1141 = vmul.f32 %v92, %v1124
    %v1142 = vmul.f32 %v93, %v1126
    %v1145 = vunpack.c.l.s4 1966171168
    %v1146 = vunpack.c.0.s8 %v1145
    %v1147 = vlaneseq
    %v1148 = vshrl.u32 %v1147, 7
    %v1149 = vsub.s32 %v1146, %v1148
    %v1150 = vrot.slane %v305, %v1149
    %v1151 = vcombine.high %v1150, %v1150
    %v1153 = vunpack.c.l.s4 1966171168
    %v1154 = vunpack.c.0.s8 %v1153
    %v1155 = vlaneseq
    %v1156 = vshrl.u32 %v1155, 7
    %v1157 = vsub.s32 %v1154, %v1156
    %v1158 = vrot.slane %v1150, %v1157
    %v1160 = vunpack.c.l.s4 1966171168
    %v1161 = vunpack.c.0.s8 %v1160
    %v1162 = vlaneseq
    %v1163 = vshrl.u32 %v1162, 7
    %v1164 = vsub.s32 %v1161, %v1163
    %v1165 = vrot.slane %v1151, %v1164
    %v1166 = vlaneseq
    %v1167 = vshrl.u32 %v1166, 7
    %v1168 = vsub.s32 0, %v1167
    %v1169 = vrot.slane %v1158, %v1168
    %v1170 = vlaneseq
    %v1171 = vshrl.u32 %v1170, 7
    %v1172 = vsub.s32 0, %v1171
    %v1173 = vrot.slane %v1165, %v1172
    %v1176 = vmul.f32 %v1022, %v1169
    %v1177 = vmul.f32 %v1026, %v1169
    %v1178 = vmul.f32 %v1030, %v1169
    %v1179 = vmul.f32 %v1034, %v1169
    %v1180 = vmul.f32 %v1041, %v1173
    %v1181 = vmul.f32 %v1045, %v1173
    %v1182 = vmul.f32 %v1049, %v1173
    %v1183 = vmul.f32 %v1053, %v1173
    %1192 = vrot.lane.b32.xlu0 %v1176, 68
    %v1193 = vpop.permute.xlu0 %1192
    %1194 = vrot.lane.b32.xlu0 %v1177, 68
    %v1195 = vpop.permute.xlu0 %1194
    %1196 = vrot.lane.b32.xlu0 %v1178, 68
    %v1197 = vpop.permute.xlu0 %1196
    %1198 = vrot.lane.b32.xlu0 %v1179, 68
    %v1199 = vpop.permute.xlu0 %1198
    %1200 = vrot.lane.b32.xlu0 %v1180, 68
    %v1201 = vpop.permute.xlu0 %1200
    %1202 = vrot.lane.b32.xlu0 %v1181, 68
    %v1203 = vpop.permute.xlu0 %1202
    %1204 = vrot.lane.b32.xlu0 %v1182, 68
    %v1205 = vpop.permute.xlu0 %1204
    %1206 = vrot.lane.b32.xlu0 %v1183, 68
    %v1207 = vpop.permute.xlu0 %1206
    %v1216 = vadd.f32 %v1135, %v1193
    %v1217 = vadd.f32 %v1136, %v1195
    %v1218 = vadd.f32 %v1137, %v1197
    %v1219 = vadd.f32 %v1138, %v1199
    %v1220 = vadd.f32 %v1139, %v1201
    %v1221 = vadd.f32 %v1140, %v1203
    %v1222 = vadd.f32 %v1141, %v1205
    %v1223 = vadd.f32 %v1142, %v1207
    %v1226 = vsel %vm538, %v1015, %v1002
    %v1227 = vsel %vm398, %v1226, 0
    %1229 = vmatprep.subr.mxu0 0.0
    %1230 = vmatpush1.msra.mxu0 %v109
    %1231 = vmatprep.subr.mxu0 0.0
    %1232 = vmatpush1.msra.mxu0 %v110
    %1233 = vmatprep.subr.mxu0 0.0
    %1234 = vmatpush1.msra.mxu0 0.0
    %1235 = vmatprep.subr.mxu0 0.0
    %1236 = vmatpush1.msra.mxu0 0.0
    %1237 = vmatprep.subr.mxu0 0.0
    %1238 = vmatpush1.msra.mxu0 0.0
    %1239 = vmatprep.subr.mxu0 0.0
    %1240 = vmatpush1.msra.mxu0 0.0
    %1241 = vmatprep.subr.mxu0 0.0
    %1242 = vmatpush1.msra.mxu0 0.0
    %1243 = vmatprep.subr.mxu0 0.0
    %1244 = vmatpush1.msra.mxu0 0.0
    %1245 = vmatprep.subr.mxu0 0.0
    %1246 = vmatpush1.msra.mxu0 0.0
    %1247 = vmatprep.subr.mxu0 0.0
    %1248 = vmatpush1.msra.mxu0 0.0
    %1249 = vmatprep.subr.mxu0 0.0
    %1250 = vmatpush1.msra.mxu0 0.0
    %1251 = vmatprep.subr.mxu0 0.0
    %1252 = vmatpush1.msra.mxu0 0.0
    %1253 = vmatprep.subr.mxu0 0.0
    %1254 = vmatpush1.msra.mxu0 0.0
    %1255 = vmatprep.subr.mxu0 0.0
    %1256 = vmatpush1.msra.mxu0 0.0
    %1257 = vmatprep.subr.mxu0 0.0
    %1258 = vmatpush1.msra.mxu0 0.0
    %1259 = vmatprep.subr.mxu0 0.0
    %1260 = vmatpush1.msra.mxu0 0.0
    %1261 = vmatprep.subr.mxu0 0.0
    %1262 = vmatpush1.msra.mxu0 0.0
    %1263 = vmatprep.subr.mxu0 0.0
    %1264 = vmatpush1.msra.mxu0 0.0
    %1265 = vmatprep.subr.mxu0 0.0
    %1266 = vmatpush1.msra.mxu0 0.0
    %1267 = vmatprep.subr.mxu0 0.0
    %1268 = vmatpush1.msra.mxu0 0.0
    %1269 = vmatprep.subr.mxu0 0.0
    %1270 = vmatpush1.msra.mxu0 0.0
    %1271 = vmatprep.subr.mxu0 0.0
    %1272 = vmatpush1.msra.mxu0 0.0
    %1273 = vmatprep.subr.mxu0 0.0
    %1274 = vmatpush1.msra.mxu0 0.0
    %1275 = vmatprep.subr.mxu0 0.0
    %1276 = vmatpush1.msra.mxu0 0.0
    %1277 = vmatprep.subr.mxu0 0.0
    %1278 = vmatpush1.msra.mxu0 0.0
    %1279 = vmatprep.subr.mxu0 0.0
    %1280 = vmatpush1.msra.mxu0 0.0
    %1281 = vmatprep.subr.mxu0 0.0
    %1282 = vmatpush1.msra.mxu0 0.0
    %1283 = vmatprep.subr.mxu0 0.0
    %1284 = vmatpush1.msra.mxu0 0.0
    %1285 = vmatprep.subr.mxu0 0.0
    %1286 = vmatpush1.msra.mxu0 0.0
    %1287 = vmatprep.subr.mxu0 0.0
    %1288 = vmatpush1.msra.mxu0 0.0
    %1289 = vmatprep.subr.mxu0 0.0
    %1290 = vmatpush1.msra.mxu0 0.0
    %1291 = vmatprep.subr.mxu0 0.0
    %1292 = vmatpush1.msra.mxu0 0.0
    %1293 = vmatprep.mubr.f32.mxu0 0.0
    %1294 = vmatmul.mubr.f32.gmra.mrb[0].mxu0 %v1227
    %v1295 = vpop.f32.mrb[0].mxu0
    %v1296 = vadd.f32 0.0, %v1295
    %v1297 = vpop.f32.mrb[0].mxu0
    %1298 = vdwg.mxu0
    %1300 = vrot.lane.b32.xlu0 %v1296, 76
    %v1301 = vpop.permute.xlu0 %1300
    %v1303 = vadd.f32 %v292, %v1301
    %v1304 = vmax.f32 %v1303, -20.0
    %v1305 = vmin.f32 %v1304, 20.0
    %1307 = vrot.lane.b32.xlu0 %v1305, 52
    %v1308 = vpop.permute.xlu0 %1307
    %vm1310 = vcmask 254976
    %1311 = vst.msk [vmem:[#allocation2] sm:$0x3] %vm1310, %v1308
    %1313 = vrot.lane.b32.xlu0 %v210, 64
    %v1314 = vpop.permute.xlu0 %1313
    %1316 = vrot.lane.b32.xlu0 %v1226, 32
    %v1317 = vpop.permute.xlu0 %1316
    %v1319 = vsel %vm222, %v1314, %v1317
    %s1320 = scalar_lea.vmem %s0, 2
    %v1321 = vld [vmem:[%s1320] sm:$0x3]
    %v1323 = vsel %vm112, %v1319, 0
    %1325 = vmatprep.subr.mxu0 0.0
    %1326 = vmatpush1.msra.mxu0 %v98
    %1327 = vmatprep.subr.mxu0 0.0
    %1328 = vmatpush1.msra.mxu0 %v99
    %1329 = vmatprep.subr.mxu0 0.0
    %1330 = vmatpush1.msra.mxu0 %v100
    %1331 = vmatprep.subr.mxu0 0.0
    %1332 = vmatpush1.msra.mxu0 %v101
    %1333 = vmatprep.subr.mxu0 0.0
    %1334 = vmatpush1.msra.mxu0 %v102
    %1335 = vmatprep.subr.mxu0 0.0
    %1336 = vmatpush1.msra.mxu0 %v103
    %1337 = vmatprep.subr.mxu0 0.0
    %1338 = vmatpush1.msra.mxu0 0.0
    %1339 = vmatprep.subr.mxu0 0.0
    %1340 = vmatpush1.msra.mxu0 0.0
    %1341 = vmatprep.subr.mxu0 0.0
    %1342 = vmatpush1.msra.mxu0 0.0
    %1343 = vmatprep.subr.mxu0 0.0
    %1344 = vmatpush1.msra.mxu0 0.0
    %1345 = vmatprep.subr.mxu0 0.0
    %1346 = vmatpush1.msra.mxu0 0.0
    %1347 = vmatprep.subr.mxu0 0.0
    %1348 = vmatpush1.msra.mxu0 0.0
    %1349 = vmatprep.subr.mxu0 0.0
    %1350 = vmatpush1.msra.mxu0 0.0
    %1351 = vmatprep.subr.mxu0 0.0
    %1352 = vmatpush1.msra.mxu0 0.0
    %1353 = vmatprep.subr.mxu0 0.0
    %1354 = vmatpush1.msra.mxu0 0.0
    %1355 = vmatprep.subr.mxu0 0.0
    %1356 = vmatpush1.msra.mxu0 0.0
    %1357 = vmatprep.subr.mxu0 0.0
    %1358 = vmatpush1.msra.mxu0 0.0
    %1359 = vmatprep.subr.mxu0 0.0
    %1360 = vmatpush1.msra.mxu0 0.0
    %1361 = vmatprep.subr.mxu0 0.0
    %1362 = vmatpush1.msra.mxu0 0.0
    %1363 = vmatprep.subr.mxu0 0.0
    %1364 = vmatpush1.msra.mxu0 0.0
    %1365 = vmatprep.subr.mxu0 0.0
    %1366 = vmatpush1.msra.mxu0 0.0
    %1367 = vmatprep.subr.mxu0 0.0
    %1368 = vmatpush1.msra.mxu0 0.0
    %1369 = vmatprep.subr.mxu0 0.0
    %1370 = vmatpush1.msra.mxu0 0.0
    %1371 = vmatprep.subr.mxu0 0.0
    %1372 = vmatpush1.msra.mxu0 0.0
    %1373 = vmatprep.subr.mxu0 0.0
    %1374 = vmatpush1.msra.mxu0 0.0
    %1375 = vmatprep.subr.mxu0 0.0
    %1376 = vmatpush1.msra.mxu0 0.0
    %1377 = vmatprep.subr.mxu0 0.0
    %1378 = vmatpush1.msra.mxu0 0.0
    %1379 = vmatprep.subr.mxu0 0.0
    %1380 = vmatpush1.msra.mxu0 0.0
    %1381 = vmatprep.subr.mxu0 0.0
    %1382 = vmatpush1.msra.mxu0 0.0
    %1383 = vmatprep.subr.mxu0 0.0
    %1384 = vmatpush1.msra.mxu0 0.0
    %1385 = vmatprep.subr.mxu0 0.0
    %1386 = vmatpush1.msra.mxu0 0.0
    %1387 = vmatprep.subr.mxu0 0.0
    %1388 = vmatpush1.msra.mxu0 0.0
    %1389 = vmatprep.mubr.f32.mxu0 0.0
    %1390 = vmatmul.mubr.f32.gmra.mrb[0].mxu0 %v1323
    %v1391 = vpop.f32.mrb[0].mxu0
    %v1392 = vadd.f32 0.0, %v1391
    %v1393 = vpop.f32.mrb[0].mxu0
    %1394 = vdwg.mxu0
    %v1395 = vadd.f32 %v1321, %v1392
    %v1396 = vmul.f32 %v1395, 0.5
    %v1397 = vtanh.pop %v1396
    %v1398 = vadd.f32 %v1397, 1.0
    %v1399 = vmul.f32 %v1398, 0.5
    %v1400 = vtanh.pop %v1395
    %v1401 = vmul.f32 %v1399, %v204
    %1403 = vrot.lane.b32.xlu0 %v1400, 32
    %v1404 = vpop.permute.xlu0 %1403
    %v1406 = vmul.f32 %v1399, %v1404
    %1408 = vrot.lane.b32.xlu0 %v1406, 32
    %v1409 = vpop.permute.xlu0 %1408
    %v1411 = vadd.f32 %v1401, %v1409
    %v1412 = vtanh.pop %v1411
    %1414 = vrot.lane.b32.xlu0 %v1412, 32
    %v1415 = vpop.permute.xlu0 %1414
    %v1417 = vmul.f32 %v1399, %v1415
    %v1418 = vmax.f32 %v1417, -20.0
    %v1419 = vmin.f32 %v1418, 20.0
    %1421 = vrot.lane.b32.xlu0 %v1419, 64
    %v1422 = vpop.permute.xlu0 %1421
    %v1423 = vsel %vm222, %v1422, 0
    %1425 = vmatprep.subr.mxu0 0.0
    %1426 = vmatpush1.msra.mxu0 %v104
    %1427 = vmatprep.subr.mxu0 0.0
    %1428 = vmatpush1.msra.mxu0 %v105
    %1429 = vmatprep.subr.mxu0 0.0
    %1430 = vmatpush1.msra.mxu0 %v106
    %1431 = vmatprep.subr.mxu0 0.0
    %1432 = vmatpush1.msra.mxu0 %v107
    %1433 = vmatprep.subr.mxu0 0.0
    %1434 = vmatpush1.msra.mxu0 0.0
    %1435 = vmatprep.subr.mxu0 0.0
    %1436 = vmatpush1.msra.mxu0 0.0
    %1437 = vmatprep.subr.mxu0 0.0
    %1438 = vmatpush1.msra.mxu0 0.0
    %1439 = vmatprep.subr.mxu0 0.0
    %1440 = vmatpush1.msra.mxu0 0.0
    %1441 = vmatprep.subr.mxu0 0.0
    %1442 = vmatpush1.msra.mxu0 0.0
    %1443 = vmatprep.subr.mxu0 0.0
    %1444 = vmatpush1.msra.mxu0 0.0
    %1445 = vmatprep.subr.mxu0 0.0
    %1446 = vmatpush1.msra.mxu0 0.0
    %1447 = vmatprep.subr.mxu0 0.0
    %1448 = vmatpush1.msra.mxu0 0.0
    %1449 = vmatprep.subr.mxu0 0.0
    %1450 = vmatpush1.msra.mxu0 0.0
    %1451 = vmatprep.subr.mxu0 0.0
    %1452 = vmatpush1.msra.mxu0 0.0
    %1453 = vmatprep.subr.mxu0 0.0
    %1454 = vmatpush1.msra.mxu0 0.0
    %1455 = vmatprep.subr.mxu0 0.0
    %1456 = vmatpush1.msra.mxu0 0.0
    %1457 = vmatprep.subr.mxu0 0.0
    %1458 = vmatpush1.msra.mxu0 0.0
    %1459 = vmatprep.subr.mxu0 0.0
    %1460 = vmatpush1.msra.mxu0 0.0
    %1461 = vmatprep.subr.mxu0 0.0
    %1462 = vmatpush1.msra.mxu0 0.0
    %1463 = vmatprep.subr.mxu0 0.0
    %1464 = vmatpush1.msra.mxu0 0.0
    %1465 = vmatprep.subr.mxu0 0.0
    %1466 = vmatpush1.msra.mxu0 0.0
    %1467 = vmatprep.subr.mxu0 0.0
    %1468 = vmatpush1.msra.mxu0 0.0
    %1469 = vmatprep.subr.mxu0 0.0
    %1470 = vmatpush1.msra.mxu0 0.0
    %1471 = vmatprep.subr.mxu0 0.0
    %1472 = vmatpush1.msra.mxu0 0.0
    %1473 = vmatprep.subr.mxu0 0.0
    %1474 = vmatpush1.msra.mxu0 0.0
    %1475 = vmatprep.subr.mxu0 0.0
    %1476 = vmatpush1.msra.mxu0 0.0
    %1477 = vmatprep.subr.mxu0 0.0
    %1478 = vmatpush1.msra.mxu0 0.0
    %1479 = vmatprep.subr.mxu0 0.0
    %1480 = vmatpush1.msra.mxu0 0.0
    %1481 = vmatprep.subr.mxu0 0.0
    %1482 = vmatpush1.msra.mxu0 0.0
    %1483 = vmatprep.subr.mxu0 0.0
    %1484 = vmatpush1.msra.mxu0 0.0
    %1485 = vmatprep.subr.mxu0 0.0
    %1486 = vmatpush1.msra.mxu0 0.0
    %1487 = vmatprep.subr.mxu0 0.0
    %1488 = vmatpush1.msra.mxu0 0.0
    %1489 = vmatprep.mubr.f32.mxu0 0.0
    %1490 = vmatmul.mubr.f32.gmra.mrb[0].mxu0 %v1423
    %v1491 = vpop.f32.mrb[0].mxu0
    %v1492 = vadd.f32 %v217, %v1491
    %v1493 = vpop.f32.mrb[0].mxu0
    %1494 = vdwg.mxu0
    %v1496 = vrot.slane %v1492, 6
    %1497 = vrot.lane.b32.xlu0 %v1496, 106
    %v1498 = vpop.permute.xlu0 %1497
    %v1500 = vsel %vm84, %v1492, %v1498
    %v1501 = vmul.f32 %v1492, 0.5
    %v1502 = vtanh.pop %v1501
    %v1503 = vadd.f32 %v1502, 1.0
    %v1504 = vmul.f32 %v1503, 0.5
    %v1505 = vtanh.pop %v1492
    %v1506 = vtanh.pop %v1500
    %v1507 = vmax.f32 %v1500, 0.0
    %v1508 = vand.u32 2147483647, %v1500
    %v1509 = vsub.f32 0.0, %v1508
    %v1510 = vmul.f32 %v1509, 1.442695
    %v1511 = vpow.pop %v1510
    %v1512 = vadd.f32 %v1511, 1.0
    %v1513 = vlog2.pop %v1512
    %v1514 = vmul.f32 %v1513, 0.6931472
    %v1515 = vadd.f32 %v1507, %v1514
    %v1516 = vmul.f32 %v1500, 0.5
    %v1517 = vtanh.pop %v1516
    %v1518 = vadd.f32 %v1517, 1.0
    %v1519 = vmul.f32 %v1518, 0.5
    %v1520 = vsel %vm320, %v1500, -inf
    %1521 = vmax.xlane.f32.xlu0 %v1520
    %v1522 = vpop.xlane.xlu0 %1521
    %v1523 = vsub.f32 %v1500, %v1522
    %v1524 = vmul.f32 %v1523, 1.442695
    %v1525 = vpow.pop %v1524
    %1527 = vrot.lane.b32.xlu0 %v1525, 110
    %v1528 = vpop.permute.xlu0 %1527
    %v1530 = vsel %vm331, %v1528, 0.0
    %1531 = vadd.xlane.f32.xlu0 %v1530
    %v1532 = vpop.xlane.xlu0 %1531
    %v1533 = vrcp.pop %v1532
    %v1534 = vmul.f32 %v1525, %v1533
    %v1537 = vunpack.c.l.s4 1966171168
    %v1538 = vunpack.c.0.s8 %v1537
    %v1539 = vlaneseq
    %v1540 = vshrl.u32 %v1539, 7
    %v1541 = vsub.s32 %v1538, %v1540
    %v1542 = vrot.slane %v1506, %v1541
    %v1543 = vcombine.high %v1542, %v1542
    %v1545 = vunpack.c.l.s4 1966171168
    %v1546 = vunpack.c.0.s8 %v1545
    %v1547 = vlaneseq
    %v1548 = vshrl.u32 %v1547, 7
    %v1549 = vsub.s32 %v1546, %v1548
    %v1550 = vrot.slane %v1542, %v1549
    %v1552 = vunpack.c.l.s4 1966171168
    %v1553 = vunpack.c.0.s8 %v1552
    %v1554 = vlaneseq
    %v1555 = vshrl.u32 %v1554, 7
    %v1556 = vsub.s32 %v1553, %v1555
    %v1557 = vrot.slane %v1543, %v1556
    %v1558 = vcombine.high %v1550, %v1550
    %v1559 = vcombine.high %v1557, %v1557
    %v1560 = vlaneseq
    %v1561 = vshrl.u32 %v1560, 7
    %v1562 = vsub.s32 0, %v1561
    %v1563 = vrot.slane %v1550, %v1562
    %v1564 = vlaneseq
    %v1565 = vshrl.u32 %v1564, 7
    %v1566 = vsub.s32 0, %v1565
    %v1567 = vrot.slane %v1557, %v1566
    %v1568 = vlaneseq
    %v1569 = vshrl.u32 %v1568, 7
    %v1570 = vsub.s32 0, %v1569
    %v1571 = vrot.slane %v1558, %v1570
    %v1572 = vlaneseq
    %v1573 = vshrl.u32 %v1572, 7
    %v1574 = vsub.s32 0, %v1573
    %v1575 = vrot.slane %v1559, %v1574
    %v1580 = vmul.f32 %v1216, %v1563
    %v1581 = vmul.f32 %v1217, %v1563
    %v1582 = vmul.f32 %v1218, %v1563
    %v1583 = vmul.f32 %v1219, %v1563
    %v1584 = vmul.f32 %v1220, %v1567
    %v1585 = vmul.f32 %v1221, %v1567
    %v1586 = vmul.f32 %v1222, %v1567
    %v1587 = vmul.f32 %v1223, %v1567
    %v1588 = vmul.f32 %v1216, %v1571
    %v1589 = vmul.f32 %v1217, %v1571
    %v1590 = vmul.f32 %v1218, %v1571
    %v1591 = vmul.f32 %v1219, %v1571
    %v1592 = vmul.f32 %v1220, %v1575
    %v1593 = vmul.f32 %v1221, %v1575
    %v1594 = vmul.f32 %v1222, %v1575
    %v1595 = vmul.f32 %v1223, %v1575
    %v1596 = vsel %vm398, %v1580, 0.0
    %1597 = vadd.xlane.f32.xlu0 %v1596
    %v1598 = vpop.xlane.xlu0 %1597
    %v1599 = vsel %vm398, %v1581, 0.0
    %1600 = vadd.xlane.f32.xlu0 %v1599
    %v1601 = vpop.xlane.xlu0 %1600
    %v1602 = vsel %vm398, %v1582, 0.0
    %1603 = vadd.xlane.f32.xlu0 %v1602
    %v1604 = vpop.xlane.xlu0 %1603
    %v1605 = vsel %vm398, %v1583, 0.0
    %1606 = vadd.xlane.f32.xlu0 %v1605
    %v1607 = vpop.xlane.xlu0 %1606
    %v1608 = vsel %vm398, %v1584, 0.0
    %1609 = vadd.xlane.f32.xlu0 %v1608
    %v1610 = vpop.xlane.xlu0 %1609
    %v1611 = vsel %vm398, %v1585, 0.0
    %1612 = vadd.xlane.f32.xlu0 %v1611
    %v1613 = vpop.xlane.xlu0 %1612
    %v1614 = vsel %vm398, %v1586, 0.0
    %1615 = vadd.xlane.f32.xlu0 %v1614
    %v1616 = vpop.xlane.xlu0 %1615
    %v1617 = vsel %vm398, %v1587, 0.0
    %1618 = vadd.xlane.f32.xlu0 %v1617
    %v1619 = vpop.xlane.xlu0 %1618
    %v1620 = vsel %vm398, %v1588, 0.0
    %1621 = vadd.xlane.f32.xlu0 %v1620
    %v1622 = vpop.xlane.xlu0 %1621
    %v1623 = vsel %vm398, %v1589, 0.0
    %1624 = vadd.xlane.f32.xlu0 %v1623
    %v1625 = vpop.xlane.xlu0 %1624
    %v1626 = vsel %vm398, %v1590, 0.0
    %1627 = vadd.xlane.f32.xlu0 %v1626
    %v1628 = vpop.xlane.xlu0 %1627
    %v1629 = vsel %vm398, %v1591, 0.0
    %1630 = vadd.xlane.f32.xlu0 %v1629
    %v1631 = vpop.xlane.xlu0 %1630
    %v1632 = vsel %vm398, %v1592, 0.0
    %1633 = vadd.xlane.f32.xlu0 %v1632
    %v1634 = vpop.xlane.xlu0 %1633
    %v1635 = vsel %vm398, %v1593, 0.0
    %1636 = vadd.xlane.f32.xlu0 %v1635
    %v1637 = vpop.xlane.xlu0 %1636
    %v1638 = vsel %vm398, %v1594, 0.0
    %1639 = vadd.xlane.f32.xlu0 %v1638
    %v1640 = vpop.xlane.xlu0 %1639
    %v1641 = vsel %vm398, %v1595, 0.0
    %1642 = vadd.xlane.f32.xlu0 %v1641
    %v1643 = vpop.xlane.xlu0 %1642
    %v1644 = vmul.f32 %v1506, %v1506
    %v1645 = vsel %vm448, %v1644, 0.0
    %1646 = vadd.xlane.f32.xlu0 %v1645
    %v1647 = vpop.xlane.xlu0 %1646
    %v1648 = vmul.f32 %v1216, %v1216
    %v1649 = vmul.f32 %v1217, %v1217
    %v1650 = vmul.f32 %v1218, %v1218
    %v1651 = vmul.f32 %v1219, %v1219
    %v1652 = vmul.f32 %v1220, %v1220
    %v1653 = vmul.f32 %v1221, %v1221
    %v1654 = vmul.f32 %v1222, %v1222
    %v1655 = vmul.f32 %v1223, %v1223
    %v1656 = vsel %vm398, %v1648, 0.0
    %1657 = vadd.xlane.f32.xlu0 %v1656
    %v1658 = vpop.xlane.xlu0 %1657
    %v1659 = vsel %vm398, %v1649, 0.0
    %1660 = vadd.xlane.f32.xlu0 %v1659
    %v1661 = vpop.xlane.xlu0 %1660
    %v1662 = vsel %vm398, %v1650, 0.0
    %1663 = vadd.xlane.f32.xlu0 %v1662
    %v1664 = vpop.xlane.xlu0 %1663
    %v1665 = vsel %vm398, %v1651, 0.0
    %1666 = vadd.xlane.f32.xlu0 %v1665
    %v1667 = vpop.xlane.xlu0 %1666
    %v1668 = vsel %vm398, %v1652, 0.0
    %1669 = vadd.xlane.f32.xlu0 %v1668
    %v1670 = vpop.xlane.xlu0 %1669
    %v1671 = vsel %vm398, %v1653, 0.0
    %1672 = vadd.xlane.f32.xlu0 %v1671
    %v1673 = vpop.xlane.xlu0 %1672
    %v1674 = vsel %vm398, %v1654, 0.0
    %1675 = vadd.xlane.f32.xlu0 %v1674
    %v1676 = vpop.xlane.xlu0 %1675
    %v1677 = vsel %vm398, %v1655, 0.0
    %1678 = vadd.xlane.f32.xlu0 %v1677
    %v1679 = vpop.xlane.xlu0 %1678
    %v1688 = vlaneseq
    %v1689 = vshrl.u32 %v1688, 7
    %v1690 = vsub.s32 %v493, %v1689
    %v1691 = vrot.slane %v1658, %v1690
    %v1692 = vlaneseq
    %v1693 = vshrl.u32 %v1692, 7
    %v1694 = vsub.s32 %v498, %v1693
    %v1695 = vrot.slane %v1661, %v1694
    %v1696 = vsel %vm503, %v1695, %v1691
    %v1697 = vlaneseq
    %v1698 = vshrl.u32 %v1697, 7
    %v1699 = vsub.s32 %v505, %v1698
    %v1700 = vrot.slane %v1664, %v1699
    %v1701 = vsel %vm510, %v1700, %v1696
    %v1702 = vlaneseq
    %v1703 = vshrl.u32 %v1702, 7
    %v1704 = vsub.s32 %v512, %v1703
    %v1705 = vrot.slane %v1667, %v1704
    %v1706 = vsel %vm517, %v1705, %v1701
    %v1707 = vlaneseq
    %v1708 = vshrl.u32 %v1707, 7
    %v1709 = vsub.s32 %v493, %v1708
    %v1710 = vrot.slane %v1670, %v1709
    %v1711 = vlaneseq
    %v1712 = vshrl.u32 %v1711, 7
    %v1713 = vsub.s32 %v498, %v1712
    %v1714 = vrot.slane %v1673, %v1713
    %v1715 = vsel %vm503, %v1714, %v1710
    %v1716 = vlaneseq
    %v1717 = vshrl.u32 %v1716, 7
    %v1718 = vsub.s32 %v505, %v1717
    %v1719 = vrot.slane %v1676, %v1718
    %v1720 = vsel %vm510, %v1719, %v1715
    %v1721 = vlaneseq
    %v1722 = vshrl.u32 %v1721, 7
    %v1723 = vsub.s32 %v512, %v1722
    %v1724 = vrot.slane %v1679, %v1723
    %v1725 = vsel %vm517, %v1724, %v1720
    %v1726 = vsel %vm538, %v1725, %v1706
    %v1728 = vsel %vm541, %v1725, %v1706
    %v1730 = vsel %vm84, %v1726, %v1728
    %v1731 = vmul.f32 %v1647, %v1730
    %v1732 = vadd.f32 %v1731, 1e-16
    %v1733 = vrsqrt.pop %v1732
    %v1735 = vlaneseq
    %v1736 = vshrl.u32 %v1735, 7
    %v1737 = vsub.s32 0, %v1736
    %v1738 = vrot.slane %v1733, %v1737
    %1740 = vbcast.lane.b32.xlu0 %v1738, 256
    %v1741 = vpop.permute.xlu0 %1740
    %s1743 = sor.u32 256, 8
    %1744 = vbcast.lane.b32.xlu0 %v1738, %s1743
    %v1745 = vpop.permute.xlu0 %1744
    %s1747 = sor.u32 256, 16
    %1748 = vbcast.lane.b32.xlu0 %v1738, %s1747
    %v1749 = vpop.permute.xlu0 %1748
    %s1751 = sor.u32 256, 24
    %1752 = vbcast.lane.b32.xlu0 %v1738, %s1751
    %v1753 = vpop.permute.xlu0 %1752
    %v1754 = vlaneseq
    %v1755 = vshrl.u32 %v1754, 7
    %v1756 = vsub.s32 1, %v1755
    %v1757 = vrot.slane %v1733, %v1756
    %1759 = vbcast.lane.b32.xlu0 %v1757, 256
    %v1760 = vpop.permute.xlu0 %1759
    %s1762 = sor.u32 256, 8
    %1763 = vbcast.lane.b32.xlu0 %v1757, %s1762
    %v1764 = vpop.permute.xlu0 %1763
    %s1766 = sor.u32 256, 16
    %1767 = vbcast.lane.b32.xlu0 %v1757, %s1766
    %v1768 = vpop.permute.xlu0 %1767
    %s1770 = sor.u32 256, 24
    %1771 = vbcast.lane.b32.xlu0 %v1757, %s1770
    %v1772 = vpop.permute.xlu0 %1771
    %v1773 = vlaneseq
    %v1774 = vshrl.u32 %v1773, 7
    %v1775 = vsub.s32 2, %v1774
    %v1776 = vrot.slane %v1733, %v1775
    %1778 = vbcast.lane.b32.xlu0 %v1776, 256
    %v1779 = vpop.permute.xlu0 %1778
    %s1781 = sor.u32 256, 8
    %1782 = vbcast.lane.b32.xlu0 %v1776, %s1781
    %v1783 = vpop.permute.xlu0 %1782
    %s1785 = sor.u32 256, 16
    %1786 = vbcast.lane.b32.xlu0 %v1776, %s1785
    %v1787 = vpop.permute.xlu0 %1786
    %s1789 = sor.u32 256, 24
    %1790 = vbcast.lane.b32.xlu0 %v1776, %s1789
    %v1791 = vpop.permute.xlu0 %1790
    %v1792 = vlaneseq
    %v1793 = vshrl.u32 %v1792, 7
    %v1794 = vsub.s32 3, %v1793
    %v1795 = vrot.slane %v1733, %v1794
    %1797 = vbcast.lane.b32.xlu0 %v1795, 256
    %v1798 = vpop.permute.xlu0 %1797
    %s1800 = sor.u32 256, 8
    %1801 = vbcast.lane.b32.xlu0 %v1795, %s1800
    %v1802 = vpop.permute.xlu0 %1801
    %s1804 = sor.u32 256, 16
    %1805 = vbcast.lane.b32.xlu0 %v1795, %s1804
    %v1806 = vpop.permute.xlu0 %1805
    %s1808 = sor.u32 256, 24
    %1809 = vbcast.lane.b32.xlu0 %v1795, %s1808
    %v1810 = vpop.permute.xlu0 %1809
    %v1827 = vmul.f32 %v1598, %v1741
    %v1828 = vmul.f32 %v1601, %v1745
    %v1829 = vmul.f32 %v1604, %v1749
    %v1830 = vmul.f32 %v1607, %v1753
    %v1831 = vmul.f32 %v1610, %v1760
    %v1832 = vmul.f32 %v1613, %v1764
    %v1833 = vmul.f32 %v1616, %v1768
    %v1834 = vmul.f32 %v1619, %v1772
    %v1835 = vmul.f32 %v1622, %v1779
    %v1836 = vmul.f32 %v1625, %v1783
    %v1837 = vmul.f32 %v1628, %v1787
    %v1838 = vmul.f32 %v1631, %v1791
    %v1839 = vmul.f32 %v1634, %v1798
    %v1840 = vmul.f32 %v1637, %v1802
    %v1841 = vmul.f32 %v1640, %v1806
    %v1842 = vmul.f32 %v1643, %v1810
    %1844 = vset.pattern.permute.xlu0 16
    %1845 = vperm.xlu0 %1844, %v1515
    %v1846 = vpop.permute.xlu0 %1845
    %1864 = vset.pattern.permute.xlu0 0
    %1865 = vperm.xlu0 %1864, %v1827
    %v1866 = vpop.permute.xlu0 %1865
    %1867 = vset.pattern.permute.xlu0 0
    %1868 = vperm.xlu0 %1867, %v1828
    %v1869 = vpop.permute.xlu0 %1868
    %1870 = vset.pattern.permute.xlu0 0
    %1871 = vperm.xlu0 %1870, %v1829
    %v1872 = vpop.permute.xlu0 %1871
    %1873 = vset.pattern.permute.xlu0 0
    %1874 = vperm.xlu0 %1873, %v1830
    %v1875 = vpop.permute.xlu0 %1874
    %1876 = vset.pattern.permute.xlu0 0
    %1877 = vperm.xlu0 %1876, %v1831
    %v1878 = vpop.permute.xlu0 %1877
    %1879 = vset.pattern.permute.xlu0 0
    %1880 = vperm.xlu0 %1879, %v1832
    %v1881 = vpop.permute.xlu0 %1880
    %1882 = vset.pattern.permute.xlu0 0
    %1883 = vperm.xlu0 %1882, %v1833
    %v1884 = vpop.permute.xlu0 %1883
    %1885 = vset.pattern.permute.xlu0 0
    %1886 = vperm.xlu0 %1885, %v1834
    %v1887 = vpop.permute.xlu0 %1886
    %1888 = vset.pattern.permute.xlu0 0
    %1889 = vperm.xlu0 %1888, %v1835
    %v1890 = vpop.permute.xlu0 %1889
    %1891 = vset.pattern.permute.xlu0 0
    %1892 = vperm.xlu0 %1891, %v1836
    %v1893 = vpop.permute.xlu0 %1892
    %1894 = vset.pattern.permute.xlu0 0
    %1895 = vperm.xlu0 %1894, %v1837
    %v1896 = vpop.permute.xlu0 %1895
    %1897 = vset.pattern.permute.xlu0 0
    %1898 = vperm.xlu0 %1897, %v1838
    %v1899 = vpop.permute.xlu0 %1898
    %1900 = vset.pattern.permute.xlu0 0
    %1901 = vperm.xlu0 %1900, %v1839
    %v1902 = vpop.permute.xlu0 %1901
    %1903 = vset.pattern.permute.xlu0 0
    %1904 = vperm.xlu0 %1903, %v1840
    %v1905 = vpop.permute.xlu0 %1904
    %1906 = vset.pattern.permute.xlu0 0
    %1907 = vperm.xlu0 %1906, %v1841
    %v1908 = vpop.permute.xlu0 %1907
    %1909 = vset.pattern.permute.xlu0 0
    %1910 = vperm.xlu0 %1909, %v1842
    %v1911 = vpop.permute.xlu0 %1910
    %v1912 = vlaneseq
    %v1913 = vshrl.u32 %v1912, 7
    %v1914 = vsub.s32 %v493, %v1913
    %v1915 = vrot.slane %v1866, %v1914
    %v1916 = vlaneseq
    %v1917 = vshrl.u32 %v1916, 7
    %v1918 = vsub.s32 %v498, %v1917
    %v1919 = vrot.slane %v1869, %v1918
    %v1920 = vsel %vm503, %v1919, %v1915
    %v1921 = vlaneseq
    %v1922 = vshrl.u32 %v1921, 7
    %v1923 = vsub.s32 %v505, %v1922
    %v1924 = vrot.slane %v1872, %v1923
    %v1925 = vsel %vm510, %v1924, %v1920
    %v1926 = vlaneseq
    %v1927 = vshrl.u32 %v1926, 7
    %v1928 = vsub.s32 %v512, %v1927
    %v1929 = vrot.slane %v1875, %v1928
    %v1930 = vsel %vm517, %v1929, %v1925
    %v1931 = vlaneseq
    %v1932 = vshrl.u32 %v1931, 7
    %v1933 = vsub.s32 %v493, %v1932
    %v1934 = vrot.slane %v1878, %v1933
    %v1935 = vlaneseq
    %v1936 = vshrl.u32 %v1935, 7
    %v1937 = vsub.s32 %v498, %v1936
    %v1938 = vrot.slane %v1881, %v1937
    %v1939 = vsel %vm503, %v1938, %v1934
    %v1940 = vlaneseq
    %v1941 = vshrl.u32 %v1940, 7
    %v1942 = vsub.s32 %v505, %v1941
    %v1943 = vrot.slane %v1884, %v1942
    %v1944 = vsel %vm510, %v1943, %v1939
    %v1945 = vlaneseq
    %v1946 = vshrl.u32 %v1945, 7
    %v1947 = vsub.s32 %v512, %v1946
    %v1948 = vrot.slane %v1887, %v1947
    %v1949 = vsel %vm517, %v1948, %v1944
    %v1950 = vlaneseq
    %v1951 = vshrl.u32 %v1950, 7
    %v1952 = vsub.s32 %v493, %v1951
    %v1953 = vrot.slane %v1890, %v1952
    %v1954 = vlaneseq
    %v1955 = vshrl.u32 %v1954, 7
    %v1956 = vsub.s32 %v498, %v1955
    %v1957 = vrot.slane %v1893, %v1956
    %v1958 = vsel %vm503, %v1957, %v1953
    %v1959 = vlaneseq
    %v1960 = vshrl.u32 %v1959, 7
    %v1961 = vsub.s32 %v505, %v1960
    %v1962 = vrot.slane %v1896, %v1961
    %v1963 = vsel %vm510, %v1962, %v1958
    %v1964 = vlaneseq
    %v1965 = vshrl.u32 %v1964, 7
    %v1966 = vsub.s32 %v512, %v1965
    %v1967 = vrot.slane %v1899, %v1966
    %v1968 = vsel %vm517, %v1967, %v1963
    %v1969 = vlaneseq
    %v1970 = vshrl.u32 %v1969, 7
    %v1971 = vsub.s32 %v493, %v1970
    %v1972 = vrot.slane %v1902, %v1971
    %v1973 = vlaneseq
    %v1974 = vshrl.u32 %v1973, 7
    %v1975 = vsub.s32 %v498, %v1974
    %v1976 = vrot.slane %v1905, %v1975
    %v1977 = vsel %vm503, %v1976, %v1972
    %v1978 = vlaneseq
    %v1979 = vshrl.u32 %v1978, 7
    %v1980 = vsub.s32 %v505, %v1979
    %v1981 = vrot.slane %v1908, %v1980
    %v1982 = vsel %vm510, %v1981, %v1977
    %v1983 = vlaneseq
    %v1984 = vshrl.u32 %v1983, 7
    %v1985 = vsub.s32 %v512, %v1984
    %v1986 = vrot.slane %v1911, %v1985
    %v1987 = vsel %vm517, %v1986, %v1982
    %v1988 = vsel %vm538, %v1949, %v1930
    %v1989 = vsel %vm803, %v1968, %v1988
    %v1990 = vsel %vm541, %v1987, %v1989
    %v1992 = vmul.f32 %v1846, %v1990
    %v1993 = vmul.f32 %v1992, 1.442695
    %v1994 = vpow.pop %v1993
    %v1995 = vsel %vm810, %v1994, 0.0
    %1996 = vadd.xlane.f32.xlu0 %v1995
    %v1997 = vpop.xlane.xlu0 %1996
    %v1998 = vrcp.pop %v1997
    %v1999 = vmul.f32 %v1994, %v1998
    %2001 = vset.pattern.permute.xlu0 17
    %2002 = vperm.xlu0 %2001, %v1519
    %v2003 = vpop.permute.xlu0 %2002
    %v2005 = vmul.f32 %v2003, %v1999
    %v2006 = vsub.f32 1.0, %v1519
    %2008 = vset.pattern.permute.xlu0 17
    %2009 = vperm.xlu0 %2008, %v2006
    %v2010 = vpop.permute.xlu0 %2009
    %v2012 = vmul.f32 %v2010, %v943
    %v2013 = vadd.f32 %v2005, %v2012
    %v2015 = vsel %vm222, %v2013, 0
    %2017 = vmatprep.subr.mxu0 0.0
    %2018 = vmatpush1.msra.mxu0 %v94
    %2019 = vmatprep.subr.mxu0 0.0
    %2020 = vmatpush1.msra.mxu0 %v95
    %2021 = vmatprep.subr.mxu0 0.0
    %2022 = vmatpush1.msra.mxu0 %v96
    %2023 = vmatprep.subr.mxu0 0.0
    %2024 = vmatpush1.msra.mxu0 %v97
    %2025 = vmatprep.subr.mxu0 0.0
    %2026 = vmatpush1.msra.mxu0 0.0
    %2027 = vmatprep.subr.mxu0 0.0
    %2028 = vmatpush1.msra.mxu0 0.0
    %2029 = vmatprep.subr.mxu0 0.0
    %2030 = vmatpush1.msra.mxu0 0.0
    %2031 = vmatprep.subr.mxu0 0.0
    %2032 = vmatpush1.msra.mxu0 0.0
    %2033 = vmatprep.subr.mxu0 0.0
    %2034 = vmatpush1.msra.mxu0 0.0
    %2035 = vmatprep.subr.mxu0 0.0
    %2036 = vmatpush1.msra.mxu0 0.0
    %2037 = vmatprep.subr.mxu0 0.0
    %2038 = vmatpush1.msra.mxu0 0.0
    %2039 = vmatprep.subr.mxu0 0.0
    %2040 = vmatpush1.msra.mxu0 0.0
    %2041 = vmatprep.subr.mxu0 0.0
    %2042 = vmatpush1.msra.mxu0 0.0
    %2043 = vmatprep.subr.mxu0 0.0
    %2044 = vmatpush1.msra.mxu0 0.0
    %2045 = vmatprep.subr.mxu0 0.0
    %2046 = vmatpush1.msra.mxu0 0.0
    %2047 = vmatprep.subr.mxu0 0.0
    %2048 = vmatpush1.msra.mxu0 0.0
    %2049 = vmatprep.subr.mxu0 0.0
    %2050 = vmatpush1.msra.mxu0 0.0
    %2051 = vmatprep.subr.mxu0 0.0
    %2052 = vmatpush1.msra.mxu0 0.0
    %2053 = vmatprep.subr.mxu0 0.0
    %2054 = vmatpush1.msra.mxu0 0.0
    %2055 = vmatprep.subr.mxu0 0.0
    %2056 = vmatpush1.msra.mxu0 0.0
    %2057 = vmatprep.subr.mxu0 0.0
    %2058 = vmatpush1.msra.mxu0 0.0
    %2059 = vmatprep.subr.mxu0 0.0
    %2060 = vmatpush1.msra.mxu0 0.0
    %2061 = vmatprep.subr.mxu0 0.0
    %2062 = vmatpush1.msra.mxu0 0.0
    %2063 = vmatprep.subr.mxu0 0.0
    %2064 = vmatpush1.msra.mxu0 0.0
    %2065 = vmatprep.subr.mxu0 0.0
    %2066 = vmatpush1.msra.mxu0 0.0
    %2067 = vmatprep.subr.mxu0 0.0
    %2068 = vmatpush1.msra.mxu0 0.0
    %2069 = vmatprep.subr.mxu0 0.0
    %2070 = vmatpush1.msra.mxu0 0.0
    %2071 = vmatprep.subr.mxu0 0.0
    %2072 = vmatpush1.msra.mxu0 0.0
    %2073 = vmatprep.subr.mxu0 0.0
    %2074 = vmatpush1.msra.mxu0 0.0
    %2075 = vmatprep.subr.mxu0 0.0
    %2076 = vmatpush1.msra.mxu0 0.0
    %2077 = vmatprep.subr.mxu0 0.0
    %2078 = vmatpush1.msra.mxu0 0.0
    %2079 = vmatprep.subr.mxu0 0.0
    %2080 = vmatpush1.msra.mxu0 0.0
    %2081 = vmatprep.mubr.f32.mxu0 0.0
    %2082 = vmatmul.mubr.f32.gmra.mrb[0].mxu0 %v2015
    %v2083 = vpop.f32.mrb[0].mxu0
    %v2084 = vadd.f32 0.0, %v2083
    %v2085 = vpop.f32.mrb[0].mxu0
    %2086 = vdwg.mxu0
    %2088 = vset.pattern.permute.xlu0 18
    %2089 = vperm.xlu0 %2088, %v1534
    %v2090 = vpop.permute.xlu0 %2089
    %v2092 = vmul.f32 %v2090, %v2013
    %2093 = vset.pattern.permute.xlu0 19
    %2094 = vperm.xlu0 %2093, %v1534
    %v2095 = vpop.permute.xlu0 %2094
    %v2097 = vmul.f32 %v2095, %v2084
    %v2098 = vadd.f32 %v2092, %v2097
    %2099 = vset.pattern.permute.xlu0 20
    %2100 = vperm.xlu0 %2099, %v1534
    %v2101 = vpop.permute.xlu0 %2100
    %v2103 = vmul.f32 %v2101, %v2084
    %2105 = vrot.lane.b32.xlu0 %v2103, 96
    %v2106 = vpop.permute.xlu0 %2105
    %v2108 = vadd.f32 %v2098, %v2106
    %v2109 = vmax.f32 %v2108, 1e-30
    %v2110 = vlog2.pop %v2109
    %v2111 = vmul.f32 %v2110, 0.6931472
    %2112 = vset.pattern.permute.xlu0 21
    %2113 = vperm.xlu0 %2112, %v1515
    %v2114 = vpop.permute.xlu0 %2113
    %v2116 = vmul.f32 %v2114, %v2111
    %v2117 = vmul.f32 %v2116, 1.442695
    %v2118 = vpow.pop %v2117
    %v2119 = vsel %vm810, %v2118, 0.0
    %2120 = vadd.xlane.f32.xlu0 %v2119
    %v2121 = vpop.xlane.xlu0 %2120
    %v2122 = vrcp.pop %v2121
    %v2123 = vmul.f32 %v2118, %v2122
    %v2124 = vlaneseq
    %v2125 = vshrl.u32 %v2124, 7
    %v2126 = vsub.s32 0, %v2125
    %v2127 = vrot.slane %v2123, %v2126
    %2129 = vbcast.lane.b32.xlu0 %v2127, 256
    %v2130 = vpop.permute.xlu0 %2129
    %s2132 = sor.u32 256, 8
    %2133 = vbcast.lane.b32.xlu0 %v2127, %s2132
    %v2134 = vpop.permute.xlu0 %2133
    %s2136 = sor.u32 256, 16
    %2137 = vbcast.lane.b32.xlu0 %v2127, %s2136
    %v2138 = vpop.permute.xlu0 %2137
    %s2140 = sor.u32 256, 24
    %2141 = vbcast.lane.b32.xlu0 %v2127, %s2140
    %v2142 = vpop.permute.xlu0 %2141
    %v2143 = vlaneseq
    %v2144 = vshrl.u32 %v2143, 7
    %v2145 = vsub.s32 1, %v2144
    %v2146 = vrot.slane %v2123, %v2145
    %2148 = vbcast.lane.b32.xlu0 %v2146, 256
    %v2149 = vpop.permute.xlu0 %2148
    %s2151 = sor.u32 256, 8
    %2152 = vbcast.lane.b32.xlu0 %v2146, %s2151
    %v2153 = vpop.permute.xlu0 %2152
    %s2155 = sor.u32 256, 16
    %2156 = vbcast.lane.b32.xlu0 %v2146, %s2155
    %v2157 = vpop.permute.xlu0 %2156
    %s2159 = sor.u32 256, 24
    %2160 = vbcast.lane.b32.xlu0 %v2146, %s2159
    %v2161 = vpop.permute.xlu0 %2160
    %v2162 = vmul.f32 %v2130, %v1216
    %v2163 = vmul.f32 %v2134, %v1217
    %v2164 = vmul.f32 %v2138, %v1218
    %v2165 = vmul.f32 %v2142, %v1219
    %v2166 = vmul.f32 %v2149, %v1220
    %v2167 = vmul.f32 %v2153, %v1221
    %v2168 = vmul.f32 %v2157, %v1222
    %v2169 = vmul.f32 %v2161, %v1223
    %v2170 = vsel %vm398, %v2162, 0.0
    %v2171 = vsel %vm398, %v2163, 0.0
    %v2172 = vadd.f32 %v2170, %v2171
    %v2173 = vsel %vm398, %v2164, 0.0
    %v2174 = vadd.f32 %v2172, %v2173
    %v2175 = vsel %vm398, %v2165, 0.0
    %v2176 = vadd.f32 %v2174, %v2175
    %v2177 = vrot.slane %v2176, 4
    %v2178 = vadd.f32 %v2176, %v2177
    %v2179 = vrot.slane %v2178, 2
    %v2180 = vadd.f32 %v2178, %v2179
    %v2181 = vrot.slane %v2180, 1
    %v2182 = vadd.f32 %v2180, %v2181
    %v2183 = vsel %vm398, %v2166, 0.0
    %v2184 = vsel %vm398, %v2167, 0.0
    %v2185 = vadd.f32 %v2183, %v2184
    %v2186 = vsel %vm398, %v2168, 0.0
    %v2187 = vadd.f32 %v2185, %v2186
    %v2188 = vsel %vm398, %v2169, 0.0
    %v2189 = vadd.f32 %v2187, %v2188
    %v2190 = vrot.slane %v2189, 4
    %v2191 = vadd.f32 %v2189, %v2190
    %v2192 = vrot.slane %v2191, 2
    %v2193 = vadd.f32 %v2191, %v2192
    %v2194 = vrot.slane %v2193, 1
    %v2195 = vadd.f32 %v2193, %v2194
    %v2196 = vlaneseq
    %v2197 = vshrl.u32 %v2196, 7
    %v2198 = vsub.s32 2, %v2197
    %v2199 = vrot.slane %v2123, %v2198
    %2201 = vbcast.lane.b32.xlu0 %v2199, 256
    %v2202 = vpop.permute.xlu0 %2201
    %s2204 = sor.u32 256, 8
    %2205 = vbcast.lane.b32.xlu0 %v2199, %s2204
    %v2206 = vpop.permute.xlu0 %2205
    %s2208 = sor.u32 256, 16
    %2209 = vbcast.lane.b32.xlu0 %v2199, %s2208
    %v2210 = vpop.permute.xlu0 %2209
    %s2212 = sor.u32 256, 24
    %2213 = vbcast.lane.b32.xlu0 %v2199, %s2212
    %v2214 = vpop.permute.xlu0 %2213
    %v2215 = vlaneseq
    %v2216 = vshrl.u32 %v2215, 7
    %v2217 = vsub.s32 3, %v2216
    %v2218 = vrot.slane %v2123, %v2217
    %2220 = vbcast.lane.b32.xlu0 %v2218, 256
    %v2221 = vpop.permute.xlu0 %2220
    %s2223 = sor.u32 256, 8
    %2224 = vbcast.lane.b32.xlu0 %v2218, %s2223
    %v2225 = vpop.permute.xlu0 %2224
    %s2227 = sor.u32 256, 16
    %2228 = vbcast.lane.b32.xlu0 %v2218, %s2227
    %v2229 = vpop.permute.xlu0 %2228
    %s2231 = sor.u32 256, 24
    %2232 = vbcast.lane.b32.xlu0 %v2218, %s2231
    %v2233 = vpop.permute.xlu0 %2232
    %v2236 = vunpack.c.l.s4 1966171168
    %v2237 = vunpack.c.0.s8 %v2236
    %v2238 = vlaneseq
    %v2239 = vshrl.u32 %v2238, 7
    %v2240 = vsub.s32 %v2237, %v2239
    %v2241 = vrot.slane %v1504, %v2240
    %v2242 = vcombine.high %v2241, %v2241
    %v2244 = vunpack.c.l.s4 1966171168
    %v2245 = vunpack.c.0.s8 %v2244
    %v2246 = vlaneseq
    %v2247 = vshrl.u32 %v2246, 7
    %v2248 = vsub.s32 %v2245, %v2247
    %v2249 = vrot.slane %v2241, %v2248
    %v2251 = vunpack.c.l.s4 1966171168
    %v2252 = vunpack.c.0.s8 %v2251
    %v2253 = vlaneseq
    %v2254 = vshrl.u32 %v2253, 7
    %v2255 = vsub.s32 %v2252, %v2254
    %v2256 = vrot.slane %v2242, %v2255
    %v2257 = vlaneseq
    %v2258 = vshrl.u32 %v2257, 7
    %v2259 = vsub.s32 0, %v2258
    %v2260 = vrot.slane %v2249, %v2259
    %v2261 = vlaneseq
    %v2262 = vshrl.u32 %v2261, 7
    %v2263 = vsub.s32 0, %v2262
    %v2264 = vrot.slane %v2256, %v2263
    %v2267 = vmul.f32 %v2202, %v2260
    %v2268 = vmul.f32 %v2206, %v2260
    %v2269 = vmul.f32 %v2210, %v2260
    %v2270 = vmul.f32 %v2214, %v2260
    %v2271 = vmul.f32 %v2221, %v2264
    %v2272 = vmul.f32 %v2225, %v2264
    %v2273 = vmul.f32 %v2229, %v2264
    %v2274 = vmul.f32 %v2233, %v2264
    %v2275 = vsub.f32 1.0, %v2267
    %v2276 = vsub.f32 1.0, %v2268
    %v2277 = vsub.f32 1.0, %v2269
    %v2278 = vsub.f32 1.0, %v2270
    %v2279 = vsub.f32 1.0, %v2271
    %v2280 = vsub.f32 1.0, %v2272
    %v2281 = vsub.f32 1.0, %v2273
    %v2282 = vsub.f32 1.0, %v2274
    %2291 = vrot.lane.b32.xlu0 %v2275, 84
    %v2292 = vpop.permute.xlu0 %2291
    %2293 = vrot.lane.b32.xlu0 %v2276, 84
    %v2294 = vpop.permute.xlu0 %2293
    %2295 = vrot.lane.b32.xlu0 %v2277, 84
    %v2296 = vpop.permute.xlu0 %2295
    %2297 = vrot.lane.b32.xlu0 %v2278, 84
    %v2298 = vpop.permute.xlu0 %2297
    %2299 = vrot.lane.b32.xlu0 %v2279, 84
    %v2300 = vpop.permute.xlu0 %2299
    %2301 = vrot.lane.b32.xlu0 %v2280, 84
    %v2302 = vpop.permute.xlu0 %2301
    %2303 = vrot.lane.b32.xlu0 %v2281, 84
    %v2304 = vpop.permute.xlu0 %2303
    %2305 = vrot.lane.b32.xlu0 %v2282, 84
    %v2306 = vpop.permute.xlu0 %2305
    %v2315 = vmul.f32 %v1216, %v2292
    %v2316 = vmul.f32 %v1217, %v2294
    %v2317 = vmul.f32 %v1218, %v2296
    %v2318 = vmul.f32 %v1219, %v2298
    %v2319 = vmul.f32 %v1220, %v2300
    %v2320 = vmul.f32 %v1221, %v2302
    %v2321 = vmul.f32 %v1222, %v2304
    %v2322 = vmul.f32 %v1223, %v2306
    %v2325 = vunpack.c.l.s4 1966171168
    %v2326 = vunpack.c.0.s8 %v2325
    %v2327 = vlaneseq
    %v2328 = vshrl.u32 %v2327, 7
    %v2329 = vsub.s32 %v2326, %v2328
    %v2330 = vrot.slane %v1505, %v2329
    %v2331 = vcombine.high %v2330, %v2330
    %v2333 = vunpack.c.l.s4 1966171168
    %v2334 = vunpack.c.0.s8 %v2333
    %v2335 = vlaneseq
    %v2336 = vshrl.u32 %v2335, 7
    %v2337 = vsub.s32 %v2334, %v2336
    %v2338 = vrot.slane %v2330, %v2337
    %v2340 = vunpack.c.l.s4 1966171168
    %v2341 = vunpack.c.0.s8 %v2340
    %v2342 = vlaneseq
    %v2343 = vshrl.u32 %v2342, 7
    %v2344 = vsub.s32 %v2341, %v2343
    %v2345 = vrot.slane %v2331, %v2344
    %v2346 = vlaneseq
    %v2347 = vshrl.u32 %v2346, 7
    %v2348 = vsub.s32 0, %v2347
    %v2349 = vrot.slane %v2338, %v2348
    %v2350 = vlaneseq
    %v2351 = vshrl.u32 %v2350, 7
    %v2352 = vsub.s32 0, %v2351
    %v2353 = vrot.slane %v2345, %v2352
    %v2356 = vmul.f32 %v2202, %v2349
    %v2357 = vmul.f32 %v2206, %v2349
    %v2358 = vmul.f32 %v2210, %v2349
    %v2359 = vmul.f32 %v2214, %v2349
    %v2360 = vmul.f32 %v2221, %v2353
    %v2361 = vmul.f32 %v2225, %v2353
    %v2362 = vmul.f32 %v2229, %v2353
    %v2363 = vmul.f32 %v2233, %v2353
    %2372 = vrot.lane.b32.xlu0 %v2356, 68
    %v2373 = vpop.permute.xlu0 %2372
    %2374 = vrot.lane.b32.xlu0 %v2357, 68
    %v2375 = vpop.permute.xlu0 %2374
    %2376 = vrot.lane.b32.xlu0 %v2358, 68
    %v2377 = vpop.permute.xlu0 %2376
    %2378 = vrot.lane.b32.xlu0 %v2359, 68
    %v2379 = vpop.permute.xlu0 %2378
    %2380 = vrot.lane.b32.xlu0 %v2360, 68
    %v2381 = vpop.permute.xlu0 %2380
    %2382 = vrot.lane.b32.xlu0 %v2361, 68
    %v2383 = vpop.permute.xlu0 %2382
    %2384 = vrot.lane.b32.xlu0 %v2362, 68
    %v2385 = vpop.permute.xlu0 %2384
    %2386 = vrot.lane.b32.xlu0 %v2363, 68
    %v2387 = vpop.permute.xlu0 %2386
    %v2396 = vadd.f32 %v2315, %v2373
    %v2397 = vadd.f32 %v2316, %v2375
    %v2398 = vadd.f32 %v2317, %v2377
    %v2399 = vadd.f32 %v2318, %v2379
    %v2400 = vadd.f32 %v2319, %v2381
    %v2401 = vadd.f32 %v2320, %v2383
    %v2402 = vadd.f32 %v2321, %v2385
    %v2403 = vadd.f32 %v2322, %v2387
    %v2406 = vsel %vm538, %v2195, %v2182
    %v2407 = vsel %vm398, %v2406, 0
    %2409 = vmatprep.subr.mxu0 0.0
    %2410 = vmatpush1.msra.mxu0 %v109
    %2411 = vmatprep.subr.mxu0 0.0
    %2412 = vmatpush1.msra.mxu0 %v110
    %2413 = vmatprep.subr.mxu0 0.0
    %2414 = vmatpush1.msra.mxu0 0.0
    %2415 = vmatprep.subr.mxu0 0.0
    %2416 = vmatpush1.msra.mxu0 0.0
    %2417 = vmatprep.subr.mxu0 0.0
    %2418 = vmatpush1.msra.mxu0 0.0
    %2419 = vmatprep.subr.mxu0 0.0
    %2420 = vmatpush1.msra.mxu0 0.0
    %2421 = vmatprep.subr.mxu0 0.0
    %2422 = vmatpush1.msra.mxu0 0.0
    %2423 = vmatprep.subr.mxu0 0.0
    %2424 = vmatpush1.msra.mxu0 0.0
    %2425 = vmatprep.subr.mxu0 0.0
    %2426 = vmatpush1.msra.mxu0 0.0
    %2427 = vmatprep.subr.mxu0 0.0
    %2428 = vmatpush1.msra.mxu0 0.0
    %2429 = vmatprep.subr.mxu0 0.0
    %2430 = vmatpush1.msra.mxu0 0.0
    %2431 = vmatprep.subr.mxu0 0.0
    %2432 = vmatpush1.msra.mxu0 0.0
    %2433 = vmatprep.subr.mxu0 0.0
    %2434 = vmatpush1.msra.mxu0 0.0
    %2435 = vmatprep.subr.mxu0 0.0
    %2436 = vmatpush1.msra.mxu0 0.0
    %2437 = vmatprep.subr.mxu0 0.0
    %2438 = vmatpush1.msra.mxu0 0.0
    %2439 = vmatprep.subr.mxu0 0.0
    %2440 = vmatpush1.msra.mxu0 0.0
    %2441 = vmatprep.subr.mxu0 0.0
    %2442 = vmatpush1.msra.mxu0 0.0
    %2443 = vmatprep.subr.mxu0 0.0
    %2444 = vmatpush1.msra.mxu0 0.0
    %2445 = vmatprep.subr.mxu0 0.0
    %2446 = vmatpush1.msra.mxu0 0.0
    %2447 = vmatprep.subr.mxu0 0.0
    %2448 = vmatpush1.msra.mxu0 0.0
    %2449 = vmatprep.subr.mxu0 0.0
    %2450 = vmatpush1.msra.mxu0 0.0
    %2451 = vmatprep.subr.mxu0 0.0
    %2452 = vmatpush1.msra.mxu0 0.0
    %2453 = vmatprep.subr.mxu0 0.0
    %2454 = vmatpush1.msra.mxu0 0.0
    %2455 = vmatprep.subr.mxu0 0.0
    %2456 = vmatpush1.msra.mxu0 0.0
    %2457 = vmatprep.subr.mxu0 0.0
    %2458 = vmatpush1.msra.mxu0 0.0
    %2459 = vmatprep.subr.mxu0 0.0
    %2460 = vmatpush1.msra.mxu0 0.0
    %2461 = vmatprep.subr.mxu0 0.0
    %2462 = vmatpush1.msra.mxu0 0.0
    %2463 = vmatprep.subr.mxu0 0.0
    %2464 = vmatpush1.msra.mxu0 0.0
    %2465 = vmatprep.subr.mxu0 0.0
    %2466 = vmatpush1.msra.mxu0 0.0
    %2467 = vmatprep.subr.mxu0 0.0
    %2468 = vmatpush1.msra.mxu0 0.0
    %2469 = vmatprep.subr.mxu0 0.0
    %2470 = vmatpush1.msra.mxu0 0.0
    %2471 = vmatprep.subr.mxu0 0.0
    %2472 = vmatpush1.msra.mxu0 0.0
    %2473 = vmatprep.mubr.f32.mxu0 0.0
    %2474 = vmatmul.mubr.f32.gmra.mrb[0].mxu0 %v2407
    %v2475 = vpop.f32.mrb[0].mxu0
    %v2476 = vadd.f32 0.0, %v2475
    %v2477 = vpop.f32.mrb[0].mxu0
    %2478 = vdwg.mxu0
    %2480 = vrot.lane.b32.xlu0 %v2476, 76
    %v2481 = vpop.permute.xlu0 %2480
    %v2483 = vadd.f32 %v1492, %v2481
    %v2484 = vmax.f32 %v2483, -20.0
    %v2485 = vmin.f32 %v2484, 20.0
    %2487 = vrot.lane.b32.xlu0 %v2485, 52
    %v2488 = vpop.permute.xlu0 %2487
    %s2490 = scalar_lea.vmem [#allocation2], 2
    %2491 = vst.msk [vmem:[%s2490] sm:$0x3] %vm1310, %v2488
    %2493 = vrot.lane.b32.xlu0 %v1417, 64
    %v2494 = vpop.permute.xlu0 %2493
    %2496 = vrot.lane.b32.xlu0 %v2406, 32
    %v2497 = vpop.permute.xlu0 %2496
    %v2499 = vsel %vm222, %v2494, %v2497
    %s2500 = scalar_lea.vmem %s0, 4
    %v2501 = vld [vmem:[%s2500] sm:$0x3]
    %v2503 = vsel %vm112, %v2499, 0
    %2505 = vmatprep.subr.mxu0 0.0
    %2506 = vmatpush1.msra.mxu0 %v98
    %2507 = vmatprep.subr.mxu0 0.0
    %2508 = vmatpush1.msra.mxu0 %v99
    %2509 = vmatprep.subr.mxu0 0.0
    %2510 = vmatpush1.msra.mxu0 %v100
    %2511 = vmatprep.subr.mxu0 0.0
    %2512 = vmatpush1.msra.mxu0 %v101
    %2513 = vmatprep.subr.mxu0 0.0
    %2514 = vmatpush1.msra.mxu0 %v102
    %2515 = vmatprep.subr.mxu0 0.0
    %2516 = vmatpush1.msra.mxu0 %v103
    %2517 = vmatprep.subr.mxu0 0.0
    %2518 = vmatpush1.msra.mxu0 0.0
    %2519 = vmatprep.subr.mxu0 0.0
    %2520 = vmatpush1.msra.mxu0 0.0
    %2521 = vmatprep.subr.mxu0 0.0
    %2522 = vmatpush1.msra.mxu0 0.0
    %2523 = vmatprep.subr.mxu0 0.0
    %2524 = vmatpush1.msra.mxu0 0.0
    %2525 = vmatprep.subr.mxu0 0.0
    %2526 = vmatpush1.msra.mxu0 0.0
    %2527 = vmatprep.subr.mxu0 0.0
    %2528 = vmatpush1.msra.mxu0 0.0
    %2529 = vmatprep.subr.mxu0 0.0
    %2530 = vmatpush1.msra.mxu0 0.0
    %2531 = vmatprep.subr.mxu0 0.0
    %2532 = vmatpush1.msra.mxu0 0.0
    %2533 = vmatprep.subr.mxu0 0.0
    %2534 = vmatpush1.msra.mxu0 0.0
    %2535 = vmatprep.subr.mxu0 0.0
    %2536 = vmatpush1.msra.mxu0 0.0
    %2537 = vmatprep.subr.mxu0 0.0
    %2538 = vmatpush1.msra.mxu0 0.0
    %2539 = vmatprep.subr.mxu0 0.0
    %2540 = vmatpush1.msra.mxu0 0.0
    %2541 = vmatprep.subr.mxu0 0.0
    %2542 = vmatpush1.msra.mxu0 0.0
    %2543 = vmatprep.subr.mxu0 0.0
    %2544 = vmatpush1.msra.mxu0 0.0
    %2545 = vmatprep.subr.mxu0 0.0
    %2546 = vmatpush1.msra.mxu0 0.0
    %2547 = vmatprep.subr.mxu0 0.0
    %2548 = vmatpush1.msra.mxu0 0.0
    %2549 = vmatprep.subr.mxu0 0.0
    %2550 = vmatpush1.msra.mxu0 0.0
    %2551 = vmatprep.subr.mxu0 0.0
    %2552 = vmatpush1.msra.mxu0 0.0
    %2553 = vmatprep.subr.mxu0 0.0
    %2554 = vmatpush1.msra.mxu0 0.0
    %2555 = vmatprep.subr.mxu0 0.0
    %2556 = vmatpush1.msra.mxu0 0.0
    %2557 = vmatprep.subr.mxu0 0.0
    %2558 = vmatpush1.msra.mxu0 0.0
    %2559 = vmatprep.subr.mxu0 0.0
    %2560 = vmatpush1.msra.mxu0 0.0
    %2561 = vmatprep.subr.mxu0 0.0
    %2562 = vmatpush1.msra.mxu0 0.0
    %2563 = vmatprep.subr.mxu0 0.0
    %2564 = vmatpush1.msra.mxu0 0.0
    %2565 = vmatprep.subr.mxu0 0.0
    %2566 = vmatpush1.msra.mxu0 0.0
    %2567 = vmatprep.subr.mxu0 0.0
    %2568 = vmatpush1.msra.mxu0 0.0
    %2569 = vmatprep.mubr.f32.mxu0 0.0
    %2570 = vmatmul.mubr.f32.gmra.mrb[0].mxu0 %v2503
    %v2571 = vpop.f32.mrb[0].mxu0
    %v2572 = vadd.f32 0.0, %v2571
    %v2573 = vpop.f32.mrb[0].mxu0
    %2574 = vdwg.mxu0
    %v2575 = vadd.f32 %v2501, %v2572
    %v2576 = vmul.f32 %v2575, 0.5
    %v2577 = vtanh.pop %v2576
    %v2578 = vadd.f32 %v2577, 1.0
    %v2579 = vmul.f32 %v2578, 0.5
    %v2580 = vtanh.pop %v2575
    %v2581 = vmul.f32 %v2579, %v1411
    %2583 = vrot.lane.b32.xlu0 %v2580, 32
    %v2584 = vpop.permute.xlu0 %2583
    %v2586 = vmul.f32 %v2579, %v2584
    %2588 = vrot.lane.b32.xlu0 %v2586, 32
    %v2589 = vpop.permute.xlu0 %2588
    %v2591 = vadd.f32 %v2581, %v2589
    %v2592 = vtanh.pop %v2591
    %2594 = vrot.lane.b32.xlu0 %v2592, 32
    %v2595 = vpop.permute.xlu0 %2594
    %v2597 = vmul.f32 %v2579, %v2595
    %v2598 = vmax.f32 %v2597, -20.0
    %v2599 = vmin.f32 %v2598, 20.0
    %2601 = vrot.lane.b32.xlu0 %v2599, 64
    %v2602 = vpop.permute.xlu0 %2601
    %v2603 = vsel %vm222, %v2602, 0
    %2605 = vmatprep.subr.mxu0 0.0
    %2606 = vmatpush1.msra.mxu0 %v104
    %2607 = vmatprep.subr.mxu0 0.0
    %2608 = vmatpush1.msra.mxu0 %v105
    %2609 = vmatprep.subr.mxu0 0.0
    %2610 = vmatpush1.msra.mxu0 %v106
    %2611 = vmatprep.subr.mxu0 0.0
    %2612 = vmatpush1.msra.mxu0 %v107
    %2613 = vmatprep.subr.mxu0 0.0
    %2614 = vmatpush1.msra.mxu0 0.0
    %2615 = vmatprep.subr.mxu0 0.0
    %2616 = vmatpush1.msra.mxu0 0.0
    %2617 = vmatprep.subr.mxu0 0.0
    %2618 = vmatpush1.msra.mxu0 0.0
    %2619 = vmatprep.subr.mxu0 0.0
    %2620 = vmatpush1.msra.mxu0 0.0
    %2621 = vmatprep.subr.mxu0 0.0
    %2622 = vmatpush1.msra.mxu0 0.0
    %2623 = vmatprep.subr.mxu0 0.0
    %2624 = vmatpush1.msra.mxu0 0.0
    %2625 = vmatprep.subr.mxu0 0.0
    %2626 = vmatpush1.msra.mxu0 0.0
    %2627 = vmatprep.subr.mxu0 0.0
    %2628 = vmatpush1.msra.mxu0 0.0
    %2629 = vmatprep.subr.mxu0 0.0
    %2630 = vmatpush1.msra.mxu0 0.0
    %2631 = vmatprep.subr.mxu0 0.0
    %2632 = vmatpush1.msra.mxu0 0.0
    %2633 = vmatprep.subr.mxu0 0.0
    %2634 = vmatpush1.msra.mxu0 0.0
    %2635 = vmatprep.subr.mxu0 0.0
    %2636 = vmatpush1.msra.mxu0 0.0
    %2637 = vmatprep.subr.mxu0 0.0
    %2638 = vmatpush1.msra.mxu0 0.0
    %2639 = vmatprep.subr.mxu0 0.0
    %2640 = vmatpush1.msra.mxu0 0.0
    %2641 = vmatprep.subr.mxu0 0.0
    %2642 = vmatpush1.msra.mxu0 0.0
    %2643 = vmatprep.subr.mxu0 0.0
    %2644 = vmatpush1.msra.mxu0 0.0
    %2645 = vmatprep.subr.mxu0 0.0
    %2646 = vmatpush1.msra.mxu0 0.0
    %2647 = vmatprep.subr.mxu0 0.0
    %2648 = vmatpush1.msra.mxu0 0.0
    %2649 = vmatprep.subr.mxu0 0.0
    %2650 = vmatpush1.msra.mxu0 0.0
    %2651 = vmatprep.subr.mxu0 0.0
    %2652 = vmatpush1.msra.mxu0 0.0
    %2653 = vmatprep.subr.mxu0 0.0
    %2654 = vmatpush1.msra.mxu0 0.0
    %2655 = vmatprep.subr.mxu0 0.0
    %2656 = vmatpush1.msra.mxu0 0.0
    %2657 = vmatprep.subr.mxu0 0.0
    %2658 = vmatpush1.msra.mxu0 0.0
    %2659 = vmatprep.subr.mxu0 0.0
    %2660 = vmatpush1.msra.mxu0 0.0
    %2661 = vmatprep.subr.mxu0 0.0
    %2662 = vmatpush1.msra.mxu0 0.0
    %2663 = vmatprep.subr.mxu0 0.0
    %2664 = vmatpush1.msra.mxu0 0.0
    %2665 = vmatprep.subr.mxu0 0.0
    %2666 = vmatpush1.msra.mxu0 0.0
    %2667 = vmatprep.subr.mxu0 0.0
    %2668 = vmatpush1.msra.mxu0 0.0
    %2669 = vmatprep.mubr.f32.mxu0 0.0
    %2670 = vmatmul.mubr.f32.gmra.mrb[0].mxu0 %v2603
    %v2671 = vpop.f32.mrb[0].mxu0
    %v2672 = vadd.f32 %v217, %v2671
    %v2673 = vpop.f32.mrb[0].mxu0
    %2674 = vdwg.mxu0
    %v2676 = vrot.slane %v2672, 6
    %2677 = vrot.lane.b32.xlu0 %v2676, 106
    %v2678 = vpop.permute.xlu0 %2677
    %v2680 = vsel %vm84, %v2672, %v2678
    %v2681 = vmul.f32 %v2672, 0.5
    %v2682 = vtanh.pop %v2681
    %v2683 = vadd.f32 %v2682, 1.0
    %v2684 = vmul.f32 %v2683, 0.5
    %v2685 = vtanh.pop %v2672
    %v2686 = vtanh.pop %v2680
    %v2687 = vmax.f32 %v2680, 0.0
    %v2688 = vand.u32 2147483647, %v2680
    %v2689 = vsub.f32 0.0, %v2688
    %v2690 = vmul.f32 %v2689, 1.442695
    %v2691 = vpow.pop %v2690
    %v2692 = vadd.f32 %v2691, 1.0
    %v2693 = vlog2.pop %v2692
    %v2694 = vmul.f32 %v2693, 0.6931472
    %v2695 = vadd.f32 %v2687, %v2694
    %v2696 = vmul.f32 %v2680, 0.5
    %v2697 = vtanh.pop %v2696
    %v2698 = vadd.f32 %v2697, 1.0
    %v2699 = vmul.f32 %v2698, 0.5
    %v2700 = vsel %vm320, %v2680, -inf
    %2701 = vmax.xlane.f32.xlu0 %v2700
    %v2702 = vpop.xlane.xlu0 %2701
    %v2703 = vsub.f32 %v2680, %v2702
    %v2704 = vmul.f32 %v2703, 1.442695
    %v2705 = vpow.pop %v2704
    %2707 = vrot.lane.b32.xlu0 %v2705, 110
    %v2708 = vpop.permute.xlu0 %2707
    %v2710 = vsel %vm331, %v2708, 0.0
    %2711 = vadd.xlane.f32.xlu0 %v2710
    %v2712 = vpop.xlane.xlu0 %2711
    %v2713 = vrcp.pop %v2712
    %v2714 = vmul.f32 %v2705, %v2713
    %v2717 = vunpack.c.l.s4 1966171168
    %v2718 = vunpack.c.0.s8 %v2717
    %v2719 = vlaneseq
    %v2720 = vshrl.u32 %v2719, 7
    %v2721 = vsub.s32 %v2718, %v2720
    %v2722 = vrot.slane %v2686, %v2721
    %v2723 = vcombine.high %v2722, %v2722
    %v2725 = vunpack.c.l.s4 1966171168
    %v2726 = vunpack.c.0.s8 %v2725
    %v2727 = vlaneseq
    %v2728 = vshrl.u32 %v2727, 7
    %v2729 = vsub.s32 %v2726, %v2728
    %v2730 = vrot.slane %v2722, %v2729
    %v2732 = vunpack.c.l.s4 1966171168
    %v2733 = vunpack.c.0.s8 %v2732
    %v2734 = vlaneseq
    %v2735 = vshrl.u32 %v2734, 7
    %v2736 = vsub.s32 %v2733, %v2735
    %v2737 = vrot.slane %v2723, %v2736
    %v2738 = vcombine.high %v2730, %v2730
    %v2739 = vcombine.high %v2737, %v2737
    %v2740 = vlaneseq
    %v2741 = vshrl.u32 %v2740, 7
    %v2742 = vsub.s32 0, %v2741
    %v2743 = vrot.slane %v2730, %v2742
    %v2744 = vlaneseq
    %v2745 = vshrl.u32 %v2744, 7
    %v2746 = vsub.s32 0, %v2745
    %v2747 = vrot.slane %v2737, %v2746
    %v2748 = vlaneseq
    %v2749 = vshrl.u32 %v2748, 7
    %v2750 = vsub.s32 0, %v2749
    %v2751 = vrot.slane %v2738, %v2750
    %v2752 = vlaneseq
    %v2753 = vshrl.u32 %v2752, 7
    %v2754 = vsub.s32 0, %v2753
    %v2755 = vrot.slane %v2739, %v2754
    %v2760 = vmul.f32 %v2396, %v2743
    %v2761 = vmul.f32 %v2397, %v2743
    %v2762 = vmul.f32 %v2398, %v2743
    %v2763 = vmul.f32 %v2399, %v2743
    %v2764 = vmul.f32 %v2400, %v2747
    %v2765 = vmul.f32 %v2401, %v2747
    %v2766 = vmul.f32 %v2402, %v2747
    %v2767 = vmul.f32 %v2403, %v2747
    %v2768 = vmul.f32 %v2396, %v2751
    %v2769 = vmul.f32 %v2397, %v2751
    %v2770 = vmul.f32 %v2398, %v2751
    %v2771 = vmul.f32 %v2399, %v2751
    %v2772 = vmul.f32 %v2400, %v2755
    %v2773 = vmul.f32 %v2401, %v2755
    %v2774 = vmul.f32 %v2402, %v2755
    %v2775 = vmul.f32 %v2403, %v2755
    %v2776 = vsel %vm398, %v2760, 0.0
    %2777 = vadd.xlane.f32.xlu0 %v2776
    %v2778 = vpop.xlane.xlu0 %2777
    %v2779 = vsel %vm398, %v2761, 0.0
    %2780 = vadd.xlane.f32.xlu0 %v2779
    %v2781 = vpop.xlane.xlu0 %2780
    %v2782 = vsel %vm398, %v2762, 0.0
    %2783 = vadd.xlane.f32.xlu0 %v2782
    %v2784 = vpop.xlane.xlu0 %2783
    %v2785 = vsel %vm398, %v2763, 0.0
    %2786 = vadd.xlane.f32.xlu0 %v2785
    %v2787 = vpop.xlane.xlu0 %2786
    %v2788 = vsel %vm398, %v2764, 0.0
    %2789 = vadd.xlane.f32.xlu0 %v2788
    %v2790 = vpop.xlane.xlu0 %2789
    %v2791 = vsel %vm398, %v2765, 0.0
    %2792 = vadd.xlane.f32.xlu0 %v2791
    %v2793 = vpop.xlane.xlu0 %2792
    %v2794 = vsel %vm398, %v2766, 0.0
    %2795 = vadd.xlane.f32.xlu0 %v2794
    %v2796 = vpop.xlane.xlu0 %2795
    %v2797 = vsel %vm398, %v2767, 0.0
    %2798 = vadd.xlane.f32.xlu0 %v2797
    %v2799 = vpop.xlane.xlu0 %2798
    %v2800 = vsel %vm398, %v2768, 0.0
    %2801 = vadd.xlane.f32.xlu0 %v2800
    %v2802 = vpop.xlane.xlu0 %2801
    %v2803 = vsel %vm398, %v2769, 0.0
    %2804 = vadd.xlane.f32.xlu0 %v2803
    %v2805 = vpop.xlane.xlu0 %2804
    %v2806 = vsel %vm398, %v2770, 0.0
    %2807 = vadd.xlane.f32.xlu0 %v2806
    %v2808 = vpop.xlane.xlu0 %2807
    %v2809 = vsel %vm398, %v2771, 0.0
    %2810 = vadd.xlane.f32.xlu0 %v2809
    %v2811 = vpop.xlane.xlu0 %2810
    %v2812 = vsel %vm398, %v2772, 0.0
    %2813 = vadd.xlane.f32.xlu0 %v2812
    %v2814 = vpop.xlane.xlu0 %2813
    %v2815 = vsel %vm398, %v2773, 0.0
    %2816 = vadd.xlane.f32.xlu0 %v2815
    %v2817 = vpop.xlane.xlu0 %2816
    %v2818 = vsel %vm398, %v2774, 0.0
    %2819 = vadd.xlane.f32.xlu0 %v2818
    %v2820 = vpop.xlane.xlu0 %2819
    %v2821 = vsel %vm398, %v2775, 0.0
    %2822 = vadd.xlane.f32.xlu0 %v2821
    %v2823 = vpop.xlane.xlu0 %2822
    %v2824 = vmul.f32 %v2686, %v2686
    %v2825 = vsel %vm448, %v2824, 0.0
    %2826 = vadd.xlane.f32.xlu0 %v2825
    %v2827 = vpop.xlane.xlu0 %2826
    %v2828 = vmul.f32 %v2396, %v2396
    %v2829 = vmul.f32 %v2397, %v2397
    %v2830 = vmul.f32 %v2398, %v2398
    %v2831 = vmul.f32 %v2399, %v2399
    %v2832 = vmul.f32 %v2400, %v2400
    %v2833 = vmul.f32 %v2401, %v2401
    %v2834 = vmul.f32 %v2402, %v2402
    %v2835 = vmul.f32 %v2403, %v2403
    %v2836 = vsel %vm398, %v2828, 0.0
    %2837 = vadd.xlane.f32.xlu0 %v2836
    %v2838 = vpop.xlane.xlu0 %2837
    %v2839 = vsel %vm398, %v2829, 0.0
    %2840 = vadd.xlane.f32.xlu0 %v2839
    %v2841 = vpop.xlane.xlu0 %2840
    %v2842 = vsel %vm398, %v2830, 0.0
    %2843 = vadd.xlane.f32.xlu0 %v2842
    %v2844 = vpop.xlane.xlu0 %2843
    %v2845 = vsel %vm398, %v2831, 0.0
    %2846 = vadd.xlane.f32.xlu0 %v2845
    %v2847 = vpop.xlane.xlu0 %2846
    %v2848 = vsel %vm398, %v2832, 0.0
    %2849 = vadd.xlane.f32.xlu0 %v2848
    %v2850 = vpop.xlane.xlu0 %2849
    %v2851 = vsel %vm398, %v2833, 0.0
    %2852 = vadd.xlane.f32.xlu0 %v2851
    %v2853 = vpop.xlane.xlu0 %2852
    %v2854 = vsel %vm398, %v2834, 0.0
    %2855 = vadd.xlane.f32.xlu0 %v2854
    %v2856 = vpop.xlane.xlu0 %2855
    %v2857 = vsel %vm398, %v2835, 0.0
    %2858 = vadd.xlane.f32.xlu0 %v2857
    %v2859 = vpop.xlane.xlu0 %2858
    %v2868 = vlaneseq
    %v2869 = vshrl.u32 %v2868, 7
    %v2870 = vsub.s32 %v493, %v2869
    %v2871 = vrot.slane %v2838, %v2870
    %v2872 = vlaneseq
    %v2873 = vshrl.u32 %v2872, 7
    %v2874 = vsub.s32 %v498, %v2873
    %v2875 = vrot.slane %v2841, %v2874
    %v2876 = vsel %vm503, %v2875, %v2871
    %v2877 = vlaneseq
    %v2878 = vshrl.u32 %v2877, 7
    %v2879 = vsub.s32 %v505, %v2878
    %v2880 = vrot.slane %v2844, %v2879
    %v2881 = vsel %vm510, %v2880, %v2876
    %v2882 = vlaneseq
    %v2883 = vshrl.u32 %v2882, 7
    %v2884 = vsub.s32 %v512, %v2883
    %v2885 = vrot.slane %v2847, %v2884
    %v2886 = vsel %vm517, %v2885, %v2881
    %v2887 = vlaneseq
    %v2888 = vshrl.u32 %v2887, 7
    %v2889 = vsub.s32 %v493, %v2888
    %v2890 = vrot.slane %v2850, %v2889
    %v2891 = vlaneseq
    %v2892 = vshrl.u32 %v2891, 7
    %v2893 = vsub.s32 %v498, %v2892
    %v2894 = vrot.slane %v2853, %v2893
    %v2895 = vsel %vm503, %v2894, %v2890
    %v2896 = vlaneseq
    %v2897 = vshrl.u32 %v2896, 7
    %v2898 = vsub.s32 %v505, %v2897
    %v2899 = vrot.slane %v2856, %v2898
    %v2900 = vsel %vm510, %v2899, %v2895
    %v2901 = vlaneseq
    %v2902 = vshrl.u32 %v2901, 7
    %v2903 = vsub.s32 %v512, %v2902
    %v2904 = vrot.slane %v2859, %v2903
    %v2905 = vsel %vm517, %v2904, %v2900
    %v2906 = vsel %vm538, %v2905, %v2886
    %v2908 = vsel %vm541, %v2905, %v2886
    %v2910 = vsel %vm84, %v2906, %v2908
    %v2911 = vmul.f32 %v2827, %v2910
    %v2912 = vadd.f32 %v2911, 1e-16
    %v2913 = vrsqrt.pop %v2912
    %v2915 = vlaneseq
    %v2916 = vshrl.u32 %v2915, 7
    %v2917 = vsub.s32 0, %v2916
    %v2918 = vrot.slane %v2913, %v2917
    %2920 = vbcast.lane.b32.xlu0 %v2918, 256
    %v2921 = vpop.permute.xlu0 %2920
    %s2923 = sor.u32 256, 8
    %2924 = vbcast.lane.b32.xlu0 %v2918, %s2923
    %v2925 = vpop.permute.xlu0 %2924
    %s2927 = sor.u32 256, 16
    %2928 = vbcast.lane.b32.xlu0 %v2918, %s2927
    %v2929 = vpop.permute.xlu0 %2928
    %s2931 = sor.u32 256, 24
    %2932 = vbcast.lane.b32.xlu0 %v2918, %s2931
    %v2933 = vpop.permute.xlu0 %2932
    %v2934 = vlaneseq
    %v2935 = vshrl.u32 %v2934, 7
    %v2936 = vsub.s32 1, %v2935
    %v2937 = vrot.slane %v2913, %v2936
    %2939 = vbcast.lane.b32.xlu0 %v2937, 256
    %v2940 = vpop.permute.xlu0 %2939
    %s2942 = sor.u32 256, 8
    %2943 = vbcast.lane.b32.xlu0 %v2937, %s2942
    %v2944 = vpop.permute.xlu0 %2943
    %s2946 = sor.u32 256, 16
    %2947 = vbcast.lane.b32.xlu0 %v2937, %s2946
    %v2948 = vpop.permute.xlu0 %2947
    %s2950 = sor.u32 256, 24
    %2951 = vbcast.lane.b32.xlu0 %v2937, %s2950
    %v2952 = vpop.permute.xlu0 %2951
    %v2953 = vlaneseq
    %v2954 = vshrl.u32 %v2953, 7
    %v2955 = vsub.s32 2, %v2954
    %v2956 = vrot.slane %v2913, %v2955
    %2958 = vbcast.lane.b32.xlu0 %v2956, 256
    %v2959 = vpop.permute.xlu0 %2958
    %s2961 = sor.u32 256, 8
    %2962 = vbcast.lane.b32.xlu0 %v2956, %s2961
    %v2963 = vpop.permute.xlu0 %2962
    %s2965 = sor.u32 256, 16
    %2966 = vbcast.lane.b32.xlu0 %v2956, %s2965
    %v2967 = vpop.permute.xlu0 %2966
    %s2969 = sor.u32 256, 24
    %2970 = vbcast.lane.b32.xlu0 %v2956, %s2969
    %v2971 = vpop.permute.xlu0 %2970
    %v2972 = vlaneseq
    %v2973 = vshrl.u32 %v2972, 7
    %v2974 = vsub.s32 3, %v2973
    %v2975 = vrot.slane %v2913, %v2974
    %2977 = vbcast.lane.b32.xlu0 %v2975, 256
    %v2978 = vpop.permute.xlu0 %2977
    %s2980 = sor.u32 256, 8
    %2981 = vbcast.lane.b32.xlu0 %v2975, %s2980
    %v2982 = vpop.permute.xlu0 %2981
    %s2984 = sor.u32 256, 16
    %2985 = vbcast.lane.b32.xlu0 %v2975, %s2984
    %v2986 = vpop.permute.xlu0 %2985
    %s2988 = sor.u32 256, 24
    %2989 = vbcast.lane.b32.xlu0 %v2975, %s2988
    %v2990 = vpop.permute.xlu0 %2989
    %v3007 = vmul.f32 %v2778, %v2921
    %v3008 = vmul.f32 %v2781, %v2925
    %v3009 = vmul.f32 %v2784, %v2929
    %v3010 = vmul.f32 %v2787, %v2933
    %v3011 = vmul.f32 %v2790, %v2940
    %v3012 = vmul.f32 %v2793, %v2944
    %v3013 = vmul.f32 %v2796, %v2948
    %v3014 = vmul.f32 %v2799, %v2952
    %v3015 = vmul.f32 %v2802, %v2959
    %v3016 = vmul.f32 %v2805, %v2963
    %v3017 = vmul.f32 %v2808, %v2967
    %v3018 = vmul.f32 %v2811, %v2971
    %v3019 = vmul.f32 %v2814, %v2978
    %v3020 = vmul.f32 %v2817, %v2982
    %v3021 = vmul.f32 %v2820, %v2986
    %v3022 = vmul.f32 %v2823, %v2990
    %3024 = vset.pattern.permute.xlu0 16
    %3025 = vperm.xlu0 %3024, %v2695
    %v3026 = vpop.permute.xlu0 %3025
    %3044 = vset.pattern.permute.xlu0 0
    %3045 = vperm.xlu0 %3044, %v3007
    %v3046 = vpop.permute.xlu0 %3045
    %3047 = vset.pattern.permute.xlu0 0
    %3048 = vperm.xlu0 %3047, %v3008
    %v3049 = vpop.permute.xlu0 %3048
    %3050 = vset.pattern.permute.xlu0 0
    %3051 = vperm.xlu0 %3050, %v3009
    %v3052 = vpop.permute.xlu0 %3051
    %3053 = vset.pattern.permute.xlu0 0
    %3054 = vperm.xlu0 %3053, %v3010
    %v3055 = vpop.permute.xlu0 %3054
    %3056 = vset.pattern.permute.xlu0 0
    %3057 = vperm.xlu0 %3056, %v3011
    %v3058 = vpop.permute.xlu0 %3057
    %3059 = vset.pattern.permute.xlu0 0
    %3060 = vperm.xlu0 %3059, %v3012
    %v3061 = vpop.permute.xlu0 %3060
    %3062 = vset.pattern.permute.xlu0 0
    %3063 = vperm.xlu0 %3062, %v3013
    %v3064 = vpop.permute.xlu0 %3063
    %3065 = vset.pattern.permute.xlu0 0
    %3066 = vperm.xlu0 %3065, %v3014
    %v3067 = vpop.permute.xlu0 %3066
    %3068 = vset.pattern.permute.xlu0 0
    %3069 = vperm.xlu0 %3068, %v3015
    %v3070 = vpop.permute.xlu0 %3069
    %3071 = vset.pattern.permute.xlu0 0
    %3072 = vperm.xlu0 %3071, %v3016
    %v3073 = vpop.permute.xlu0 %3072
    %3074 = vset.pattern.permute.xlu0 0
    %3075 = vperm.xlu0 %3074, %v3017
    %v3076 = vpop.permute.xlu0 %3075
    %3077 = vset.pattern.permute.xlu0 0
    %3078 = vperm.xlu0 %3077, %v3018
    %v3079 = vpop.permute.xlu0 %3078
    %3080 = vset.pattern.permute.xlu0 0
    %3081 = vperm.xlu0 %3080, %v3019
    %v3082 = vpop.permute.xlu0 %3081
    %3083 = vset.pattern.permute.xlu0 0
    %3084 = vperm.xlu0 %3083, %v3020
    %v3085 = vpop.permute.xlu0 %3084
    %3086 = vset.pattern.permute.xlu0 0
    %3087 = vperm.xlu0 %3086, %v3021
    %v3088 = vpop.permute.xlu0 %3087
    %3089 = vset.pattern.permute.xlu0 0
    %3090 = vperm.xlu0 %3089, %v3022
    %v3091 = vpop.permute.xlu0 %3090
    %v3092 = vlaneseq
    %v3093 = vshrl.u32 %v3092, 7
    %v3094 = vsub.s32 %v493, %v3093
    %v3095 = vrot.slane %v3046, %v3094
    %v3096 = vlaneseq
    %v3097 = vshrl.u32 %v3096, 7
    %v3098 = vsub.s32 %v498, %v3097
    %v3099 = vrot.slane %v3049, %v3098
    %v3100 = vsel %vm503, %v3099, %v3095
    %v3101 = vlaneseq
    %v3102 = vshrl.u32 %v3101, 7
    %v3103 = vsub.s32 %v505, %v3102
    %v3104 = vrot.slane %v3052, %v3103
    %v3105 = vsel %vm510, %v3104, %v3100
    %v3106 = vlaneseq
    %v3107 = vshrl.u32 %v3106, 7
    %v3108 = vsub.s32 %v512, %v3107
    %v3109 = vrot.slane %v3055, %v3108
    %v3110 = vsel %vm517, %v3109, %v3105
    %v3111 = vlaneseq
    %v3112 = vshrl.u32 %v3111, 7
    %v3113 = vsub.s32 %v493, %v3112
    %v3114 = vrot.slane %v3058, %v3113
    %v3115 = vlaneseq
    %v3116 = vshrl.u32 %v3115, 7
    %v3117 = vsub.s32 %v498, %v3116
    %v3118 = vrot.slane %v3061, %v3117
    %v3119 = vsel %vm503, %v3118, %v3114
    %v3120 = vlaneseq
    %v3121 = vshrl.u32 %v3120, 7
    %v3122 = vsub.s32 %v505, %v3121
    %v3123 = vrot.slane %v3064, %v3122
    %v3124 = vsel %vm510, %v3123, %v3119
    %v3125 = vlaneseq
    %v3126 = vshrl.u32 %v3125, 7
    %v3127 = vsub.s32 %v512, %v3126
    %v3128 = vrot.slane %v3067, %v3127
    %v3129 = vsel %vm517, %v3128, %v3124
    %v3130 = vlaneseq
    %v3131 = vshrl.u32 %v3130, 7
    %v3132 = vsub.s32 %v493, %v3131
    %v3133 = vrot.slane %v3070, %v3132
    %v3134 = vlaneseq
    %v3135 = vshrl.u32 %v3134, 7
    %v3136 = vsub.s32 %v498, %v3135
    %v3137 = vrot.slane %v3073, %v3136
    %v3138 = vsel %vm503, %v3137, %v3133
    %v3139 = vlaneseq
    %v3140 = vshrl.u32 %v3139, 7
    %v3141 = vsub.s32 %v505, %v3140
    %v3142 = vrot.slane %v3076, %v3141
    %v3143 = vsel %vm510, %v3142, %v3138
    %v3144 = vlaneseq
    %v3145 = vshrl.u32 %v3144, 7
    %v3146 = vsub.s32 %v512, %v3145
    %v3147 = vrot.slane %v3079, %v3146
    %v3148 = vsel %vm517, %v3147, %v3143
    %v3149 = vlaneseq
    %v3150 = vshrl.u32 %v3149, 7
    %v3151 = vsub.s32 %v493, %v3150
    %v3152 = vrot.slane %v3082, %v3151
    %v3153 = vlaneseq
    %v3154 = vshrl.u32 %v3153, 7
    %v3155 = vsub.s32 %v498, %v3154
    %v3156 = vrot.slane %v3085, %v3155
    %v3157 = vsel %vm503, %v3156, %v3152
    %v3158 = vlaneseq
    %v3159 = vshrl.u32 %v3158, 7
    %v3160 = vsub.s32 %v505, %v3159
    %v3161 = vrot.slane %v3088, %v3160
    %v3162 = vsel %vm510, %v3161, %v3157
    %v3163 = vlaneseq
    %v3164 = vshrl.u32 %v3163, 7
    %v3165 = vsub.s32 %v512, %v3164
    %v3166 = vrot.slane %v3091, %v3165
    %v3167 = vsel %vm517, %v3166, %v3162
    %v3168 = vsel %vm538, %v3129, %v3110
    %v3169 = vsel %vm803, %v3148, %v3168
    %v3170 = vsel %vm541, %v3167, %v3169
    %v3172 = vmul.f32 %v3026, %v3170
    %v3173 = vmul.f32 %v3172, 1.442695
    %v3174 = vpow.pop %v3173
    %v3175 = vsel %vm810, %v3174, 0.0
    %3176 = vadd.xlane.f32.xlu0 %v3175
    %v3177 = vpop.xlane.xlu0 %3176
    %v3178 = vrcp.pop %v3177
    %v3179 = vmul.f32 %v3174, %v3178
    %3181 = vset.pattern.permute.xlu0 17
    %3182 = vperm.xlu0 %3181, %v2699
    %v3183 = vpop.permute.xlu0 %3182
    %v3185 = vmul.f32 %v3183, %v3179
    %v3186 = vsub.f32 1.0, %v2699
    %3188 = vset.pattern.permute.xlu0 17
    %3189 = vperm.xlu0 %3188, %v3186
    %v3190 = vpop.permute.xlu0 %3189
    %v3192 = vmul.f32 %v3190, %v2123
    %v3193 = vadd.f32 %v3185, %v3192
    %v3195 = vsel %vm222, %v3193, 0
    %3197 = vmatprep.subr.mxu0 0.0
    %3198 = vmatpush1.msra.mxu0 %v94
    %3199 = vmatprep.subr.mxu0 0.0
    %3200 = vmatpush1.msra.mxu0 %v95
    %3201 = vmatprep.subr.mxu0 0.0
    %3202 = vmatpush1.msra.mxu0 %v96
    %3203 = vmatprep.subr.mxu0 0.0
    %3204 = vmatpush1.msra.mxu0 %v97
    %3205 = vmatprep.subr.mxu0 0.0
    %3206 = vmatpush1.msra.mxu0 0.0
    %3207 = vmatprep.subr.mxu0 0.0
    %3208 = vmatpush1.msra.mxu0 0.0
    %3209 = vmatprep.subr.mxu0 0.0
    %3210 = vmatpush1.msra.mxu0 0.0
    %3211 = vmatprep.subr.mxu0 0.0
    %3212 = vmatpush1.msra.mxu0 0.0
    %3213 = vmatprep.subr.mxu0 0.0
    %3214 = vmatpush1.msra.mxu0 0.0
    %3215 = vmatprep.subr.mxu0 0.0
    %3216 = vmatpush1.msra.mxu0 0.0
    %3217 = vmatprep.subr.mxu0 0.0
    %3218 = vmatpush1.msra.mxu0 0.0
    %3219 = vmatprep.subr.mxu0 0.0
    %3220 = vmatpush1.msra.mxu0 0.0
    %3221 = vmatprep.subr.mxu0 0.0
    %3222 = vmatpush1.msra.mxu0 0.0
    %3223 = vmatprep.subr.mxu0 0.0
    %3224 = vmatpush1.msra.mxu0 0.0
    %3225 = vmatprep.subr.mxu0 0.0
    %3226 = vmatpush1.msra.mxu0 0.0
    %3227 = vmatprep.subr.mxu0 0.0
    %3228 = vmatpush1.msra.mxu0 0.0
    %3229 = vmatprep.subr.mxu0 0.0
    %3230 = vmatpush1.msra.mxu0 0.0
    %3231 = vmatprep.subr.mxu0 0.0
    %3232 = vmatpush1.msra.mxu0 0.0
    %3233 = vmatprep.subr.mxu0 0.0
    %3234 = vmatpush1.msra.mxu0 0.0
    %3235 = vmatprep.subr.mxu0 0.0
    %3236 = vmatpush1.msra.mxu0 0.0
    %3237 = vmatprep.subr.mxu0 0.0
    %3238 = vmatpush1.msra.mxu0 0.0
    %3239 = vmatprep.subr.mxu0 0.0
    %3240 = vmatpush1.msra.mxu0 0.0
    %3241 = vmatprep.subr.mxu0 0.0
    %3242 = vmatpush1.msra.mxu0 0.0
    %3243 = vmatprep.subr.mxu0 0.0
    %3244 = vmatpush1.msra.mxu0 0.0
    %3245 = vmatprep.subr.mxu0 0.0
    %3246 = vmatpush1.msra.mxu0 0.0
    %3247 = vmatprep.subr.mxu0 0.0
    %3248 = vmatpush1.msra.mxu0 0.0
    %3249 = vmatprep.subr.mxu0 0.0
    %3250 = vmatpush1.msra.mxu0 0.0
    %3251 = vmatprep.subr.mxu0 0.0
    %3252 = vmatpush1.msra.mxu0 0.0
    %3253 = vmatprep.subr.mxu0 0.0
    %3254 = vmatpush1.msra.mxu0 0.0
    %3255 = vmatprep.subr.mxu0 0.0
    %3256 = vmatpush1.msra.mxu0 0.0
    %3257 = vmatprep.subr.mxu0 0.0
    %3258 = vmatpush1.msra.mxu0 0.0
    %3259 = vmatprep.subr.mxu0 0.0
    %3260 = vmatpush1.msra.mxu0 0.0
    %3261 = vmatprep.mubr.f32.mxu0 0.0
    %3262 = vmatmul.mubr.f32.gmra.mrb[0].mxu0 %v3195
    %v3263 = vpop.f32.mrb[0].mxu0
    %v3264 = vadd.f32 0.0, %v3263
    %v3265 = vpop.f32.mrb[0].mxu0
    %3266 = vdwg.mxu0
    %3268 = vset.pattern.permute.xlu0 18
    %3269 = vperm.xlu0 %3268, %v2714
    %v3270 = vpop.permute.xlu0 %3269
    %v3272 = vmul.f32 %v3270, %v3193
    %3273 = vset.pattern.permute.xlu0 19
    %3274 = vperm.xlu0 %3273, %v2714
    %v3275 = vpop.permute.xlu0 %3274
    %v3277 = vmul.f32 %v3275, %v3264
    %v3278 = vadd.f32 %v3272, %v3277
    %3279 = vset.pattern.permute.xlu0 20
    %3280 = vperm.xlu0 %3279, %v2714
    %v3281 = vpop.permute.xlu0 %3280
    %v3283 = vmul.f32 %v3281, %v3264
    %3285 = vrot.lane.b32.xlu0 %v3283, 96
    %v3286 = vpop.permute.xlu0 %3285
    %v3288 = vadd.f32 %v3278, %v3286
    %v3289 = vmax.f32 %v3288, 1e-30
    %v3290 = vlog2.pop %v3289
    %v3291 = vmul.f32 %v3290, 0.6931472
    %3292 = vset.pattern.permute.xlu0 21
    %3293 = vperm.xlu0 %3292, %v2695
    %v3294 = vpop.permute.xlu0 %3293
    %v3296 = vmul.f32 %v3294, %v3291
    %v3297 = vmul.f32 %v3296, 1.442695
    %v3298 = vpow.pop %v3297
    %v3299 = vsel %vm810, %v3298, 0.0
    %3300 = vadd.xlane.f32.xlu0 %v3299
    %v3301 = vpop.xlane.xlu0 %3300
    %v3302 = vrcp.pop %v3301
    %v3303 = vmul.f32 %v3298, %v3302
    %v3304 = vlaneseq
    %v3305 = vshrl.u32 %v3304, 7
    %v3306 = vsub.s32 0, %v3305
    %v3307 = vrot.slane %v3303, %v3306
    %3309 = vbcast.lane.b32.xlu0 %v3307, 256
    %v3310 = vpop.permute.xlu0 %3309
    %s3312 = sor.u32 256, 8
    %3313 = vbcast.lane.b32.xlu0 %v3307, %s3312
    %v3314 = vpop.permute.xlu0 %3313
    %s3316 = sor.u32 256, 16
    %3317 = vbcast.lane.b32.xlu0 %v3307, %s3316
    %v3318 = vpop.permute.xlu0 %3317
    %s3320 = sor.u32 256, 24
    %3321 = vbcast.lane.b32.xlu0 %v3307, %s3320
    %v3322 = vpop.permute.xlu0 %3321
    %v3323 = vlaneseq
    %v3324 = vshrl.u32 %v3323, 7
    %v3325 = vsub.s32 1, %v3324
    %v3326 = vrot.slane %v3303, %v3325
    %3328 = vbcast.lane.b32.xlu0 %v3326, 256
    %v3329 = vpop.permute.xlu0 %3328
    %s3331 = sor.u32 256, 8
    %3332 = vbcast.lane.b32.xlu0 %v3326, %s3331
    %v3333 = vpop.permute.xlu0 %3332
    %s3335 = sor.u32 256, 16
    %3336 = vbcast.lane.b32.xlu0 %v3326, %s3335
    %v3337 = vpop.permute.xlu0 %3336
    %s3339 = sor.u32 256, 24
    %3340 = vbcast.lane.b32.xlu0 %v3326, %s3339
    %v3341 = vpop.permute.xlu0 %3340
    %v3342 = vmul.f32 %v3310, %v2396
    %v3343 = vmul.f32 %v3314, %v2397
    %v3344 = vmul.f32 %v3318, %v2398
    %v3345 = vmul.f32 %v3322, %v2399
    %v3346 = vmul.f32 %v3329, %v2400
    %v3347 = vmul.f32 %v3333, %v2401
    %v3348 = vmul.f32 %v3337, %v2402
    %v3349 = vmul.f32 %v3341, %v2403
    %v3350 = vsel %vm398, %v3342, 0.0
    %v3351 = vsel %vm398, %v3343, 0.0
    %v3352 = vadd.f32 %v3350, %v3351
    %v3353 = vsel %vm398, %v3344, 0.0
    %v3354 = vadd.f32 %v3352, %v3353
    %v3355 = vsel %vm398, %v3345, 0.0
    %v3356 = vadd.f32 %v3354, %v3355
    %v3357 = vrot.slane %v3356, 4
    %v3358 = vadd.f32 %v3356, %v3357
    %v3359 = vrot.slane %v3358, 2
    %v3360 = vadd.f32 %v3358, %v3359
    %v3361 = vrot.slane %v3360, 1
    %v3362 = vadd.f32 %v3360, %v3361
    %v3363 = vsel %vm398, %v3346, 0.0
    %v3364 = vsel %vm398, %v3347, 0.0
    %v3365 = vadd.f32 %v3363, %v3364
    %v3366 = vsel %vm398, %v3348, 0.0
    %v3367 = vadd.f32 %v3365, %v3366
    %v3368 = vsel %vm398, %v3349, 0.0
    %v3369 = vadd.f32 %v3367, %v3368
    %v3370 = vrot.slane %v3369, 4
    %v3371 = vadd.f32 %v3369, %v3370
    %v3372 = vrot.slane %v3371, 2
    %v3373 = vadd.f32 %v3371, %v3372
    %v3374 = vrot.slane %v3373, 1
    %v3375 = vadd.f32 %v3373, %v3374
    %v3376 = vlaneseq
    %v3377 = vshrl.u32 %v3376, 7
    %v3378 = vsub.s32 2, %v3377
    %v3379 = vrot.slane %v3303, %v3378
    %3381 = vbcast.lane.b32.xlu0 %v3379, 256
    %v3382 = vpop.permute.xlu0 %3381
    %s3384 = sor.u32 256, 8
    %3385 = vbcast.lane.b32.xlu0 %v3379, %s3384
    %v3386 = vpop.permute.xlu0 %3385
    %s3388 = sor.u32 256, 16
    %3389 = vbcast.lane.b32.xlu0 %v3379, %s3388
    %v3390 = vpop.permute.xlu0 %3389
    %s3392 = sor.u32 256, 24
    %3393 = vbcast.lane.b32.xlu0 %v3379, %s3392
    %v3394 = vpop.permute.xlu0 %3393
    %v3395 = vlaneseq
    %v3396 = vshrl.u32 %v3395, 7
    %v3397 = vsub.s32 3, %v3396
    %v3398 = vrot.slane %v3303, %v3397
    %3400 = vbcast.lane.b32.xlu0 %v3398, 256
    %v3401 = vpop.permute.xlu0 %3400
    %s3403 = sor.u32 256, 8
    %3404 = vbcast.lane.b32.xlu0 %v3398, %s3403
    %v3405 = vpop.permute.xlu0 %3404
    %s3407 = sor.u32 256, 16
    %3408 = vbcast.lane.b32.xlu0 %v3398, %s3407
    %v3409 = vpop.permute.xlu0 %3408
    %s3411 = sor.u32 256, 24
    %3412 = vbcast.lane.b32.xlu0 %v3398, %s3411
    %v3413 = vpop.permute.xlu0 %3412
    %v3416 = vunpack.c.l.s4 1966171168
    %v3417 = vunpack.c.0.s8 %v3416
    %v3418 = vlaneseq
    %v3419 = vshrl.u32 %v3418, 7
    %v3420 = vsub.s32 %v3417, %v3419
    %v3421 = vrot.slane %v2684, %v3420
    %v3422 = vcombine.high %v3421, %v3421
    %v3424 = vunpack.c.l.s4 1966171168
    %v3425 = vunpack.c.0.s8 %v3424
    %v3426 = vlaneseq
    %v3427 = vshrl.u32 %v3426, 7
    %v3428 = vsub.s32 %v3425, %v3427
    %v3429 = vrot.slane %v3421, %v3428
    %v3431 = vunpack.c.l.s4 1966171168
    %v3432 = vunpack.c.0.s8 %v3431
    %v3433 = vlaneseq
    %v3434 = vshrl.u32 %v3433, 7
    %v3435 = vsub.s32 %v3432, %v3434
    %v3436 = vrot.slane %v3422, %v3435
    %v3437 = vlaneseq
    %v3438 = vshrl.u32 %v3437, 7
    %v3439 = vsub.s32 0, %v3438
    %v3440 = vrot.slane %v3429, %v3439
    %v3441 = vlaneseq
    %v3442 = vshrl.u32 %v3441, 7
    %v3443 = vsub.s32 0, %v3442
    %v3444 = vrot.slane %v3436, %v3443
    %v3447 = vmul.f32 %v3382, %v3440
    %v3448 = vmul.f32 %v3386, %v3440
    %v3449 = vmul.f32 %v3390, %v3440
    %v3450 = vmul.f32 %v3394, %v3440
    %v3451 = vmul.f32 %v3401, %v3444
    %v3452 = vmul.f32 %v3405, %v3444
    %v3453 = vmul.f32 %v3409, %v3444
    %v3454 = vmul.f32 %v3413, %v3444
    %v3455 = vsub.f32 1.0, %v3447
    %v3456 = vsub.f32 1.0, %v3448
    %v3457 = vsub.f32 1.0, %v3449
    %v3458 = vsub.f32 1.0, %v3450
    %v3459 = vsub.f32 1.0, %v3451
    %v3460 = vsub.f32 1.0, %v3452
    %v3461 = vsub.f32 1.0, %v3453
    %v3462 = vsub.f32 1.0, %v3454
    %3471 = vrot.lane.b32.xlu0 %v3455, 84
    %v3472 = vpop.permute.xlu0 %3471
    %3473 = vrot.lane.b32.xlu0 %v3456, 84
    %v3474 = vpop.permute.xlu0 %3473
    %3475 = vrot.lane.b32.xlu0 %v3457, 84
    %v3476 = vpop.permute.xlu0 %3475
    %3477 = vrot.lane.b32.xlu0 %v3458, 84
    %v3478 = vpop.permute.xlu0 %3477
    %3479 = vrot.lane.b32.xlu0 %v3459, 84
    %v3480 = vpop.permute.xlu0 %3479
    %3481 = vrot.lane.b32.xlu0 %v3460, 84
    %v3482 = vpop.permute.xlu0 %3481
    %3483 = vrot.lane.b32.xlu0 %v3461, 84
    %v3484 = vpop.permute.xlu0 %3483
    %3485 = vrot.lane.b32.xlu0 %v3462, 84
    %v3486 = vpop.permute.xlu0 %3485
    %v3495 = vmul.f32 %v2396, %v3472
    %v3496 = vmul.f32 %v2397, %v3474
    %v3497 = vmul.f32 %v2398, %v3476
    %v3498 = vmul.f32 %v2399, %v3478
    %v3499 = vmul.f32 %v2400, %v3480
    %v3500 = vmul.f32 %v2401, %v3482
    %v3501 = vmul.f32 %v2402, %v3484
    %v3502 = vmul.f32 %v2403, %v3486
    %v3505 = vunpack.c.l.s4 1966171168
    %v3506 = vunpack.c.0.s8 %v3505
    %v3507 = vlaneseq
    %v3508 = vshrl.u32 %v3507, 7
    %v3509 = vsub.s32 %v3506, %v3508
    %v3510 = vrot.slane %v2685, %v3509
    %v3511 = vcombine.high %v3510, %v3510
    %v3513 = vunpack.c.l.s4 1966171168
    %v3514 = vunpack.c.0.s8 %v3513
    %v3515 = vlaneseq
    %v3516 = vshrl.u32 %v3515, 7
    %v3517 = vsub.s32 %v3514, %v3516
    %v3518 = vrot.slane %v3510, %v3517
    %v3520 = vunpack.c.l.s4 1966171168
    %v3521 = vunpack.c.0.s8 %v3520
    %v3522 = vlaneseq
    %v3523 = vshrl.u32 %v3522, 7
    %v3524 = vsub.s32 %v3521, %v3523
    %v3525 = vrot.slane %v3511, %v3524
    %v3526 = vlaneseq
    %v3527 = vshrl.u32 %v3526, 7
    %v3528 = vsub.s32 0, %v3527
    %v3529 = vrot.slane %v3518, %v3528
    %v3530 = vlaneseq
    %v3531 = vshrl.u32 %v3530, 7
    %v3532 = vsub.s32 0, %v3531
    %v3533 = vrot.slane %v3525, %v3532
    %v3536 = vmul.f32 %v3382, %v3529
    %v3537 = vmul.f32 %v3386, %v3529
    %v3538 = vmul.f32 %v3390, %v3529
    %v3539 = vmul.f32 %v3394, %v3529
    %v3540 = vmul.f32 %v3401, %v3533
    %v3541 = vmul.f32 %v3405, %v3533
    %v3542 = vmul.f32 %v3409, %v3533
    %v3543 = vmul.f32 %v3413, %v3533
    %3552 = vrot.lane.b32.xlu0 %v3536, 68
    %v3553 = vpop.permute.xlu0 %3552
    %3554 = vrot.lane.b32.xlu0 %v3537, 68
    %v3555 = vpop.permute.xlu0 %3554
    %3556 = vrot.lane.b32.xlu0 %v3538, 68
    %v3557 = vpop.permute.xlu0 %3556
    %3558 = vrot.lane.b32.xlu0 %v3539, 68
    %v3559 = vpop.permute.xlu0 %3558
    %3560 = vrot.lane.b32.xlu0 %v3540, 68
    %v3561 = vpop.permute.xlu0 %3560
    %3562 = vrot.lane.b32.xlu0 %v3541, 68
    %v3563 = vpop.permute.xlu0 %3562
    %3564 = vrot.lane.b32.xlu0 %v3542, 68
    %v3565 = vpop.permute.xlu0 %3564
    %3566 = vrot.lane.b32.xlu0 %v3543, 68
    %v3567 = vpop.permute.xlu0 %3566
    %v3576 = vadd.f32 %v3495, %v3553
    %v3577 = vadd.f32 %v3496, %v3555
    %v3578 = vadd.f32 %v3497, %v3557
    %v3579 = vadd.f32 %v3498, %v3559
    %v3580 = vadd.f32 %v3499, %v3561
    %v3581 = vadd.f32 %v3500, %v3563
    %v3582 = vadd.f32 %v3501, %v3565
    %v3583 = vadd.f32 %v3502, %v3567
    %v3586 = vsel %vm538, %v3375, %v3362
    %v3587 = vsel %vm398, %v3586, 0
    %3589 = vmatprep.subr.mxu0 0.0
    %3590 = vmatpush1.msra.mxu0 %v109
    %3591 = vmatprep.subr.mxu0 0.0
    %3592 = vmatpush1.msra.mxu0 %v110
    %3593 = vmatprep.subr.mxu0 0.0
    %3594 = vmatpush1.msra.mxu0 0.0
    %3595 = vmatprep.subr.mxu0 0.0
    %3596 = vmatpush1.msra.mxu0 0.0
    %3597 = vmatprep.subr.mxu0 0.0
    %3598 = vmatpush1.msra.mxu0 0.0
    %3599 = vmatprep.subr.mxu0 0.0
    %3600 = vmatpush1.msra.mxu0 0.0
    %3601 = vmatprep.subr.mxu0 0.0
    %3602 = vmatpush1.msra.mxu0 0.0
    %3603 = vmatprep.subr.mxu0 0.0
    %3604 = vmatpush1.msra.mxu0 0.0
    %3605 = vmatprep.subr.mxu0 0.0
    %3606 = vmatpush1.msra.mxu0 0.0
    %3607 = vmatprep.subr.mxu0 0.0
    %3608 = vmatpush1.msra.mxu0 0.0
    %3609 = vmatprep.subr.mxu0 0.0
    %3610 = vmatpush1.msra.mxu0 0.0
    %3611 = vmatprep.subr.mxu0 0.0
    %3612 = vmatpush1.msra.mxu0 0.0
    %3613 = vmatprep.subr.mxu0 0.0
    %3614 = vmatpush1.msra.mxu0 0.0
    %3615 = vmatprep.subr.mxu0 0.0
    %3616 = vmatpush1.msra.mxu0 0.0
    %3617 = vmatprep.subr.mxu0 0.0
    %3618 = vmatpush1.msra.mxu0 0.0
    %3619 = vmatprep.subr.mxu0 0.0
    %3620 = vmatpush1.msra.mxu0 0.0
    %3621 = vmatprep.subr.mxu0 0.0
    %3622 = vmatpush1.msra.mxu0 0.0
    %3623 = vmatprep.subr.mxu0 0.0
    %3624 = vmatpush1.msra.mxu0 0.0
    %3625 = vmatprep.subr.mxu0 0.0
    %3626 = vmatpush1.msra.mxu0 0.0
    %3627 = vmatprep.subr.mxu0 0.0
    %3628 = vmatpush1.msra.mxu0 0.0
    %3629 = vmatprep.subr.mxu0 0.0
    %3630 = vmatpush1.msra.mxu0 0.0
    %3631 = vmatprep.subr.mxu0 0.0
    %3632 = vmatpush1.msra.mxu0 0.0
    %3633 = vmatprep.subr.mxu0 0.0
    %3634 = vmatpush1.msra.mxu0 0.0
    %3635 = vmatprep.subr.mxu0 0.0
    %3636 = vmatpush1.msra.mxu0 0.0
    %3637 = vmatprep.subr.mxu0 0.0
    %3638 = vmatpush1.msra.mxu0 0.0
    %3639 = vmatprep.subr.mxu0 0.0
    %3640 = vmatpush1.msra.mxu0 0.0
    %3641 = vmatprep.subr.mxu0 0.0
    %3642 = vmatpush1.msra.mxu0 0.0
    %3643 = vmatprep.subr.mxu0 0.0
    %3644 = vmatpush1.msra.mxu0 0.0
    %3645 = vmatprep.subr.mxu0 0.0
    %3646 = vmatpush1.msra.mxu0 0.0
    %3647 = vmatprep.subr.mxu0 0.0
    %3648 = vmatpush1.msra.mxu0 0.0
    %3649 = vmatprep.subr.mxu0 0.0
    %3650 = vmatpush1.msra.mxu0 0.0
    %3651 = vmatprep.subr.mxu0 0.0
    %3652 = vmatpush1.msra.mxu0 0.0
    %3653 = vmatprep.mubr.f32.mxu0 0.0
    %3654 = vmatmul.mubr.f32.gmra.mrb[0].mxu0 %v3587
    %v3655 = vpop.f32.mrb[0].mxu0
    %v3656 = vadd.f32 0.0, %v3655
    %v3657 = vpop.f32.mrb[0].mxu0
    %3658 = vdwg.mxu0
    %3660 = vrot.lane.b32.xlu0 %v3656, 76
    %v3661 = vpop.permute.xlu0 %3660
    %v3663 = vadd.f32 %v2672, %v3661
    %v3664 = vmax.f32 %v3663, -20.0
    %v3665 = vmin.f32 %v3664, 20.0
    %3667 = vrot.lane.b32.xlu0 %v3665, 52
    %v3668 = vpop.permute.xlu0 %3667
    %s3670 = scalar_lea.vmem [#allocation2], 4
    %3671 = vst.msk [vmem:[%s3670] sm:$0x3] %vm1310, %v3668
    %3673 = vrot.lane.b32.xlu0 %v2597, 64
    %v3674 = vpop.permute.xlu0 %3673
    %3676 = vrot.lane.b32.xlu0 %v3586, 32
    %v3677 = vpop.permute.xlu0 %3676
    %v3679 = vsel %vm222, %v3674, %v3677
    %s3680 = scalar_lea.vmem %s0, 6
    %v3681 = vld [vmem:[%s3680] sm:$0x3]
    %v3683 = vsel %vm112, %v3679, 0
    %3685 = vmatprep.subr.mxu0 0.0
    %3686 = vmatpush1.msra.mxu0 %v98
    %3687 = vmatprep.subr.mxu0 0.0
    %3688 = vmatpush1.msra.mxu0 %v99
    %3689 = vmatprep.subr.mxu0 0.0
    %3690 = vmatpush1.msra.mxu0 %v100
    %3691 = vmatprep.subr.mxu0 0.0
    %3692 = vmatpush1.msra.mxu0 %v101
    %3693 = vmatprep.subr.mxu0 0.0
    %3694 = vmatpush1.msra.mxu0 %v102
    %3695 = vmatprep.subr.mxu0 0.0
    %3696 = vmatpush1.msra.mxu0 %v103
    %3697 = vmatprep.subr.mxu0 0.0
    %3698 = vmatpush1.msra.mxu0 0.0
    %3699 = vmatprep.subr.mxu0 0.0
    %3700 = vmatpush1.msra.mxu0 0.0
    %3701 = vmatprep.subr.mxu0 0.0
    %3702 = vmatpush1.msra.mxu0 0.0
    %3703 = vmatprep.subr.mxu0 0.0
    %3704 = vmatpush1.msra.mxu0 0.0
    %3705 = vmatprep.subr.mxu0 0.0
    %3706 = vmatpush1.msra.mxu0 0.0
    %3707 = vmatprep.subr.mxu0 0.0
    %3708 = vmatpush1.msra.mxu0 0.0
    %3709 = vmatprep.subr.mxu0 0.0
    %3710 = vmatpush1.msra.mxu0 0.0
    %3711 = vmatprep.subr.mxu0 0.0
    %3712 = vmatpush1.msra.mxu0 0.0
    %3713 = vmatprep.subr.mxu0 0.0
    %3714 = vmatpush1.msra.mxu0 0.0
    %3715 = vmatprep.subr.mxu0 0.0
    %3716 = vmatpush1.msra.mxu0 0.0
    %3717 = vmatprep.subr.mxu0 0.0
    %3718 = vmatpush1.msra.mxu0 0.0
    %3719 = vmatprep.subr.mxu0 0.0
    %3720 = vmatpush1.msra.mxu0 0.0
    %3721 = vmatprep.subr.mxu0 0.0
    %3722 = vmatpush1.msra.mxu0 0.0
    %3723 = vmatprep.subr.mxu0 0.0
    %3724 = vmatpush1.msra.mxu0 0.0
    %3725 = vmatprep.subr.mxu0 0.0
    %3726 = vmatpush1.msra.mxu0 0.0
    %3727 = vmatprep.subr.mxu0 0.0
    %3728 = vmatpush1.msra.mxu0 0.0
    %3729 = vmatprep.subr.mxu0 0.0
    %3730 = vmatpush1.msra.mxu0 0.0
    %3731 = vmatprep.subr.mxu0 0.0
    %3732 = vmatpush1.msra.mxu0 0.0
    %3733 = vmatprep.subr.mxu0 0.0
    %3734 = vmatpush1.msra.mxu0 0.0
    %3735 = vmatprep.subr.mxu0 0.0
    %3736 = vmatpush1.msra.mxu0 0.0
    %3737 = vmatprep.subr.mxu0 0.0
    %3738 = vmatpush1.msra.mxu0 0.0
    %3739 = vmatprep.subr.mxu0 0.0
    %3740 = vmatpush1.msra.mxu0 0.0
    %3741 = vmatprep.subr.mxu0 0.0
    %3742 = vmatpush1.msra.mxu0 0.0
    %3743 = vmatprep.subr.mxu0 0.0
    %3744 = vmatpush1.msra.mxu0 0.0
    %3745 = vmatprep.subr.mxu0 0.0
    %3746 = vmatpush1.msra.mxu0 0.0
    %3747 = vmatprep.subr.mxu0 0.0
    %3748 = vmatpush1.msra.mxu0 0.0
    %3749 = vmatprep.mubr.f32.mxu0 0.0
    %3750 = vmatmul.mubr.f32.gmra.mrb[0].mxu0 %v3683
    %v3751 = vpop.f32.mrb[0].mxu0
    %v3752 = vadd.f32 0.0, %v3751
    %v3753 = vpop.f32.mrb[0].mxu0
    %3754 = vdwg.mxu0
    %v3755 = vadd.f32 %v3681, %v3752
    %v3756 = vmul.f32 %v3755, 0.5
    %v3757 = vtanh.pop %v3756
    %v3758 = vadd.f32 %v3757, 1.0
    %v3759 = vmul.f32 %v3758, 0.5
    %v3760 = vtanh.pop %v3755
    %v3761 = vmul.f32 %v3759, %v2591
    %3763 = vrot.lane.b32.xlu0 %v3760, 32
    %v3764 = vpop.permute.xlu0 %3763
    %v3766 = vmul.f32 %v3759, %v3764
    %3768 = vrot.lane.b32.xlu0 %v3766, 32
    %v3769 = vpop.permute.xlu0 %3768
    %v3771 = vadd.f32 %v3761, %v3769
    %v3772 = vtanh.pop %v3771
    %3774 = vrot.lane.b32.xlu0 %v3772, 32
    %v3775 = vpop.permute.xlu0 %3774
    %v3777 = vmul.f32 %v3759, %v3775
    %v3778 = vmax.f32 %v3777, -20.0
    %v3779 = vmin.f32 %v3778, 20.0
    %3781 = vrot.lane.b32.xlu0 %v3779, 64
    %v3782 = vpop.permute.xlu0 %3781
    %v3783 = vsel %vm222, %v3782, 0
    %3785 = vmatprep.subr.mxu0 0.0
    %3786 = vmatpush1.msra.mxu0 %v104
    %3787 = vmatprep.subr.mxu0 0.0
    %3788 = vmatpush1.msra.mxu0 %v105
    %3789 = vmatprep.subr.mxu0 0.0
    %3790 = vmatpush1.msra.mxu0 %v106
    %3791 = vmatprep.subr.mxu0 0.0
    %3792 = vmatpush1.msra.mxu0 %v107
    %3793 = vmatprep.subr.mxu0 0.0
    %3794 = vmatpush1.msra.mxu0 0.0
    %3795 = vmatprep.subr.mxu0 0.0
    %3796 = vmatpush1.msra.mxu0 0.0
    %3797 = vmatprep.subr.mxu0 0.0
    %3798 = vmatpush1.msra.mxu0 0.0
    %3799 = vmatprep.subr.mxu0 0.0
    %3800 = vmatpush1.msra.mxu0 0.0
    %3801 = vmatprep.subr.mxu0 0.0
    %3802 = vmatpush1.msra.mxu0 0.0
    %3803 = vmatprep.subr.mxu0 0.0
    %3804 = vmatpush1.msra.mxu0 0.0
    %3805 = vmatprep.subr.mxu0 0.0
    %3806 = vmatpush1.msra.mxu0 0.0
    %3807 = vmatprep.subr.mxu0 0.0
    %3808 = vmatpush1.msra.mxu0 0.0
    %3809 = vmatprep.subr.mxu0 0.0
    %3810 = vmatpush1.msra.mxu0 0.0
    %3811 = vmatprep.subr.mxu0 0.0
    %3812 = vmatpush1.msra.mxu0 0.0
    %3813 = vmatprep.subr.mxu0 0.0
    %3814 = vmatpush1.msra.mxu0 0.0
    %3815 = vmatprep.subr.mxu0 0.0
    %3816 = vmatpush1.msra.mxu0 0.0
    %3817 = vmatprep.subr.mxu0 0.0
    %3818 = vmatpush1.msra.mxu0 0.0
    %3819 = vmatprep.subr.mxu0 0.0
    %3820 = vmatpush1.msra.mxu0 0.0
    %3821 = vmatprep.subr.mxu0 0.0
    %3822 = vmatpush1.msra.mxu0 0.0
    %3823 = vmatprep.subr.mxu0 0.0
    %3824 = vmatpush1.msra.mxu0 0.0
    %3825 = vmatprep.subr.mxu0 0.0
    %3826 = vmatpush1.msra.mxu0 0.0
    %3827 = vmatprep.subr.mxu0 0.0
    %3828 = vmatpush1.msra.mxu0 0.0
    %3829 = vmatprep.subr.mxu0 0.0
    %3830 = vmatpush1.msra.mxu0 0.0
    %3831 = vmatprep.subr.mxu0 0.0
    %3832 = vmatpush1.msra.mxu0 0.0
    %3833 = vmatprep.subr.mxu0 0.0
    %3834 = vmatpush1.msra.mxu0 0.0
    %3835 = vmatprep.subr.mxu0 0.0
    %3836 = vmatpush1.msra.mxu0 0.0
    %3837 = vmatprep.subr.mxu0 0.0
    %3838 = vmatpush1.msra.mxu0 0.0
    %3839 = vmatprep.subr.mxu0 0.0
    %3840 = vmatpush1.msra.mxu0 0.0
    %3841 = vmatprep.subr.mxu0 0.0
    %3842 = vmatpush1.msra.mxu0 0.0
    %3843 = vmatprep.subr.mxu0 0.0
    %3844 = vmatpush1.msra.mxu0 0.0
    %3845 = vmatprep.subr.mxu0 0.0
    %3846 = vmatpush1.msra.mxu0 0.0
    %3847 = vmatprep.subr.mxu0 0.0
    %3848 = vmatpush1.msra.mxu0 0.0
    %3849 = vmatprep.mubr.f32.mxu0 0.0
    %3850 = vmatmul.mubr.f32.gmra.mrb[0].mxu0 %v3783
    %v3851 = vpop.f32.mrb[0].mxu0
    %v3852 = vadd.f32 %v217, %v3851
    %v3853 = vpop.f32.mrb[0].mxu0
    %3854 = vdwg.mxu0
    %v3856 = vrot.slane %v3852, 6
    %3857 = vrot.lane.b32.xlu0 %v3856, 106
    %v3858 = vpop.permute.xlu0 %3857
    %v3860 = vsel %vm84, %v3852, %v3858
    %v3861 = vmul.f32 %v3852, 0.5
    %v3862 = vtanh.pop %v3861
    %v3863 = vadd.f32 %v3862, 1.0
    %v3864 = vmul.f32 %v3863, 0.5
    %v3865 = vtanh.pop %v3852
    %v3866 = vtanh.pop %v3860
    %v3867 = vmax.f32 %v3860, 0.0
    %v3868 = vand.u32 2147483647, %v3860
    %v3869 = vsub.f32 0.0, %v3868
    %v3870 = vmul.f32 %v3869, 1.442695
    %v3871 = vpow.pop %v3870
    %v3872 = vadd.f32 %v3871, 1.0
    %v3873 = vlog2.pop %v3872
    %v3874 = vmul.f32 %v3873, 0.6931472
    %v3875 = vadd.f32 %v3867, %v3874
    %v3876 = vmul.f32 %v3860, 0.5
    %v3877 = vtanh.pop %v3876
    %v3878 = vadd.f32 %v3877, 1.0
    %v3879 = vmul.f32 %v3878, 0.5
    %v3880 = vsel %vm320, %v3860, -inf
    %3881 = vmax.xlane.f32.xlu0 %v3880
    %v3882 = vpop.xlane.xlu0 %3881
    %v3883 = vsub.f32 %v3860, %v3882
    %v3884 = vmul.f32 %v3883, 1.442695
    %v3885 = vpow.pop %v3884
    %3887 = vrot.lane.b32.xlu0 %v3885, 110
    %v3888 = vpop.permute.xlu0 %3887
    %v3890 = vsel %vm331, %v3888, 0.0
    %3891 = vadd.xlane.f32.xlu0 %v3890
    %v3892 = vpop.xlane.xlu0 %3891
    %v3893 = vrcp.pop %v3892
    %v3894 = vmul.f32 %v3885, %v3893
    %v3897 = vunpack.c.l.s4 1966171168
    %v3898 = vunpack.c.0.s8 %v3897
    %v3899 = vlaneseq
    %v3900 = vshrl.u32 %v3899, 7
    %v3901 = vsub.s32 %v3898, %v3900
    %v3902 = vrot.slane %v3866, %v3901
    %v3903 = vcombine.high %v3902, %v3902
    %v3905 = vunpack.c.l.s4 1966171168
    %v3906 = vunpack.c.0.s8 %v3905
    %v3907 = vlaneseq
    %v3908 = vshrl.u32 %v3907, 7
    %v3909 = vsub.s32 %v3906, %v3908
    %v3910 = vrot.slane %v3902, %v3909
    %v3912 = vunpack.c.l.s4 1966171168
    %v3913 = vunpack.c.0.s8 %v3912
    %v3914 = vlaneseq
    %v3915 = vshrl.u32 %v3914, 7
    %v3916 = vsub.s32 %v3913, %v3915
    %v3917 = vrot.slane %v3903, %v3916
    %v3918 = vcombine.high %v3910, %v3910
    %v3919 = vcombine.high %v3917, %v3917
    %v3920 = vlaneseq
    %v3921 = vshrl.u32 %v3920, 7
    %v3922 = vsub.s32 0, %v3921
    %v3923 = vrot.slane %v3910, %v3922
    %v3924 = vlaneseq
    %v3925 = vshrl.u32 %v3924, 7
    %v3926 = vsub.s32 0, %v3925
    %v3927 = vrot.slane %v3917, %v3926
    %v3928 = vlaneseq
    %v3929 = vshrl.u32 %v3928, 7
    %v3930 = vsub.s32 0, %v3929
    %v3931 = vrot.slane %v3918, %v3930
    %v3932 = vlaneseq
    %v3933 = vshrl.u32 %v3932, 7
    %v3934 = vsub.s32 0, %v3933
    %v3935 = vrot.slane %v3919, %v3934
    %v3940 = vmul.f32 %v3576, %v3923
    %v3941 = vmul.f32 %v3577, %v3923
    %v3942 = vmul.f32 %v3578, %v3923
    %v3943 = vmul.f32 %v3579, %v3923
    %v3944 = vmul.f32 %v3580, %v3927
    %v3945 = vmul.f32 %v3581, %v3927
    %v3946 = vmul.f32 %v3582, %v3927
    %v3947 = vmul.f32 %v3583, %v3927
    %v3948 = vmul.f32 %v3576, %v3931
    %v3949 = vmul.f32 %v3577, %v3931
    %v3950 = vmul.f32 %v3578, %v3931
    %v3951 = vmul.f32 %v3579, %v3931
    %v3952 = vmul.f32 %v3580, %v3935
    %v3953 = vmul.f32 %v3581, %v3935
    %v3954 = vmul.f32 %v3582, %v3935
    %v3955 = vmul.f32 %v3583, %v3935
    %v3956 = vsel %vm398, %v3940, 0.0
    %3957 = vadd.xlane.f32.xlu0 %v3956
    %v3958 = vpop.xlane.xlu0 %3957
    %v3959 = vsel %vm398, %v3941, 0.0
    %3960 = vadd.xlane.f32.xlu0 %v3959
    %v3961 = vpop.xlane.xlu0 %3960
    %v3962 = vsel %vm398, %v3942, 0.0
    %3963 = vadd.xlane.f32.xlu0 %v3962
    %v3964 = vpop.xlane.xlu0 %3963
    %v3965 = vsel %vm398, %v3943, 0.0
    %3966 = vadd.xlane.f32.xlu0 %v3965
    %v3967 = vpop.xlane.xlu0 %3966
    %v3968 = vsel %vm398, %v3944, 0.0
    %3969 = vadd.xlane.f32.xlu0 %v3968
    %v3970 = vpop.xlane.xlu0 %3969
    %v3971 = vsel %vm398, %v3945, 0.0
    %3972 = vadd.xlane.f32.xlu0 %v3971
    %v3973 = vpop.xlane.xlu0 %3972
    %v3974 = vsel %vm398, %v3946, 0.0
    %3975 = vadd.xlane.f32.xlu0 %v3974
    %v3976 = vpop.xlane.xlu0 %3975
    %v3977 = vsel %vm398, %v3947, 0.0
    %3978 = vadd.xlane.f32.xlu0 %v3977
    %v3979 = vpop.xlane.xlu0 %3978
    %v3980 = vsel %vm398, %v3948, 0.0
    %3981 = vadd.xlane.f32.xlu0 %v3980
    %v3982 = vpop.xlane.xlu0 %3981
    %v3983 = vsel %vm398, %v3949, 0.0
    %3984 = vadd.xlane.f32.xlu0 %v3983
    %v3985 = vpop.xlane.xlu0 %3984
    %v3986 = vsel %vm398, %v3950, 0.0
    %3987 = vadd.xlane.f32.xlu0 %v3986
    %v3988 = vpop.xlane.xlu0 %3987
    %v3989 = vsel %vm398, %v3951, 0.0
    %3990 = vadd.xlane.f32.xlu0 %v3989
    %v3991 = vpop.xlane.xlu0 %3990
    %v3992 = vsel %vm398, %v3952, 0.0
    %3993 = vadd.xlane.f32.xlu0 %v3992
    %v3994 = vpop.xlane.xlu0 %3993
    %v3995 = vsel %vm398, %v3953, 0.0
    %3996 = vadd.xlane.f32.xlu0 %v3995
    %v3997 = vpop.xlane.xlu0 %3996
    %v3998 = vsel %vm398, %v3954, 0.0
    %3999 = vadd.xlane.f32.xlu0 %v3998
    %v4000 = vpop.xlane.xlu0 %3999
    %v4001 = vsel %vm398, %v3955, 0.0
    %4002 = vadd.xlane.f32.xlu0 %v4001
    %v4003 = vpop.xlane.xlu0 %4002
    %v4004 = vmul.f32 %v3866, %v3866
    %v4005 = vsel %vm448, %v4004, 0.0
    %4006 = vadd.xlane.f32.xlu0 %v4005
    %v4007 = vpop.xlane.xlu0 %4006
    %v4008 = vmul.f32 %v3576, %v3576
    %v4009 = vmul.f32 %v3577, %v3577
    %v4010 = vmul.f32 %v3578, %v3578
    %v4011 = vmul.f32 %v3579, %v3579
    %v4012 = vmul.f32 %v3580, %v3580
    %v4013 = vmul.f32 %v3581, %v3581
    %v4014 = vmul.f32 %v3582, %v3582
    %v4015 = vmul.f32 %v3583, %v3583
    %v4016 = vsel %vm398, %v4008, 0.0
    %4017 = vadd.xlane.f32.xlu0 %v4016
    %v4018 = vpop.xlane.xlu0 %4017
    %v4019 = vsel %vm398, %v4009, 0.0
    %4020 = vadd.xlane.f32.xlu0 %v4019
    %v4021 = vpop.xlane.xlu0 %4020
    %v4022 = vsel %vm398, %v4010, 0.0
    %4023 = vadd.xlane.f32.xlu0 %v4022
    %v4024 = vpop.xlane.xlu0 %4023
    %v4025 = vsel %vm398, %v4011, 0.0
    %4026 = vadd.xlane.f32.xlu0 %v4025
    %v4027 = vpop.xlane.xlu0 %4026
    %v4028 = vsel %vm398, %v4012, 0.0
    %4029 = vadd.xlane.f32.xlu0 %v4028
    %v4030 = vpop.xlane.xlu0 %4029
    %v4031 = vsel %vm398, %v4013, 0.0
    %4032 = vadd.xlane.f32.xlu0 %v4031
    %v4033 = vpop.xlane.xlu0 %4032
    %v4034 = vsel %vm398, %v4014, 0.0
    %4035 = vadd.xlane.f32.xlu0 %v4034
    %v4036 = vpop.xlane.xlu0 %4035
    %v4037 = vsel %vm398, %v4015, 0.0
    %4038 = vadd.xlane.f32.xlu0 %v4037
    %v4039 = vpop.xlane.xlu0 %4038
    %v4048 = vlaneseq
    %v4049 = vshrl.u32 %v4048, 7
    %v4050 = vsub.s32 %v493, %v4049
    %v4051 = vrot.slane %v4018, %v4050
    %v4052 = vlaneseq
    %v4053 = vshrl.u32 %v4052, 7
    %v4054 = vsub.s32 %v498, %v4053
    %v4055 = vrot.slane %v4021, %v4054
    %v4056 = vsel %vm503, %v4055, %v4051
    %v4057 = vlaneseq
    %v4058 = vshrl.u32 %v4057, 7
    %v4059 = vsub.s32 %v505, %v4058
    %v4060 = vrot.slane %v4024, %v4059
    %v4061 = vsel %vm510, %v4060, %v4056
    %v4062 = vlaneseq
    %v4063 = vshrl.u32 %v4062, 7
    %v4064 = vsub.s32 %v512, %v4063
    %v4065 = vrot.slane %v4027, %v4064
    %v4066 = vsel %vm517, %v4065, %v4061
    %v4067 = vlaneseq
    %v4068 = vshrl.u32 %v4067, 7
    %v4069 = vsub.s32 %v493, %v4068
    %v4070 = vrot.slane %v4030, %v4069
    %v4071 = vlaneseq
    %v4072 = vshrl.u32 %v4071, 7
    %v4073 = vsub.s32 %v498, %v4072
    %v4074 = vrot.slane %v4033, %v4073
    %v4075 = vsel %vm503, %v4074, %v4070
    %v4076 = vlaneseq
    %v4077 = vshrl.u32 %v4076, 7
    %v4078 = vsub.s32 %v505, %v4077
    %v4079 = vrot.slane %v4036, %v4078
    %v4080 = vsel %vm510, %v4079, %v4075
    %v4081 = vlaneseq
    %v4082 = vshrl.u32 %v4081, 7
    %v4083 = vsub.s32 %v512, %v4082
    %v4084 = vrot.slane %v4039, %v4083
    %v4085 = vsel %vm517, %v4084, %v4080
    %v4086 = vsel %vm538, %v4085, %v4066
    %v4088 = vsel %vm541, %v4085, %v4066
    %v4090 = vsel %vm84, %v4086, %v4088
    %v4091 = vmul.f32 %v4007, %v4090
    %v4092 = vadd.f32 %v4091, 1e-16
    %v4093 = vrsqrt.pop %v4092
    %v4095 = vlaneseq
    %v4096 = vshrl.u32 %v4095, 7
    %v4097 = vsub.s32 0, %v4096
    %v4098 = vrot.slane %v4093, %v4097
    %4100 = vbcast.lane.b32.xlu0 %v4098, 256
    %v4101 = vpop.permute.xlu0 %4100
    %s4103 = sor.u32 256, 8
    %4104 = vbcast.lane.b32.xlu0 %v4098, %s4103
    %v4105 = vpop.permute.xlu0 %4104
    %s4107 = sor.u32 256, 16
    %4108 = vbcast.lane.b32.xlu0 %v4098, %s4107
    %v4109 = vpop.permute.xlu0 %4108
    %s4111 = sor.u32 256, 24
    %4112 = vbcast.lane.b32.xlu0 %v4098, %s4111
    %v4113 = vpop.permute.xlu0 %4112
    %v4114 = vlaneseq
    %v4115 = vshrl.u32 %v4114, 7
    %v4116 = vsub.s32 1, %v4115
    %v4117 = vrot.slane %v4093, %v4116
    %4119 = vbcast.lane.b32.xlu0 %v4117, 256
    %v4120 = vpop.permute.xlu0 %4119
    %s4122 = sor.u32 256, 8
    %4123 = vbcast.lane.b32.xlu0 %v4117, %s4122
    %v4124 = vpop.permute.xlu0 %4123
    %s4126 = sor.u32 256, 16
    %4127 = vbcast.lane.b32.xlu0 %v4117, %s4126
    %v4128 = vpop.permute.xlu0 %4127
    %s4130 = sor.u32 256, 24
    %4131 = vbcast.lane.b32.xlu0 %v4117, %s4130
    %v4132 = vpop.permute.xlu0 %4131
    %v4133 = vlaneseq
    %v4134 = vshrl.u32 %v4133, 7
    %v4135 = vsub.s32 2, %v4134
    %v4136 = vrot.slane %v4093, %v4135
    %4138 = vbcast.lane.b32.xlu0 %v4136, 256
    %v4139 = vpop.permute.xlu0 %4138
    %s4141 = sor.u32 256, 8
    %4142 = vbcast.lane.b32.xlu0 %v4136, %s4141
    %v4143 = vpop.permute.xlu0 %4142
    %s4145 = sor.u32 256, 16
    %4146 = vbcast.lane.b32.xlu0 %v4136, %s4145
    %v4147 = vpop.permute.xlu0 %4146
    %s4149 = sor.u32 256, 24
    %4150 = vbcast.lane.b32.xlu0 %v4136, %s4149
    %v4151 = vpop.permute.xlu0 %4150
    %v4152 = vlaneseq
    %v4153 = vshrl.u32 %v4152, 7
    %v4154 = vsub.s32 3, %v4153
    %v4155 = vrot.slane %v4093, %v4154
    %4157 = vbcast.lane.b32.xlu0 %v4155, 256
    %v4158 = vpop.permute.xlu0 %4157
    %s4160 = sor.u32 256, 8
    %4161 = vbcast.lane.b32.xlu0 %v4155, %s4160
    %v4162 = vpop.permute.xlu0 %4161
    %s4164 = sor.u32 256, 16
    %4165 = vbcast.lane.b32.xlu0 %v4155, %s4164
    %v4166 = vpop.permute.xlu0 %4165
    %s4168 = sor.u32 256, 24
    %4169 = vbcast.lane.b32.xlu0 %v4155, %s4168
    %v4170 = vpop.permute.xlu0 %4169
    %v4187 = vmul.f32 %v3958, %v4101
    %v4188 = vmul.f32 %v3961, %v4105
    %v4189 = vmul.f32 %v3964, %v4109
    %v4190 = vmul.f32 %v3967, %v4113
    %v4191 = vmul.f32 %v3970, %v4120
    %v4192 = vmul.f32 %v3973, %v4124
    %v4193 = vmul.f32 %v3976, %v4128
    %v4194 = vmul.f32 %v3979, %v4132
    %v4195 = vmul.f32 %v3982, %v4139
    %v4196 = vmul.f32 %v3985, %v4143
    %v4197 = vmul.f32 %v3988, %v4147
    %v4198 = vmul.f32 %v3991, %v4151
    %v4199 = vmul.f32 %v3994, %v4158
    %v4200 = vmul.f32 %v3997, %v4162
    %v4201 = vmul.f32 %v4000, %v4166
    %v4202 = vmul.f32 %v4003, %v4170
    %4204 = vset.pattern.permute.xlu0 16
    %4205 = vperm.xlu0 %4204, %v3875
    %v4206 = vpop.permute.xlu0 %4205
    %4224 = vset.pattern.permute.xlu0 0
    %4225 = vperm.xlu0 %4224, %v4187
    %v4226 = vpop.permute.xlu0 %4225
    %4227 = vset.pattern.permute.xlu0 0
    %4228 = vperm.xlu0 %4227, %v4188
    %v4229 = vpop.permute.xlu0 %4228
    %4230 = vset.pattern.permute.xlu0 0
    %4231 = vperm.xlu0 %4230, %v4189
    %v4232 = vpop.permute.xlu0 %4231
    %4233 = vset.pattern.permute.xlu0 0
    %4234 = vperm.xlu0 %4233, %v4190
    %v4235 = vpop.permute.xlu0 %4234
    %4236 = vset.pattern.permute.xlu0 0
    %4237 = vperm.xlu0 %4236, %v4191
    %v4238 = vpop.permute.xlu0 %4237
    %4239 = vset.pattern.permute.xlu0 0
    %4240 = vperm.xlu0 %4239, %v4192
    %v4241 = vpop.permute.xlu0 %4240
    %4242 = vset.pattern.permute.xlu0 0
    %4243 = vperm.xlu0 %4242, %v4193
    %v4244 = vpop.permute.xlu0 %4243
    %4245 = vset.pattern.permute.xlu0 0
    %4246 = vperm.xlu0 %4245, %v4194
    %v4247 = vpop.permute.xlu0 %4246
    %4248 = vset.pattern.permute.xlu0 0
    %4249 = vperm.xlu0 %4248, %v4195
    %v4250 = vpop.permute.xlu0 %4249
    %4251 = vset.pattern.permute.xlu0 0
    %4252 = vperm.xlu0 %4251, %v4196
    %v4253 = vpop.permute.xlu0 %4252
    %4254 = vset.pattern.permute.xlu0 0
    %4255 = vperm.xlu0 %4254, %v4197
    %v4256 = vpop.permute.xlu0 %4255
    %4257 = vset.pattern.permute.xlu0 0
    %4258 = vperm.xlu0 %4257, %v4198
    %v4259 = vpop.permute.xlu0 %4258
    %4260 = vset.pattern.permute.xlu0 0
    %4261 = vperm.xlu0 %4260, %v4199
    %v4262 = vpop.permute.xlu0 %4261
    %4263 = vset.pattern.permute.xlu0 0
    %4264 = vperm.xlu0 %4263, %v4200
    %v4265 = vpop.permute.xlu0 %4264
    %4266 = vset.pattern.permute.xlu0 0
    %4267 = vperm.xlu0 %4266, %v4201
    %v4268 = vpop.permute.xlu0 %4267
    %4269 = vset.pattern.permute.xlu0 0
    %4270 = vperm.xlu0 %4269, %v4202
    %v4271 = vpop.permute.xlu0 %4270
    %v4272 = vlaneseq
    %v4273 = vshrl.u32 %v4272, 7
    %v4274 = vsub.s32 %v493, %v4273
    %v4275 = vrot.slane %v4226, %v4274
    %v4276 = vlaneseq
    %v4277 = vshrl.u32 %v4276, 7
    %v4278 = vsub.s32 %v498, %v4277
    %v4279 = vrot.slane %v4229, %v4278
    %v4280 = vsel %vm503, %v4279, %v4275
    %v4281 = vlaneseq
    %v4282 = vshrl.u32 %v4281, 7
    %v4283 = vsub.s32 %v505, %v4282
    %v4284 = vrot.slane %v4232, %v4283
    %v4285 = vsel %vm510, %v4284, %v4280
    %v4286 = vlaneseq
    %v4287 = vshrl.u32 %v4286, 7
    %v4288 = vsub.s32 %v512, %v4287
    %v4289 = vrot.slane %v4235, %v4288
    %v4290 = vsel %vm517, %v4289, %v4285
    %v4291 = vlaneseq
    %v4292 = vshrl.u32 %v4291, 7
    %v4293 = vsub.s32 %v493, %v4292
    %v4294 = vrot.slane %v4238, %v4293
    %v4295 = vlaneseq
    %v4296 = vshrl.u32 %v4295, 7
    %v4297 = vsub.s32 %v498, %v4296
    %v4298 = vrot.slane %v4241, %v4297
    %v4299 = vsel %vm503, %v4298, %v4294
    %v4300 = vlaneseq
    %v4301 = vshrl.u32 %v4300, 7
    %v4302 = vsub.s32 %v505, %v4301
    %v4303 = vrot.slane %v4244, %v4302
    %v4304 = vsel %vm510, %v4303, %v4299
    %v4305 = vlaneseq
    %v4306 = vshrl.u32 %v4305, 7
    %v4307 = vsub.s32 %v512, %v4306
    %v4308 = vrot.slane %v4247, %v4307
    %v4309 = vsel %vm517, %v4308, %v4304
    %v4310 = vlaneseq
    %v4311 = vshrl.u32 %v4310, 7
    %v4312 = vsub.s32 %v493, %v4311
    %v4313 = vrot.slane %v4250, %v4312
    %v4314 = vlaneseq
    %v4315 = vshrl.u32 %v4314, 7
    %v4316 = vsub.s32 %v498, %v4315
    %v4317 = vrot.slane %v4253, %v4316
    %v4318 = vsel %vm503, %v4317, %v4313
    %v4319 = vlaneseq
    %v4320 = vshrl.u32 %v4319, 7
    %v4321 = vsub.s32 %v505, %v4320
    %v4322 = vrot.slane %v4256, %v4321
    %v4323 = vsel %vm510, %v4322, %v4318
    %v4324 = vlaneseq
    %v4325 = vshrl.u32 %v4324, 7
    %v4326 = vsub.s32 %v512, %v4325
    %v4327 = vrot.slane %v4259, %v4326
    %v4328 = vsel %vm517, %v4327, %v4323
    %v4329 = vlaneseq
    %v4330 = vshrl.u32 %v4329, 7
    %v4331 = vsub.s32 %v493, %v4330
    %v4332 = vrot.slane %v4262, %v4331
    %v4333 = vlaneseq
    %v4334 = vshrl.u32 %v4333, 7
    %v4335 = vsub.s32 %v498, %v4334
    %v4336 = vrot.slane %v4265, %v4335
    %v4337 = vsel %vm503, %v4336, %v4332
    %v4338 = vlaneseq
    %v4339 = vshrl.u32 %v4338, 7
    %v4340 = vsub.s32 %v505, %v4339
    %v4341 = vrot.slane %v4268, %v4340
    %v4342 = vsel %vm510, %v4341, %v4337
    %v4343 = vlaneseq
    %v4344 = vshrl.u32 %v4343, 7
    %v4345 = vsub.s32 %v512, %v4344
    %v4346 = vrot.slane %v4271, %v4345
    %v4347 = vsel %vm517, %v4346, %v4342
    %v4348 = vsel %vm538, %v4309, %v4290
    %v4349 = vsel %vm803, %v4328, %v4348
    %v4350 = vsel %vm541, %v4347, %v4349
    %v4352 = vmul.f32 %v4206, %v4350
    %v4353 = vmul.f32 %v4352, 1.442695
    %v4354 = vpow.pop %v4353
    %v4355 = vsel %vm810, %v4354, 0.0
    %4356 = vadd.xlane.f32.xlu0 %v4355
    %v4357 = vpop.xlane.xlu0 %4356
    %v4358 = vrcp.pop %v4357
    %v4359 = vmul.f32 %v4354, %v4358
    %4361 = vset.pattern.permute.xlu0 17
    %4362 = vperm.xlu0 %4361, %v3879
    %v4363 = vpop.permute.xlu0 %4362
    %v4365 = vmul.f32 %v4363, %v4359
    %v4366 = vsub.f32 1.0, %v3879
    %4368 = vset.pattern.permute.xlu0 17
    %4369 = vperm.xlu0 %4368, %v4366
    %v4370 = vpop.permute.xlu0 %4369
    %v4372 = vmul.f32 %v4370, %v3303
    %v4373 = vadd.f32 %v4365, %v4372
    %v4375 = vsel %vm222, %v4373, 0
    %4377 = vmatprep.subr.mxu0 0.0
    %4378 = vmatpush1.msra.mxu0 %v94
    %4379 = vmatprep.subr.mxu0 0.0
    %4380 = vmatpush1.msra.mxu0 %v95
    %4381 = vmatprep.subr.mxu0 0.0
    %4382 = vmatpush1.msra.mxu0 %v96
    %4383 = vmatprep.subr.mxu0 0.0
    %4384 = vmatpush1.msra.mxu0 %v97
    %4385 = vmatprep.subr.mxu0 0.0
    %4386 = vmatpush1.msra.mxu0 0.0
    %4387 = vmatprep.subr.mxu0 0.0
    %4388 = vmatpush1.msra.mxu0 0.0
    %4389 = vmatprep.subr.mxu0 0.0
    %4390 = vmatpush1.msra.mxu0 0.0
    %4391 = vmatprep.subr.mxu0 0.0
    %4392 = vmatpush1.msra.mxu0 0.0
    %4393 = vmatprep.subr.mxu0 0.0
    %4394 = vmatpush1.msra.mxu0 0.0
    %4395 = vmatprep.subr.mxu0 0.0
    %4396 = vmatpush1.msra.mxu0 0.0
    %4397 = vmatprep.subr.mxu0 0.0
    %4398 = vmatpush1.msra.mxu0 0.0
    %4399 = vmatprep.subr.mxu0 0.0
    %4400 = vmatpush1.msra.mxu0 0.0
    %4401 = vmatprep.subr.mxu0 0.0
    %4402 = vmatpush1.msra.mxu0 0.0
    %4403 = vmatprep.subr.mxu0 0.0
    %4404 = vmatpush1.msra.mxu0 0.0
    %4405 = vmatprep.subr.mxu0 0.0
    %4406 = vmatpush1.msra.mxu0 0.0
    %4407 = vmatprep.subr.mxu0 0.0
    %4408 = vmatpush1.msra.mxu0 0.0
    %4409 = vmatprep.subr.mxu0 0.0
    %4410 = vmatpush1.msra.mxu0 0.0
    %4411 = vmatprep.subr.mxu0 0.0
    %4412 = vmatpush1.msra.mxu0 0.0
    %4413 = vmatprep.subr.mxu0 0.0
    %4414 = vmatpush1.msra.mxu0 0.0
    %4415 = vmatprep.subr.mxu0 0.0
    %4416 = vmatpush1.msra.mxu0 0.0
    %4417 = vmatprep.subr.mxu0 0.0
    %4418 = vmatpush1.msra.mxu0 0.0
    %4419 = vmatprep.subr.mxu0 0.0
    %4420 = vmatpush1.msra.mxu0 0.0
    %4421 = vmatprep.subr.mxu0 0.0
    %4422 = vmatpush1.msra.mxu0 0.0
    %4423 = vmatprep.subr.mxu0 0.0
    %4424 = vmatpush1.msra.mxu0 0.0
    %4425 = vmatprep.subr.mxu0 0.0
    %4426 = vmatpush1.msra.mxu0 0.0
    %4427 = vmatprep.subr.mxu0 0.0
    %4428 = vmatpush1.msra.mxu0 0.0
    %4429 = vmatprep.subr.mxu0 0.0
    %4430 = vmatpush1.msra.mxu0 0.0
    %4431 = vmatprep.subr.mxu0 0.0
    %4432 = vmatpush1.msra.mxu0 0.0
    %4433 = vmatprep.subr.mxu0 0.0
    %4434 = vmatpush1.msra.mxu0 0.0
    %4435 = vmatprep.subr.mxu0 0.0
    %4436 = vmatpush1.msra.mxu0 0.0
    %4437 = vmatprep.subr.mxu0 0.0
    %4438 = vmatpush1.msra.mxu0 0.0
    %4439 = vmatprep.subr.mxu0 0.0
    %4440 = vmatpush1.msra.mxu0 0.0
    %4441 = vmatprep.mubr.f32.mxu0 0.0
    %4442 = vmatmul.mubr.f32.gmra.mrb[0].mxu0 %v4375
    %v4443 = vpop.f32.mrb[0].mxu0
    %v4444 = vadd.f32 0.0, %v4443
    %v4445 = vpop.f32.mrb[0].mxu0
    %4446 = vdwg.mxu0
    %4448 = vset.pattern.permute.xlu0 18
    %4449 = vperm.xlu0 %4448, %v3894
    %v4450 = vpop.permute.xlu0 %4449
    %v4452 = vmul.f32 %v4450, %v4373
    %4453 = vset.pattern.permute.xlu0 19
    %4454 = vperm.xlu0 %4453, %v3894
    %v4455 = vpop.permute.xlu0 %4454
    %v4457 = vmul.f32 %v4455, %v4444
    %v4458 = vadd.f32 %v4452, %v4457
    %4459 = vset.pattern.permute.xlu0 20
    %4460 = vperm.xlu0 %4459, %v3894
    %v4461 = vpop.permute.xlu0 %4460
    %v4463 = vmul.f32 %v4461, %v4444
    %4465 = vrot.lane.b32.xlu0 %v4463, 96
    %v4466 = vpop.permute.xlu0 %4465
    %v4468 = vadd.f32 %v4458, %v4466
    %v4469 = vmax.f32 %v4468, 1e-30
    %v4470 = vlog2.pop %v4469
    %v4471 = vmul.f32 %v4470, 0.6931472
    %4472 = vset.pattern.permute.xlu0 21
    %4473 = vperm.xlu0 %4472, %v3875
    %v4474 = vpop.permute.xlu0 %4473
    %v4476 = vmul.f32 %v4474, %v4471
    %v4477 = vmul.f32 %v4476, 1.442695
    %v4478 = vpow.pop %v4477
    %v4479 = vsel %vm810, %v4478, 0.0
    %4480 = vadd.xlane.f32.xlu0 %v4479
    %v4481 = vpop.xlane.xlu0 %4480
    %v4482 = vrcp.pop %v4481
    %v4483 = vmul.f32 %v4478, %v4482
    %v4484 = vlaneseq
    %v4485 = vshrl.u32 %v4484, 7
    %v4486 = vsub.s32 0, %v4485
    %v4487 = vrot.slane %v4483, %v4486
    %4489 = vbcast.lane.b32.xlu0 %v4487, 256
    %v4490 = vpop.permute.xlu0 %4489
    %s4492 = sor.u32 256, 8
    %4493 = vbcast.lane.b32.xlu0 %v4487, %s4492
    %v4494 = vpop.permute.xlu0 %4493
    %s4496 = sor.u32 256, 16
    %4497 = vbcast.lane.b32.xlu0 %v4487, %s4496
    %v4498 = vpop.permute.xlu0 %4497
    %s4500 = sor.u32 256, 24
    %4501 = vbcast.lane.b32.xlu0 %v4487, %s4500
    %v4502 = vpop.permute.xlu0 %4501
    %v4503 = vlaneseq
    %v4504 = vshrl.u32 %v4503, 7
    %v4505 = vsub.s32 1, %v4504
    %v4506 = vrot.slane %v4483, %v4505
    %4508 = vbcast.lane.b32.xlu0 %v4506, 256
    %v4509 = vpop.permute.xlu0 %4508
    %s4511 = sor.u32 256, 8
    %4512 = vbcast.lane.b32.xlu0 %v4506, %s4511
    %v4513 = vpop.permute.xlu0 %4512
    %s4515 = sor.u32 256, 16
    %4516 = vbcast.lane.b32.xlu0 %v4506, %s4515
    %v4517 = vpop.permute.xlu0 %4516
    %s4519 = sor.u32 256, 24
    %4520 = vbcast.lane.b32.xlu0 %v4506, %s4519
    %v4521 = vpop.permute.xlu0 %4520
    %v4522 = vmul.f32 %v4490, %v3576
    %v4523 = vmul.f32 %v4494, %v3577
    %v4524 = vmul.f32 %v4498, %v3578
    %v4525 = vmul.f32 %v4502, %v3579
    %v4526 = vmul.f32 %v4509, %v3580
    %v4527 = vmul.f32 %v4513, %v3581
    %v4528 = vmul.f32 %v4517, %v3582
    %v4529 = vmul.f32 %v4521, %v3583
    %v4530 = vsel %vm398, %v4522, 0.0
    %v4531 = vsel %vm398, %v4523, 0.0
    %v4532 = vadd.f32 %v4530, %v4531
    %v4533 = vsel %vm398, %v4524, 0.0
    %v4534 = vadd.f32 %v4532, %v4533
    %v4535 = vsel %vm398, %v4525, 0.0
    %v4536 = vadd.f32 %v4534, %v4535
    %v4537 = vrot.slane %v4536, 4
    %v4538 = vadd.f32 %v4536, %v4537
    %v4539 = vrot.slane %v4538, 2
    %v4540 = vadd.f32 %v4538, %v4539
    %v4541 = vrot.slane %v4540, 1
    %v4542 = vadd.f32 %v4540, %v4541
    %v4543 = vsel %vm398, %v4526, 0.0
    %v4544 = vsel %vm398, %v4527, 0.0
    %v4545 = vadd.f32 %v4543, %v4544
    %v4546 = vsel %vm398, %v4528, 0.0
    %v4547 = vadd.f32 %v4545, %v4546
    %v4548 = vsel %vm398, %v4529, 0.0
    %v4549 = vadd.f32 %v4547, %v4548
    %v4550 = vrot.slane %v4549, 4
    %v4551 = vadd.f32 %v4549, %v4550
    %v4552 = vrot.slane %v4551, 2
    %v4553 = vadd.f32 %v4551, %v4552
    %v4554 = vrot.slane %v4553, 1
    %v4555 = vadd.f32 %v4553, %v4554
    %v4556 = vlaneseq
    %v4557 = vshrl.u32 %v4556, 7
    %v4558 = vsub.s32 2, %v4557
    %v4559 = vrot.slane %v4483, %v4558
    %4561 = vbcast.lane.b32.xlu0 %v4559, 256
    %v4562 = vpop.permute.xlu0 %4561
    %s4564 = sor.u32 256, 8
    %4565 = vbcast.lane.b32.xlu0 %v4559, %s4564
    %v4566 = vpop.permute.xlu0 %4565
    %s4568 = sor.u32 256, 16
    %4569 = vbcast.lane.b32.xlu0 %v4559, %s4568
    %v4570 = vpop.permute.xlu0 %4569
    %s4572 = sor.u32 256, 24
    %4573 = vbcast.lane.b32.xlu0 %v4559, %s4572
    %v4574 = vpop.permute.xlu0 %4573
    %v4575 = vlaneseq
    %v4576 = vshrl.u32 %v4575, 7
    %v4577 = vsub.s32 3, %v4576
    %v4578 = vrot.slane %v4483, %v4577
    %4580 = vbcast.lane.b32.xlu0 %v4578, 256
    %v4581 = vpop.permute.xlu0 %4580
    %s4583 = sor.u32 256, 8
    %4584 = vbcast.lane.b32.xlu0 %v4578, %s4583
    %v4585 = vpop.permute.xlu0 %4584
    %s4587 = sor.u32 256, 16
    %4588 = vbcast.lane.b32.xlu0 %v4578, %s4587
    %v4589 = vpop.permute.xlu0 %4588
    %s4591 = sor.u32 256, 24
    %4592 = vbcast.lane.b32.xlu0 %v4578, %s4591
    %v4593 = vpop.permute.xlu0 %4592
    %v4596 = vunpack.c.l.s4 1966171168
    %v4597 = vunpack.c.0.s8 %v4596
    %v4598 = vlaneseq
    %v4599 = vshrl.u32 %v4598, 7
    %v4600 = vsub.s32 %v4597, %v4599
    %v4601 = vrot.slane %v3864, %v4600
    %v4602 = vcombine.high %v4601, %v4601
    %v4604 = vunpack.c.l.s4 1966171168
    %v4605 = vunpack.c.0.s8 %v4604
    %v4606 = vlaneseq
    %v4607 = vshrl.u32 %v4606, 7
    %v4608 = vsub.s32 %v4605, %v4607
    %v4609 = vrot.slane %v4601, %v4608
    %v4611 = vunpack.c.l.s4 1966171168
    %v4612 = vunpack.c.0.s8 %v4611
    %v4613 = vlaneseq
    %v4614 = vshrl.u32 %v4613, 7
    %v4615 = vsub.s32 %v4612, %v4614
    %v4616 = vrot.slane %v4602, %v4615
    %v4617 = vlaneseq
    %v4618 = vshrl.u32 %v4617, 7
    %v4619 = vsub.s32 0, %v4618
    %v4620 = vrot.slane %v4609, %v4619
    %v4621 = vlaneseq
    %v4622 = vshrl.u32 %v4621, 7
    %v4623 = vsub.s32 0, %v4622
    %v4624 = vrot.slane %v4616, %v4623
    %v4627 = vmul.f32 %v4562, %v4620
    %v4628 = vmul.f32 %v4566, %v4620
    %v4629 = vmul.f32 %v4570, %v4620
    %v4630 = vmul.f32 %v4574, %v4620
    %v4631 = vmul.f32 %v4581, %v4624
    %v4632 = vmul.f32 %v4585, %v4624
    %v4633 = vmul.f32 %v4589, %v4624
    %v4634 = vmul.f32 %v4593, %v4624
    %v4635 = vsub.f32 1.0, %v4627
    %v4636 = vsub.f32 1.0, %v4628
    %v4637 = vsub.f32 1.0, %v4629
    %v4638 = vsub.f32 1.0, %v4630
    %v4639 = vsub.f32 1.0, %v4631
    %v4640 = vsub.f32 1.0, %v4632
    %v4641 = vsub.f32 1.0, %v4633
    %v4642 = vsub.f32 1.0, %v4634
    %4651 = vrot.lane.b32.xlu0 %v4635, 84
    %v4652 = vpop.permute.xlu0 %4651
    %4653 = vrot.lane.b32.xlu0 %v4636, 84
    %v4654 = vpop.permute.xlu0 %4653
    %4655 = vrot.lane.b32.xlu0 %v4637, 84
    %v4656 = vpop.permute.xlu0 %4655
    %4657 = vrot.lane.b32.xlu0 %v4638, 84
    %v4658 = vpop.permute.xlu0 %4657
    %4659 = vrot.lane.b32.xlu0 %v4639, 84
    %v4660 = vpop.permute.xlu0 %4659
    %4661 = vrot.lane.b32.xlu0 %v4640, 84
    %v4662 = vpop.permute.xlu0 %4661
    %4663 = vrot.lane.b32.xlu0 %v4641, 84
    %v4664 = vpop.permute.xlu0 %4663
    %4665 = vrot.lane.b32.xlu0 %v4642, 84
    %v4666 = vpop.permute.xlu0 %4665
    %v4675 = vmul.f32 %v3576, %v4652
    %v4676 = vmul.f32 %v3577, %v4654
    %v4677 = vmul.f32 %v3578, %v4656
    %v4678 = vmul.f32 %v3579, %v4658
    %v4679 = vmul.f32 %v3580, %v4660
    %v4680 = vmul.f32 %v3581, %v4662
    %v4681 = vmul.f32 %v3582, %v4664
    %v4682 = vmul.f32 %v3583, %v4666
    %v4685 = vunpack.c.l.s4 1966171168
    %v4686 = vunpack.c.0.s8 %v4685
    %v4687 = vlaneseq
    %v4688 = vshrl.u32 %v4687, 7
    %v4689 = vsub.s32 %v4686, %v4688
    %v4690 = vrot.slane %v3865, %v4689
    %v4691 = vcombine.high %v4690, %v4690
    %v4693 = vunpack.c.l.s4 1966171168
    %v4694 = vunpack.c.0.s8 %v4693
    %v4695 = vlaneseq
    %v4696 = vshrl.u32 %v4695, 7
    %v4697 = vsub.s32 %v4694, %v4696
    %v4698 = vrot.slane %v4690, %v4697
    %v4700 = vunpack.c.l.s4 1966171168
    %v4701 = vunpack.c.0.s8 %v4700
    %v4702 = vlaneseq
    %v4703 = vshrl.u32 %v4702, 7
    %v4704 = vsub.s32 %v4701, %v4703
    %v4705 = vrot.slane %v4691, %v4704
    %v4706 = vlaneseq
    %v4707 = vshrl.u32 %v4706, 7
    %v4708 = vsub.s32 0, %v4707
    %v4709 = vrot.slane %v4698, %v4708
    %v4710 = vlaneseq
    %v4711 = vshrl.u32 %v4710, 7
    %v4712 = vsub.s32 0, %v4711
    %v4713 = vrot.slane %v4705, %v4712
    %v4716 = vmul.f32 %v4562, %v4709
    %v4717 = vmul.f32 %v4566, %v4709
    %v4718 = vmul.f32 %v4570, %v4709
    %v4719 = vmul.f32 %v4574, %v4709
    %v4720 = vmul.f32 %v4581, %v4713
    %v4721 = vmul.f32 %v4585, %v4713
    %v4722 = vmul.f32 %v4589, %v4713
    %v4723 = vmul.f32 %v4593, %v4713
    %4732 = vrot.lane.b32.xlu0 %v4716, 68
    %v4733 = vpop.permute.xlu0 %4732
    %4734 = vrot.lane.b32.xlu0 %v4717, 68
    %v4735 = vpop.permute.xlu0 %4734
    %4736 = vrot.lane.b32.xlu0 %v4718, 68
    %v4737 = vpop.permute.xlu0 %4736
    %4738 = vrot.lane.b32.xlu0 %v4719, 68
    %v4739 = vpop.permute.xlu0 %4738
    %4740 = vrot.lane.b32.xlu0 %v4720, 68
    %v4741 = vpop.permute.xlu0 %4740
    %4742 = vrot.lane.b32.xlu0 %v4721, 68
    %v4743 = vpop.permute.xlu0 %4742
    %4744 = vrot.lane.b32.xlu0 %v4722, 68
    %v4745 = vpop.permute.xlu0 %4744
    %4746 = vrot.lane.b32.xlu0 %v4723, 68
    %v4747 = vpop.permute.xlu0 %4746
    %v4756 = vadd.f32 %v4675, %v4733
    %v4757 = vadd.f32 %v4676, %v4735
    %v4758 = vadd.f32 %v4677, %v4737
    %v4759 = vadd.f32 %v4678, %v4739
    %v4760 = vadd.f32 %v4679, %v4741
    %v4761 = vadd.f32 %v4680, %v4743
    %v4762 = vadd.f32 %v4681, %v4745
    %v4763 = vadd.f32 %v4682, %v4747
    %v4766 = vsel %vm538, %v4555, %v4542
    %v4767 = vsel %vm398, %v4766, 0
    %4769 = vmatprep.subr.mxu0 0.0
    %4770 = vmatpush1.msra.mxu0 %v109
    %4771 = vmatprep.subr.mxu0 0.0
    %4772 = vmatpush1.msra.mxu0 %v110
    %4773 = vmatprep.subr.mxu0 0.0
    %4774 = vmatpush1.msra.mxu0 0.0
    %4775 = vmatprep.subr.mxu0 0.0
    %4776 = vmatpush1.msra.mxu0 0.0
    %4777 = vmatprep.subr.mxu0 0.0
    %4778 = vmatpush1.msra.mxu0 0.0
    %4779 = vmatprep.subr.mxu0 0.0
    %4780 = vmatpush1.msra.mxu0 0.0
    %4781 = vmatprep.subr.mxu0 0.0
    %4782 = vmatpush1.msra.mxu0 0.0
    %4783 = vmatprep.subr.mxu0 0.0
    %4784 = vmatpush1.msra.mxu0 0.0
    %4785 = vmatprep.subr.mxu0 0.0
    %4786 = vmatpush1.msra.mxu0 0.0
    %4787 = vmatprep.subr.mxu0 0.0
    %4788 = vmatpush1.msra.mxu0 0.0
    %4789 = vmatprep.subr.mxu0 0.0
    %4790 = vmatpush1.msra.mxu0 0.0
    %4791 = vmatprep.subr.mxu0 0.0
    %4792 = vmatpush1.msra.mxu0 0.0
    %4793 = vmatprep.subr.mxu0 0.0
    %4794 = vmatpush1.msra.mxu0 0.0
    %4795 = vmatprep.subr.mxu0 0.0
    %4796 = vmatpush1.msra.mxu0 0.0
    %4797 = vmatprep.subr.mxu0 0.0
    %4798 = vmatpush1.msra.mxu0 0.0
    %4799 = vmatprep.subr.mxu0 0.0
    %4800 = vmatpush1.msra.mxu0 0.0
    %4801 = vmatprep.subr.mxu0 0.0
    %4802 = vmatpush1.msra.mxu0 0.0
    %4803 = vmatprep.subr.mxu0 0.0
    %4804 = vmatpush1.msra.mxu0 0.0
    %4805 = vmatprep.subr.mxu0 0.0
    %4806 = vmatpush1.msra.mxu0 0.0
    %4807 = vmatprep.subr.mxu0 0.0
    %4808 = vmatpush1.msra.mxu0 0.0
    %4809 = vmatprep.subr.mxu0 0.0
    %4810 = vmatpush1.msra.mxu0 0.0
    %4811 = vmatprep.subr.mxu0 0.0
    %4812 = vmatpush1.msra.mxu0 0.0
    %4813 = vmatprep.subr.mxu0 0.0
    %4814 = vmatpush1.msra.mxu0 0.0
    %4815 = vmatprep.subr.mxu0 0.0
    %4816 = vmatpush1.msra.mxu0 0.0
    %4817 = vmatprep.subr.mxu0 0.0
    %4818 = vmatpush1.msra.mxu0 0.0
    %4819 = vmatprep.subr.mxu0 0.0
    %4820 = vmatpush1.msra.mxu0 0.0
    %4821 = vmatprep.subr.mxu0 0.0
    %4822 = vmatpush1.msra.mxu0 0.0
    %4823 = vmatprep.subr.mxu0 0.0
    %4824 = vmatpush1.msra.mxu0 0.0
    %4825 = vmatprep.subr.mxu0 0.0
    %4826 = vmatpush1.msra.mxu0 0.0
    %4827 = vmatprep.subr.mxu0 0.0
    %4828 = vmatpush1.msra.mxu0 0.0
    %4829 = vmatprep.subr.mxu0 0.0
    %4830 = vmatpush1.msra.mxu0 0.0
    %4831 = vmatprep.subr.mxu0 0.0
    %4832 = vmatpush1.msra.mxu0 0.0
    %4833 = vmatprep.mubr.f32.mxu0 0.0
    %4834 = vmatmul.mubr.f32.gmra.mrb[0].mxu0 %v4767
    %v4835 = vpop.f32.mrb[0].mxu0
    %v4836 = vadd.f32 0.0, %v4835
    %v4837 = vpop.f32.mrb[0].mxu0
    %4838 = vdwg.mxu0
    %4840 = vrot.lane.b32.xlu0 %v4836, 76
    %v4841 = vpop.permute.xlu0 %4840
    %v4843 = vadd.f32 %v3852, %v4841
    %v4844 = vmax.f32 %v4843, -20.0
    %v4845 = vmin.f32 %v4844, 20.0
    %4847 = vrot.lane.b32.xlu0 %v4845, 52
    %v4848 = vpop.permute.xlu0 %4847
    %s4850 = scalar_lea.vmem [#allocation2], 6
    %4851 = vst.msk [vmem:[%s4850] sm:$0x3] %vm1310, %v4848
    %4853 = vrot.lane.b32.xlu0 %v3777, 64
    %v4854 = vpop.permute.xlu0 %4853
    %4856 = vrot.lane.b32.xlu0 %v4766, 32
    %v4857 = vpop.permute.xlu0 %4856
    %v4859 = vsel %vm222, %v4854, %v4857
    %s4860 = scalar_lea.vmem %s0, 8
    %v4861 = vld [vmem:[%s4860] sm:$0x3]
    %v4863 = vsel %vm112, %v4859, 0
    %4865 = vmatprep.subr.mxu0 0.0
    %4866 = vmatpush1.msra.mxu0 %v98
    %4867 = vmatprep.subr.mxu0 0.0
    %4868 = vmatpush1.msra.mxu0 %v99
    %4869 = vmatprep.subr.mxu0 0.0
    %4870 = vmatpush1.msra.mxu0 %v100
    %4871 = vmatprep.subr.mxu0 0.0
    %4872 = vmatpush1.msra.mxu0 %v101
    %4873 = vmatprep.subr.mxu0 0.0
    %4874 = vmatpush1.msra.mxu0 %v102
    %4875 = vmatprep.subr.mxu0 0.0
    %4876 = vmatpush1.msra.mxu0 %v103
    %4877 = vmatprep.subr.mxu0 0.0
    %4878 = vmatpush1.msra.mxu0 0.0
    %4879 = vmatprep.subr.mxu0 0.0
    %4880 = vmatpush1.msra.mxu0 0.0
    %4881 = vmatprep.subr.mxu0 0.0
    %4882 = vmatpush1.msra.mxu0 0.0
    %4883 = vmatprep.subr.mxu0 0.0
    %4884 = vmatpush1.msra.mxu0 0.0
    %4885 = vmatprep.subr.mxu0 0.0
    %4886 = vmatpush1.msra.mxu0 0.0
    %4887 = vmatprep.subr.mxu0 0.0
    %4888 = vmatpush1.msra.mxu0 0.0
    %4889 = vmatprep.subr.mxu0 0.0
    %4890 = vmatpush1.msra.mxu0 0.0
    %4891 = vmatprep.subr.mxu0 0.0
    %4892 = vmatpush1.msra.mxu0 0.0
    %4893 = vmatprep.subr.mxu0 0.0
    %4894 = vmatpush1.msra.mxu0 0.0
    %4895 = vmatprep.subr.mxu0 0.0
    %4896 = vmatpush1.msra.mxu0 0.0
    %4897 = vmatprep.subr.mxu0 0.0
    %4898 = vmatpush1.msra.mxu0 0.0
    %4899 = vmatprep.subr.mxu0 0.0
    %4900 = vmatpush1.msra.mxu0 0.0
    %4901 = vmatprep.subr.mxu0 0.0
    %4902 = vmatpush1.msra.mxu0 0.0
    %4903 = vmatprep.subr.mxu0 0.0
    %4904 = vmatpush1.msra.mxu0 0.0
    %4905 = vmatprep.subr.mxu0 0.0
    %4906 = vmatpush1.msra.mxu0 0.0
    %4907 = vmatprep.subr.mxu0 0.0
    %4908 = vmatpush1.msra.mxu0 0.0
    %4909 = vmatprep.subr.mxu0 0.0
    %4910 = vmatpush1.msra.mxu0 0.0
    %4911 = vmatprep.subr.mxu0 0.0
    %4912 = vmatpush1.msra.mxu0 0.0
    %4913 = vmatprep.subr.mxu0 0.0
    %4914 = vmatpush1.msra.mxu0 0.0
    %4915 = vmatprep.subr.mxu0 0.0
    %4916 = vmatpush1.msra.mxu0 0.0
    %4917 = vmatprep.subr.mxu0 0.0
    %4918 = vmatpush1.msra.mxu0 0.0
    %4919 = vmatprep.subr.mxu0 0.0
    %4920 = vmatpush1.msra.mxu0 0.0
    %4921 = vmatprep.subr.mxu0 0.0
    %4922 = vmatpush1.msra.mxu0 0.0
    %4923 = vmatprep.subr.mxu0 0.0
    %4924 = vmatpush1.msra.mxu0 0.0
    %4925 = vmatprep.subr.mxu0 0.0
    %4926 = vmatpush1.msra.mxu0 0.0
    %4927 = vmatprep.subr.mxu0 0.0
    %4928 = vmatpush1.msra.mxu0 0.0
    %4929 = vmatprep.mubr.f32.mxu0 0.0
    %4930 = vmatmul.mubr.f32.gmra.mrb[0].mxu0 %v4863
    %v4931 = vpop.f32.mrb[0].mxu0
    %v4932 = vadd.f32 0.0, %v4931
    %v4933 = vpop.f32.mrb[0].mxu0
    %4934 = vdwg.mxu0
    %v4935 = vadd.f32 %v4861, %v4932
    %v4936 = vmul.f32 %v4935, 0.5
    %v4937 = vtanh.pop %v4936
    %v4938 = vadd.f32 %v4937, 1.0
    %v4939 = vmul.f32 %v4938, 0.5
    %v4940 = vtanh.pop %v4935
    %v4941 = vmul.f32 %v4939, %v3771
    %4943 = vrot.lane.b32.xlu0 %v4940, 32
    %v4944 = vpop.permute.xlu0 %4943
    %v4946 = vmul.f32 %v4939, %v4944
    %4948 = vrot.lane.b32.xlu0 %v4946, 32
    %v4949 = vpop.permute.xlu0 %4948
    %v4951 = vadd.f32 %v4941, %v4949
    %v4952 = vtanh.pop %v4951
    %4954 = vrot.lane.b32.xlu0 %v4952, 32
    %v4955 = vpop.permute.xlu0 %4954
    %v4957 = vmul.f32 %v4939, %v4955
    %v4958 = vmax.f32 %v4957, -20.0
    %v4959 = vmin.f32 %v4958, 20.0
    %4961 = vrot.lane.b32.xlu0 %v4959, 64
    %v4962 = vpop.permute.xlu0 %4961
    %v4963 = vsel %vm222, %v4962, 0
    %4965 = vmatprep.subr.mxu0 0.0
    %4966 = vmatpush1.msra.mxu0 %v104
    %4967 = vmatprep.subr.mxu0 0.0
    %4968 = vmatpush1.msra.mxu0 %v105
    %4969 = vmatprep.subr.mxu0 0.0
    %4970 = vmatpush1.msra.mxu0 %v106
    %4971 = vmatprep.subr.mxu0 0.0
    %4972 = vmatpush1.msra.mxu0 %v107
    %4973 = vmatprep.subr.mxu0 0.0
    %4974 = vmatpush1.msra.mxu0 0.0
    %4975 = vmatprep.subr.mxu0 0.0
    %4976 = vmatpush1.msra.mxu0 0.0
    %4977 = vmatprep.subr.mxu0 0.0
    %4978 = vmatpush1.msra.mxu0 0.0
    %4979 = vmatprep.subr.mxu0 0.0
    %4980 = vmatpush1.msra.mxu0 0.0
    %4981 = vmatprep.subr.mxu0 0.0
    %4982 = vmatpush1.msra.mxu0 0.0
    %4983 = vmatprep.subr.mxu0 0.0
    %4984 = vmatpush1.msra.mxu0 0.0
    %4985 = vmatprep.subr.mxu0 0.0
    %4986 = vmatpush1.msra.mxu0 0.0
    %4987 = vmatprep.subr.mxu0 0.0
    %4988 = vmatpush1.msra.mxu0 0.0
    %4989 = vmatprep.subr.mxu0 0.0
    %4990 = vmatpush1.msra.mxu0 0.0
    %4991 = vmatprep.subr.mxu0 0.0
    %4992 = vmatpush1.msra.mxu0 0.0
    %4993 = vmatprep.subr.mxu0 0.0
    %4994 = vmatpush1.msra.mxu0 0.0
    %4995 = vmatprep.subr.mxu0 0.0
    %4996 = vmatpush1.msra.mxu0 0.0
    %4997 = vmatprep.subr.mxu0 0.0
    %4998 = vmatpush1.msra.mxu0 0.0
    %4999 = vmatprep.subr.mxu0 0.0
    %5000 = vmatpush1.msra.mxu0 0.0
    %5001 = vmatprep.subr.mxu0 0.0
    %5002 = vmatpush1.msra.mxu0 0.0
    %5003 = vmatprep.subr.mxu0 0.0
    %5004 = vmatpush1.msra.mxu0 0.0
    %5005 = vmatprep.subr.mxu0 0.0
    %5006 = vmatpush1.msra.mxu0 0.0
    %5007 = vmatprep.subr.mxu0 0.0
    %5008 = vmatpush1.msra.mxu0 0.0
    %5009 = vmatprep.subr.mxu0 0.0
    %5010 = vmatpush1.msra.mxu0 0.0
    %5011 = vmatprep.subr.mxu0 0.0
    %5012 = vmatpush1.msra.mxu0 0.0
    %5013 = vmatprep.subr.mxu0 0.0
    %5014 = vmatpush1.msra.mxu0 0.0
    %5015 = vmatprep.subr.mxu0 0.0
    %5016 = vmatpush1.msra.mxu0 0.0
    %5017 = vmatprep.subr.mxu0 0.0
    %5018 = vmatpush1.msra.mxu0 0.0
    %5019 = vmatprep.subr.mxu0 0.0
    %5020 = vmatpush1.msra.mxu0 0.0
    %5021 = vmatprep.subr.mxu0 0.0
    %5022 = vmatpush1.msra.mxu0 0.0
    %5023 = vmatprep.subr.mxu0 0.0
    %5024 = vmatpush1.msra.mxu0 0.0
    %5025 = vmatprep.subr.mxu0 0.0
    %5026 = vmatpush1.msra.mxu0 0.0
    %5027 = vmatprep.subr.mxu0 0.0
    %5028 = vmatpush1.msra.mxu0 0.0
    %5029 = vmatprep.mubr.f32.mxu0 0.0
    %5030 = vmatmul.mubr.f32.gmra.mrb[0].mxu0 %v4963
    %v5031 = vpop.f32.mrb[0].mxu0
    %v5032 = vadd.f32 %v217, %v5031
    %v5033 = vpop.f32.mrb[0].mxu0
    %5034 = vdwg.mxu0
    %v5036 = vrot.slane %v5032, 6
    %5037 = vrot.lane.b32.xlu0 %v5036, 106
    %v5038 = vpop.permute.xlu0 %5037
    %v5040 = vsel %vm84, %v5032, %v5038
    %v5041 = vmul.f32 %v5032, 0.5
    %v5042 = vtanh.pop %v5041
    %v5043 = vadd.f32 %v5042, 1.0
    %v5044 = vmul.f32 %v5043, 0.5
    %v5045 = vtanh.pop %v5032
    %v5046 = vtanh.pop %v5040
    %v5047 = vmax.f32 %v5040, 0.0
    %v5048 = vand.u32 2147483647, %v5040
    %v5049 = vsub.f32 0.0, %v5048
    %v5050 = vmul.f32 %v5049, 1.442695
    %v5051 = vpow.pop %v5050
    %v5052 = vadd.f32 %v5051, 1.0
    %v5053 = vlog2.pop %v5052
    %v5054 = vmul.f32 %v5053, 0.6931472
    %v5055 = vadd.f32 %v5047, %v5054
    %v5056 = vmul.f32 %v5040, 0.5
    %v5057 = vtanh.pop %v5056
    %v5058 = vadd.f32 %v5057, 1.0
    %v5059 = vmul.f32 %v5058, 0.5
    %v5060 = vsel %vm320, %v5040, -inf
    %5061 = vmax.xlane.f32.xlu0 %v5060
    %v5062 = vpop.xlane.xlu0 %5061
    %v5063 = vsub.f32 %v5040, %v5062
    %v5064 = vmul.f32 %v5063, 1.442695
    %v5065 = vpow.pop %v5064
    %5067 = vrot.lane.b32.xlu0 %v5065, 110
    %v5068 = vpop.permute.xlu0 %5067
    %v5070 = vsel %vm331, %v5068, 0.0
    %5071 = vadd.xlane.f32.xlu0 %v5070
    %v5072 = vpop.xlane.xlu0 %5071
    %v5073 = vrcp.pop %v5072
    %v5074 = vmul.f32 %v5065, %v5073
    %v5077 = vunpack.c.l.s4 1966171168
    %v5078 = vunpack.c.0.s8 %v5077
    %v5079 = vlaneseq
    %v5080 = vshrl.u32 %v5079, 7
    %v5081 = vsub.s32 %v5078, %v5080
    %v5082 = vrot.slane %v5046, %v5081
    %v5083 = vcombine.high %v5082, %v5082
    %v5085 = vunpack.c.l.s4 1966171168
    %v5086 = vunpack.c.0.s8 %v5085
    %v5087 = vlaneseq
    %v5088 = vshrl.u32 %v5087, 7
    %v5089 = vsub.s32 %v5086, %v5088
    %v5090 = vrot.slane %v5082, %v5089
    %v5092 = vunpack.c.l.s4 1966171168
    %v5093 = vunpack.c.0.s8 %v5092
    %v5094 = vlaneseq
    %v5095 = vshrl.u32 %v5094, 7
    %v5096 = vsub.s32 %v5093, %v5095
    %v5097 = vrot.slane %v5083, %v5096
    %v5098 = vcombine.high %v5090, %v5090
    %v5099 = vcombine.high %v5097, %v5097
    %v5100 = vlaneseq
    %v5101 = vshrl.u32 %v5100, 7
    %v5102 = vsub.s32 0, %v5101
    %v5103 = vrot.slane %v5090, %v5102
    %v5104 = vlaneseq
    %v5105 = vshrl.u32 %v5104, 7
    %v5106 = vsub.s32 0, %v5105
    %v5107 = vrot.slane %v5097, %v5106
    %v5108 = vlaneseq
    %v5109 = vshrl.u32 %v5108, 7
    %v5110 = vsub.s32 0, %v5109
    %v5111 = vrot.slane %v5098, %v5110
    %v5112 = vlaneseq
    %v5113 = vshrl.u32 %v5112, 7
    %v5114 = vsub.s32 0, %v5113
    %v5115 = vrot.slane %v5099, %v5114
    %v5120 = vmul.f32 %v4756, %v5103
    %v5121 = vmul.f32 %v4757, %v5103
    %v5122 = vmul.f32 %v4758, %v5103
    %v5123 = vmul.f32 %v4759, %v5103
    %v5124 = vmul.f32 %v4760, %v5107
    %v5125 = vmul.f32 %v4761, %v5107
    %v5126 = vmul.f32 %v4762, %v5107
    %v5127 = vmul.f32 %v4763, %v5107
    %v5128 = vmul.f32 %v4756, %v5111
    %v5129 = vmul.f32 %v4757, %v5111
    %v5130 = vmul.f32 %v4758, %v5111
    %v5131 = vmul.f32 %v4759, %v5111
    %v5132 = vmul.f32 %v4760, %v5115
    %v5133 = vmul.f32 %v4761, %v5115
    %v5134 = vmul.f32 %v4762, %v5115
    %v5135 = vmul.f32 %v4763, %v5115
    %v5136 = vsel %vm398, %v5120, 0.0
    %5137 = vadd.xlane.f32.xlu0 %v5136
    %v5138 = vpop.xlane.xlu0 %5137
    %v5139 = vsel %vm398, %v5121, 0.0
    %5140 = vadd.xlane.f32.xlu0 %v5139
    %v5141 = vpop.xlane.xlu0 %5140
    %v5142 = vsel %vm398, %v5122, 0.0
    %5143 = vadd.xlane.f32.xlu0 %v5142
    %v5144 = vpop.xlane.xlu0 %5143
    %v5145 = vsel %vm398, %v5123, 0.0
    %5146 = vadd.xlane.f32.xlu0 %v5145
    %v5147 = vpop.xlane.xlu0 %5146
    %v5148 = vsel %vm398, %v5124, 0.0
    %5149 = vadd.xlane.f32.xlu0 %v5148
    %v5150 = vpop.xlane.xlu0 %5149
    %v5151 = vsel %vm398, %v5125, 0.0
    %5152 = vadd.xlane.f32.xlu0 %v5151
    %v5153 = vpop.xlane.xlu0 %5152
    %v5154 = vsel %vm398, %v5126, 0.0
    %5155 = vadd.xlane.f32.xlu0 %v5154
    %v5156 = vpop.xlane.xlu0 %5155
    %v5157 = vsel %vm398, %v5127, 0.0
    %5158 = vadd.xlane.f32.xlu0 %v5157
    %v5159 = vpop.xlane.xlu0 %5158
    %v5160 = vsel %vm398, %v5128, 0.0
    %5161 = vadd.xlane.f32.xlu0 %v5160
    %v5162 = vpop.xlane.xlu0 %5161
    %v5163 = vsel %vm398, %v5129, 0.0
    %5164 = vadd.xlane.f32.xlu0 %v5163
    %v5165 = vpop.xlane.xlu0 %5164
    %v5166 = vsel %vm398, %v5130, 0.0
    %5167 = vadd.xlane.f32.xlu0 %v5166
    %v5168 = vpop.xlane.xlu0 %5167
    %v5169 = vsel %vm398, %v5131, 0.0
    %5170 = vadd.xlane.f32.xlu0 %v5169
    %v5171 = vpop.xlane.xlu0 %5170
    %v5172 = vsel %vm398, %v5132, 0.0
    %5173 = vadd.xlane.f32.xlu0 %v5172
    %v5174 = vpop.xlane.xlu0 %5173
    %v5175 = vsel %vm398, %v5133, 0.0
    %5176 = vadd.xlane.f32.xlu0 %v5175
    %v5177 = vpop.xlane.xlu0 %5176
    %v5178 = vsel %vm398, %v5134, 0.0
    %5179 = vadd.xlane.f32.xlu0 %v5178
    %v5180 = vpop.xlane.xlu0 %5179
    %v5181 = vsel %vm398, %v5135, 0.0
    %5182 = vadd.xlane.f32.xlu0 %v5181
    %v5183 = vpop.xlane.xlu0 %5182
    %v5184 = vmul.f32 %v5046, %v5046
    %v5185 = vsel %vm448, %v5184, 0.0
    %5186 = vadd.xlane.f32.xlu0 %v5185
    %v5187 = vpop.xlane.xlu0 %5186
    %v5188 = vmul.f32 %v4756, %v4756
    %v5189 = vmul.f32 %v4757, %v4757
    %v5190 = vmul.f32 %v4758, %v4758
    %v5191 = vmul.f32 %v4759, %v4759
    %v5192 = vmul.f32 %v4760, %v4760
    %v5193 = vmul.f32 %v4761, %v4761
    %v5194 = vmul.f32 %v4762, %v4762
    %v5195 = vmul.f32 %v4763, %v4763
    %v5196 = vsel %vm398, %v5188, 0.0
    %5197 = vadd.xlane.f32.xlu0 %v5196
    %v5198 = vpop.xlane.xlu0 %5197
    %v5199 = vsel %vm398, %v5189, 0.0
    %5200 = vadd.xlane.f32.xlu0 %v5199
    %v5201 = vpop.xlane.xlu0 %5200
    %v5202 = vsel %vm398, %v5190, 0.0
    %5203 = vadd.xlane.f32.xlu0 %v5202
    %v5204 = vpop.xlane.xlu0 %5203
    %v5205 = vsel %vm398, %v5191, 0.0
    %5206 = vadd.xlane.f32.xlu0 %v5205
    %v5207 = vpop.xlane.xlu0 %5206
    %v5208 = vsel %vm398, %v5192, 0.0
    %5209 = vadd.xlane.f32.xlu0 %v5208
    %v5210 = vpop.xlane.xlu0 %5209
    %v5211 = vsel %vm398, %v5193, 0.0
    %5212 = vadd.xlane.f32.xlu0 %v5211
    %v5213 = vpop.xlane.xlu0 %5212
    %v5214 = vsel %vm398, %v5194, 0.0
    %5215 = vadd.xlane.f32.xlu0 %v5214
    %v5216 = vpop.xlane.xlu0 %5215
    %v5217 = vsel %vm398, %v5195, 0.0
    %5218 = vadd.xlane.f32.xlu0 %v5217
    %v5219 = vpop.xlane.xlu0 %5218
    %v5228 = vlaneseq
    %v5229 = vshrl.u32 %v5228, 7
    %v5230 = vsub.s32 %v493, %v5229
    %v5231 = vrot.slane %v5198, %v5230
    %v5232 = vlaneseq
    %v5233 = vshrl.u32 %v5232, 7
    %v5234 = vsub.s32 %v498, %v5233
    %v5235 = vrot.slane %v5201, %v5234
    %v5236 = vsel %vm503, %v5235, %v5231
    %v5237 = vlaneseq
    %v5238 = vshrl.u32 %v5237, 7
    %v5239 = vsub.s32 %v505, %v5238
    %v5240 = vrot.slane %v5204, %v5239
    %v5241 = vsel %vm510, %v5240, %v5236
    %v5242 = vlaneseq
    %v5243 = vshrl.u32 %v5242, 7
    %v5244 = vsub.s32 %v512, %v5243
    %v5245 = vrot.slane %v5207, %v5244
    %v5246 = vsel %vm517, %v5245, %v5241
    %v5247 = vlaneseq
    %v5248 = vshrl.u32 %v5247, 7
    %v5249 = vsub.s32 %v493, %v5248
    %v5250 = vrot.slane %v5210, %v5249
    %v5251 = vlaneseq
    %v5252 = vshrl.u32 %v5251, 7
    %v5253 = vsub.s32 %v498, %v5252
    %v5254 = vrot.slane %v5213, %v5253
    %v5255 = vsel %vm503, %v5254, %v5250
    %v5256 = vlaneseq
    %v5257 = vshrl.u32 %v5256, 7
    %v5258 = vsub.s32 %v505, %v5257
    %v5259 = vrot.slane %v5216, %v5258
    %v5260 = vsel %vm510, %v5259, %v5255
    %v5261 = vlaneseq
    %v5262 = vshrl.u32 %v5261, 7
    %v5263 = vsub.s32 %v512, %v5262
    %v5264 = vrot.slane %v5219, %v5263
    %v5265 = vsel %vm517, %v5264, %v5260
    %v5266 = vsel %vm538, %v5265, %v5246
    %v5268 = vsel %vm541, %v5265, %v5246
    %v5270 = vsel %vm84, %v5266, %v5268
    %v5271 = vmul.f32 %v5187, %v5270
    %v5272 = vadd.f32 %v5271, 1e-16
    %v5273 = vrsqrt.pop %v5272
    %v5275 = vlaneseq
    %v5276 = vshrl.u32 %v5275, 7
    %v5277 = vsub.s32 0, %v5276
    %v5278 = vrot.slane %v5273, %v5277
    %5280 = vbcast.lane.b32.xlu0 %v5278, 256
    %v5281 = vpop.permute.xlu0 %5280
    %s5283 = sor.u32 256, 8
    %5284 = vbcast.lane.b32.xlu0 %v5278, %s5283
    %v5285 = vpop.permute.xlu0 %5284
    %s5287 = sor.u32 256, 16
    %5288 = vbcast.lane.b32.xlu0 %v5278, %s5287
    %v5289 = vpop.permute.xlu0 %5288
    %s5291 = sor.u32 256, 24
    %5292 = vbcast.lane.b32.xlu0 %v5278, %s5291
    %v5293 = vpop.permute.xlu0 %5292
    %v5294 = vlaneseq
    %v5295 = vshrl.u32 %v5294, 7
    %v5296 = vsub.s32 1, %v5295
    %v5297 = vrot.slane %v5273, %v5296
    %5299 = vbcast.lane.b32.xlu0 %v5297, 256
    %v5300 = vpop.permute.xlu0 %5299
    %s5302 = sor.u32 256, 8
    %5303 = vbcast.lane.b32.xlu0 %v5297, %s5302
    %v5304 = vpop.permute.xlu0 %5303
    %s5306 = sor.u32 256, 16
    %5307 = vbcast.lane.b32.xlu0 %v5297, %s5306
    %v5308 = vpop.permute.xlu0 %5307
    %s5310 = sor.u32 256, 24
    %5311 = vbcast.lane.b32.xlu0 %v5297, %s5310
    %v5312 = vpop.permute.xlu0 %5311
    %v5313 = vlaneseq
    %v5314 = vshrl.u32 %v5313, 7
    %v5315 = vsub.s32 2, %v5314
    %v5316 = vrot.slane %v5273, %v5315
    %5318 = vbcast.lane.b32.xlu0 %v5316, 256
    %v5319 = vpop.permute.xlu0 %5318
    %s5321 = sor.u32 256, 8
    %5322 = vbcast.lane.b32.xlu0 %v5316, %s5321
    %v5323 = vpop.permute.xlu0 %5322
    %s5325 = sor.u32 256, 16
    %5326 = vbcast.lane.b32.xlu0 %v5316, %s5325
    %v5327 = vpop.permute.xlu0 %5326
    %s5329 = sor.u32 256, 24
    %5330 = vbcast.lane.b32.xlu0 %v5316, %s5329
    %v5331 = vpop.permute.xlu0 %5330
    %v5332 = vlaneseq
    %v5333 = vshrl.u32 %v5332, 7
    %v5334 = vsub.s32 3, %v5333
    %v5335 = vrot.slane %v5273, %v5334
    %5337 = vbcast.lane.b32.xlu0 %v5335, 256
    %v5338 = vpop.permute.xlu0 %5337
    %s5340 = sor.u32 256, 8
    %5341 = vbcast.lane.b32.xlu0 %v5335, %s5340
    %v5342 = vpop.permute.xlu0 %5341
    %s5344 = sor.u32 256, 16
    %5345 = vbcast.lane.b32.xlu0 %v5335, %s5344
    %v5346 = vpop.permute.xlu0 %5345
    %s5348 = sor.u32 256, 24
    %5349 = vbcast.lane.b32.xlu0 %v5335, %s5348
    %v5350 = vpop.permute.xlu0 %5349
    %v5367 = vmul.f32 %v5138, %v5281
    %v5368 = vmul.f32 %v5141, %v5285
    %v5369 = vmul.f32 %v5144, %v5289
    %v5370 = vmul.f32 %v5147, %v5293
    %v5371 = vmul.f32 %v5150, %v5300
    %v5372 = vmul.f32 %v5153, %v5304
    %v5373 = vmul.f32 %v5156, %v5308
    %v5374 = vmul.f32 %v5159, %v5312
    %v5375 = vmul.f32 %v5162, %v5319
    %v5376 = vmul.f32 %v5165, %v5323
    %v5377 = vmul.f32 %v5168, %v5327
    %v5378 = vmul.f32 %v5171, %v5331
    %v5379 = vmul.f32 %v5174, %v5338
    %v5380 = vmul.f32 %v5177, %v5342
    %v5381 = vmul.f32 %v5180, %v5346
    %v5382 = vmul.f32 %v5183, %v5350
    %5384 = vset.pattern.permute.xlu0 16
    %5385 = vperm.xlu0 %5384, %v5055
    %v5386 = vpop.permute.xlu0 %5385
    %5404 = vset.pattern.permute.xlu0 0
    %5405 = vperm.xlu0 %5404, %v5367
    %v5406 = vpop.permute.xlu0 %5405
    %5407 = vset.pattern.permute.xlu0 0
    %5408 = vperm.xlu0 %5407, %v5368
    %v5409 = vpop.permute.xlu0 %5408
    %5410 = vset.pattern.permute.xlu0 0
    %5411 = vperm.xlu0 %5410, %v5369
    %v5412 = vpop.permute.xlu0 %5411
    %5413 = vset.pattern.permute.xlu0 0
    %5414 = vperm.xlu0 %5413, %v5370
    %v5415 = vpop.permute.xlu0 %5414
    %5416 = vset.pattern.permute.xlu0 0
    %5417 = vperm.xlu0 %5416, %v5371
    %v5418 = vpop.permute.xlu0 %5417
    %5419 = vset.pattern.permute.xlu0 0
    %5420 = vperm.xlu0 %5419, %v5372
    %v5421 = vpop.permute.xlu0 %5420
    %5422 = vset.pattern.permute.xlu0 0
    %5423 = vperm.xlu0 %5422, %v5373
    %v5424 = vpop.permute.xlu0 %5423
    %5425 = vset.pattern.permute.xlu0 0
    %5426 = vperm.xlu0 %5425, %v5374
    %v5427 = vpop.permute.xlu0 %5426
    %5428 = vset.pattern.permute.xlu0 0
    %5429 = vperm.xlu0 %5428, %v5375
    %v5430 = vpop.permute.xlu0 %5429
    %5431 = vset.pattern.permute.xlu0 0
    %5432 = vperm.xlu0 %5431, %v5376
    %v5433 = vpop.permute.xlu0 %5432
    %5434 = vset.pattern.permute.xlu0 0
    %5435 = vperm.xlu0 %5434, %v5377
    %v5436 = vpop.permute.xlu0 %5435
    %5437 = vset.pattern.permute.xlu0 0
    %5438 = vperm.xlu0 %5437, %v5378
    %v5439 = vpop.permute.xlu0 %5438
    %5440 = vset.pattern.permute.xlu0 0
    %5441 = vperm.xlu0 %5440, %v5379
    %v5442 = vpop.permute.xlu0 %5441
    %5443 = vset.pattern.permute.xlu0 0
    %5444 = vperm.xlu0 %5443, %v5380
    %v5445 = vpop.permute.xlu0 %5444
    %5446 = vset.pattern.permute.xlu0 0
    %5447 = vperm.xlu0 %5446, %v5381
    %v5448 = vpop.permute.xlu0 %5447
    %5449 = vset.pattern.permute.xlu0 0
    %5450 = vperm.xlu0 %5449, %v5382
    %v5451 = vpop.permute.xlu0 %5450
    %v5452 = vlaneseq
    %v5453 = vshrl.u32 %v5452, 7
    %v5454 = vsub.s32 %v493, %v5453
    %v5455 = vrot.slane %v5406, %v5454
    %v5456 = vlaneseq
    %v5457 = vshrl.u32 %v5456, 7
    %v5458 = vsub.s32 %v498, %v5457
    %v5459 = vrot.slane %v5409, %v5458
    %v5460 = vsel %vm503, %v5459, %v5455
    %v5461 = vlaneseq
    %v5462 = vshrl.u32 %v5461, 7
    %v5463 = vsub.s32 %v505, %v5462
    %v5464 = vrot.slane %v5412, %v5463
    %v5465 = vsel %vm510, %v5464, %v5460
    %v5466 = vlaneseq
    %v5467 = vshrl.u32 %v5466, 7
    %v5468 = vsub.s32 %v512, %v5467
    %v5469 = vrot.slane %v5415, %v5468
    %v5470 = vsel %vm517, %v5469, %v5465
    %v5471 = vlaneseq
    %v5472 = vshrl.u32 %v5471, 7
    %v5473 = vsub.s32 %v493, %v5472
    %v5474 = vrot.slane %v5418, %v5473
    %v5475 = vlaneseq
    %v5476 = vshrl.u32 %v5475, 7
    %v5477 = vsub.s32 %v498, %v5476
    %v5478 = vrot.slane %v5421, %v5477
    %v5479 = vsel %vm503, %v5478, %v5474
    %v5480 = vlaneseq
    %v5481 = vshrl.u32 %v5480, 7
    %v5482 = vsub.s32 %v505, %v5481
    %v5483 = vrot.slane %v5424, %v5482
    %v5484 = vsel %vm510, %v5483, %v5479
    %v5485 = vlaneseq
    %v5486 = vshrl.u32 %v5485, 7
    %v5487 = vsub.s32 %v512, %v5486
    %v5488 = vrot.slane %v5427, %v5487
    %v5489 = vsel %vm517, %v5488, %v5484
    %v5490 = vlaneseq
    %v5491 = vshrl.u32 %v5490, 7
    %v5492 = vsub.s32 %v493, %v5491
    %v5493 = vrot.slane %v5430, %v5492
    %v5494 = vlaneseq
    %v5495 = vshrl.u32 %v5494, 7
    %v5496 = vsub.s32 %v498, %v5495
    %v5497 = vrot.slane %v5433, %v5496
    %v5498 = vsel %vm503, %v5497, %v5493
    %v5499 = vlaneseq
    %v5500 = vshrl.u32 %v5499, 7
    %v5501 = vsub.s32 %v505, %v5500
    %v5502 = vrot.slane %v5436, %v5501
    %v5503 = vsel %vm510, %v5502, %v5498
    %v5504 = vlaneseq
    %v5505 = vshrl.u32 %v5504, 7
    %v5506 = vsub.s32 %v512, %v5505
    %v5507 = vrot.slane %v5439, %v5506
    %v5508 = vsel %vm517, %v5507, %v5503
    %v5509 = vlaneseq
    %v5510 = vshrl.u32 %v5509, 7
    %v5511 = vsub.s32 %v493, %v5510
    %v5512 = vrot.slane %v5442, %v5511
    %v5513 = vlaneseq
    %v5514 = vshrl.u32 %v5513, 7
    %v5515 = vsub.s32 %v498, %v5514
    %v5516 = vrot.slane %v5445, %v5515
    %v5517 = vsel %vm503, %v5516, %v5512
    %v5518 = vlaneseq
    %v5519 = vshrl.u32 %v5518, 7
    %v5520 = vsub.s32 %v505, %v5519
    %v5521 = vrot.slane %v5448, %v5520
    %v5522 = vsel %vm510, %v5521, %v5517
    %v5523 = vlaneseq
    %v5524 = vshrl.u32 %v5523, 7
    %v5525 = vsub.s32 %v512, %v5524
    %v5526 = vrot.slane %v5451, %v5525
    %v5527 = vsel %vm517, %v5526, %v5522
    %v5528 = vsel %vm538, %v5489, %v5470
    %v5529 = vsel %vm803, %v5508, %v5528
    %v5530 = vsel %vm541, %v5527, %v5529
    %v5532 = vmul.f32 %v5386, %v5530
    %v5533 = vmul.f32 %v5532, 1.442695
    %v5534 = vpow.pop %v5533
    %v5535 = vsel %vm810, %v5534, 0.0
    %5536 = vadd.xlane.f32.xlu0 %v5535
    %v5537 = vpop.xlane.xlu0 %5536
    %v5538 = vrcp.pop %v5537
    %v5539 = vmul.f32 %v5534, %v5538
    %5541 = vset.pattern.permute.xlu0 17
    %5542 = vperm.xlu0 %5541, %v5059
    %v5543 = vpop.permute.xlu0 %5542
    %v5545 = vmul.f32 %v5543, %v5539
    %v5546 = vsub.f32 1.0, %v5059
    %5548 = vset.pattern.permute.xlu0 17
    %5549 = vperm.xlu0 %5548, %v5546
    %v5550 = vpop.permute.xlu0 %5549
    %v5552 = vmul.f32 %v5550, %v4483
    %v5553 = vadd.f32 %v5545, %v5552
    %v5555 = vsel %vm222, %v5553, 0
    %5557 = vmatprep.subr.mxu0 0.0
    %5558 = vmatpush1.msra.mxu0 %v94
    %5559 = vmatprep.subr.mxu0 0.0
    %5560 = vmatpush1.msra.mxu0 %v95
    %5561 = vmatprep.subr.mxu0 0.0
    %5562 = vmatpush1.msra.mxu0 %v96
    %5563 = vmatprep.subr.mxu0 0.0
    %5564 = vmatpush1.msra.mxu0 %v97
    %5565 = vmatprep.subr.mxu0 0.0
    %5566 = vmatpush1.msra.mxu0 0.0
    %5567 = vmatprep.subr.mxu0 0.0
    %5568 = vmatpush1.msra.mxu0 0.0
    %5569 = vmatprep.subr.mxu0 0.0
    %5570 = vmatpush1.msra.mxu0 0.0
    %5571 = vmatprep.subr.mxu0 0.0
    %5572 = vmatpush1.msra.mxu0 0.0
    %5573 = vmatprep.subr.mxu0 0.0
    %5574 = vmatpush1.msra.mxu0 0.0
    %5575 = vmatprep.subr.mxu0 0.0
    %5576 = vmatpush1.msra.mxu0 0.0
    %5577 = vmatprep.subr.mxu0 0.0
    %5578 = vmatpush1.msra.mxu0 0.0
    %5579 = vmatprep.subr.mxu0 0.0
    %5580 = vmatpush1.msra.mxu0 0.0
    %5581 = vmatprep.subr.mxu0 0.0
    %5582 = vmatpush1.msra.mxu0 0.0
    %5583 = vmatprep.subr.mxu0 0.0
    %5584 = vmatpush1.msra.mxu0 0.0
    %5585 = vmatprep.subr.mxu0 0.0
    %5586 = vmatpush1.msra.mxu0 0.0
    %5587 = vmatprep.subr.mxu0 0.0
    %5588 = vmatpush1.msra.mxu0 0.0
    %5589 = vmatprep.subr.mxu0 0.0
    %5590 = vmatpush1.msra.mxu0 0.0
    %5591 = vmatprep.subr.mxu0 0.0
    %5592 = vmatpush1.msra.mxu0 0.0
    %5593 = vmatprep.subr.mxu0 0.0
    %5594 = vmatpush1.msra.mxu0 0.0
    %5595 = vmatprep.subr.mxu0 0.0
    %5596 = vmatpush1.msra.mxu0 0.0
    %5597 = vmatprep.subr.mxu0 0.0
    %5598 = vmatpush1.msra.mxu0 0.0
    %5599 = vmatprep.subr.mxu0 0.0
    %5600 = vmatpush1.msra.mxu0 0.0
    %5601 = vmatprep.subr.mxu0 0.0
    %5602 = vmatpush1.msra.mxu0 0.0
    %5603 = vmatprep.subr.mxu0 0.0
    %5604 = vmatpush1.msra.mxu0 0.0
    %5605 = vmatprep.subr.mxu0 0.0
    %5606 = vmatpush1.msra.mxu0 0.0
    %5607 = vmatprep.subr.mxu0 0.0
    %5608 = vmatpush1.msra.mxu0 0.0
    %5609 = vmatprep.subr.mxu0 0.0
    %5610 = vmatpush1.msra.mxu0 0.0
    %5611 = vmatprep.subr.mxu0 0.0
    %5612 = vmatpush1.msra.mxu0 0.0
    %5613 = vmatprep.subr.mxu0 0.0
    %5614 = vmatpush1.msra.mxu0 0.0
    %5615 = vmatprep.subr.mxu0 0.0
    %5616 = vmatpush1.msra.mxu0 0.0
    %5617 = vmatprep.subr.mxu0 0.0
    %5618 = vmatpush1.msra.mxu0 0.0
    %5619 = vmatprep.subr.mxu0 0.0
    %5620 = vmatpush1.msra.mxu0 0.0
    %5621 = vmatprep.mubr.f32.mxu0 0.0
    %5622 = vmatmul.mubr.f32.gmra.mrb[0].mxu0 %v5555
    %v5623 = vpop.f32.mrb[0].mxu0
    %v5624 = vadd.f32 0.0, %v5623
    %v5625 = vpop.f32.mrb[0].mxu0
    %5626 = vdwg.mxu0
    %5628 = vset.pattern.permute.xlu0 18
    %5629 = vperm.xlu0 %5628, %v5074
    %v5630 = vpop.permute.xlu0 %5629
    %v5632 = vmul.f32 %v5630, %v5553
    %5633 = vset.pattern.permute.xlu0 19
    %5634 = vperm.xlu0 %5633, %v5074
    %v5635 = vpop.permute.xlu0 %5634
    %v5637 = vmul.f32 %v5635, %v5624
    %v5638 = vadd.f32 %v5632, %v5637
    %5639 = vset.pattern.permute.xlu0 20
    %5640 = vperm.xlu0 %5639, %v5074
    %v5641 = vpop.permute.xlu0 %5640
    %v5643 = vmul.f32 %v5641, %v5624
    %5645 = vrot.lane.b32.xlu0 %v5643, 96
    %v5646 = vpop.permute.xlu0 %5645
    %v5648 = vadd.f32 %v5638, %v5646
    %v5649 = vmax.f32 %v5648, 1e-30
    %v5650 = vlog2.pop %v5649
    %v5651 = vmul.f32 %v5650, 0.6931472
    %5652 = vset.pattern.permute.xlu0 21
    %5653 = vperm.xlu0 %5652, %v5055
    %v5654 = vpop.permute.xlu0 %5653
    %v5656 = vmul.f32 %v5654, %v5651
    %v5657 = vmul.f32 %v5656, 1.442695
    %v5658 = vpow.pop %v5657
    %v5659 = vsel %vm810, %v5658, 0.0
    %5660 = vadd.xlane.f32.xlu0 %v5659
    %v5661 = vpop.xlane.xlu0 %5660
    %v5662 = vrcp.pop %v5661
    %v5663 = vmul.f32 %v5658, %v5662
    %v5664 = vlaneseq
    %v5665 = vshrl.u32 %v5664, 7
    %v5666 = vsub.s32 0, %v5665
    %v5667 = vrot.slane %v5663, %v5666
    %5669 = vbcast.lane.b32.xlu0 %v5667, 256
    %v5670 = vpop.permute.xlu0 %5669
    %s5672 = sor.u32 256, 8
    %5673 = vbcast.lane.b32.xlu0 %v5667, %s5672
    %v5674 = vpop.permute.xlu0 %5673
    %s5676 = sor.u32 256, 16
    %5677 = vbcast.lane.b32.xlu0 %v5667, %s5676
    %v5678 = vpop.permute.xlu0 %5677
    %s5680 = sor.u32 256, 24
    %5681 = vbcast.lane.b32.xlu0 %v5667, %s5680
    %v5682 = vpop.permute.xlu0 %5681
    %v5683 = vlaneseq
    %v5684 = vshrl.u32 %v5683, 7
    %v5685 = vsub.s32 1, %v5684
    %v5686 = vrot.slane %v5663, %v5685
    %5688 = vbcast.lane.b32.xlu0 %v5686, 256
    %v5689 = vpop.permute.xlu0 %5688
    %s5691 = sor.u32 256, 8
    %5692 = vbcast.lane.b32.xlu0 %v5686, %s5691
    %v5693 = vpop.permute.xlu0 %5692
    %s5695 = sor.u32 256, 16
    %5696 = vbcast.lane.b32.xlu0 %v5686, %s5695
    %v5697 = vpop.permute.xlu0 %5696
    %s5699 = sor.u32 256, 24
    %5700 = vbcast.lane.b32.xlu0 %v5686, %s5699
    %v5701 = vpop.permute.xlu0 %5700
    %v5702 = vmul.f32 %v5670, %v4756
    %v5703 = vmul.f32 %v5674, %v4757
    %v5704 = vmul.f32 %v5678, %v4758
    %v5705 = vmul.f32 %v5682, %v4759
    %v5706 = vmul.f32 %v5689, %v4760
    %v5707 = vmul.f32 %v5693, %v4761
    %v5708 = vmul.f32 %v5697, %v4762
    %v5709 = vmul.f32 %v5701, %v4763
    %v5710 = vsel %vm398, %v5702, 0.0
    %v5711 = vsel %vm398, %v5703, 0.0
    %v5712 = vadd.f32 %v5710, %v5711
    %v5713 = vsel %vm398, %v5704, 0.0
    %v5714 = vadd.f32 %v5712, %v5713
    %v5715 = vsel %vm398, %v5705, 0.0
    %v5716 = vadd.f32 %v5714, %v5715
    %v5717 = vrot.slane %v5716, 4
    %v5718 = vadd.f32 %v5716, %v5717
    %v5719 = vrot.slane %v5718, 2
    %v5720 = vadd.f32 %v5718, %v5719
    %v5721 = vrot.slane %v5720, 1
    %v5722 = vadd.f32 %v5720, %v5721
    %v5723 = vsel %vm398, %v5706, 0.0
    %v5724 = vsel %vm398, %v5707, 0.0
    %v5725 = vadd.f32 %v5723, %v5724
    %v5726 = vsel %vm398, %v5708, 0.0
    %v5727 = vadd.f32 %v5725, %v5726
    %v5728 = vsel %vm398, %v5709, 0.0
    %v5729 = vadd.f32 %v5727, %v5728
    %v5730 = vrot.slane %v5729, 4
    %v5731 = vadd.f32 %v5729, %v5730
    %v5732 = vrot.slane %v5731, 2
    %v5733 = vadd.f32 %v5731, %v5732
    %v5734 = vrot.slane %v5733, 1
    %v5735 = vadd.f32 %v5733, %v5734
    %v5736 = vlaneseq
    %v5737 = vshrl.u32 %v5736, 7
    %v5738 = vsub.s32 2, %v5737
    %v5739 = vrot.slane %v5663, %v5738
    %5741 = vbcast.lane.b32.xlu0 %v5739, 256
    %v5742 = vpop.permute.xlu0 %5741
    %s5744 = sor.u32 256, 8
    %5745 = vbcast.lane.b32.xlu0 %v5739, %s5744
    %v5746 = vpop.permute.xlu0 %5745
    %s5748 = sor.u32 256, 16
    %5749 = vbcast.lane.b32.xlu0 %v5739, %s5748
    %v5750 = vpop.permute.xlu0 %5749
    %s5752 = sor.u32 256, 24
    %5753 = vbcast.lane.b32.xlu0 %v5739, %s5752
    %v5754 = vpop.permute.xlu0 %5753
    %v5755 = vlaneseq
    %v5756 = vshrl.u32 %v5755, 7
    %v5757 = vsub.s32 3, %v5756
    %v5758 = vrot.slane %v5663, %v5757
    %5760 = vbcast.lane.b32.xlu0 %v5758, 256
    %v5761 = vpop.permute.xlu0 %5760
    %s5763 = sor.u32 256, 8
    %5764 = vbcast.lane.b32.xlu0 %v5758, %s5763
    %v5765 = vpop.permute.xlu0 %5764
    %s5767 = sor.u32 256, 16
    %5768 = vbcast.lane.b32.xlu0 %v5758, %s5767
    %v5769 = vpop.permute.xlu0 %5768
    %s5771 = sor.u32 256, 24
    %5772 = vbcast.lane.b32.xlu0 %v5758, %s5771
    %v5773 = vpop.permute.xlu0 %5772
    %v5776 = vunpack.c.l.s4 1966171168
    %v5777 = vunpack.c.0.s8 %v5776
    %v5778 = vlaneseq
    %v5779 = vshrl.u32 %v5778, 7
    %v5780 = vsub.s32 %v5777, %v5779
    %v5781 = vrot.slane %v5044, %v5780
    %v5782 = vcombine.high %v5781, %v5781
    %v5784 = vunpack.c.l.s4 1966171168
    %v5785 = vunpack.c.0.s8 %v5784
    %v5786 = vlaneseq
    %v5787 = vshrl.u32 %v5786, 7
    %v5788 = vsub.s32 %v5785, %v5787
    %v5789 = vrot.slane %v5781, %v5788
    %v5791 = vunpack.c.l.s4 1966171168
    %v5792 = vunpack.c.0.s8 %v5791
    %v5793 = vlaneseq
    %v5794 = vshrl.u32 %v5793, 7
    %v5795 = vsub.s32 %v5792, %v5794
    %v5796 = vrot.slane %v5782, %v5795
    %v5797 = vlaneseq
    %v5798 = vshrl.u32 %v5797, 7
    %v5799 = vsub.s32 0, %v5798
    %v5800 = vrot.slane %v5789, %v5799
    %v5801 = vlaneseq
    %v5802 = vshrl.u32 %v5801, 7
    %v5803 = vsub.s32 0, %v5802
    %v5804 = vrot.slane %v5796, %v5803
    %v5807 = vmul.f32 %v5742, %v5800
    %v5808 = vmul.f32 %v5746, %v5800
    %v5809 = vmul.f32 %v5750, %v5800
    %v5810 = vmul.f32 %v5754, %v5800
    %v5811 = vmul.f32 %v5761, %v5804
    %v5812 = vmul.f32 %v5765, %v5804
    %v5813 = vmul.f32 %v5769, %v5804
    %v5814 = vmul.f32 %v5773, %v5804
    %v5815 = vsub.f32 1.0, %v5807
    %v5816 = vsub.f32 1.0, %v5808
    %v5817 = vsub.f32 1.0, %v5809
    %v5818 = vsub.f32 1.0, %v5810
    %v5819 = vsub.f32 1.0, %v5811
    %v5820 = vsub.f32 1.0, %v5812
    %v5821 = vsub.f32 1.0, %v5813
    %v5822 = vsub.f32 1.0, %v5814
    %5831 = vrot.lane.b32.xlu0 %v5815, 84
    %v5832 = vpop.permute.xlu0 %5831
    %5833 = vrot.lane.b32.xlu0 %v5816, 84
    %v5834 = vpop.permute.xlu0 %5833
    %5835 = vrot.lane.b32.xlu0 %v5817, 84
    %v5836 = vpop.permute.xlu0 %5835
    %5837 = vrot.lane.b32.xlu0 %v5818, 84
    %v5838 = vpop.permute.xlu0 %5837
    %5839 = vrot.lane.b32.xlu0 %v5819, 84
    %v5840 = vpop.permute.xlu0 %5839
    %5841 = vrot.lane.b32.xlu0 %v5820, 84
    %v5842 = vpop.permute.xlu0 %5841
    %5843 = vrot.lane.b32.xlu0 %v5821, 84
    %v5844 = vpop.permute.xlu0 %5843
    %5845 = vrot.lane.b32.xlu0 %v5822, 84
    %v5846 = vpop.permute.xlu0 %5845
    %v5855 = vmul.f32 %v4756, %v5832
    %v5856 = vmul.f32 %v4757, %v5834
    %v5857 = vmul.f32 %v4758, %v5836
    %v5858 = vmul.f32 %v4759, %v5838
    %v5859 = vmul.f32 %v4760, %v5840
    %v5860 = vmul.f32 %v4761, %v5842
    %v5861 = vmul.f32 %v4762, %v5844
    %v5862 = vmul.f32 %v4763, %v5846
    %v5865 = vunpack.c.l.s4 1966171168
    %v5866 = vunpack.c.0.s8 %v5865
    %v5867 = vlaneseq
    %v5868 = vshrl.u32 %v5867, 7
    %v5869 = vsub.s32 %v5866, %v5868
    %v5870 = vrot.slane %v5045, %v5869
    %v5871 = vcombine.high %v5870, %v5870
    %v5873 = vunpack.c.l.s4 1966171168
    %v5874 = vunpack.c.0.s8 %v5873
    %v5875 = vlaneseq
    %v5876 = vshrl.u32 %v5875, 7
    %v5877 = vsub.s32 %v5874, %v5876
    %v5878 = vrot.slane %v5870, %v5877
    %v5880 = vunpack.c.l.s4 1966171168
    %v5881 = vunpack.c.0.s8 %v5880
    %v5882 = vlaneseq
    %v5883 = vshrl.u32 %v5882, 7
    %v5884 = vsub.s32 %v5881, %v5883
    %v5885 = vrot.slane %v5871, %v5884
    %v5886 = vlaneseq
    %v5887 = vshrl.u32 %v5886, 7
    %v5888 = vsub.s32 0, %v5887
    %v5889 = vrot.slane %v5878, %v5888
    %v5890 = vlaneseq
    %v5891 = vshrl.u32 %v5890, 7
    %v5892 = vsub.s32 0, %v5891
    %v5893 = vrot.slane %v5885, %v5892
    %v5896 = vmul.f32 %v5742, %v5889
    %v5897 = vmul.f32 %v5746, %v5889
    %v5898 = vmul.f32 %v5750, %v5889
    %v5899 = vmul.f32 %v5754, %v5889
    %v5900 = vmul.f32 %v5761, %v5893
    %v5901 = vmul.f32 %v5765, %v5893
    %v5902 = vmul.f32 %v5769, %v5893
    %v5903 = vmul.f32 %v5773, %v5893
    %5912 = vrot.lane.b32.xlu0 %v5896, 68
    %v5913 = vpop.permute.xlu0 %5912
    %5914 = vrot.lane.b32.xlu0 %v5897, 68
    %v5915 = vpop.permute.xlu0 %5914
    %5916 = vrot.lane.b32.xlu0 %v5898, 68
    %v5917 = vpop.permute.xlu0 %5916
    %5918 = vrot.lane.b32.xlu0 %v5899, 68
    %v5919 = vpop.permute.xlu0 %5918
    %5920 = vrot.lane.b32.xlu0 %v5900, 68
    %v5921 = vpop.permute.xlu0 %5920
    %5922 = vrot.lane.b32.xlu0 %v5901, 68
    %v5923 = vpop.permute.xlu0 %5922
    %5924 = vrot.lane.b32.xlu0 %v5902, 68
    %v5925 = vpop.permute.xlu0 %5924
    %5926 = vrot.lane.b32.xlu0 %v5903, 68
    %v5927 = vpop.permute.xlu0 %5926
    %v5936 = vadd.f32 %v5855, %v5913
    %v5937 = vadd.f32 %v5856, %v5915
    %v5938 = vadd.f32 %v5857, %v5917
    %v5939 = vadd.f32 %v5858, %v5919
    %v5940 = vadd.f32 %v5859, %v5921
    %v5941 = vadd.f32 %v5860, %v5923
    %v5942 = vadd.f32 %v5861, %v5925
    %v5943 = vadd.f32 %v5862, %v5927
    %v5946 = vsel %vm538, %v5735, %v5722
    %v5947 = vsel %vm398, %v5946, 0
    %5949 = vmatprep.subr.mxu0 0.0
    %5950 = vmatpush1.msra.mxu0 %v109
    %5951 = vmatprep.subr.mxu0 0.0
    %5952 = vmatpush1.msra.mxu0 %v110
    %5953 = vmatprep.subr.mxu0 0.0
    %5954 = vmatpush1.msra.mxu0 0.0
    %5955 = vmatprep.subr.mxu0 0.0
    %5956 = vmatpush1.msra.mxu0 0.0
    %5957 = vmatprep.subr.mxu0 0.0
    %5958 = vmatpush1.msra.mxu0 0.0
    %5959 = vmatprep.subr.mxu0 0.0
    %5960 = vmatpush1.msra.mxu0 0.0
    %5961 = vmatprep.subr.mxu0 0.0
    %5962 = vmatpush1.msra.mxu0 0.0
    %5963 = vmatprep.subr.mxu0 0.0
    %5964 = vmatpush1.msra.mxu0 0.0
    %5965 = vmatprep.subr.mxu0 0.0
    %5966 = vmatpush1.msra.mxu0 0.0
    %5967 = vmatprep.subr.mxu0 0.0
    %5968 = vmatpush1.msra.mxu0 0.0
    %5969 = vmatprep.subr.mxu0 0.0
    %5970 = vmatpush1.msra.mxu0 0.0
    %5971 = vmatprep.subr.mxu0 0.0
    %5972 = vmatpush1.msra.mxu0 0.0
    %5973 = vmatprep.subr.mxu0 0.0
    %5974 = vmatpush1.msra.mxu0 0.0
    %5975 = vmatprep.subr.mxu0 0.0
    %5976 = vmatpush1.msra.mxu0 0.0
    %5977 = vmatprep.subr.mxu0 0.0
    %5978 = vmatpush1.msra.mxu0 0.0
    %5979 = vmatprep.subr.mxu0 0.0
    %5980 = vmatpush1.msra.mxu0 0.0
    %5981 = vmatprep.subr.mxu0 0.0
    %5982 = vmatpush1.msra.mxu0 0.0
    %5983 = vmatprep.subr.mxu0 0.0
    %5984 = vmatpush1.msra.mxu0 0.0
    %5985 = vmatprep.subr.mxu0 0.0
    %5986 = vmatpush1.msra.mxu0 0.0
    %5987 = vmatprep.subr.mxu0 0.0
    %5988 = vmatpush1.msra.mxu0 0.0
    %5989 = vmatprep.subr.mxu0 0.0
    %5990 = vmatpush1.msra.mxu0 0.0
    %5991 = vmatprep.subr.mxu0 0.0
    %5992 = vmatpush1.msra.mxu0 0.0
    %5993 = vmatprep.subr.mxu0 0.0
    %5994 = vmatpush1.msra.mxu0 0.0
    %5995 = vmatprep.subr.mxu0 0.0
    %5996 = vmatpush1.msra.mxu0 0.0
    %5997 = vmatprep.subr.mxu0 0.0
    %5998 = vmatpush1.msra.mxu0 0.0
    %5999 = vmatprep.subr.mxu0 0.0
    %6000 = vmatpush1.msra.mxu0 0.0
    %6001 = vmatprep.subr.mxu0 0.0
    %6002 = vmatpush1.msra.mxu0 0.0
    %6003 = vmatprep.subr.mxu0 0.0
    %6004 = vmatpush1.msra.mxu0 0.0
    %6005 = vmatprep.subr.mxu0 0.0
    %6006 = vmatpush1.msra.mxu0 0.0
    %6007 = vmatprep.subr.mxu0 0.0
    %6008 = vmatpush1.msra.mxu0 0.0
    %6009 = vmatprep.subr.mxu0 0.0
    %6010 = vmatpush1.msra.mxu0 0.0
    %6011 = vmatprep.subr.mxu0 0.0
    %6012 = vmatpush1.msra.mxu0 0.0
    %6013 = vmatprep.mubr.f32.mxu0 0.0
    %6014 = vmatmul.mubr.f32.gmra.mrb[0].mxu0 %v5947
    %v6015 = vpop.f32.mrb[0].mxu0
    %v6016 = vadd.f32 0.0, %v6015
    %v6017 = vpop.f32.mrb[0].mxu0
    %6018 = vdwg.mxu0
    %6020 = vrot.lane.b32.xlu0 %v6016, 76
    %v6021 = vpop.permute.xlu0 %6020
    %v6023 = vadd.f32 %v5032, %v6021
    %v6024 = vmax.f32 %v6023, -20.0
    %v6025 = vmin.f32 %v6024, 20.0
    %6027 = vrot.lane.b32.xlu0 %v6025, 52
    %v6028 = vpop.permute.xlu0 %6027
    %s6030 = scalar_lea.vmem [#allocation2], 8
    %6031 = vst.msk [vmem:[%s6030] sm:$0x3] %vm1310, %v6028
    %6033 = vrot.lane.b32.xlu0 %v4957, 64
    %v6034 = vpop.permute.xlu0 %6033
    %6036 = vrot.lane.b32.xlu0 %v5946, 32
    %v6037 = vpop.permute.xlu0 %6036
    %v6039 = vsel %vm222, %v6034, %v6037
    %s6040 = scalar_lea.vmem %s0, 10
    %v6041 = vld [vmem:[%s6040] sm:$0x3]
    %v6043 = vsel %vm112, %v6039, 0
    %6045 = vmatprep.subr.mxu0 0.0
    %6046 = vmatpush1.msra.mxu0 %v98
    %6047 = vmatprep.subr.mxu0 0.0
    %6048 = vmatpush1.msra.mxu0 %v99
    %6049 = vmatprep.subr.mxu0 0.0
    %6050 = vmatpush1.msra.mxu0 %v100
    %6051 = vmatprep.subr.mxu0 0.0
    %6052 = vmatpush1.msra.mxu0 %v101
    %6053 = vmatprep.subr.mxu0 0.0
    %6054 = vmatpush1.msra.mxu0 %v102
    %6055 = vmatprep.subr.mxu0 0.0
    %6056 = vmatpush1.msra.mxu0 %v103
    %6057 = vmatprep.subr.mxu0 0.0
    %6058 = vmatpush1.msra.mxu0 0.0
    %6059 = vmatprep.subr.mxu0 0.0
    %6060 = vmatpush1.msra.mxu0 0.0
    %6061 = vmatprep.subr.mxu0 0.0
    %6062 = vmatpush1.msra.mxu0 0.0
    %6063 = vmatprep.subr.mxu0 0.0
    %6064 = vmatpush1.msra.mxu0 0.0
    %6065 = vmatprep.subr.mxu0 0.0
    %6066 = vmatpush1.msra.mxu0 0.0
    %6067 = vmatprep.subr.mxu0 0.0
    %6068 = vmatpush1.msra.mxu0 0.0
    %6069 = vmatprep.subr.mxu0 0.0
    %6070 = vmatpush1.msra.mxu0 0.0
    %6071 = vmatprep.subr.mxu0 0.0
    %6072 = vmatpush1.msra.mxu0 0.0
    %6073 = vmatprep.subr.mxu0 0.0
    %6074 = vmatpush1.msra.mxu0 0.0
    %6075 = vmatprep.subr.mxu0 0.0
    %6076 = vmatpush1.msra.mxu0 0.0
    %6077 = vmatprep.subr.mxu0 0.0
    %6078 = vmatpush1.msra.mxu0 0.0
    %6079 = vmatprep.subr.mxu0 0.0
    %6080 = vmatpush1.msra.mxu0 0.0
    %6081 = vmatprep.subr.mxu0 0.0
    %6082 = vmatpush1.msra.mxu0 0.0
    %6083 = vmatprep.subr.mxu0 0.0
    %6084 = vmatpush1.msra.mxu0 0.0
    %6085 = vmatprep.subr.mxu0 0.0
    %6086 = vmatpush1.msra.mxu0 0.0
    %6087 = vmatprep.subr.mxu0 0.0
    %6088 = vmatpush1.msra.mxu0 0.0
    %6089 = vmatprep.subr.mxu0 0.0
    %6090 = vmatpush1.msra.mxu0 0.0
    %6091 = vmatprep.subr.mxu0 0.0
    %6092 = vmatpush1.msra.mxu0 0.0
    %6093 = vmatprep.subr.mxu0 0.0
    %6094 = vmatpush1.msra.mxu0 0.0
    %6095 = vmatprep.subr.mxu0 0.0
    %6096 = vmatpush1.msra.mxu0 0.0
    %6097 = vmatprep.subr.mxu0 0.0
    %6098 = vmatpush1.msra.mxu0 0.0
    %6099 = vmatprep.subr.mxu0 0.0
    %6100 = vmatpush1.msra.mxu0 0.0
    %6101 = vmatprep.subr.mxu0 0.0
    %6102 = vmatpush1.msra.mxu0 0.0
    %6103 = vmatprep.subr.mxu0 0.0
    %6104 = vmatpush1.msra.mxu0 0.0
    %6105 = vmatprep.subr.mxu0 0.0
    %6106 = vmatpush1.msra.mxu0 0.0
    %6107 = vmatprep.subr.mxu0 0.0
    %6108 = vmatpush1.msra.mxu0 0.0
    %6109 = vmatprep.mubr.f32.mxu0 0.0
    %6110 = vmatmul.mubr.f32.gmra.mrb[0].mxu0 %v6043
    %v6111 = vpop.f32.mrb[0].mxu0
    %v6112 = vadd.f32 0.0, %v6111
    %v6113 = vpop.f32.mrb[0].mxu0
    %6114 = vdwg.mxu0
    %v6115 = vadd.f32 %v6041, %v6112
    %v6116 = vmul.f32 %v6115, 0.5
    %v6117 = vtanh.pop %v6116
    %v6118 = vadd.f32 %v6117, 1.0
    %v6119 = vmul.f32 %v6118, 0.5
    %v6120 = vtanh.pop %v6115
    %v6121 = vmul.f32 %v6119, %v4951
    %6123 = vrot.lane.b32.xlu0 %v6120, 32
    %v6124 = vpop.permute.xlu0 %6123
    %v6126 = vmul.f32 %v6119, %v6124
    %6128 = vrot.lane.b32.xlu0 %v6126, 32
    %v6129 = vpop.permute.xlu0 %6128
    %v6131 = vadd.f32 %v6121, %v6129
    %v6132 = vtanh.pop %v6131
    %6134 = vrot.lane.b32.xlu0 %v6132, 32
    %v6135 = vpop.permute.xlu0 %6134
    %v6137 = vmul.f32 %v6119, %v6135
    %v6138 = vmax.f32 %v6137, -20.0
    %v6139 = vmin.f32 %v6138, 20.0
    %6141 = vrot.lane.b32.xlu0 %v6139, 64
    %v6142 = vpop.permute.xlu0 %6141
    %v6143 = vsel %vm222, %v6142, 0
    %6145 = vmatprep.subr.mxu0 0.0
    %6146 = vmatpush1.msra.mxu0 %v104
    %6147 = vmatprep.subr.mxu0 0.0
    %6148 = vmatpush1.msra.mxu0 %v105
    %6149 = vmatprep.subr.mxu0 0.0
    %6150 = vmatpush1.msra.mxu0 %v106
    %6151 = vmatprep.subr.mxu0 0.0
    %6152 = vmatpush1.msra.mxu0 %v107
    %6153 = vmatprep.subr.mxu0 0.0
    %6154 = vmatpush1.msra.mxu0 0.0
    %6155 = vmatprep.subr.mxu0 0.0
    %6156 = vmatpush1.msra.mxu0 0.0
    %6157 = vmatprep.subr.mxu0 0.0
    %6158 = vmatpush1.msra.mxu0 0.0
    %6159 = vmatprep.subr.mxu0 0.0
    %6160 = vmatpush1.msra.mxu0 0.0
    %6161 = vmatprep.subr.mxu0 0.0
    %6162 = vmatpush1.msra.mxu0 0.0
    %6163 = vmatprep.subr.mxu0 0.0
    %6164 = vmatpush1.msra.mxu0 0.0
    %6165 = vmatprep.subr.mxu0 0.0
    %6166 = vmatpush1.msra.mxu0 0.0
    %6167 = vmatprep.subr.mxu0 0.0
    %6168 = vmatpush1.msra.mxu0 0.0
    %6169 = vmatprep.subr.mxu0 0.0
    %6170 = vmatpush1.msra.mxu0 0.0
    %6171 = vmatprep.subr.mxu0 0.0
    %6172 = vmatpush1.msra.mxu0 0.0
    %6173 = vmatprep.subr.mxu0 0.0
    %6174 = vmatpush1.msra.mxu0 0.0
    %6175 = vmatprep.subr.mxu0 0.0
    %6176 = vmatpush1.msra.mxu0 0.0
    %6177 = vmatprep.subr.mxu0 0.0
    %6178 = vmatpush1.msra.mxu0 0.0
    %6179 = vmatprep.subr.mxu0 0.0
    %6180 = vmatpush1.msra.mxu0 0.0
    %6181 = vmatprep.subr.mxu0 0.0
    %6182 = vmatpush1.msra.mxu0 0.0
    %6183 = vmatprep.subr.mxu0 0.0
    %6184 = vmatpush1.msra.mxu0 0.0
    %6185 = vmatprep.subr.mxu0 0.0
    %6186 = vmatpush1.msra.mxu0 0.0
    %6187 = vmatprep.subr.mxu0 0.0
    %6188 = vmatpush1.msra.mxu0 0.0
    %6189 = vmatprep.subr.mxu0 0.0
    %6190 = vmatpush1.msra.mxu0 0.0
    %6191 = vmatprep.subr.mxu0 0.0
    %6192 = vmatpush1.msra.mxu0 0.0
    %6193 = vmatprep.subr.mxu0 0.0
    %6194 = vmatpush1.msra.mxu0 0.0
    %6195 = vmatprep.subr.mxu0 0.0
    %6196 = vmatpush1.msra.mxu0 0.0
    %6197 = vmatprep.subr.mxu0 0.0
    %6198 = vmatpush1.msra.mxu0 0.0
    %6199 = vmatprep.subr.mxu0 0.0
    %6200 = vmatpush1.msra.mxu0 0.0
    %6201 = vmatprep.subr.mxu0 0.0
    %6202 = vmatpush1.msra.mxu0 0.0
    %6203 = vmatprep.subr.mxu0 0.0
    %6204 = vmatpush1.msra.mxu0 0.0
    %6205 = vmatprep.subr.mxu0 0.0
    %6206 = vmatpush1.msra.mxu0 0.0
    %6207 = vmatprep.subr.mxu0 0.0
    %6208 = vmatpush1.msra.mxu0 0.0
    %6209 = vmatprep.mubr.f32.mxu0 0.0
    %6210 = vmatmul.mubr.f32.gmra.mrb[0].mxu0 %v6143
    %v6211 = vpop.f32.mrb[0].mxu0
    %v6212 = vadd.f32 %v217, %v6211
    %v6213 = vpop.f32.mrb[0].mxu0
    %6214 = vdwg.mxu0
    %v6216 = vrot.slane %v6212, 6
    %6217 = vrot.lane.b32.xlu0 %v6216, 106
    %v6218 = vpop.permute.xlu0 %6217
    %v6220 = vsel %vm84, %v6212, %v6218
    %v6221 = vmul.f32 %v6212, 0.5
    %v6222 = vtanh.pop %v6221
    %v6223 = vadd.f32 %v6222, 1.0
    %v6224 = vmul.f32 %v6223, 0.5
    %v6225 = vtanh.pop %v6212
    %v6226 = vtanh.pop %v6220
    %v6227 = vmax.f32 %v6220, 0.0
    %v6228 = vand.u32 2147483647, %v6220
    %v6229 = vsub.f32 0.0, %v6228
    %v6230 = vmul.f32 %v6229, 1.442695
    %v6231 = vpow.pop %v6230
    %v6232 = vadd.f32 %v6231, 1.0
    %v6233 = vlog2.pop %v6232
    %v6234 = vmul.f32 %v6233, 0.6931472
    %v6235 = vadd.f32 %v6227, %v6234
    %v6236 = vmul.f32 %v6220, 0.5
    %v6237 = vtanh.pop %v6236
    %v6238 = vadd.f32 %v6237, 1.0
    %v6239 = vmul.f32 %v6238, 0.5
    %v6240 = vsel %vm320, %v6220, -inf
    %6241 = vmax.xlane.f32.xlu0 %v6240
    %v6242 = vpop.xlane.xlu0 %6241
    %v6243 = vsub.f32 %v6220, %v6242
    %v6244 = vmul.f32 %v6243, 1.442695
    %v6245 = vpow.pop %v6244
    %6247 = vrot.lane.b32.xlu0 %v6245, 110
    %v6248 = vpop.permute.xlu0 %6247
    %v6250 = vsel %vm331, %v6248, 0.0
    %6251 = vadd.xlane.f32.xlu0 %v6250
    %v6252 = vpop.xlane.xlu0 %6251
    %v6253 = vrcp.pop %v6252
    %v6254 = vmul.f32 %v6245, %v6253
    %v6257 = vunpack.c.l.s4 1966171168
    %v6258 = vunpack.c.0.s8 %v6257
    %v6259 = vlaneseq
    %v6260 = vshrl.u32 %v6259, 7
    %v6261 = vsub.s32 %v6258, %v6260
    %v6262 = vrot.slane %v6226, %v6261
    %v6263 = vcombine.high %v6262, %v6262
    %v6265 = vunpack.c.l.s4 1966171168
    %v6266 = vunpack.c.0.s8 %v6265
    %v6267 = vlaneseq
    %v6268 = vshrl.u32 %v6267, 7
    %v6269 = vsub.s32 %v6266, %v6268
    %v6270 = vrot.slane %v6262, %v6269
    %v6272 = vunpack.c.l.s4 1966171168
    %v6273 = vunpack.c.0.s8 %v6272
    %v6274 = vlaneseq
    %v6275 = vshrl.u32 %v6274, 7
    %v6276 = vsub.s32 %v6273, %v6275
    %v6277 = vrot.slane %v6263, %v6276
    %v6278 = vcombine.high %v6270, %v6270
    %v6279 = vcombine.high %v6277, %v6277
    %v6280 = vlaneseq
    %v6281 = vshrl.u32 %v6280, 7
    %v6282 = vsub.s32 0, %v6281
    %v6283 = vrot.slane %v6270, %v6282
    %v6284 = vlaneseq
    %v6285 = vshrl.u32 %v6284, 7
    %v6286 = vsub.s32 0, %v6285
    %v6287 = vrot.slane %v6277, %v6286
    %v6288 = vlaneseq
    %v6289 = vshrl.u32 %v6288, 7
    %v6290 = vsub.s32 0, %v6289
    %v6291 = vrot.slane %v6278, %v6290
    %v6292 = vlaneseq
    %v6293 = vshrl.u32 %v6292, 7
    %v6294 = vsub.s32 0, %v6293
    %v6295 = vrot.slane %v6279, %v6294
    %v6300 = vmul.f32 %v5936, %v6283
    %v6301 = vmul.f32 %v5937, %v6283
    %v6302 = vmul.f32 %v5938, %v6283
    %v6303 = vmul.f32 %v5939, %v6283
    %v6304 = vmul.f32 %v5940, %v6287
    %v6305 = vmul.f32 %v5941, %v6287
    %v6306 = vmul.f32 %v5942, %v6287
    %v6307 = vmul.f32 %v5943, %v6287
    %v6308 = vmul.f32 %v5936, %v6291
    %v6309 = vmul.f32 %v5937, %v6291
    %v6310 = vmul.f32 %v5938, %v6291
    %v6311 = vmul.f32 %v5939, %v6291
    %v6312 = vmul.f32 %v5940, %v6295
    %v6313 = vmul.f32 %v5941, %v6295
    %v6314 = vmul.f32 %v5942, %v6295
    %v6315 = vmul.f32 %v5943, %v6295
    %v6316 = vsel %vm398, %v6300, 0.0
    %6317 = vadd.xlane.f32.xlu0 %v6316
    %v6318 = vpop.xlane.xlu0 %6317
    %v6319 = vsel %vm398, %v6301, 0.0
    %6320 = vadd.xlane.f32.xlu0 %v6319
    %v6321 = vpop.xlane.xlu0 %6320
    %v6322 = vsel %vm398, %v6302, 0.0
    %6323 = vadd.xlane.f32.xlu0 %v6322
    %v6324 = vpop.xlane.xlu0 %6323
    %v6325 = vsel %vm398, %v6303, 0.0
    %6326 = vadd.xlane.f32.xlu0 %v6325
    %v6327 = vpop.xlane.xlu0 %6326
    %v6328 = vsel %vm398, %v6304, 0.0
    %6329 = vadd.xlane.f32.xlu0 %v6328
    %v6330 = vpop.xlane.xlu0 %6329
    %v6331 = vsel %vm398, %v6305, 0.0
    %6332 = vadd.xlane.f32.xlu0 %v6331
    %v6333 = vpop.xlane.xlu0 %6332
    %v6334 = vsel %vm398, %v6306, 0.0
    %6335 = vadd.xlane.f32.xlu0 %v6334
    %v6336 = vpop.xlane.xlu0 %6335
    %v6337 = vsel %vm398, %v6307, 0.0
    %6338 = vadd.xlane.f32.xlu0 %v6337
    %v6339 = vpop.xlane.xlu0 %6338
    %v6340 = vsel %vm398, %v6308, 0.0
    %6341 = vadd.xlane.f32.xlu0 %v6340
    %v6342 = vpop.xlane.xlu0 %6341
    %v6343 = vsel %vm398, %v6309, 0.0
    %6344 = vadd.xlane.f32.xlu0 %v6343
    %v6345 = vpop.xlane.xlu0 %6344
    %v6346 = vsel %vm398, %v6310, 0.0
    %6347 = vadd.xlane.f32.xlu0 %v6346
    %v6348 = vpop.xlane.xlu0 %6347
    %v6349 = vsel %vm398, %v6311, 0.0
    %6350 = vadd.xlane.f32.xlu0 %v6349
    %v6351 = vpop.xlane.xlu0 %6350
    %v6352 = vsel %vm398, %v6312, 0.0
    %6353 = vadd.xlane.f32.xlu0 %v6352
    %v6354 = vpop.xlane.xlu0 %6353
    %v6355 = vsel %vm398, %v6313, 0.0
    %6356 = vadd.xlane.f32.xlu0 %v6355
    %v6357 = vpop.xlane.xlu0 %6356
    %v6358 = vsel %vm398, %v6314, 0.0
    %6359 = vadd.xlane.f32.xlu0 %v6358
    %v6360 = vpop.xlane.xlu0 %6359
    %v6361 = vsel %vm398, %v6315, 0.0
    %6362 = vadd.xlane.f32.xlu0 %v6361
    %v6363 = vpop.xlane.xlu0 %6362
    %v6364 = vmul.f32 %v6226, %v6226
    %v6365 = vsel %vm448, %v6364, 0.0
    %6366 = vadd.xlane.f32.xlu0 %v6365
    %v6367 = vpop.xlane.xlu0 %6366
    %v6368 = vmul.f32 %v5936, %v5936
    %v6369 = vmul.f32 %v5937, %v5937
    %v6370 = vmul.f32 %v5938, %v5938
    %v6371 = vmul.f32 %v5939, %v5939
    %v6372 = vmul.f32 %v5940, %v5940
    %v6373 = vmul.f32 %v5941, %v5941
    %v6374 = vmul.f32 %v5942, %v5942
    %v6375 = vmul.f32 %v5943, %v5943
    %v6376 = vsel %vm398, %v6368, 0.0
    %6377 = vadd.xlane.f32.xlu0 %v6376
    %v6378 = vpop.xlane.xlu0 %6377
    %v6379 = vsel %vm398, %v6369, 0.0
    %6380 = vadd.xlane.f32.xlu0 %v6379
    %v6381 = vpop.xlane.xlu0 %6380
    %v6382 = vsel %vm398, %v6370, 0.0
    %6383 = vadd.xlane.f32.xlu0 %v6382
    %v6384 = vpop.xlane.xlu0 %6383
    %v6385 = vsel %vm398, %v6371, 0.0
    %6386 = vadd.xlane.f32.xlu0 %v6385
    %v6387 = vpop.xlane.xlu0 %6386
    %v6388 = vsel %vm398, %v6372, 0.0
    %6389 = vadd.xlane.f32.xlu0 %v6388
    %v6390 = vpop.xlane.xlu0 %6389
    %v6391 = vsel %vm398, %v6373, 0.0
    %6392 = vadd.xlane.f32.xlu0 %v6391
    %v6393 = vpop.xlane.xlu0 %6392
    %v6394 = vsel %vm398, %v6374, 0.0
    %6395 = vadd.xlane.f32.xlu0 %v6394
    %v6396 = vpop.xlane.xlu0 %6395
    %v6397 = vsel %vm398, %v6375, 0.0
    %6398 = vadd.xlane.f32.xlu0 %v6397
    %v6399 = vpop.xlane.xlu0 %6398
    %v6408 = vlaneseq
    %v6409 = vshrl.u32 %v6408, 7
    %v6410 = vsub.s32 %v493, %v6409
    %v6411 = vrot.slane %v6378, %v6410
    %v6412 = vlaneseq
    %v6413 = vshrl.u32 %v6412, 7
    %v6414 = vsub.s32 %v498, %v6413
    %v6415 = vrot.slane %v6381, %v6414
    %v6416 = vsel %vm503, %v6415, %v6411
    %v6417 = vlaneseq
    %v6418 = vshrl.u32 %v6417, 7
    %v6419 = vsub.s32 %v505, %v6418
    %v6420 = vrot.slane %v6384, %v6419
    %v6421 = vsel %vm510, %v6420, %v6416
    %v6422 = vlaneseq
    %v6423 = vshrl.u32 %v6422, 7
    %v6424 = vsub.s32 %v512, %v6423
    %v6425 = vrot.slane %v6387, %v6424
    %v6426 = vsel %vm517, %v6425, %v6421
    %v6427 = vlaneseq
    %v6428 = vshrl.u32 %v6427, 7
    %v6429 = vsub.s32 %v493, %v6428
    %v6430 = vrot.slane %v6390, %v6429
    %v6431 = vlaneseq
    %v6432 = vshrl.u32 %v6431, 7
    %v6433 = vsub.s32 %v498, %v6432
    %v6434 = vrot.slane %v6393, %v6433
    %v6435 = vsel %vm503, %v6434, %v6430
    %v6436 = vlaneseq
    %v6437 = vshrl.u32 %v6436, 7
    %v6438 = vsub.s32 %v505, %v6437
    %v6439 = vrot.slane %v6396, %v6438
    %v6440 = vsel %vm510, %v6439, %v6435
    %v6441 = vlaneseq
    %v6442 = vshrl.u32 %v6441, 7
    %v6443 = vsub.s32 %v512, %v6442
    %v6444 = vrot.slane %v6399, %v6443
    %v6445 = vsel %vm517, %v6444, %v6440
    %v6446 = vsel %vm538, %v6445, %v6426
    %v6448 = vsel %vm541, %v6445, %v6426
    %v6450 = vsel %vm84, %v6446, %v6448
    %v6451 = vmul.f32 %v6367, %v6450
    %v6452 = vadd.f32 %v6451, 1e-16
    %v6453 = vrsqrt.pop %v6452
    %v6455 = vlaneseq
    %v6456 = vshrl.u32 %v6455, 7
    %v6457 = vsub.s32 0, %v6456
    %v6458 = vrot.slane %v6453, %v6457
    %6460 = vbcast.lane.b32.xlu0 %v6458, 256
    %v6461 = vpop.permute.xlu0 %6460
    %s6463 = sor.u32 256, 8
    %6464 = vbcast.lane.b32.xlu0 %v6458, %s6463
    %v6465 = vpop.permute.xlu0 %6464
    %s6467 = sor.u32 256, 16
    %6468 = vbcast.lane.b32.xlu0 %v6458, %s6467
    %v6469 = vpop.permute.xlu0 %6468
    %s6471 = sor.u32 256, 24
    %6472 = vbcast.lane.b32.xlu0 %v6458, %s6471
    %v6473 = vpop.permute.xlu0 %6472
    %v6474 = vlaneseq
    %v6475 = vshrl.u32 %v6474, 7
    %v6476 = vsub.s32 1, %v6475
    %v6477 = vrot.slane %v6453, %v6476
    %6479 = vbcast.lane.b32.xlu0 %v6477, 256
    %v6480 = vpop.permute.xlu0 %6479
    %s6482 = sor.u32 256, 8
    %6483 = vbcast.lane.b32.xlu0 %v6477, %s6482
    %v6484 = vpop.permute.xlu0 %6483
    %s6486 = sor.u32 256, 16
    %6487 = vbcast.lane.b32.xlu0 %v6477, %s6486
    %v6488 = vpop.permute.xlu0 %6487
    %s6490 = sor.u32 256, 24
    %6491 = vbcast.lane.b32.xlu0 %v6477, %s6490
    %v6492 = vpop.permute.xlu0 %6491
    %v6493 = vlaneseq
    %v6494 = vshrl.u32 %v6493, 7
    %v6495 = vsub.s32 2, %v6494
    %v6496 = vrot.slane %v6453, %v6495
    %6498 = vbcast.lane.b32.xlu0 %v6496, 256
    %v6499 = vpop.permute.xlu0 %6498
    %s6501 = sor.u32 256, 8
    %6502 = vbcast.lane.b32.xlu0 %v6496, %s6501
    %v6503 = vpop.permute.xlu0 %6502
    %s6505 = sor.u32 256, 16
    %6506 = vbcast.lane.b32.xlu0 %v6496, %s6505
    %v6507 = vpop.permute.xlu0 %6506
    %s6509 = sor.u32 256, 24
    %6510 = vbcast.lane.b32.xlu0 %v6496, %s6509
    %v6511 = vpop.permute.xlu0 %6510
    %v6512 = vlaneseq
    %v6513 = vshrl.u32 %v6512, 7
    %v6514 = vsub.s32 3, %v6513
    %v6515 = vrot.slane %v6453, %v6514
    %6517 = vbcast.lane.b32.xlu0 %v6515, 256
    %v6518 = vpop.permute.xlu0 %6517
    %s6520 = sor.u32 256, 8
    %6521 = vbcast.lane.b32.xlu0 %v6515, %s6520
    %v6522 = vpop.permute.xlu0 %6521
    %s6524 = sor.u32 256, 16
    %6525 = vbcast.lane.b32.xlu0 %v6515, %s6524
    %v6526 = vpop.permute.xlu0 %6525
    %s6528 = sor.u32 256, 24
    %6529 = vbcast.lane.b32.xlu0 %v6515, %s6528
    %v6530 = vpop.permute.xlu0 %6529
    %v6547 = vmul.f32 %v6318, %v6461
    %v6548 = vmul.f32 %v6321, %v6465
    %v6549 = vmul.f32 %v6324, %v6469
    %v6550 = vmul.f32 %v6327, %v6473
    %v6551 = vmul.f32 %v6330, %v6480
    %v6552 = vmul.f32 %v6333, %v6484
    %v6553 = vmul.f32 %v6336, %v6488
    %v6554 = vmul.f32 %v6339, %v6492
    %v6555 = vmul.f32 %v6342, %v6499
    %v6556 = vmul.f32 %v6345, %v6503
    %v6557 = vmul.f32 %v6348, %v6507
    %v6558 = vmul.f32 %v6351, %v6511
    %v6559 = vmul.f32 %v6354, %v6518
    %v6560 = vmul.f32 %v6357, %v6522
    %v6561 = vmul.f32 %v6360, %v6526
    %v6562 = vmul.f32 %v6363, %v6530
    %6564 = vset.pattern.permute.xlu0 16
    %6565 = vperm.xlu0 %6564, %v6235
    %v6566 = vpop.permute.xlu0 %6565
    %6584 = vset.pattern.permute.xlu0 0
    %6585 = vperm.xlu0 %6584, %v6547
    %v6586 = vpop.permute.xlu0 %6585
    %6587 = vset.pattern.permute.xlu0 0
    %6588 = vperm.xlu0 %6587, %v6548
    %v6589 = vpop.permute.xlu0 %6588
    %6590 = vset.pattern.permute.xlu0 0
    %6591 = vperm.xlu0 %6590, %v6549
    %v6592 = vpop.permute.xlu0 %6591
    %6593 = vset.pattern.permute.xlu0 0
    %6594 = vperm.xlu0 %6593, %v6550
    %v6595 = vpop.permute.xlu0 %6594
    %6596 = vset.pattern.permute.xlu0 0
    %6597 = vperm.xlu0 %6596, %v6551
    %v6598 = vpop.permute.xlu0 %6597
    %6599 = vset.pattern.permute.xlu0 0
    %6600 = vperm.xlu0 %6599, %v6552
    %v6601 = vpop.permute.xlu0 %6600
    %6602 = vset.pattern.permute.xlu0 0
    %6603 = vperm.xlu0 %6602, %v6553
    %v6604 = vpop.permute.xlu0 %6603
    %6605 = vset.pattern.permute.xlu0 0
    %6606 = vperm.xlu0 %6605, %v6554
    %v6607 = vpop.permute.xlu0 %6606
    %6608 = vset.pattern.permute.xlu0 0
    %6609 = vperm.xlu0 %6608, %v6555
    %v6610 = vpop.permute.xlu0 %6609
    %6611 = vset.pattern.permute.xlu0 0
    %6612 = vperm.xlu0 %6611, %v6556
    %v6613 = vpop.permute.xlu0 %6612
    %6614 = vset.pattern.permute.xlu0 0
    %6615 = vperm.xlu0 %6614, %v6557
    %v6616 = vpop.permute.xlu0 %6615
    %6617 = vset.pattern.permute.xlu0 0
    %6618 = vperm.xlu0 %6617, %v6558
    %v6619 = vpop.permute.xlu0 %6618
    %6620 = vset.pattern.permute.xlu0 0
    %6621 = vperm.xlu0 %6620, %v6559
    %v6622 = vpop.permute.xlu0 %6621
    %6623 = vset.pattern.permute.xlu0 0
    %6624 = vperm.xlu0 %6623, %v6560
    %v6625 = vpop.permute.xlu0 %6624
    %6626 = vset.pattern.permute.xlu0 0
    %6627 = vperm.xlu0 %6626, %v6561
    %v6628 = vpop.permute.xlu0 %6627
    %6629 = vset.pattern.permute.xlu0 0
    %6630 = vperm.xlu0 %6629, %v6562
    %v6631 = vpop.permute.xlu0 %6630
    %v6632 = vlaneseq
    %v6633 = vshrl.u32 %v6632, 7
    %v6634 = vsub.s32 %v493, %v6633
    %v6635 = vrot.slane %v6586, %v6634
    %v6636 = vlaneseq
    %v6637 = vshrl.u32 %v6636, 7
    %v6638 = vsub.s32 %v498, %v6637
    %v6639 = vrot.slane %v6589, %v6638
    %v6640 = vsel %vm503, %v6639, %v6635
    %v6641 = vlaneseq
    %v6642 = vshrl.u32 %v6641, 7
    %v6643 = vsub.s32 %v505, %v6642
    %v6644 = vrot.slane %v6592, %v6643
    %v6645 = vsel %vm510, %v6644, %v6640
    %v6646 = vlaneseq
    %v6647 = vshrl.u32 %v6646, 7
    %v6648 = vsub.s32 %v512, %v6647
    %v6649 = vrot.slane %v6595, %v6648
    %v6650 = vsel %vm517, %v6649, %v6645
    %v6651 = vlaneseq
    %v6652 = vshrl.u32 %v6651, 7
    %v6653 = vsub.s32 %v493, %v6652
    %v6654 = vrot.slane %v6598, %v6653
    %v6655 = vlaneseq
    %v6656 = vshrl.u32 %v6655, 7
    %v6657 = vsub.s32 %v498, %v6656
    %v6658 = vrot.slane %v6601, %v6657
    %v6659 = vsel %vm503, %v6658, %v6654
    %v6660 = vlaneseq
    %v6661 = vshrl.u32 %v6660, 7
    %v6662 = vsub.s32 %v505, %v6661
    %v6663 = vrot.slane %v6604, %v6662
    %v6664 = vsel %vm510, %v6663, %v6659
    %v6665 = vlaneseq
    %v6666 = vshrl.u32 %v6665, 7
    %v6667 = vsub.s32 %v512, %v6666
    %v6668 = vrot.slane %v6607, %v6667
    %v6669 = vsel %vm517, %v6668, %v6664
    %v6670 = vlaneseq
    %v6671 = vshrl.u32 %v6670, 7
    %v6672 = vsub.s32 %v493, %v6671
    %v6673 = vrot.slane %v6610, %v6672
    %v6674 = vlaneseq
    %v6675 = vshrl.u32 %v6674, 7
    %v6676 = vsub.s32 %v498, %v6675
    %v6677 = vrot.slane %v6613, %v6676
    %v6678 = vsel %vm503, %v6677, %v6673
    %v6679 = vlaneseq
    %v6680 = vshrl.u32 %v6679, 7
    %v6681 = vsub.s32 %v505, %v6680
    %v6682 = vrot.slane %v6616, %v6681
    %v6683 = vsel %vm510, %v6682, %v6678
    %v6684 = vlaneseq
    %v6685 = vshrl.u32 %v6684, 7
    %v6686 = vsub.s32 %v512, %v6685
    %v6687 = vrot.slane %v6619, %v6686
    %v6688 = vsel %vm517, %v6687, %v6683
    %v6689 = vlaneseq
    %v6690 = vshrl.u32 %v6689, 7
    %v6691 = vsub.s32 %v493, %v6690
    %v6692 = vrot.slane %v6622, %v6691
    %v6693 = vlaneseq
    %v6694 = vshrl.u32 %v6693, 7
    %v6695 = vsub.s32 %v498, %v6694
    %v6696 = vrot.slane %v6625, %v6695
    %v6697 = vsel %vm503, %v6696, %v6692
    %v6698 = vlaneseq
    %v6699 = vshrl.u32 %v6698, 7
    %v6700 = vsub.s32 %v505, %v6699
    %v6701 = vrot.slane %v6628, %v6700
    %v6702 = vsel %vm510, %v6701, %v6697
    %v6703 = vlaneseq
    %v6704 = vshrl.u32 %v6703, 7
    %v6705 = vsub.s32 %v512, %v6704
    %v6706 = vrot.slane %v6631, %v6705
    %v6707 = vsel %vm517, %v6706, %v6702
    %v6708 = vsel %vm538, %v6669, %v6650
    %v6709 = vsel %vm803, %v6688, %v6708
    %v6710 = vsel %vm541, %v6707, %v6709
    %v6712 = vmul.f32 %v6566, %v6710
    %v6713 = vmul.f32 %v6712, 1.442695
    %v6714 = vpow.pop %v6713
    %v6715 = vsel %vm810, %v6714, 0.0
    %6716 = vadd.xlane.f32.xlu0 %v6715
    %v6717 = vpop.xlane.xlu0 %6716
    %v6718 = vrcp.pop %v6717
    %v6719 = vmul.f32 %v6714, %v6718
    %6721 = vset.pattern.permute.xlu0 17
    %6722 = vperm.xlu0 %6721, %v6239
    %v6723 = vpop.permute.xlu0 %6722
    %v6725 = vmul.f32 %v6723, %v6719
    %v6726 = vsub.f32 1.0, %v6239
    %6728 = vset.pattern.permute.xlu0 17
    %6729 = vperm.xlu0 %6728, %v6726
    %v6730 = vpop.permute.xlu0 %6729
    %v6732 = vmul.f32 %v6730, %v5663
    %v6733 = vadd.f32 %v6725, %v6732
    %v6735 = vsel %vm222, %v6733, 0
    %6737 = vmatprep.subr.mxu0 0.0
    %6738 = vmatpush1.msra.mxu0 %v94
    %6739 = vmatprep.subr.mxu0 0.0
    %6740 = vmatpush1.msra.mxu0 %v95
    %6741 = vmatprep.subr.mxu0 0.0
    %6742 = vmatpush1.msra.mxu0 %v96
    %6743 = vmatprep.subr.mxu0 0.0
    %6744 = vmatpush1.msra.mxu0 %v97
    %6745 = vmatprep.subr.mxu0 0.0
    %6746 = vmatpush1.msra.mxu0 0.0
    %6747 = vmatprep.subr.mxu0 0.0
    %6748 = vmatpush1.msra.mxu0 0.0
    %6749 = vmatprep.subr.mxu0 0.0
    %6750 = vmatpush1.msra.mxu0 0.0
    %6751 = vmatprep.subr.mxu0 0.0
    %6752 = vmatpush1.msra.mxu0 0.0
    %6753 = vmatprep.subr.mxu0 0.0
    %6754 = vmatpush1.msra.mxu0 0.0
    %6755 = vmatprep.subr.mxu0 0.0
    %6756 = vmatpush1.msra.mxu0 0.0
    %6757 = vmatprep.subr.mxu0 0.0
    %6758 = vmatpush1.msra.mxu0 0.0
    %6759 = vmatprep.subr.mxu0 0.0
    %6760 = vmatpush1.msra.mxu0 0.0
    %6761 = vmatprep.subr.mxu0 0.0
    %6762 = vmatpush1.msra.mxu0 0.0
    %6763 = vmatprep.subr.mxu0 0.0
    %6764 = vmatpush1.msra.mxu0 0.0
    %6765 = vmatprep.subr.mxu0 0.0
    %6766 = vmatpush1.msra.mxu0 0.0
    %6767 = vmatprep.subr.mxu0 0.0
    %6768 = vmatpush1.msra.mxu0 0.0
    %6769 = vmatprep.subr.mxu0 0.0
    %6770 = vmatpush1.msra.mxu0 0.0
    %6771 = vmatprep.subr.mxu0 0.0
    %6772 = vmatpush1.msra.mxu0 0.0
    %6773 = vmatprep.subr.mxu0 0.0
    %6774 = vmatpush1.msra.mxu0 0.0
    %6775 = vmatprep.subr.mxu0 0.0
    %6776 = vmatpush1.msra.mxu0 0.0
    %6777 = vmatprep.subr.mxu0 0.0
    %6778 = vmatpush1.msra.mxu0 0.0
    %6779 = vmatprep.subr.mxu0 0.0
    %6780 = vmatpush1.msra.mxu0 0.0
    %6781 = vmatprep.subr.mxu0 0.0
    %6782 = vmatpush1.msra.mxu0 0.0
    %6783 = vmatprep.subr.mxu0 0.0
    %6784 = vmatpush1.msra.mxu0 0.0
    %6785 = vmatprep.subr.mxu0 0.0
    %6786 = vmatpush1.msra.mxu0 0.0
    %6787 = vmatprep.subr.mxu0 0.0
    %6788 = vmatpush1.msra.mxu0 0.0
    %6789 = vmatprep.subr.mxu0 0.0
    %6790 = vmatpush1.msra.mxu0 0.0
    %6791 = vmatprep.subr.mxu0 0.0
    %6792 = vmatpush1.msra.mxu0 0.0
    %6793 = vmatprep.subr.mxu0 0.0
    %6794 = vmatpush1.msra.mxu0 0.0
    %6795 = vmatprep.subr.mxu0 0.0
    %6796 = vmatpush1.msra.mxu0 0.0
    %6797 = vmatprep.subr.mxu0 0.0
    %6798 = vmatpush1.msra.mxu0 0.0
    %6799 = vmatprep.subr.mxu0 0.0
    %6800 = vmatpush1.msra.mxu0 0.0
    %6801 = vmatprep.mubr.f32.mxu0 0.0
    %6802 = vmatmul.mubr.f32.gmra.mrb[0].mxu0 %v6735
    %v6803 = vpop.f32.mrb[0].mxu0
    %v6804 = vadd.f32 0.0, %v6803
    %v6805 = vpop.f32.mrb[0].mxu0
    %6806 = vdwg.mxu0
    %6808 = vset.pattern.permute.xlu0 18
    %6809 = vperm.xlu0 %6808, %v6254
    %v6810 = vpop.permute.xlu0 %6809
    %v6812 = vmul.f32 %v6810, %v6733
    %6813 = vset.pattern.permute.xlu0 19
    %6814 = vperm.xlu0 %6813, %v6254
    %v6815 = vpop.permute.xlu0 %6814
    %v6817 = vmul.f32 %v6815, %v6804
    %v6818 = vadd.f32 %v6812, %v6817
    %6819 = vset.pattern.permute.xlu0 20
    %6820 = vperm.xlu0 %6819, %v6254
    %v6821 = vpop.permute.xlu0 %6820
    %v6823 = vmul.f32 %v6821, %v6804
    %6825 = vrot.lane.b32.xlu0 %v6823, 96
    %v6826 = vpop.permute.xlu0 %6825
    %v6828 = vadd.f32 %v6818, %v6826
    %v6829 = vmax.f32 %v6828, 1e-30
    %v6830 = vlog2.pop %v6829
    %v6831 = vmul.f32 %v6830, 0.6931472
    %6832 = vset.pattern.permute.xlu0 21
    %6833 = vperm.xlu0 %6832, %v6235
    %v6834 = vpop.permute.xlu0 %6833
    %v6836 = vmul.f32 %v6834, %v6831
    %v6837 = vmul.f32 %v6836, 1.442695
    %v6838 = vpow.pop %v6837
    %v6839 = vsel %vm810, %v6838, 0.0
    %6840 = vadd.xlane.f32.xlu0 %v6839
    %v6841 = vpop.xlane.xlu0 %6840
    %v6842 = vrcp.pop %v6841
    %v6843 = vmul.f32 %v6838, %v6842
    %v6844 = vlaneseq
    %v6845 = vshrl.u32 %v6844, 7
    %v6846 = vsub.s32 0, %v6845
    %v6847 = vrot.slane %v6843, %v6846
    %6849 = vbcast.lane.b32.xlu0 %v6847, 256
    %v6850 = vpop.permute.xlu0 %6849
    %s6852 = sor.u32 256, 8
    %6853 = vbcast.lane.b32.xlu0 %v6847, %s6852
    %v6854 = vpop.permute.xlu0 %6853
    %s6856 = sor.u32 256, 16
    %6857 = vbcast.lane.b32.xlu0 %v6847, %s6856
    %v6858 = vpop.permute.xlu0 %6857
    %s6860 = sor.u32 256, 24
    %6861 = vbcast.lane.b32.xlu0 %v6847, %s6860
    %v6862 = vpop.permute.xlu0 %6861
    %v6863 = vlaneseq
    %v6864 = vshrl.u32 %v6863, 7
    %v6865 = vsub.s32 1, %v6864
    %v6866 = vrot.slane %v6843, %v6865
    %6868 = vbcast.lane.b32.xlu0 %v6866, 256
    %v6869 = vpop.permute.xlu0 %6868
    %s6871 = sor.u32 256, 8
    %6872 = vbcast.lane.b32.xlu0 %v6866, %s6871
    %v6873 = vpop.permute.xlu0 %6872
    %s6875 = sor.u32 256, 16
    %6876 = vbcast.lane.b32.xlu0 %v6866, %s6875
    %v6877 = vpop.permute.xlu0 %6876
    %s6879 = sor.u32 256, 24
    %6880 = vbcast.lane.b32.xlu0 %v6866, %s6879
    %v6881 = vpop.permute.xlu0 %6880
    %v6882 = vmul.f32 %v6850, %v5936
    %v6883 = vmul.f32 %v6854, %v5937
    %v6884 = vmul.f32 %v6858, %v5938
    %v6885 = vmul.f32 %v6862, %v5939
    %v6886 = vmul.f32 %v6869, %v5940
    %v6887 = vmul.f32 %v6873, %v5941
    %v6888 = vmul.f32 %v6877, %v5942
    %v6889 = vmul.f32 %v6881, %v5943
    %v6890 = vsel %vm398, %v6882, 0.0
    %v6891 = vsel %vm398, %v6883, 0.0
    %v6892 = vadd.f32 %v6890, %v6891
    %v6893 = vsel %vm398, %v6884, 0.0
    %v6894 = vadd.f32 %v6892, %v6893
    %v6895 = vsel %vm398, %v6885, 0.0
    %v6896 = vadd.f32 %v6894, %v6895
    %v6897 = vrot.slane %v6896, 4
    %v6898 = vadd.f32 %v6896, %v6897
    %v6899 = vrot.slane %v6898, 2
    %v6900 = vadd.f32 %v6898, %v6899
    %v6901 = vrot.slane %v6900, 1
    %v6902 = vadd.f32 %v6900, %v6901
    %v6903 = vsel %vm398, %v6886, 0.0
    %v6904 = vsel %vm398, %v6887, 0.0
    %v6905 = vadd.f32 %v6903, %v6904
    %v6906 = vsel %vm398, %v6888, 0.0
    %v6907 = vadd.f32 %v6905, %v6906
    %v6908 = vsel %vm398, %v6889, 0.0
    %v6909 = vadd.f32 %v6907, %v6908
    %v6910 = vrot.slane %v6909, 4
    %v6911 = vadd.f32 %v6909, %v6910
    %v6912 = vrot.slane %v6911, 2
    %v6913 = vadd.f32 %v6911, %v6912
    %v6914 = vrot.slane %v6913, 1
    %v6915 = vadd.f32 %v6913, %v6914
    %v6916 = vlaneseq
    %v6917 = vshrl.u32 %v6916, 7
    %v6918 = vsub.s32 2, %v6917
    %v6919 = vrot.slane %v6843, %v6918
    %6921 = vbcast.lane.b32.xlu0 %v6919, 256
    %v6922 = vpop.permute.xlu0 %6921
    %s6924 = sor.u32 256, 8
    %6925 = vbcast.lane.b32.xlu0 %v6919, %s6924
    %v6926 = vpop.permute.xlu0 %6925
    %s6928 = sor.u32 256, 16
    %6929 = vbcast.lane.b32.xlu0 %v6919, %s6928
    %v6930 = vpop.permute.xlu0 %6929
    %s6932 = sor.u32 256, 24
    %6933 = vbcast.lane.b32.xlu0 %v6919, %s6932
    %v6934 = vpop.permute.xlu0 %6933
    %v6935 = vlaneseq
    %v6936 = vshrl.u32 %v6935, 7
    %v6937 = vsub.s32 3, %v6936
    %v6938 = vrot.slane %v6843, %v6937
    %6940 = vbcast.lane.b32.xlu0 %v6938, 256
    %v6941 = vpop.permute.xlu0 %6940
    %s6943 = sor.u32 256, 8
    %6944 = vbcast.lane.b32.xlu0 %v6938, %s6943
    %v6945 = vpop.permute.xlu0 %6944
    %s6947 = sor.u32 256, 16
    %6948 = vbcast.lane.b32.xlu0 %v6938, %s6947
    %v6949 = vpop.permute.xlu0 %6948
    %s6951 = sor.u32 256, 24
    %6952 = vbcast.lane.b32.xlu0 %v6938, %s6951
    %v6953 = vpop.permute.xlu0 %6952
    %v6956 = vunpack.c.l.s4 1966171168
    %v6957 = vunpack.c.0.s8 %v6956
    %v6958 = vlaneseq
    %v6959 = vshrl.u32 %v6958, 7
    %v6960 = vsub.s32 %v6957, %v6959
    %v6961 = vrot.slane %v6224, %v6960
    %v6962 = vcombine.high %v6961, %v6961
    %v6964 = vunpack.c.l.s4 1966171168
    %v6965 = vunpack.c.0.s8 %v6964
    %v6966 = vlaneseq
    %v6967 = vshrl.u32 %v6966, 7
    %v6968 = vsub.s32 %v6965, %v6967
    %v6969 = vrot.slane %v6961, %v6968
    %v6971 = vunpack.c.l.s4 1966171168
    %v6972 = vunpack.c.0.s8 %v6971
    %v6973 = vlaneseq
    %v6974 = vshrl.u32 %v6973, 7
    %v6975 = vsub.s32 %v6972, %v6974
    %v6976 = vrot.slane %v6962, %v6975
    %v6977 = vlaneseq
    %v6978 = vshrl.u32 %v6977, 7
    %v6979 = vsub.s32 0, %v6978
    %v6980 = vrot.slane %v6969, %v6979
    %v6981 = vlaneseq
    %v6982 = vshrl.u32 %v6981, 7
    %v6983 = vsub.s32 0, %v6982
    %v6984 = vrot.slane %v6976, %v6983
    %v6987 = vmul.f32 %v6922, %v6980
    %v6988 = vmul.f32 %v6926, %v6980
    %v6989 = vmul.f32 %v6930, %v6980
    %v6990 = vmul.f32 %v6934, %v6980
    %v6991 = vmul.f32 %v6941, %v6984
    %v6992 = vmul.f32 %v6945, %v6984
    %v6993 = vmul.f32 %v6949, %v6984
    %v6994 = vmul.f32 %v6953, %v6984
    %v6995 = vsub.f32 1.0, %v6987
    %v6996 = vsub.f32 1.0, %v6988
    %v6997 = vsub.f32 1.0, %v6989
    %v6998 = vsub.f32 1.0, %v6990
    %v6999 = vsub.f32 1.0, %v6991
    %v7000 = vsub.f32 1.0, %v6992
    %v7001 = vsub.f32 1.0, %v6993
    %v7002 = vsub.f32 1.0, %v6994
    %7011 = vrot.lane.b32.xlu0 %v6995, 84
    %v7012 = vpop.permute.xlu0 %7011
    %7013 = vrot.lane.b32.xlu0 %v6996, 84
    %v7014 = vpop.permute.xlu0 %7013
    %7015 = vrot.lane.b32.xlu0 %v6997, 84
    %v7016 = vpop.permute.xlu0 %7015
    %7017 = vrot.lane.b32.xlu0 %v6998, 84
    %v7018 = vpop.permute.xlu0 %7017
    %7019 = vrot.lane.b32.xlu0 %v6999, 84
    %v7020 = vpop.permute.xlu0 %7019
    %7021 = vrot.lane.b32.xlu0 %v7000, 84
    %v7022 = vpop.permute.xlu0 %7021
    %7023 = vrot.lane.b32.xlu0 %v7001, 84
    %v7024 = vpop.permute.xlu0 %7023
    %7025 = vrot.lane.b32.xlu0 %v7002, 84
    %v7026 = vpop.permute.xlu0 %7025
    %v7035 = vmul.f32 %v5936, %v7012
    %v7036 = vmul.f32 %v5937, %v7014
    %v7037 = vmul.f32 %v5938, %v7016
    %v7038 = vmul.f32 %v5939, %v7018
    %v7039 = vmul.f32 %v5940, %v7020
    %v7040 = vmul.f32 %v5941, %v7022
    %v7041 = vmul.f32 %v5942, %v7024
    %v7042 = vmul.f32 %v5943, %v7026
    %v7045 = vunpack.c.l.s4 1966171168
    %v7046 = vunpack.c.0.s8 %v7045
    %v7047 = vlaneseq
    %v7048 = vshrl.u32 %v7047, 7
    %v7049 = vsub.s32 %v7046, %v7048
    %v7050 = vrot.slane %v6225, %v7049
    %v7051 = vcombine.high %v7050, %v7050
    %v7053 = vunpack.c.l.s4 1966171168
    %v7054 = vunpack.c.0.s8 %v7053
    %v7055 = vlaneseq
    %v7056 = vshrl.u32 %v7055, 7
    %v7057 = vsub.s32 %v7054, %v7056
    %v7058 = vrot.slane %v7050, %v7057
    %v7060 = vunpack.c.l.s4 1966171168
    %v7061 = vunpack.c.0.s8 %v7060
    %v7062 = vlaneseq
    %v7063 = vshrl.u32 %v7062, 7
    %v7064 = vsub.s32 %v7061, %v7063
    %v7065 = vrot.slane %v7051, %v7064
    %v7066 = vlaneseq
    %v7067 = vshrl.u32 %v7066, 7
    %v7068 = vsub.s32 0, %v7067
    %v7069 = vrot.slane %v7058, %v7068
    %v7070 = vlaneseq
    %v7071 = vshrl.u32 %v7070, 7
    %v7072 = vsub.s32 0, %v7071
    %v7073 = vrot.slane %v7065, %v7072
    %v7076 = vmul.f32 %v6922, %v7069
    %v7077 = vmul.f32 %v6926, %v7069
    %v7078 = vmul.f32 %v6930, %v7069
    %v7079 = vmul.f32 %v6934, %v7069
    %v7080 = vmul.f32 %v6941, %v7073
    %v7081 = vmul.f32 %v6945, %v7073
    %v7082 = vmul.f32 %v6949, %v7073
    %v7083 = vmul.f32 %v6953, %v7073
    %7092 = vrot.lane.b32.xlu0 %v7076, 68
    %v7093 = vpop.permute.xlu0 %7092
    %7094 = vrot.lane.b32.xlu0 %v7077, 68
    %v7095 = vpop.permute.xlu0 %7094
    %7096 = vrot.lane.b32.xlu0 %v7078, 68
    %v7097 = vpop.permute.xlu0 %7096
    %7098 = vrot.lane.b32.xlu0 %v7079, 68
    %v7099 = vpop.permute.xlu0 %7098
    %7100 = vrot.lane.b32.xlu0 %v7080, 68
    %v7101 = vpop.permute.xlu0 %7100
    %7102 = vrot.lane.b32.xlu0 %v7081, 68
    %v7103 = vpop.permute.xlu0 %7102
    %7104 = vrot.lane.b32.xlu0 %v7082, 68
    %v7105 = vpop.permute.xlu0 %7104
    %7106 = vrot.lane.b32.xlu0 %v7083, 68
    %v7107 = vpop.permute.xlu0 %7106
    %v7116 = vadd.f32 %v7035, %v7093
    %v7117 = vadd.f32 %v7036, %v7095
    %v7118 = vadd.f32 %v7037, %v7097
    %v7119 = vadd.f32 %v7038, %v7099
    %v7120 = vadd.f32 %v7039, %v7101
    %v7121 = vadd.f32 %v7040, %v7103
    %v7122 = vadd.f32 %v7041, %v7105
    %v7123 = vadd.f32 %v7042, %v7107
    %v7126 = vsel %vm538, %v6915, %v6902
    %v7127 = vsel %vm398, %v7126, 0
    %7129 = vmatprep.subr.mxu0 0.0
    %7130 = vmatpush1.msra.mxu0 %v109
    %7131 = vmatprep.subr.mxu0 0.0
    %7132 = vmatpush1.msra.mxu0 %v110
    %7133 = vmatprep.subr.mxu0 0.0
    %7134 = vmatpush1.msra.mxu0 0.0
    %7135 = vmatprep.subr.mxu0 0.0
    %7136 = vmatpush1.msra.mxu0 0.0
    %7137 = vmatprep.subr.mxu0 0.0
    %7138 = vmatpush1.msra.mxu0 0.0
    %7139 = vmatprep.subr.mxu0 0.0
    %7140 = vmatpush1.msra.mxu0 0.0
    %7141 = vmatprep.subr.mxu0 0.0
    %7142 = vmatpush1.msra.mxu0 0.0
    %7143 = vmatprep.subr.mxu0 0.0
    %7144 = vmatpush1.msra.mxu0 0.0
    %7145 = vmatprep.subr.mxu0 0.0
    %7146 = vmatpush1.msra.mxu0 0.0
    %7147 = vmatprep.subr.mxu0 0.0
    %7148 = vmatpush1.msra.mxu0 0.0
    %7149 = vmatprep.subr.mxu0 0.0
    %7150 = vmatpush1.msra.mxu0 0.0
    %7151 = vmatprep.subr.mxu0 0.0
    %7152 = vmatpush1.msra.mxu0 0.0
    %7153 = vmatprep.subr.mxu0 0.0
    %7154 = vmatpush1.msra.mxu0 0.0
    %7155 = vmatprep.subr.mxu0 0.0
    %7156 = vmatpush1.msra.mxu0 0.0
    %7157 = vmatprep.subr.mxu0 0.0
    %7158 = vmatpush1.msra.mxu0 0.0
    %7159 = vmatprep.subr.mxu0 0.0
    %7160 = vmatpush1.msra.mxu0 0.0
    %7161 = vmatprep.subr.mxu0 0.0
    %7162 = vmatpush1.msra.mxu0 0.0
    %7163 = vmatprep.subr.mxu0 0.0
    %7164 = vmatpush1.msra.mxu0 0.0
    %7165 = vmatprep.subr.mxu0 0.0
    %7166 = vmatpush1.msra.mxu0 0.0
    %7167 = vmatprep.subr.mxu0 0.0
    %7168 = vmatpush1.msra.mxu0 0.0
    %7169 = vmatprep.subr.mxu0 0.0
    %7170 = vmatpush1.msra.mxu0 0.0
    %7171 = vmatprep.subr.mxu0 0.0
    %7172 = vmatpush1.msra.mxu0 0.0
    %7173 = vmatprep.subr.mxu0 0.0
    %7174 = vmatpush1.msra.mxu0 0.0
    %7175 = vmatprep.subr.mxu0 0.0
    %7176 = vmatpush1.msra.mxu0 0.0
    %7177 = vmatprep.subr.mxu0 0.0
    %7178 = vmatpush1.msra.mxu0 0.0
    %7179 = vmatprep.subr.mxu0 0.0
    %7180 = vmatpush1.msra.mxu0 0.0
    %7181 = vmatprep.subr.mxu0 0.0
    %7182 = vmatpush1.msra.mxu0 0.0
    %7183 = vmatprep.subr.mxu0 0.0
    %7184 = vmatpush1.msra.mxu0 0.0
    %7185 = vmatprep.subr.mxu0 0.0
    %7186 = vmatpush1.msra.mxu0 0.0
    %7187 = vmatprep.subr.mxu0 0.0
    %7188 = vmatpush1.msra.mxu0 0.0
    %7189 = vmatprep.subr.mxu0 0.0
    %7190 = vmatpush1.msra.mxu0 0.0
    %7191 = vmatprep.subr.mxu0 0.0
    %7192 = vmatpush1.msra.mxu0 0.0
    %7193 = vmatprep.mubr.f32.mxu0 0.0
    %7194 = vmatmul.mubr.f32.gmra.mrb[0].mxu0 %v7127
    %v7195 = vpop.f32.mrb[0].mxu0
    %v7196 = vadd.f32 0.0, %v7195
    %v7197 = vpop.f32.mrb[0].mxu0
    %7198 = vdwg.mxu0
    %7200 = vrot.lane.b32.xlu0 %v7196, 76
    %v7201 = vpop.permute.xlu0 %7200
    %v7203 = vadd.f32 %v6212, %v7201
    %v7204 = vmax.f32 %v7203, -20.0
    %v7205 = vmin.f32 %v7204, 20.0
    %7207 = vrot.lane.b32.xlu0 %v7205, 52
    %v7208 = vpop.permute.xlu0 %7207
    %s7210 = scalar_lea.vmem [#allocation2], 10
    %7211 = vst.msk [vmem:[%s7210] sm:$0x3] %vm1310, %v7208
    %7213 = vrot.lane.b32.xlu0 %v6137, 64
    %v7214 = vpop.permute.xlu0 %7213
    %7216 = vrot.lane.b32.xlu0 %v7126, 32
    %v7217 = vpop.permute.xlu0 %7216
    %v7219 = vsel %vm222, %v7214, %v7217
    %s7220 = scalar_lea.vmem %s0, 12
    %v7221 = vld [vmem:[%s7220] sm:$0x3]
    %v7223 = vsel %vm112, %v7219, 0
    %7225 = vmatprep.subr.mxu0 0.0
    %7226 = vmatpush1.msra.mxu0 %v98
    %7227 = vmatprep.subr.mxu0 0.0
    %7228 = vmatpush1.msra.mxu0 %v99
    %7229 = vmatprep.subr.mxu0 0.0
    %7230 = vmatpush1.msra.mxu0 %v100
    %7231 = vmatprep.subr.mxu0 0.0
    %7232 = vmatpush1.msra.mxu0 %v101
    %7233 = vmatprep.subr.mxu0 0.0
    %7234 = vmatpush1.msra.mxu0 %v102
    %7235 = vmatprep.subr.mxu0 0.0
    %7236 = vmatpush1.msra.mxu0 %v103
    %7237 = vmatprep.subr.mxu0 0.0
    %7238 = vmatpush1.msra.mxu0 0.0
    %7239 = vmatprep.subr.mxu0 0.0
    %7240 = vmatpush1.msra.mxu0 0.0
    %7241 = vmatprep.subr.mxu0 0.0
    %7242 = vmatpush1.msra.mxu0 0.0
    %7243 = vmatprep.subr.mxu0 0.0
    %7244 = vmatpush1.msra.mxu0 0.0
    %7245 = vmatprep.subr.mxu0 0.0
    %7246 = vmatpush1.msra.mxu0 0.0
    %7247 = vmatprep.subr.mxu0 0.0
    %7248 = vmatpush1.msra.mxu0 0.0
    %7249 = vmatprep.subr.mxu0 0.0
    %7250 = vmatpush1.msra.mxu0 0.0
    %7251 = vmatprep.subr.mxu0 0.0
    %7252 = vmatpush1.msra.mxu0 0.0
    %7253 = vmatprep.subr.mxu0 0.0
    %7254 = vmatpush1.msra.mxu0 0.0
    %7255 = vmatprep.subr.mxu0 0.0
    %7256 = vmatpush1.msra.mxu0 0.0
    %7257 = vmatprep.subr.mxu0 0.0
    %7258 = vmatpush1.msra.mxu0 0.0
    %7259 = vmatprep.subr.mxu0 0.0
    %7260 = vmatpush1.msra.mxu0 0.0
    %7261 = vmatprep.subr.mxu0 0.0
    %7262 = vmatpush1.msra.mxu0 0.0
    %7263 = vmatprep.subr.mxu0 0.0
    %7264 = vmatpush1.msra.mxu0 0.0
    %7265 = vmatprep.subr.mxu0 0.0
    %7266 = vmatpush1.msra.mxu0 0.0
    %7267 = vmatprep.subr.mxu0 0.0
    %7268 = vmatpush1.msra.mxu0 0.0
    %7269 = vmatprep.subr.mxu0 0.0
    %7270 = vmatpush1.msra.mxu0 0.0
    %7271 = vmatprep.subr.mxu0 0.0
    %7272 = vmatpush1.msra.mxu0 0.0
    %7273 = vmatprep.subr.mxu0 0.0
    %7274 = vmatpush1.msra.mxu0 0.0
    %7275 = vmatprep.subr.mxu0 0.0
    %7276 = vmatpush1.msra.mxu0 0.0
    %7277 = vmatprep.subr.mxu0 0.0
    %7278 = vmatpush1.msra.mxu0 0.0
    %7279 = vmatprep.subr.mxu0 0.0
    %7280 = vmatpush1.msra.mxu0 0.0
    %7281 = vmatprep.subr.mxu0 0.0
    %7282 = vmatpush1.msra.mxu0 0.0
    %7283 = vmatprep.subr.mxu0 0.0
    %7284 = vmatpush1.msra.mxu0 0.0
    %7285 = vmatprep.subr.mxu0 0.0
    %7286 = vmatpush1.msra.mxu0 0.0
    %7287 = vmatprep.subr.mxu0 0.0
    %7288 = vmatpush1.msra.mxu0 0.0
    %7289 = vmatprep.mubr.f32.mxu0 0.0
    %7290 = vmatmul.mubr.f32.gmra.mrb[0].mxu0 %v7223
    %v7291 = vpop.f32.mrb[0].mxu0
    %v7292 = vadd.f32 0.0, %v7291
    %v7293 = vpop.f32.mrb[0].mxu0
    %7294 = vdwg.mxu0
    %v7295 = vadd.f32 %v7221, %v7292
    %v7296 = vmul.f32 %v7295, 0.5
    %v7297 = vtanh.pop %v7296
    %v7298 = vadd.f32 %v7297, 1.0
    %v7299 = vmul.f32 %v7298, 0.5
    %v7300 = vtanh.pop %v7295
    %v7301 = vmul.f32 %v7299, %v6131
    %7303 = vrot.lane.b32.xlu0 %v7300, 32
    %v7304 = vpop.permute.xlu0 %7303
    %v7306 = vmul.f32 %v7299, %v7304
    %7308 = vrot.lane.b32.xlu0 %v7306, 32
    %v7309 = vpop.permute.xlu0 %7308
    %v7311 = vadd.f32 %v7301, %v7309
    %v7312 = vtanh.pop %v7311
    %7314 = vrot.lane.b32.xlu0 %v7312, 32
    %v7315 = vpop.permute.xlu0 %7314
    %v7317 = vmul.f32 %v7299, %v7315
    %v7318 = vmax.f32 %v7317, -20.0
    %v7319 = vmin.f32 %v7318, 20.0
    %7321 = vrot.lane.b32.xlu0 %v7319, 64
    %v7322 = vpop.permute.xlu0 %7321
    %v7323 = vsel %vm222, %v7322, 0
    %7325 = vmatprep.subr.mxu0 0.0
    %7326 = vmatpush1.msra.mxu0 %v104
    %7327 = vmatprep.subr.mxu0 0.0
    %7328 = vmatpush1.msra.mxu0 %v105
    %7329 = vmatprep.subr.mxu0 0.0
    %7330 = vmatpush1.msra.mxu0 %v106
    %7331 = vmatprep.subr.mxu0 0.0
    %7332 = vmatpush1.msra.mxu0 %v107
    %7333 = vmatprep.subr.mxu0 0.0
    %7334 = vmatpush1.msra.mxu0 0.0
    %7335 = vmatprep.subr.mxu0 0.0
    %7336 = vmatpush1.msra.mxu0 0.0
    %7337 = vmatprep.subr.mxu0 0.0
    %7338 = vmatpush1.msra.mxu0 0.0
    %7339 = vmatprep.subr.mxu0 0.0
    %7340 = vmatpush1.msra.mxu0 0.0
    %7341 = vmatprep.subr.mxu0 0.0
    %7342 = vmatpush1.msra.mxu0 0.0
    %7343 = vmatprep.subr.mxu0 0.0
    %7344 = vmatpush1.msra.mxu0 0.0
    %7345 = vmatprep.subr.mxu0 0.0
    %7346 = vmatpush1.msra.mxu0 0.0
    %7347 = vmatprep.subr.mxu0 0.0
    %7348 = vmatpush1.msra.mxu0 0.0
    %7349 = vmatprep.subr.mxu0 0.0
    %7350 = vmatpush1.msra.mxu0 0.0
    %7351 = vmatprep.subr.mxu0 0.0
    %7352 = vmatpush1.msra.mxu0 0.0
    %7353 = vmatprep.subr.mxu0 0.0
    %7354 = vmatpush1.msra.mxu0 0.0
    %7355 = vmatprep.subr.mxu0 0.0
    %7356 = vmatpush1.msra.mxu0 0.0
    %7357 = vmatprep.subr.mxu0 0.0
    %7358 = vmatpush1.msra.mxu0 0.0
    %7359 = vmatprep.subr.mxu0 0.0
    %7360 = vmatpush1.msra.mxu0 0.0
    %7361 = vmatprep.subr.mxu0 0.0
    %7362 = vmatpush1.msra.mxu0 0.0
    %7363 = vmatprep.subr.mxu0 0.0
    %7364 = vmatpush1.msra.mxu0 0.0
    %7365 = vmatprep.subr.mxu0 0.0
    %7366 = vmatpush1.msra.mxu0 0.0
    %7367 = vmatprep.subr.mxu0 0.0
    %7368 = vmatpush1.msra.mxu0 0.0
    %7369 = vmatprep.subr.mxu0 0.0
    %7370 = vmatpush1.msra.mxu0 0.0
    %7371 = vmatprep.subr.mxu0 0.0
    %7372 = vmatpush1.msra.mxu0 0.0
    %7373 = vmatprep.subr.mxu0 0.0
    %7374 = vmatpush1.msra.mxu0 0.0
    %7375 = vmatprep.subr.mxu0 0.0
    %7376 = vmatpush1.msra.mxu0 0.0
    %7377 = vmatprep.subr.mxu0 0.0
    %7378 = vmatpush1.msra.mxu0 0.0
    %7379 = vmatprep.subr.mxu0 0.0
    %7380 = vmatpush1.msra.mxu0 0.0
    %7381 = vmatprep.subr.mxu0 0.0
    %7382 = vmatpush1.msra.mxu0 0.0
    %7383 = vmatprep.subr.mxu0 0.0
    %7384 = vmatpush1.msra.mxu0 0.0
    %7385 = vmatprep.subr.mxu0 0.0
    %7386 = vmatpush1.msra.mxu0 0.0
    %7387 = vmatprep.subr.mxu0 0.0
    %7388 = vmatpush1.msra.mxu0 0.0
    %7389 = vmatprep.mubr.f32.mxu0 0.0
    %7390 = vmatmul.mubr.f32.gmra.mrb[0].mxu0 %v7323
    %v7391 = vpop.f32.mrb[0].mxu0
    %v7392 = vadd.f32 %v217, %v7391
    %v7393 = vpop.f32.mrb[0].mxu0
    %7394 = vdwg.mxu0
    %v7396 = vrot.slane %v7392, 6
    %7397 = vrot.lane.b32.xlu0 %v7396, 106
    %v7398 = vpop.permute.xlu0 %7397
    %v7400 = vsel %vm84, %v7392, %v7398
    %v7401 = vmul.f32 %v7392, 0.5
    %v7402 = vtanh.pop %v7401
    %v7403 = vadd.f32 %v7402, 1.0
    %v7404 = vmul.f32 %v7403, 0.5
    %v7405 = vtanh.pop %v7392
    %v7406 = vtanh.pop %v7400
    %v7407 = vmax.f32 %v7400, 0.0
    %v7408 = vand.u32 2147483647, %v7400
    %v7409 = vsub.f32 0.0, %v7408
    %v7410 = vmul.f32 %v7409, 1.442695
    %v7411 = vpow.pop %v7410
    %v7412 = vadd.f32 %v7411, 1.0
    %v7413 = vlog2.pop %v7412
    %v7414 = vmul.f32 %v7413, 0.6931472
    %v7415 = vadd.f32 %v7407, %v7414
    %v7416 = vmul.f32 %v7400, 0.5
    %v7417 = vtanh.pop %v7416
    %v7418 = vadd.f32 %v7417, 1.0
    %v7419 = vmul.f32 %v7418, 0.5
    %v7420 = vsel %vm320, %v7400, -inf
    %7421 = vmax.xlane.f32.xlu0 %v7420
    %v7422 = vpop.xlane.xlu0 %7421
    %v7423 = vsub.f32 %v7400, %v7422
    %v7424 = vmul.f32 %v7423, 1.442695
    %v7425 = vpow.pop %v7424
    %7427 = vrot.lane.b32.xlu0 %v7425, 110
    %v7428 = vpop.permute.xlu0 %7427
    %v7430 = vsel %vm331, %v7428, 0.0
    %7431 = vadd.xlane.f32.xlu0 %v7430
    %v7432 = vpop.xlane.xlu0 %7431
    %v7433 = vrcp.pop %v7432
    %v7434 = vmul.f32 %v7425, %v7433
    %v7437 = vunpack.c.l.s4 1966171168
    %v7438 = vunpack.c.0.s8 %v7437
    %v7439 = vlaneseq
    %v7440 = vshrl.u32 %v7439, 7
    %v7441 = vsub.s32 %v7438, %v7440
    %v7442 = vrot.slane %v7406, %v7441
    %v7443 = vcombine.high %v7442, %v7442
    %v7445 = vunpack.c.l.s4 1966171168
    %v7446 = vunpack.c.0.s8 %v7445
    %v7447 = vlaneseq
    %v7448 = vshrl.u32 %v7447, 7
    %v7449 = vsub.s32 %v7446, %v7448
    %v7450 = vrot.slane %v7442, %v7449
    %v7452 = vunpack.c.l.s4 1966171168
    %v7453 = vunpack.c.0.s8 %v7452
    %v7454 = vlaneseq
    %v7455 = vshrl.u32 %v7454, 7
    %v7456 = vsub.s32 %v7453, %v7455
    %v7457 = vrot.slane %v7443, %v7456
    %v7458 = vcombine.high %v7450, %v7450
    %v7459 = vcombine.high %v7457, %v7457
    %v7460 = vlaneseq
    %v7461 = vshrl.u32 %v7460, 7
    %v7462 = vsub.s32 0, %v7461
    %v7463 = vrot.slane %v7450, %v7462
    %v7464 = vlaneseq
    %v7465 = vshrl.u32 %v7464, 7
    %v7466 = vsub.s32 0, %v7465
    %v7467 = vrot.slane %v7457, %v7466
    %v7468 = vlaneseq
    %v7469 = vshrl.u32 %v7468, 7
    %v7470 = vsub.s32 0, %v7469
    %v7471 = vrot.slane %v7458, %v7470
    %v7472 = vlaneseq
    %v7473 = vshrl.u32 %v7472, 7
    %v7474 = vsub.s32 0, %v7473
    %v7475 = vrot.slane %v7459, %v7474
    %v7480 = vmul.f32 %v7116, %v7463
    %v7481 = vmul.f32 %v7117, %v7463
    %v7482 = vmul.f32 %v7118, %v7463
    %v7483 = vmul.f32 %v7119, %v7463
    %v7484 = vmul.f32 %v7120, %v7467
    %v7485 = vmul.f32 %v7121, %v7467
    %v7486 = vmul.f32 %v7122, %v7467
    %v7487 = vmul.f32 %v7123, %v7467
    %v7488 = vmul.f32 %v7116, %v7471
    %v7489 = vmul.f32 %v7117, %v7471
    %v7490 = vmul.f32 %v7118, %v7471
    %v7491 = vmul.f32 %v7119, %v7471
    %v7492 = vmul.f32 %v7120, %v7475
    %v7493 = vmul.f32 %v7121, %v7475
    %v7494 = vmul.f32 %v7122, %v7475
    %v7495 = vmul.f32 %v7123, %v7475
    %v7496 = vsel %vm398, %v7480, 0.0
    %7497 = vadd.xlane.f32.xlu0 %v7496
    %v7498 = vpop.xlane.xlu0 %7497
    %v7499 = vsel %vm398, %v7481, 0.0
    %7500 = vadd.xlane.f32.xlu0 %v7499
    %v7501 = vpop.xlane.xlu0 %7500
    %v7502 = vsel %vm398, %v7482, 0.0
    %7503 = vadd.xlane.f32.xlu0 %v7502
    %v7504 = vpop.xlane.xlu0 %7503
    %v7505 = vsel %vm398, %v7483, 0.0
    %7506 = vadd.xlane.f32.xlu0 %v7505
    %v7507 = vpop.xlane.xlu0 %7506
    %v7508 = vsel %vm398, %v7484, 0.0
    %7509 = vadd.xlane.f32.xlu0 %v7508
    %v7510 = vpop.xlane.xlu0 %7509
    %v7511 = vsel %vm398, %v7485, 0.0
    %7512 = vadd.xlane.f32.xlu0 %v7511
    %v7513 = vpop.xlane.xlu0 %7512
    %v7514 = vsel %vm398, %v7486, 0.0
    %7515 = vadd.xlane.f32.xlu0 %v7514
    %v7516 = vpop.xlane.xlu0 %7515
    %v7517 = vsel %vm398, %v7487, 0.0
    %7518 = vadd.xlane.f32.xlu0 %v7517
    %v7519 = vpop.xlane.xlu0 %7518
    %v7520 = vsel %vm398, %v7488, 0.0
    %7521 = vadd.xlane.f32.xlu0 %v7520
    %v7522 = vpop.xlane.xlu0 %7521
    %v7523 = vsel %vm398, %v7489, 0.0
    %7524 = vadd.xlane.f32.xlu0 %v7523
    %v7525 = vpop.xlane.xlu0 %7524
    %v7526 = vsel %vm398, %v7490, 0.0
    %7527 = vadd.xlane.f32.xlu0 %v7526
    %v7528 = vpop.xlane.xlu0 %7527
    %v7529 = vsel %vm398, %v7491, 0.0
    %7530 = vadd.xlane.f32.xlu0 %v7529
    %v7531 = vpop.xlane.xlu0 %7530
    %v7532 = vsel %vm398, %v7492, 0.0
    %7533 = vadd.xlane.f32.xlu0 %v7532
    %v7534 = vpop.xlane.xlu0 %7533
    %v7535 = vsel %vm398, %v7493, 0.0
    %7536 = vadd.xlane.f32.xlu0 %v7535
    %v7537 = vpop.xlane.xlu0 %7536
    %v7538 = vsel %vm398, %v7494, 0.0
    %7539 = vadd.xlane.f32.xlu0 %v7538
    %v7540 = vpop.xlane.xlu0 %7539
    %v7541 = vsel %vm398, %v7495, 0.0
    %7542 = vadd.xlane.f32.xlu0 %v7541
    %v7543 = vpop.xlane.xlu0 %7542
    %v7544 = vmul.f32 %v7406, %v7406
    %v7545 = vsel %vm448, %v7544, 0.0
    %7546 = vadd.xlane.f32.xlu0 %v7545
    %v7547 = vpop.xlane.xlu0 %7546
    %v7548 = vmul.f32 %v7116, %v7116
    %v7549 = vmul.f32 %v7117, %v7117
    %v7550 = vmul.f32 %v7118, %v7118
    %v7551 = vmul.f32 %v7119, %v7119
    %v7552 = vmul.f32 %v7120, %v7120
    %v7553 = vmul.f32 %v7121, %v7121
    %v7554 = vmul.f32 %v7122, %v7122
    %v7555 = vmul.f32 %v7123, %v7123
    %v7556 = vsel %vm398, %v7548, 0.0
    %7557 = vadd.xlane.f32.xlu0 %v7556
    %v7558 = vpop.xlane.xlu0 %7557
    %v7559 = vsel %vm398, %v7549, 0.0
    %7560 = vadd.xlane.f32.xlu0 %v7559
    %v7561 = vpop.xlane.xlu0 %7560
    %v7562 = vsel %vm398, %v7550, 0.0
    %7563 = vadd.xlane.f32.xlu0 %v7562
    %v7564 = vpop.xlane.xlu0 %7563
    %v7565 = vsel %vm398, %v7551, 0.0
    %7566 = vadd.xlane.f32.xlu0 %v7565
    %v7567 = vpop.xlane.xlu0 %7566
    %v7568 = vsel %vm398, %v7552, 0.0
    %7569 = vadd.xlane.f32.xlu0 %v7568
    %v7570 = vpop.xlane.xlu0 %7569
    %v7571 = vsel %vm398, %v7553, 0.0
    %7572 = vadd.xlane.f32.xlu0 %v7571
    %v7573 = vpop.xlane.xlu0 %7572
    %v7574 = vsel %vm398, %v7554, 0.0
    %7575 = vadd.xlane.f32.xlu0 %v7574
    %v7576 = vpop.xlane.xlu0 %7575
    %v7577 = vsel %vm398, %v7555, 0.0
    %7578 = vadd.xlane.f32.xlu0 %v7577
    %v7579 = vpop.xlane.xlu0 %7578
    %v7588 = vlaneseq
    %v7589 = vshrl.u32 %v7588, 7
    %v7590 = vsub.s32 %v493, %v7589
    %v7591 = vrot.slane %v7558, %v7590
    %v7592 = vlaneseq
    %v7593 = vshrl.u32 %v7592, 7
    %v7594 = vsub.s32 %v498, %v7593
    %v7595 = vrot.slane %v7561, %v7594
    %v7596 = vsel %vm503, %v7595, %v7591
    %v7597 = vlaneseq
    %v7598 = vshrl.u32 %v7597, 7
    %v7599 = vsub.s32 %v505, %v7598
    %v7600 = vrot.slane %v7564, %v7599
    %v7601 = vsel %vm510, %v7600, %v7596
    %v7602 = vlaneseq
    %v7603 = vshrl.u32 %v7602, 7
    %v7604 = vsub.s32 %v512, %v7603
    %v7605 = vrot.slane %v7567, %v7604
    %v7606 = vsel %vm517, %v7605, %v7601
    %v7607 = vlaneseq
    %v7608 = vshrl.u32 %v7607, 7
    %v7609 = vsub.s32 %v493, %v7608
    %v7610 = vrot.slane %v7570, %v7609
    %v7611 = vlaneseq
    %v7612 = vshrl.u32 %v7611, 7
    %v7613 = vsub.s32 %v498, %v7612
    %v7614 = vrot.slane %v7573, %v7613
    %v7615 = vsel %vm503, %v7614, %v7610
    %v7616 = vlaneseq
    %v7617 = vshrl.u32 %v7616, 7
    %v7618 = vsub.s32 %v505, %v7617
    %v7619 = vrot.slane %v7576, %v7618
    %v7620 = vsel %vm510, %v7619, %v7615
    %v7621 = vlaneseq
    %v7622 = vshrl.u32 %v7621, 7
    %v7623 = vsub.s32 %v512, %v7622
    %v7624 = vrot.slane %v7579, %v7623
    %v7625 = vsel %vm517, %v7624, %v7620
    %v7626 = vsel %vm538, %v7625, %v7606
    %v7628 = vsel %vm541, %v7625, %v7606
    %v7630 = vsel %vm84, %v7626, %v7628
    %v7631 = vmul.f32 %v7547, %v7630
    %v7632 = vadd.f32 %v7631, 1e-16
    %v7633 = vrsqrt.pop %v7632
    %v7635 = vlaneseq
    %v7636 = vshrl.u32 %v7635, 7
    %v7637 = vsub.s32 0, %v7636
    %v7638 = vrot.slane %v7633, %v7637
    %7640 = vbcast.lane.b32.xlu0 %v7638, 256
    %v7641 = vpop.permute.xlu0 %7640
    %s7643 = sor.u32 256, 8
    %7644 = vbcast.lane.b32.xlu0 %v7638, %s7643
    %v7645 = vpop.permute.xlu0 %7644
    %s7647 = sor.u32 256, 16
    %7648 = vbcast.lane.b32.xlu0 %v7638, %s7647
    %v7649 = vpop.permute.xlu0 %7648
    %s7651 = sor.u32 256, 24
    %7652 = vbcast.lane.b32.xlu0 %v7638, %s7651
    %v7653 = vpop.permute.xlu0 %7652
    %v7654 = vlaneseq
    %v7655 = vshrl.u32 %v7654, 7
    %v7656 = vsub.s32 1, %v7655
    %v7657 = vrot.slane %v7633, %v7656
    %7659 = vbcast.lane.b32.xlu0 %v7657, 256
    %v7660 = vpop.permute.xlu0 %7659
    %s7662 = sor.u32 256, 8
    %7663 = vbcast.lane.b32.xlu0 %v7657, %s7662
    %v7664 = vpop.permute.xlu0 %7663
    %s7666 = sor.u32 256, 16
    %7667 = vbcast.lane.b32.xlu0 %v7657, %s7666
    %v7668 = vpop.permute.xlu0 %7667
    %s7670 = sor.u32 256, 24
    %7671 = vbcast.lane.b32.xlu0 %v7657, %s7670
    %v7672 = vpop.permute.xlu0 %7671
    %v7673 = vlaneseq
    %v7674 = vshrl.u32 %v7673, 7
    %v7675 = vsub.s32 2, %v7674
    %v7676 = vrot.slane %v7633, %v7675
    %7678 = vbcast.lane.b32.xlu0 %v7676, 256
    %v7679 = vpop.permute.xlu0 %7678
    %s7681 = sor.u32 256, 8
    %7682 = vbcast.lane.b32.xlu0 %v7676, %s7681
    %v7683 = vpop.permute.xlu0 %7682
    %s7685 = sor.u32 256, 16
    %7686 = vbcast.lane.b32.xlu0 %v7676, %s7685
    %v7687 = vpop.permute.xlu0 %7686
    %s7689 = sor.u32 256, 24
    %7690 = vbcast.lane.b32.xlu0 %v7676, %s7689
    %v7691 = vpop.permute.xlu0 %7690
    %v7692 = vlaneseq
    %v7693 = vshrl.u32 %v7692, 7
    %v7694 = vsub.s32 3, %v7693
    %v7695 = vrot.slane %v7633, %v7694
    %7697 = vbcast.lane.b32.xlu0 %v7695, 256
    %v7698 = vpop.permute.xlu0 %7697
    %s7700 = sor.u32 256, 8
    %7701 = vbcast.lane.b32.xlu0 %v7695, %s7700
    %v7702 = vpop.permute.xlu0 %7701
    %s7704 = sor.u32 256, 16
    %7705 = vbcast.lane.b32.xlu0 %v7695, %s7704
    %v7706 = vpop.permute.xlu0 %7705
    %s7708 = sor.u32 256, 24
    %7709 = vbcast.lane.b32.xlu0 %v7695, %s7708
    %v7710 = vpop.permute.xlu0 %7709
    %v7727 = vmul.f32 %v7498, %v7641
    %v7728 = vmul.f32 %v7501, %v7645
    %v7729 = vmul.f32 %v7504, %v7649
    %v7730 = vmul.f32 %v7507, %v7653
    %v7731 = vmul.f32 %v7510, %v7660
    %v7732 = vmul.f32 %v7513, %v7664
    %v7733 = vmul.f32 %v7516, %v7668
    %v7734 = vmul.f32 %v7519, %v7672
    %v7735 = vmul.f32 %v7522, %v7679
    %v7736 = vmul.f32 %v7525, %v7683
    %v7737 = vmul.f32 %v7528, %v7687
    %v7738 = vmul.f32 %v7531, %v7691
    %v7739 = vmul.f32 %v7534, %v7698
    %v7740 = vmul.f32 %v7537, %v7702
    %v7741 = vmul.f32 %v7540, %v7706
    %v7742 = vmul.f32 %v7543, %v7710
    %7744 = vset.pattern.permute.xlu0 16
    %7745 = vperm.xlu0 %7744, %v7415
    %v7746 = vpop.permute.xlu0 %7745
    %7764 = vset.pattern.permute.xlu0 0
    %7765 = vperm.xlu0 %7764, %v7727
    %v7766 = vpop.permute.xlu0 %7765
    %7767 = vset.pattern.permute.xlu0 0
    %7768 = vperm.xlu0 %7767, %v7728
    %v7769 = vpop.permute.xlu0 %7768
    %7770 = vset.pattern.permute.xlu0 0
    %7771 = vperm.xlu0 %7770, %v7729
    %v7772 = vpop.permute.xlu0 %7771
    %7773 = vset.pattern.permute.xlu0 0
    %7774 = vperm.xlu0 %7773, %v7730
    %v7775 = vpop.permute.xlu0 %7774
    %7776 = vset.pattern.permute.xlu0 0
    %7777 = vperm.xlu0 %7776, %v7731
    %v7778 = vpop.permute.xlu0 %7777
    %7779 = vset.pattern.permute.xlu0 0
    %7780 = vperm.xlu0 %7779, %v7732
    %v7781 = vpop.permute.xlu0 %7780
    %7782 = vset.pattern.permute.xlu0 0
    %7783 = vperm.xlu0 %7782, %v7733
    %v7784 = vpop.permute.xlu0 %7783
    %7785 = vset.pattern.permute.xlu0 0
    %7786 = vperm.xlu0 %7785, %v7734
    %v7787 = vpop.permute.xlu0 %7786
    %7788 = vset.pattern.permute.xlu0 0
    %7789 = vperm.xlu0 %7788, %v7735
    %v7790 = vpop.permute.xlu0 %7789
    %7791 = vset.pattern.permute.xlu0 0
    %7792 = vperm.xlu0 %7791, %v7736
    %v7793 = vpop.permute.xlu0 %7792
    %7794 = vset.pattern.permute.xlu0 0
    %7795 = vperm.xlu0 %7794, %v7737
    %v7796 = vpop.permute.xlu0 %7795
    %7797 = vset.pattern.permute.xlu0 0
    %7798 = vperm.xlu0 %7797, %v7738
    %v7799 = vpop.permute.xlu0 %7798
    %7800 = vset.pattern.permute.xlu0 0
    %7801 = vperm.xlu0 %7800, %v7739
    %v7802 = vpop.permute.xlu0 %7801
    %7803 = vset.pattern.permute.xlu0 0
    %7804 = vperm.xlu0 %7803, %v7740
    %v7805 = vpop.permute.xlu0 %7804
    %7806 = vset.pattern.permute.xlu0 0
    %7807 = vperm.xlu0 %7806, %v7741
    %v7808 = vpop.permute.xlu0 %7807
    %7809 = vset.pattern.permute.xlu0 0
    %7810 = vperm.xlu0 %7809, %v7742
    %v7811 = vpop.permute.xlu0 %7810
    %v7812 = vlaneseq
    %v7813 = vshrl.u32 %v7812, 7
    %v7814 = vsub.s32 %v493, %v7813
    %v7815 = vrot.slane %v7766, %v7814
    %v7816 = vlaneseq
    %v7817 = vshrl.u32 %v7816, 7
    %v7818 = vsub.s32 %v498, %v7817
    %v7819 = vrot.slane %v7769, %v7818
    %v7820 = vsel %vm503, %v7819, %v7815
    %v7821 = vlaneseq
    %v7822 = vshrl.u32 %v7821, 7
    %v7823 = vsub.s32 %v505, %v7822
    %v7824 = vrot.slane %v7772, %v7823
    %v7825 = vsel %vm510, %v7824, %v7820
    %v7826 = vlaneseq
    %v7827 = vshrl.u32 %v7826, 7
    %v7828 = vsub.s32 %v512, %v7827
    %v7829 = vrot.slane %v7775, %v7828
    %v7830 = vsel %vm517, %v7829, %v7825
    %v7831 = vlaneseq
    %v7832 = vshrl.u32 %v7831, 7
    %v7833 = vsub.s32 %v493, %v7832
    %v7834 = vrot.slane %v7778, %v7833
    %v7835 = vlaneseq
    %v7836 = vshrl.u32 %v7835, 7
    %v7837 = vsub.s32 %v498, %v7836
    %v7838 = vrot.slane %v7781, %v7837
    %v7839 = vsel %vm503, %v7838, %v7834
    %v7840 = vlaneseq
    %v7841 = vshrl.u32 %v7840, 7
    %v7842 = vsub.s32 %v505, %v7841
    %v7843 = vrot.slane %v7784, %v7842
    %v7844 = vsel %vm510, %v7843, %v7839
    %v7845 = vlaneseq
    %v7846 = vshrl.u32 %v7845, 7
    %v7847 = vsub.s32 %v512, %v7846
    %v7848 = vrot.slane %v7787, %v7847
    %v7849 = vsel %vm517, %v7848, %v7844
    %v7850 = vlaneseq
    %v7851 = vshrl.u32 %v7850, 7
    %v7852 = vsub.s32 %v493, %v7851
    %v7853 = vrot.slane %v7790, %v7852
    %v7854 = vlaneseq
    %v7855 = vshrl.u32 %v7854, 7
    %v7856 = vsub.s32 %v498, %v7855
    %v7857 = vrot.slane %v7793, %v7856
    %v7858 = vsel %vm503, %v7857, %v7853
    %v7859 = vlaneseq
    %v7860 = vshrl.u32 %v7859, 7
    %v7861 = vsub.s32 %v505, %v7860
    %v7862 = vrot.slane %v7796, %v7861
    %v7863 = vsel %vm510, %v7862, %v7858
    %v7864 = vlaneseq
    %v7865 = vshrl.u32 %v7864, 7
    %v7866 = vsub.s32 %v512, %v7865
    %v7867 = vrot.slane %v7799, %v7866
    %v7868 = vsel %vm517, %v7867, %v7863
    %v7869 = vlaneseq
    %v7870 = vshrl.u32 %v7869, 7
    %v7871 = vsub.s32 %v493, %v7870
    %v7872 = vrot.slane %v7802, %v7871
    %v7873 = vlaneseq
    %v7874 = vshrl.u32 %v7873, 7
    %v7875 = vsub.s32 %v498, %v7874
    %v7876 = vrot.slane %v7805, %v7875
    %v7877 = vsel %vm503, %v7876, %v7872
    %v7878 = vlaneseq
    %v7879 = vshrl.u32 %v7878, 7
    %v7880 = vsub.s32 %v505, %v7879
    %v7881 = vrot.slane %v7808, %v7880
    %v7882 = vsel %vm510, %v7881, %v7877
    %v7883 = vlaneseq
    %v7884 = vshrl.u32 %v7883, 7
    %v7885 = vsub.s32 %v512, %v7884
    %v7886 = vrot.slane %v7811, %v7885
    %v7887 = vsel %vm517, %v7886, %v7882
    %v7888 = vsel %vm538, %v7849, %v7830
    %v7889 = vsel %vm803, %v7868, %v7888
    %v7890 = vsel %vm541, %v7887, %v7889
    %v7892 = vmul.f32 %v7746, %v7890
    %v7893 = vmul.f32 %v7892, 1.442695
    %v7894 = vpow.pop %v7893
    %v7895 = vsel %vm810, %v7894, 0.0
    %7896 = vadd.xlane.f32.xlu0 %v7895
    %v7897 = vpop.xlane.xlu0 %7896
    %v7898 = vrcp.pop %v7897
    %v7899 = vmul.f32 %v7894, %v7898
    %7901 = vset.pattern.permute.xlu0 17
    %7902 = vperm.xlu0 %7901, %v7419
    %v7903 = vpop.permute.xlu0 %7902
    %v7905 = vmul.f32 %v7903, %v7899
    %v7906 = vsub.f32 1.0, %v7419
    %7908 = vset.pattern.permute.xlu0 17
    %7909 = vperm.xlu0 %7908, %v7906
    %v7910 = vpop.permute.xlu0 %7909
    %v7912 = vmul.f32 %v7910, %v6843
    %v7913 = vadd.f32 %v7905, %v7912
    %v7915 = vsel %vm222, %v7913, 0
    %7917 = vmatprep.subr.mxu0 0.0
    %7918 = vmatpush1.msra.mxu0 %v94
    %7919 = vmatprep.subr.mxu0 0.0
    %7920 = vmatpush1.msra.mxu0 %v95
    %7921 = vmatprep.subr.mxu0 0.0
    %7922 = vmatpush1.msra.mxu0 %v96
    %7923 = vmatprep.subr.mxu0 0.0
    %7924 = vmatpush1.msra.mxu0 %v97
    %7925 = vmatprep.subr.mxu0 0.0
    %7926 = vmatpush1.msra.mxu0 0.0
    %7927 = vmatprep.subr.mxu0 0.0
    %7928 = vmatpush1.msra.mxu0 0.0
    %7929 = vmatprep.subr.mxu0 0.0
    %7930 = vmatpush1.msra.mxu0 0.0
    %7931 = vmatprep.subr.mxu0 0.0
    %7932 = vmatpush1.msra.mxu0 0.0
    %7933 = vmatprep.subr.mxu0 0.0
    %7934 = vmatpush1.msra.mxu0 0.0
    %7935 = vmatprep.subr.mxu0 0.0
    %7936 = vmatpush1.msra.mxu0 0.0
    %7937 = vmatprep.subr.mxu0 0.0
    %7938 = vmatpush1.msra.mxu0 0.0
    %7939 = vmatprep.subr.mxu0 0.0
    %7940 = vmatpush1.msra.mxu0 0.0
    %7941 = vmatprep.subr.mxu0 0.0
    %7942 = vmatpush1.msra.mxu0 0.0
    %7943 = vmatprep.subr.mxu0 0.0
    %7944 = vmatpush1.msra.mxu0 0.0
    %7945 = vmatprep.subr.mxu0 0.0
    %7946 = vmatpush1.msra.mxu0 0.0
    %7947 = vmatprep.subr.mxu0 0.0
    %7948 = vmatpush1.msra.mxu0 0.0
    %7949 = vmatprep.subr.mxu0 0.0
    %7950 = vmatpush1.msra.mxu0 0.0
    %7951 = vmatprep.subr.mxu0 0.0
    %7952 = vmatpush1.msra.mxu0 0.0
    %7953 = vmatprep.subr.mxu0 0.0
    %7954 = vmatpush1.msra.mxu0 0.0
    %7955 = vmatprep.subr.mxu0 0.0
    %7956 = vmatpush1.msra.mxu0 0.0
    %7957 = vmatprep.subr.mxu0 0.0
    %7958 = vmatpush1.msra.mxu0 0.0
    %7959 = vmatprep.subr.mxu0 0.0
    %7960 = vmatpush1.msra.mxu0 0.0
    %7961 = vmatprep.subr.mxu0 0.0
    %7962 = vmatpush1.msra.mxu0 0.0
    %7963 = vmatprep.subr.mxu0 0.0
    %7964 = vmatpush1.msra.mxu0 0.0
    %7965 = vmatprep.subr.mxu0 0.0
    %7966 = vmatpush1.msra.mxu0 0.0
    %7967 = vmatprep.subr.mxu0 0.0
    %7968 = vmatpush1.msra.mxu0 0.0
    %7969 = vmatprep.subr.mxu0 0.0
    %7970 = vmatpush1.msra.mxu0 0.0
    %7971 = vmatprep.subr.mxu0 0.0
    %7972 = vmatpush1.msra.mxu0 0.0
    %7973 = vmatprep.subr.mxu0 0.0
    %7974 = vmatpush1.msra.mxu0 0.0
    %7975 = vmatprep.subr.mxu0 0.0
    %7976 = vmatpush1.msra.mxu0 0.0
    %7977 = vmatprep.subr.mxu0 0.0
    %7978 = vmatpush1.msra.mxu0 0.0
    %7979 = vmatprep.subr.mxu0 0.0
    %7980 = vmatpush1.msra.mxu0 0.0
    %7981 = vmatprep.mubr.f32.mxu0 0.0
    %7982 = vmatmul.mubr.f32.gmra.mrb[0].mxu0 %v7915
    %v7983 = vpop.f32.mrb[0].mxu0
    %v7984 = vadd.f32 0.0, %v7983
    %v7985 = vpop.f32.mrb[0].mxu0
    %7986 = vdwg.mxu0
    %7988 = vset.pattern.permute.xlu0 18
    %7989 = vperm.xlu0 %7988, %v7434
    %v7990 = vpop.permute.xlu0 %7989
    %v7992 = vmul.f32 %v7990, %v7913
    %7993 = vset.pattern.permute.xlu0 19
    %7994 = vperm.xlu0 %7993, %v7434
    %v7995 = vpop.permute.xlu0 %7994
    %v7997 = vmul.f32 %v7995, %v7984
    %v7998 = vadd.f32 %v7992, %v7997
    %7999 = vset.pattern.permute.xlu0 20
    %8000 = vperm.xlu0 %7999, %v7434
    %v8001 = vpop.permute.xlu0 %8000
    %v8003 = vmul.f32 %v8001, %v7984
    %8005 = vrot.lane.b32.xlu0 %v8003, 96
    %v8006 = vpop.permute.xlu0 %8005
    %v8008 = vadd.f32 %v7998, %v8006
    %v8009 = vmax.f32 %v8008, 1e-30
    %v8010 = vlog2.pop %v8009
    %v8011 = vmul.f32 %v8010, 0.6931472
    %8012 = vset.pattern.permute.xlu0 21
    %8013 = vperm.xlu0 %8012, %v7415
    %v8014 = vpop.permute.xlu0 %8013
    %v8016 = vmul.f32 %v8014, %v8011
    %v8017 = vmul.f32 %v8016, 1.442695
    %v8018 = vpow.pop %v8017
    %v8019 = vsel %vm810, %v8018, 0.0
    %8020 = vadd.xlane.f32.xlu0 %v8019
    %v8021 = vpop.xlane.xlu0 %8020
    %v8022 = vrcp.pop %v8021
    %v8023 = vmul.f32 %v8018, %v8022
    %v8024 = vlaneseq
    %v8025 = vshrl.u32 %v8024, 7
    %v8026 = vsub.s32 0, %v8025
    %v8027 = vrot.slane %v8023, %v8026
    %8029 = vbcast.lane.b32.xlu0 %v8027, 256
    %v8030 = vpop.permute.xlu0 %8029
    %s8032 = sor.u32 256, 8
    %8033 = vbcast.lane.b32.xlu0 %v8027, %s8032
    %v8034 = vpop.permute.xlu0 %8033
    %s8036 = sor.u32 256, 16
    %8037 = vbcast.lane.b32.xlu0 %v8027, %s8036
    %v8038 = vpop.permute.xlu0 %8037
    %s8040 = sor.u32 256, 24
    %8041 = vbcast.lane.b32.xlu0 %v8027, %s8040
    %v8042 = vpop.permute.xlu0 %8041
    %v8043 = vlaneseq
    %v8044 = vshrl.u32 %v8043, 7
    %v8045 = vsub.s32 1, %v8044
    %v8046 = vrot.slane %v8023, %v8045
    %8048 = vbcast.lane.b32.xlu0 %v8046, 256
    %v8049 = vpop.permute.xlu0 %8048
    %s8051 = sor.u32 256, 8
    %8052 = vbcast.lane.b32.xlu0 %v8046, %s8051
    %v8053 = vpop.permute.xlu0 %8052
    %s8055 = sor.u32 256, 16
    %8056 = vbcast.lane.b32.xlu0 %v8046, %s8055
    %v8057 = vpop.permute.xlu0 %8056
    %s8059 = sor.u32 256, 24
    %8060 = vbcast.lane.b32.xlu0 %v8046, %s8059
    %v8061 = vpop.permute.xlu0 %8060
    %v8062 = vmul.f32 %v8030, %v7116
    %v8063 = vmul.f32 %v8034, %v7117
    %v8064 = vmul.f32 %v8038, %v7118
    %v8065 = vmul.f32 %v8042, %v7119
    %v8066 = vmul.f32 %v8049, %v7120
    %v8067 = vmul.f32 %v8053, %v7121
    %v8068 = vmul.f32 %v8057, %v7122
    %v8069 = vmul.f32 %v8061, %v7123
    %v8070 = vsel %vm398, %v8062, 0.0
    %v8071 = vsel %vm398, %v8063, 0.0
    %v8072 = vadd.f32 %v8070, %v8071
    %v8073 = vsel %vm398, %v8064, 0.0
    %v8074 = vadd.f32 %v8072, %v8073
    %v8075 = vsel %vm398, %v8065, 0.0
    %v8076 = vadd.f32 %v8074, %v8075
    %v8077 = vrot.slane %v8076, 4
    %v8078 = vadd.f32 %v8076, %v8077
    %v8079 = vrot.slane %v8078, 2
    %v8080 = vadd.f32 %v8078, %v8079
    %v8081 = vrot.slane %v8080, 1
    %v8082 = vadd.f32 %v8080, %v8081
    %v8083 = vsel %vm398, %v8066, 0.0
    %v8084 = vsel %vm398, %v8067, 0.0
    %v8085 = vadd.f32 %v8083, %v8084
    %v8086 = vsel %vm398, %v8068, 0.0
    %v8087 = vadd.f32 %v8085, %v8086
    %v8088 = vsel %vm398, %v8069, 0.0
    %v8089 = vadd.f32 %v8087, %v8088
    %v8090 = vrot.slane %v8089, 4
    %v8091 = vadd.f32 %v8089, %v8090
    %v8092 = vrot.slane %v8091, 2
    %v8093 = vadd.f32 %v8091, %v8092
    %v8094 = vrot.slane %v8093, 1
    %v8095 = vadd.f32 %v8093, %v8094
    %v8096 = vlaneseq
    %v8097 = vshrl.u32 %v8096, 7
    %v8098 = vsub.s32 2, %v8097
    %v8099 = vrot.slane %v8023, %v8098
    %8101 = vbcast.lane.b32.xlu0 %v8099, 256
    %v8102 = vpop.permute.xlu0 %8101
    %s8104 = sor.u32 256, 8
    %8105 = vbcast.lane.b32.xlu0 %v8099, %s8104
    %v8106 = vpop.permute.xlu0 %8105
    %s8108 = sor.u32 256, 16
    %8109 = vbcast.lane.b32.xlu0 %v8099, %s8108
    %v8110 = vpop.permute.xlu0 %8109
    %s8112 = sor.u32 256, 24
    %8113 = vbcast.lane.b32.xlu0 %v8099, %s8112
    %v8114 = vpop.permute.xlu0 %8113
    %v8115 = vlaneseq
    %v8116 = vshrl.u32 %v8115, 7
    %v8117 = vsub.s32 3, %v8116
    %v8118 = vrot.slane %v8023, %v8117
    %8120 = vbcast.lane.b32.xlu0 %v8118, 256
    %v8121 = vpop.permute.xlu0 %8120
    %s8123 = sor.u32 256, 8
    %8124 = vbcast.lane.b32.xlu0 %v8118, %s8123
    %v8125 = vpop.permute.xlu0 %8124
    %s8127 = sor.u32 256, 16
    %8128 = vbcast.lane.b32.xlu0 %v8118, %s8127
    %v8129 = vpop.permute.xlu0 %8128
    %s8131 = sor.u32 256, 24
    %8132 = vbcast.lane.b32.xlu0 %v8118, %s8131
    %v8133 = vpop.permute.xlu0 %8132
    %v8136 = vunpack.c.l.s4 1966171168
    %v8137 = vunpack.c.0.s8 %v8136
    %v8138 = vlaneseq
    %v8139 = vshrl.u32 %v8138, 7
    %v8140 = vsub.s32 %v8137, %v8139
    %v8141 = vrot.slane %v7404, %v8140
    %v8142 = vcombine.high %v8141, %v8141
    %v8144 = vunpack.c.l.s4 1966171168
    %v8145 = vunpack.c.0.s8 %v8144
    %v8146 = vlaneseq
    %v8147 = vshrl.u32 %v8146, 7
    %v8148 = vsub.s32 %v8145, %v8147
    %v8149 = vrot.slane %v8141, %v8148
    %v8151 = vunpack.c.l.s4 1966171168
    %v8152 = vunpack.c.0.s8 %v8151
    %v8153 = vlaneseq
    %v8154 = vshrl.u32 %v8153, 7
    %v8155 = vsub.s32 %v8152, %v8154
    %v8156 = vrot.slane %v8142, %v8155
    %v8157 = vlaneseq
    %v8158 = vshrl.u32 %v8157, 7
    %v8159 = vsub.s32 0, %v8158
    %v8160 = vrot.slane %v8149, %v8159
    %v8161 = vlaneseq
    %v8162 = vshrl.u32 %v8161, 7
    %v8163 = vsub.s32 0, %v8162
    %v8164 = vrot.slane %v8156, %v8163
    %v8167 = vmul.f32 %v8102, %v8160
    %v8168 = vmul.f32 %v8106, %v8160
    %v8169 = vmul.f32 %v8110, %v8160
    %v8170 = vmul.f32 %v8114, %v8160
    %v8171 = vmul.f32 %v8121, %v8164
    %v8172 = vmul.f32 %v8125, %v8164
    %v8173 = vmul.f32 %v8129, %v8164
    %v8174 = vmul.f32 %v8133, %v8164
    %v8175 = vsub.f32 1.0, %v8167
    %v8176 = vsub.f32 1.0, %v8168
    %v8177 = vsub.f32 1.0, %v8169
    %v8178 = vsub.f32 1.0, %v8170
    %v8179 = vsub.f32 1.0, %v8171
    %v8180 = vsub.f32 1.0, %v8172
    %v8181 = vsub.f32 1.0, %v8173
    %v8182 = vsub.f32 1.0, %v8174
    %8191 = vrot.lane.b32.xlu0 %v8175, 84
    %v8192 = vpop.permute.xlu0 %8191
    %8193 = vrot.lane.b32.xlu0 %v8176, 84
    %v8194 = vpop.permute.xlu0 %8193
    %8195 = vrot.lane.b32.xlu0 %v8177, 84
    %v8196 = vpop.permute.xlu0 %8195
    %8197 = vrot.lane.b32.xlu0 %v8178, 84
    %v8198 = vpop.permute.xlu0 %8197
    %8199 = vrot.lane.b32.xlu0 %v8179, 84
    %v8200 = vpop.permute.xlu0 %8199
    %8201 = vrot.lane.b32.xlu0 %v8180, 84
    %v8202 = vpop.permute.xlu0 %8201
    %8203 = vrot.lane.b32.xlu0 %v8181, 84
    %v8204 = vpop.permute.xlu0 %8203
    %8205 = vrot.lane.b32.xlu0 %v8182, 84
    %v8206 = vpop.permute.xlu0 %8205
    %v8215 = vmul.f32 %v7116, %v8192
    %v8216 = vmul.f32 %v7117, %v8194
    %v8217 = vmul.f32 %v7118, %v8196
    %v8218 = vmul.f32 %v7119, %v8198
    %v8219 = vmul.f32 %v7120, %v8200
    %v8220 = vmul.f32 %v7121, %v8202
    %v8221 = vmul.f32 %v7122, %v8204
    %v8222 = vmul.f32 %v7123, %v8206
    %v8225 = vunpack.c.l.s4 1966171168
    %v8226 = vunpack.c.0.s8 %v8225
    %v8227 = vlaneseq
    %v8228 = vshrl.u32 %v8227, 7
    %v8229 = vsub.s32 %v8226, %v8228
    %v8230 = vrot.slane %v7405, %v8229
    %v8231 = vcombine.high %v8230, %v8230
    %v8233 = vunpack.c.l.s4 1966171168
    %v8234 = vunpack.c.0.s8 %v8233
    %v8235 = vlaneseq
    %v8236 = vshrl.u32 %v8235, 7
    %v8237 = vsub.s32 %v8234, %v8236
    %v8238 = vrot.slane %v8230, %v8237
    %v8240 = vunpack.c.l.s4 1966171168
    %v8241 = vunpack.c.0.s8 %v8240
    %v8242 = vlaneseq
    %v8243 = vshrl.u32 %v8242, 7
    %v8244 = vsub.s32 %v8241, %v8243
    %v8245 = vrot.slane %v8231, %v8244
    %v8246 = vlaneseq
    %v8247 = vshrl.u32 %v8246, 7
    %v8248 = vsub.s32 0, %v8247
    %v8249 = vrot.slane %v8238, %v8248
    %v8250 = vlaneseq
    %v8251 = vshrl.u32 %v8250, 7
    %v8252 = vsub.s32 0, %v8251
    %v8253 = vrot.slane %v8245, %v8252
    %v8256 = vmul.f32 %v8102, %v8249
    %v8257 = vmul.f32 %v8106, %v8249
    %v8258 = vmul.f32 %v8110, %v8249
    %v8259 = vmul.f32 %v8114, %v8249
    %v8260 = vmul.f32 %v8121, %v8253
    %v8261 = vmul.f32 %v8125, %v8253
    %v8262 = vmul.f32 %v8129, %v8253
    %v8263 = vmul.f32 %v8133, %v8253
    %8272 = vrot.lane.b32.xlu0 %v8256, 68
    %v8273 = vpop.permute.xlu0 %8272
    %8274 = vrot.lane.b32.xlu0 %v8257, 68
    %v8275 = vpop.permute.xlu0 %8274
    %8276 = vrot.lane.b32.xlu0 %v8258, 68
    %v8277 = vpop.permute.xlu0 %8276
    %8278 = vrot.lane.b32.xlu0 %v8259, 68
    %v8279 = vpop.permute.xlu0 %8278
    %8280 = vrot.lane.b32.xlu0 %v8260, 68
    %v8281 = vpop.permute.xlu0 %8280
    %8282 = vrot.lane.b32.xlu0 %v8261, 68
    %v8283 = vpop.permute.xlu0 %8282
    %8284 = vrot.lane.b32.xlu0 %v8262, 68
    %v8285 = vpop.permute.xlu0 %8284
    %8286 = vrot.lane.b32.xlu0 %v8263, 68
    %v8287 = vpop.permute.xlu0 %8286
    %v8296 = vadd.f32 %v8215, %v8273
    %v8297 = vadd.f32 %v8216, %v8275
    %v8298 = vadd.f32 %v8217, %v8277
    %v8299 = vadd.f32 %v8218, %v8279
    %v8300 = vadd.f32 %v8219, %v8281
    %v8301 = vadd.f32 %v8220, %v8283
    %v8302 = vadd.f32 %v8221, %v8285
    %v8303 = vadd.f32 %v8222, %v8287
    %v8306 = vsel %vm538, %v8095, %v8082
    %v8307 = vsel %vm398, %v8306, 0
    %8309 = vmatprep.subr.mxu0 0.0
    %8310 = vmatpush1.msra.mxu0 %v109
    %8311 = vmatprep.subr.mxu0 0.0
    %8312 = vmatpush1.msra.mxu0 %v110
    %8313 = vmatprep.subr.mxu0 0.0
    %8314 = vmatpush1.msra.mxu0 0.0
    %8315 = vmatprep.subr.mxu0 0.0
    %8316 = vmatpush1.msra.mxu0 0.0
    %8317 = vmatprep.subr.mxu0 0.0
    %8318 = vmatpush1.msra.mxu0 0.0
    %8319 = vmatprep.subr.mxu0 0.0
    %8320 = vmatpush1.msra.mxu0 0.0
    %8321 = vmatprep.subr.mxu0 0.0
    %8322 = vmatpush1.msra.mxu0 0.0
    %8323 = vmatprep.subr.mxu0 0.0
    %8324 = vmatpush1.msra.mxu0 0.0
    %8325 = vmatprep.subr.mxu0 0.0
    %8326 = vmatpush1.msra.mxu0 0.0
    %8327 = vmatprep.subr.mxu0 0.0
    %8328 = vmatpush1.msra.mxu0 0.0
    %8329 = vmatprep.subr.mxu0 0.0
    %8330 = vmatpush1.msra.mxu0 0.0
    %8331 = vmatprep.subr.mxu0 0.0
    %8332 = vmatpush1.msra.mxu0 0.0
    %8333 = vmatprep.subr.mxu0 0.0
    %8334 = vmatpush1.msra.mxu0 0.0
    %8335 = vmatprep.subr.mxu0 0.0
    %8336 = vmatpush1.msra.mxu0 0.0
    %8337 = vmatprep.subr.mxu0 0.0
    %8338 = vmatpush1.msra.mxu0 0.0
    %8339 = vmatprep.subr.mxu0 0.0
    %8340 = vmatpush1.msra.mxu0 0.0
    %8341 = vmatprep.subr.mxu0 0.0
    %8342 = vmatpush1.msra.mxu0 0.0
    %8343 = vmatprep.subr.mxu0 0.0
    %8344 = vmatpush1.msra.mxu0 0.0
    %8345 = vmatprep.subr.mxu0 0.0
    %8346 = vmatpush1.msra.mxu0 0.0
    %8347 = vmatprep.subr.mxu0 0.0
    %8348 = vmatpush1.msra.mxu0 0.0
    %8349 = vmatprep.subr.mxu0 0.0
    %8350 = vmatpush1.msra.mxu0 0.0
    %8351 = vmatprep.subr.mxu0 0.0
    %8352 = vmatpush1.msra.mxu0 0.0
    %8353 = vmatprep.subr.mxu0 0.0
    %8354 = vmatpush1.msra.mxu0 0.0
    %8355 = vmatprep.subr.mxu0 0.0
    %8356 = vmatpush1.msra.mxu0 0.0
    %8357 = vmatprep.subr.mxu0 0.0
    %8358 = vmatpush1.msra.mxu0 0.0
    %8359 = vmatprep.subr.mxu0 0.0
    %8360 = vmatpush1.msra.mxu0 0.0
    %8361 = vmatprep.subr.mxu0 0.0
    %8362 = vmatpush1.msra.mxu0 0.0
    %8363 = vmatprep.subr.mxu0 0.0
    %8364 = vmatpush1.msra.mxu0 0.0
    %8365 = vmatprep.subr.mxu0 0.0
    %8366 = vmatpush1.msra.mxu0 0.0
    %8367 = vmatprep.subr.mxu0 0.0
    %8368 = vmatpush1.msra.mxu0 0.0
    %8369 = vmatprep.subr.mxu0 0.0
    %8370 = vmatpush1.msra.mxu0 0.0
    %8371 = vmatprep.subr.mxu0 0.0
    %8372 = vmatpush1.msra.mxu0 0.0
    %8373 = vmatprep.mubr.f32.mxu0 0.0
    %8374 = vmatmul.mubr.f32.gmra.mrb[0].mxu0 %v8307
    %v8375 = vpop.f32.mrb[0].mxu0
    %v8376 = vadd.f32 0.0, %v8375
    %v8377 = vpop.f32.mrb[0].mxu0
    %8378 = vdwg.mxu0
    %8380 = vrot.lane.b32.xlu0 %v8376, 76
    %v8381 = vpop.permute.xlu0 %8380
    %v8383 = vadd.f32 %v7392, %v8381
    %v8384 = vmax.f32 %v8383, -20.0
    %v8385 = vmin.f32 %v8384, 20.0
    %8387 = vrot.lane.b32.xlu0 %v8385, 52
    %v8388 = vpop.permute.xlu0 %8387
    %s8390 = scalar_lea.vmem [#allocation2], 12
    %8391 = vst.msk [vmem:[%s8390] sm:$0x3] %vm1310, %v8388
    %8393 = vrot.lane.b32.xlu0 %v7317, 64
    %v8394 = vpop.permute.xlu0 %8393
    %8396 = vrot.lane.b32.xlu0 %v8306, 32
    %v8397 = vpop.permute.xlu0 %8396
    %v8399 = vsel %vm222, %v8394, %v8397
    %s8400 = scalar_lea.vmem %s0, 14
    %v8401 = vld [vmem:[%s8400] sm:$0x3]
    %v8403 = vsel %vm112, %v8399, 0
    %8405 = vmatprep.subr.mxu0 0.0
    %8406 = vmatpush1.msra.mxu0 %v98
    %8407 = vmatprep.subr.mxu0 0.0
    %8408 = vmatpush1.msra.mxu0 %v99
    %8409 = vmatprep.subr.mxu0 0.0
    %8410 = vmatpush1.msra.mxu0 %v100
    %8411 = vmatprep.subr.mxu0 0.0
    %8412 = vmatpush1.msra.mxu0 %v101
    %8413 = vmatprep.subr.mxu0 0.0
    %8414 = vmatpush1.msra.mxu0 %v102
    %8415 = vmatprep.subr.mxu0 0.0
    %8416 = vmatpush1.msra.mxu0 %v103
    %8417 = vmatprep.subr.mxu0 0.0
    %8418 = vmatpush1.msra.mxu0 0.0
    %8419 = vmatprep.subr.mxu0 0.0
    %8420 = vmatpush1.msra.mxu0 0.0
    %8421 = vmatprep.subr.mxu0 0.0
    %8422 = vmatpush1.msra.mxu0 0.0
    %8423 = vmatprep.subr.mxu0 0.0
    %8424 = vmatpush1.msra.mxu0 0.0
    %8425 = vmatprep.subr.mxu0 0.0
    %8426 = vmatpush1.msra.mxu0 0.0
    %8427 = vmatprep.subr.mxu0 0.0
    %8428 = vmatpush1.msra.mxu0 0.0
    %8429 = vmatprep.subr.mxu0 0.0
    %8430 = vmatpush1.msra.mxu0 0.0
    %8431 = vmatprep.subr.mxu0 0.0
    %8432 = vmatpush1.msra.mxu0 0.0
    %8433 = vmatprep.subr.mxu0 0.0
    %8434 = vmatpush1.msra.mxu0 0.0
    %8435 = vmatprep.subr.mxu0 0.0
    %8436 = vmatpush1.msra.mxu0 0.0
    %8437 = vmatprep.subr.mxu0 0.0
    %8438 = vmatpush1.msra.mxu0 0.0
    %8439 = vmatprep.subr.mxu0 0.0
    %8440 = vmatpush1.msra.mxu0 0.0
    %8441 = vmatprep.subr.mxu0 0.0
    %8442 = vmatpush1.msra.mxu0 0.0
    %8443 = vmatprep.subr.mxu0 0.0
    %8444 = vmatpush1.msra.mxu0 0.0
    %8445 = vmatprep.subr.mxu0 0.0
    %8446 = vmatpush1.msra.mxu0 0.0
    %8447 = vmatprep.subr.mxu0 0.0
    %8448 = vmatpush1.msra.mxu0 0.0
    %8449 = vmatprep.subr.mxu0 0.0
    %8450 = vmatpush1.msra.mxu0 0.0
    %8451 = vmatprep.subr.mxu0 0.0
    %8452 = vmatpush1.msra.mxu0 0.0
    %8453 = vmatprep.subr.mxu0 0.0
    %8454 = vmatpush1.msra.mxu0 0.0
    %8455 = vmatprep.subr.mxu0 0.0
    %8456 = vmatpush1.msra.mxu0 0.0
    %8457 = vmatprep.subr.mxu0 0.0
    %8458 = vmatpush1.msra.mxu0 0.0
    %8459 = vmatprep.subr.mxu0 0.0
    %8460 = vmatpush1.msra.mxu0 0.0
    %8461 = vmatprep.subr.mxu0 0.0
    %8462 = vmatpush1.msra.mxu0 0.0
    %8463 = vmatprep.subr.mxu0 0.0
    %8464 = vmatpush1.msra.mxu0 0.0
    %8465 = vmatprep.subr.mxu0 0.0
    %8466 = vmatpush1.msra.mxu0 0.0
    %8467 = vmatprep.subr.mxu0 0.0
    %8468 = vmatpush1.msra.mxu0 0.0
    %8469 = vmatprep.mubr.f32.mxu0 0.0
    %8470 = vmatmul.mubr.f32.gmra.mrb[0].mxu0 %v8403
    %v8471 = vpop.f32.mrb[0].mxu0
    %v8472 = vadd.f32 0.0, %v8471
    %v8473 = vpop.f32.mrb[0].mxu0
    %8474 = vdwg.mxu0
    %v8475 = vadd.f32 %v8401, %v8472
    %v8476 = vmul.f32 %v8475, 0.5
    %v8477 = vtanh.pop %v8476
    %v8478 = vadd.f32 %v8477, 1.0
    %v8479 = vmul.f32 %v8478, 0.5
    %v8480 = vtanh.pop %v8475
    %v8481 = vmul.f32 %v8479, %v7311
    %8483 = vrot.lane.b32.xlu0 %v8480, 32
    %v8484 = vpop.permute.xlu0 %8483
    %v8486 = vmul.f32 %v8479, %v8484
    %8488 = vrot.lane.b32.xlu0 %v8486, 32
    %v8489 = vpop.permute.xlu0 %8488
    %v8491 = vadd.f32 %v8481, %v8489
    %v8492 = vtanh.pop %v8491
    %8494 = vrot.lane.b32.xlu0 %v8492, 32
    %v8495 = vpop.permute.xlu0 %8494
    %v8497 = vmul.f32 %v8479, %v8495
    %v8498 = vmax.f32 %v8497, -20.0
    %v8499 = vmin.f32 %v8498, 20.0
    %8501 = vrot.lane.b32.xlu0 %v8499, 64
    %v8502 = vpop.permute.xlu0 %8501
    %v8503 = vsel %vm222, %v8502, 0
    %8505 = vmatprep.subr.mxu0 0.0
    %8506 = vmatpush1.msra.mxu0 %v104
    %8507 = vmatprep.subr.mxu0 0.0
    %8508 = vmatpush1.msra.mxu0 %v105
    %8509 = vmatprep.subr.mxu0 0.0
    %8510 = vmatpush1.msra.mxu0 %v106
    %8511 = vmatprep.subr.mxu0 0.0
    %8512 = vmatpush1.msra.mxu0 %v107
    %8513 = vmatprep.subr.mxu0 0.0
    %8514 = vmatpush1.msra.mxu0 0.0
    %8515 = vmatprep.subr.mxu0 0.0
    %8516 = vmatpush1.msra.mxu0 0.0
    %8517 = vmatprep.subr.mxu0 0.0
    %8518 = vmatpush1.msra.mxu0 0.0
    %8519 = vmatprep.subr.mxu0 0.0
    %8520 = vmatpush1.msra.mxu0 0.0
    %8521 = vmatprep.subr.mxu0 0.0
    %8522 = vmatpush1.msra.mxu0 0.0
    %8523 = vmatprep.subr.mxu0 0.0
    %8524 = vmatpush1.msra.mxu0 0.0
    %8525 = vmatprep.subr.mxu0 0.0
    %8526 = vmatpush1.msra.mxu0 0.0
    %8527 = vmatprep.subr.mxu0 0.0
    %8528 = vmatpush1.msra.mxu0 0.0
    %8529 = vmatprep.subr.mxu0 0.0
    %8530 = vmatpush1.msra.mxu0 0.0
    %8531 = vmatprep.subr.mxu0 0.0
    %8532 = vmatpush1.msra.mxu0 0.0
    %8533 = vmatprep.subr.mxu0 0.0
    %8534 = vmatpush1.msra.mxu0 0.0
    %8535 = vmatprep.subr.mxu0 0.0
    %8536 = vmatpush1.msra.mxu0 0.0
    %8537 = vmatprep.subr.mxu0 0.0
    %8538 = vmatpush1.msra.mxu0 0.0
    %8539 = vmatprep.subr.mxu0 0.0
    %8540 = vmatpush1.msra.mxu0 0.0
    %8541 = vmatprep.subr.mxu0 0.0
    %8542 = vmatpush1.msra.mxu0 0.0
    %8543 = vmatprep.subr.mxu0 0.0
    %8544 = vmatpush1.msra.mxu0 0.0
    %8545 = vmatprep.subr.mxu0 0.0
    %8546 = vmatpush1.msra.mxu0 0.0
    %8547 = vmatprep.subr.mxu0 0.0
    %8548 = vmatpush1.msra.mxu0 0.0
    %8549 = vmatprep.subr.mxu0 0.0
    %8550 = vmatpush1.msra.mxu0 0.0
    %8551 = vmatprep.subr.mxu0 0.0
    %8552 = vmatpush1.msra.mxu0 0.0
    %8553 = vmatprep.subr.mxu0 0.0
    %8554 = vmatpush1.msra.mxu0 0.0
    %8555 = vmatprep.subr.mxu0 0.0
    %8556 = vmatpush1.msra.mxu0 0.0
    %8557 = vmatprep.subr.mxu0 0.0
    %8558 = vmatpush1.msra.mxu0 0.0
    %8559 = vmatprep.subr.mxu0 0.0
    %8560 = vmatpush1.msra.mxu0 0.0
    %8561 = vmatprep.subr.mxu0 0.0
    %8562 = vmatpush1.msra.mxu0 0.0
    %8563 = vmatprep.subr.mxu0 0.0
    %8564 = vmatpush1.msra.mxu0 0.0
    %8565 = vmatprep.subr.mxu0 0.0
    %8566 = vmatpush1.msra.mxu0 0.0
    %8567 = vmatprep.subr.mxu0 0.0
    %8568 = vmatpush1.msra.mxu0 0.0
    %8569 = vmatprep.mubr.f32.mxu0 0.0
    %8570 = vmatmul.mubr.f32.gmra.mrb[0].mxu0 %v8503
    %v8571 = vpop.f32.mrb[0].mxu0
    %v8572 = vadd.f32 %v217, %v8571
    %v8573 = vpop.f32.mrb[0].mxu0
    %8574 = vdwg.mxu0
    %v8576 = vrot.slane %v8572, 6
    %8577 = vrot.lane.b32.xlu0 %v8576, 106
    %v8578 = vpop.permute.xlu0 %8577
    %v8580 = vsel %vm84, %v8572, %v8578
    %v8581 = vmul.f32 %v8572, 0.5
    %v8582 = vtanh.pop %v8581
    %v8583 = vadd.f32 %v8582, 1.0
    %v8584 = vmul.f32 %v8583, 0.5
    %v8585 = vtanh.pop %v8572
    %v8586 = vtanh.pop %v8580
    %v8587 = vmax.f32 %v8580, 0.0
    %v8588 = vand.u32 2147483647, %v8580
    %v8589 = vsub.f32 0.0, %v8588
    %v8590 = vmul.f32 %v8589, 1.442695
    %v8591 = vpow.pop %v8590
    %v8592 = vadd.f32 %v8591, 1.0
    %v8593 = vlog2.pop %v8592
    %v8594 = vmul.f32 %v8593, 0.6931472
    %v8595 = vadd.f32 %v8587, %v8594
    %v8596 = vmul.f32 %v8580, 0.5
    %v8597 = vtanh.pop %v8596
    %v8598 = vadd.f32 %v8597, 1.0
    %v8599 = vmul.f32 %v8598, 0.5
    %v8600 = vsel %vm320, %v8580, -inf
    %8601 = vmax.xlane.f32.xlu0 %v8600
    %v8602 = vpop.xlane.xlu0 %8601
    %v8603 = vsub.f32 %v8580, %v8602
    %v8604 = vmul.f32 %v8603, 1.442695
    %v8605 = vpow.pop %v8604
    %8607 = vrot.lane.b32.xlu0 %v8605, 110
    %v8608 = vpop.permute.xlu0 %8607
    %v8610 = vsel %vm331, %v8608, 0.0
    %8611 = vadd.xlane.f32.xlu0 %v8610
    %v8612 = vpop.xlane.xlu0 %8611
    %v8613 = vrcp.pop %v8612
    %v8614 = vmul.f32 %v8605, %v8613
    %v8617 = vunpack.c.l.s4 1966171168
    %v8618 = vunpack.c.0.s8 %v8617
    %v8619 = vlaneseq
    %v8620 = vshrl.u32 %v8619, 7
    %v8621 = vsub.s32 %v8618, %v8620
    %v8622 = vrot.slane %v8586, %v8621
    %v8623 = vcombine.high %v8622, %v8622
    %v8625 = vunpack.c.l.s4 1966171168
    %v8626 = vunpack.c.0.s8 %v8625
    %v8627 = vlaneseq
    %v8628 = vshrl.u32 %v8627, 7
    %v8629 = vsub.s32 %v8626, %v8628
    %v8630 = vrot.slane %v8622, %v8629
    %v8632 = vunpack.c.l.s4 1966171168
    %v8633 = vunpack.c.0.s8 %v8632
    %v8634 = vlaneseq
    %v8635 = vshrl.u32 %v8634, 7
    %v8636 = vsub.s32 %v8633, %v8635
    %v8637 = vrot.slane %v8623, %v8636
    %v8638 = vcombine.high %v8630, %v8630
    %v8639 = vcombine.high %v8637, %v8637
    %v8640 = vlaneseq
    %v8641 = vshrl.u32 %v8640, 7
    %v8642 = vsub.s32 0, %v8641
    %v8643 = vrot.slane %v8630, %v8642
    %v8644 = vlaneseq
    %v8645 = vshrl.u32 %v8644, 7
    %v8646 = vsub.s32 0, %v8645
    %v8647 = vrot.slane %v8637, %v8646
    %v8648 = vlaneseq
    %v8649 = vshrl.u32 %v8648, 7
    %v8650 = vsub.s32 0, %v8649
    %v8651 = vrot.slane %v8638, %v8650
    %v8652 = vlaneseq
    %v8653 = vshrl.u32 %v8652, 7
    %v8654 = vsub.s32 0, %v8653
    %v8655 = vrot.slane %v8639, %v8654
    %v8660 = vmul.f32 %v8296, %v8643
    %v8661 = vmul.f32 %v8297, %v8643
    %v8662 = vmul.f32 %v8298, %v8643
    %v8663 = vmul.f32 %v8299, %v8643
    %v8664 = vmul.f32 %v8300, %v8647
    %v8665 = vmul.f32 %v8301, %v8647
    %v8666 = vmul.f32 %v8302, %v8647
    %v8667 = vmul.f32 %v8303, %v8647
    %v8668 = vmul.f32 %v8296, %v8651
    %v8669 = vmul.f32 %v8297, %v8651
    %v8670 = vmul.f32 %v8298, %v8651
    %v8671 = vmul.f32 %v8299, %v8651
    %v8672 = vmul.f32 %v8300, %v8655
    %v8673 = vmul.f32 %v8301, %v8655
    %v8674 = vmul.f32 %v8302, %v8655
    %v8675 = vmul.f32 %v8303, %v8655
    %v8676 = vsel %vm398, %v8660, 0.0
    %8677 = vadd.xlane.f32.xlu0 %v8676
    %v8678 = vpop.xlane.xlu0 %8677
    %v8679 = vsel %vm398, %v8661, 0.0
    %8680 = vadd.xlane.f32.xlu0 %v8679
    %v8681 = vpop.xlane.xlu0 %8680
    %v8682 = vsel %vm398, %v8662, 0.0
    %8683 = vadd.xlane.f32.xlu0 %v8682
    %v8684 = vpop.xlane.xlu0 %8683
    %v8685 = vsel %vm398, %v8663, 0.0
    %8686 = vadd.xlane.f32.xlu0 %v8685
    %v8687 = vpop.xlane.xlu0 %8686
    %v8688 = vsel %vm398, %v8664, 0.0
    %8689 = vadd.xlane.f32.xlu0 %v8688
    %v8690 = vpop.xlane.xlu0 %8689
    %v8691 = vsel %vm398, %v8665, 0.0
    %8692 = vadd.xlane.f32.xlu0 %v8691
    %v8693 = vpop.xlane.xlu0 %8692
    %v8694 = vsel %vm398, %v8666, 0.0
    %8695 = vadd.xlane.f32.xlu0 %v8694
    %v8696 = vpop.xlane.xlu0 %8695
    %v8697 = vsel %vm398, %v8667, 0.0
    %8698 = vadd.xlane.f32.xlu0 %v8697
    %v8699 = vpop.xlane.xlu0 %8698
    %v8700 = vsel %vm398, %v8668, 0.0
    %8701 = vadd.xlane.f32.xlu0 %v8700
    %v8702 = vpop.xlane.xlu0 %8701
    %v8703 = vsel %vm398, %v8669, 0.0
    %8704 = vadd.xlane.f32.xlu0 %v8703
    %v8705 = vpop.xlane.xlu0 %8704
    %v8706 = vsel %vm398, %v8670, 0.0
    %8707 = vadd.xlane.f32.xlu0 %v8706
    %v8708 = vpop.xlane.xlu0 %8707
    %v8709 = vsel %vm398, %v8671, 0.0
    %8710 = vadd.xlane.f32.xlu0 %v8709
    %v8711 = vpop.xlane.xlu0 %8710
    %v8712 = vsel %vm398, %v8672, 0.0
    %8713 = vadd.xlane.f32.xlu0 %v8712
    %v8714 = vpop.xlane.xlu0 %8713
    %v8715 = vsel %vm398, %v8673, 0.0
    %8716 = vadd.xlane.f32.xlu0 %v8715
    %v8717 = vpop.xlane.xlu0 %8716
    %v8718 = vsel %vm398, %v8674, 0.0
    %8719 = vadd.xlane.f32.xlu0 %v8718
    %v8720 = vpop.xlane.xlu0 %8719
    %v8721 = vsel %vm398, %v8675, 0.0
    %8722 = vadd.xlane.f32.xlu0 %v8721
    %v8723 = vpop.xlane.xlu0 %8722
    %v8724 = vmul.f32 %v8586, %v8586
    %v8725 = vsel %vm448, %v8724, 0.0
    %8726 = vadd.xlane.f32.xlu0 %v8725
    %v8727 = vpop.xlane.xlu0 %8726
    %v8728 = vmul.f32 %v8296, %v8296
    %v8729 = vmul.f32 %v8297, %v8297
    %v8730 = vmul.f32 %v8298, %v8298
    %v8731 = vmul.f32 %v8299, %v8299
    %v8732 = vmul.f32 %v8300, %v8300
    %v8733 = vmul.f32 %v8301, %v8301
    %v8734 = vmul.f32 %v8302, %v8302
    %v8735 = vmul.f32 %v8303, %v8303
    %v8736 = vsel %vm398, %v8728, 0.0
    %8737 = vadd.xlane.f32.xlu0 %v8736
    %v8738 = vpop.xlane.xlu0 %8737
    %v8739 = vsel %vm398, %v8729, 0.0
    %8740 = vadd.xlane.f32.xlu0 %v8739
    %v8741 = vpop.xlane.xlu0 %8740
    %v8742 = vsel %vm398, %v8730, 0.0
    %8743 = vadd.xlane.f32.xlu0 %v8742
    %v8744 = vpop.xlane.xlu0 %8743
    %v8745 = vsel %vm398, %v8731, 0.0
    %8746 = vadd.xlane.f32.xlu0 %v8745
    %v8747 = vpop.xlane.xlu0 %8746
    %v8748 = vsel %vm398, %v8732, 0.0
    %8749 = vadd.xlane.f32.xlu0 %v8748
    %v8750 = vpop.xlane.xlu0 %8749
    %v8751 = vsel %vm398, %v8733, 0.0
    %8752 = vadd.xlane.f32.xlu0 %v8751
    %v8753 = vpop.xlane.xlu0 %8752
    %v8754 = vsel %vm398, %v8734, 0.0
    %8755 = vadd.xlane.f32.xlu0 %v8754
    %v8756 = vpop.xlane.xlu0 %8755
    %v8757 = vsel %vm398, %v8735, 0.0
    %8758 = vadd.xlane.f32.xlu0 %v8757
    %v8759 = vpop.xlane.xlu0 %8758
    %v8768 = vlaneseq
    %v8769 = vshrl.u32 %v8768, 7
    %v8770 = vsub.s32 %v493, %v8769
    %v8771 = vrot.slane %v8738, %v8770
    %v8772 = vlaneseq
    %v8773 = vshrl.u32 %v8772, 7
    %v8774 = vsub.s32 %v498, %v8773
    %v8775 = vrot.slane %v8741, %v8774
    %v8776 = vsel %vm503, %v8775, %v8771
    %v8777 = vlaneseq
    %v8778 = vshrl.u32 %v8777, 7
    %v8779 = vsub.s32 %v505, %v8778
    %v8780 = vrot.slane %v8744, %v8779
    %v8781 = vsel %vm510, %v8780, %v8776
    %v8782 = vlaneseq
    %v8783 = vshrl.u32 %v8782, 7
    %v8784 = vsub.s32 %v512, %v8783
    %v8785 = vrot.slane %v8747, %v8784
    %v8786 = vsel %vm517, %v8785, %v8781
    %v8787 = vlaneseq
    %v8788 = vshrl.u32 %v8787, 7
    %v8789 = vsub.s32 %v493, %v8788
    %v8790 = vrot.slane %v8750, %v8789
    %v8791 = vlaneseq
    %v8792 = vshrl.u32 %v8791, 7
    %v8793 = vsub.s32 %v498, %v8792
    %v8794 = vrot.slane %v8753, %v8793
    %v8795 = vsel %vm503, %v8794, %v8790
    %v8796 = vlaneseq
    %v8797 = vshrl.u32 %v8796, 7
    %v8798 = vsub.s32 %v505, %v8797
    %v8799 = vrot.slane %v8756, %v8798
    %v8800 = vsel %vm510, %v8799, %v8795
    %v8801 = vlaneseq
    %v8802 = vshrl.u32 %v8801, 7
    %v8803 = vsub.s32 %v512, %v8802
    %v8804 = vrot.slane %v8759, %v8803
    %v8805 = vsel %vm517, %v8804, %v8800
    %v8806 = vsel %vm538, %v8805, %v8786
    %v8808 = vsel %vm541, %v8805, %v8786
    %v8810 = vsel %vm84, %v8806, %v8808
    %v8811 = vmul.f32 %v8727, %v8810
    %v8812 = vadd.f32 %v8811, 1e-16
    %v8813 = vrsqrt.pop %v8812
    %v8815 = vlaneseq
    %v8816 = vshrl.u32 %v8815, 7
    %v8817 = vsub.s32 0, %v8816
    %v8818 = vrot.slane %v8813, %v8817
    %8820 = vbcast.lane.b32.xlu0 %v8818, 256
    %v8821 = vpop.permute.xlu0 %8820
    %s8823 = sor.u32 256, 8
    %8824 = vbcast.lane.b32.xlu0 %v8818, %s8823
    %v8825 = vpop.permute.xlu0 %8824
    %s8827 = sor.u32 256, 16
    %8828 = vbcast.lane.b32.xlu0 %v8818, %s8827
    %v8829 = vpop.permute.xlu0 %8828
    %s8831 = sor.u32 256, 24
    %8832 = vbcast.lane.b32.xlu0 %v8818, %s8831
    %v8833 = vpop.permute.xlu0 %8832
    %v8834 = vlaneseq
    %v8835 = vshrl.u32 %v8834, 7
    %v8836 = vsub.s32 1, %v8835
    %v8837 = vrot.slane %v8813, %v8836
    %8839 = vbcast.lane.b32.xlu0 %v8837, 256
    %v8840 = vpop.permute.xlu0 %8839
    %s8842 = sor.u32 256, 8
    %8843 = vbcast.lane.b32.xlu0 %v8837, %s8842
    %v8844 = vpop.permute.xlu0 %8843
    %s8846 = sor.u32 256, 16
    %8847 = vbcast.lane.b32.xlu0 %v8837, %s8846
    %v8848 = vpop.permute.xlu0 %8847
    %s8850 = sor.u32 256, 24
    %8851 = vbcast.lane.b32.xlu0 %v8837, %s8850
    %v8852 = vpop.permute.xlu0 %8851
    %v8853 = vlaneseq
    %v8854 = vshrl.u32 %v8853, 7
    %v8855 = vsub.s32 2, %v8854
    %v8856 = vrot.slane %v8813, %v8855
    %8858 = vbcast.lane.b32.xlu0 %v8856, 256
    %v8859 = vpop.permute.xlu0 %8858
    %s8861 = sor.u32 256, 8
    %8862 = vbcast.lane.b32.xlu0 %v8856, %s8861
    %v8863 = vpop.permute.xlu0 %8862
    %s8865 = sor.u32 256, 16
    %8866 = vbcast.lane.b32.xlu0 %v8856, %s8865
    %v8867 = vpop.permute.xlu0 %8866
    %s8869 = sor.u32 256, 24
    %8870 = vbcast.lane.b32.xlu0 %v8856, %s8869
    %v8871 = vpop.permute.xlu0 %8870
    %v8872 = vlaneseq
    %v8873 = vshrl.u32 %v8872, 7
    %v8874 = vsub.s32 3, %v8873
    %v8875 = vrot.slane %v8813, %v8874
    %8877 = vbcast.lane.b32.xlu0 %v8875, 256
    %v8878 = vpop.permute.xlu0 %8877
    %s8880 = sor.u32 256, 8
    %8881 = vbcast.lane.b32.xlu0 %v8875, %s8880
    %v8882 = vpop.permute.xlu0 %8881
    %s8884 = sor.u32 256, 16
    %8885 = vbcast.lane.b32.xlu0 %v8875, %s8884
    %v8886 = vpop.permute.xlu0 %8885
    %s8888 = sor.u32 256, 24
    %8889 = vbcast.lane.b32.xlu0 %v8875, %s8888
    %v8890 = vpop.permute.xlu0 %8889
    %v8907 = vmul.f32 %v8678, %v8821
    %v8908 = vmul.f32 %v8681, %v8825
    %v8909 = vmul.f32 %v8684, %v8829
    %v8910 = vmul.f32 %v8687, %v8833
    %v8911 = vmul.f32 %v8690, %v8840
    %v8912 = vmul.f32 %v8693, %v8844
    %v8913 = vmul.f32 %v8696, %v8848
    %v8914 = vmul.f32 %v8699, %v8852
    %v8915 = vmul.f32 %v8702, %v8859
    %v8916 = vmul.f32 %v8705, %v8863
    %v8917 = vmul.f32 %v8708, %v8867
    %v8918 = vmul.f32 %v8711, %v8871
    %v8919 = vmul.f32 %v8714, %v8878
    %v8920 = vmul.f32 %v8717, %v8882
    %v8921 = vmul.f32 %v8720, %v8886
    %v8922 = vmul.f32 %v8723, %v8890
    %8924 = vset.pattern.permute.xlu0 16
    %8925 = vperm.xlu0 %8924, %v8595
    %v8926 = vpop.permute.xlu0 %8925
    %8944 = vset.pattern.permute.xlu0 0
    %8945 = vperm.xlu0 %8944, %v8907
    %v8946 = vpop.permute.xlu0 %8945
    %8947 = vset.pattern.permute.xlu0 0
    %8948 = vperm.xlu0 %8947, %v8908
    %v8949 = vpop.permute.xlu0 %8948
    %8950 = vset.pattern.permute.xlu0 0
    %8951 = vperm.xlu0 %8950, %v8909
    %v8952 = vpop.permute.xlu0 %8951
    %8953 = vset.pattern.permute.xlu0 0
    %8954 = vperm.xlu0 %8953, %v8910
    %v8955 = vpop.permute.xlu0 %8954
    %8956 = vset.pattern.permute.xlu0 0
    %8957 = vperm.xlu0 %8956, %v8911
    %v8958 = vpop.permute.xlu0 %8957
    %8959 = vset.pattern.permute.xlu0 0
    %8960 = vperm.xlu0 %8959, %v8912
    %v8961 = vpop.permute.xlu0 %8960
    %8962 = vset.pattern.permute.xlu0 0
    %8963 = vperm.xlu0 %8962, %v8913
    %v8964 = vpop.permute.xlu0 %8963
    %8965 = vset.pattern.permute.xlu0 0
    %8966 = vperm.xlu0 %8965, %v8914
    %v8967 = vpop.permute.xlu0 %8966
    %8968 = vset.pattern.permute.xlu0 0
    %8969 = vperm.xlu0 %8968, %v8915
    %v8970 = vpop.permute.xlu0 %8969
    %8971 = vset.pattern.permute.xlu0 0
    %8972 = vperm.xlu0 %8971, %v8916
    %v8973 = vpop.permute.xlu0 %8972
    %8974 = vset.pattern.permute.xlu0 0
    %8975 = vperm.xlu0 %8974, %v8917
    %v8976 = vpop.permute.xlu0 %8975
    %8977 = vset.pattern.permute.xlu0 0
    %8978 = vperm.xlu0 %8977, %v8918
    %v8979 = vpop.permute.xlu0 %8978
    %8980 = vset.pattern.permute.xlu0 0
    %8981 = vperm.xlu0 %8980, %v8919
    %v8982 = vpop.permute.xlu0 %8981
    %8983 = vset.pattern.permute.xlu0 0
    %8984 = vperm.xlu0 %8983, %v8920
    %v8985 = vpop.permute.xlu0 %8984
    %8986 = vset.pattern.permute.xlu0 0
    %8987 = vperm.xlu0 %8986, %v8921
    %v8988 = vpop.permute.xlu0 %8987
    %8989 = vset.pattern.permute.xlu0 0
    %8990 = vperm.xlu0 %8989, %v8922
    %v8991 = vpop.permute.xlu0 %8990
    %v8992 = vlaneseq
    %v8993 = vshrl.u32 %v8992, 7
    %v8994 = vsub.s32 %v493, %v8993
    %v8995 = vrot.slane %v8946, %v8994
    %v8996 = vlaneseq
    %v8997 = vshrl.u32 %v8996, 7
    %v8998 = vsub.s32 %v498, %v8997
    %v8999 = vrot.slane %v8949, %v8998
    %v9000 = vsel %vm503, %v8999, %v8995
    %v9001 = vlaneseq
    %v9002 = vshrl.u32 %v9001, 7
    %v9003 = vsub.s32 %v505, %v9002
    %v9004 = vrot.slane %v8952, %v9003
    %v9005 = vsel %vm510, %v9004, %v9000
    %v9006 = vlaneseq
    %v9007 = vshrl.u32 %v9006, 7
    %v9008 = vsub.s32 %v512, %v9007
    %v9009 = vrot.slane %v8955, %v9008
    %v9010 = vsel %vm517, %v9009, %v9005
    %v9011 = vlaneseq
    %v9012 = vshrl.u32 %v9011, 7
    %v9013 = vsub.s32 %v493, %v9012
    %v9014 = vrot.slane %v8958, %v9013
    %v9015 = vlaneseq
    %v9016 = vshrl.u32 %v9015, 7
    %v9017 = vsub.s32 %v498, %v9016
    %v9018 = vrot.slane %v8961, %v9017
    %v9019 = vsel %vm503, %v9018, %v9014
    %v9020 = vlaneseq
    %v9021 = vshrl.u32 %v9020, 7
    %v9022 = vsub.s32 %v505, %v9021
    %v9023 = vrot.slane %v8964, %v9022
    %v9024 = vsel %vm510, %v9023, %v9019
    %v9025 = vlaneseq
    %v9026 = vshrl.u32 %v9025, 7
    %v9027 = vsub.s32 %v512, %v9026
    %v9028 = vrot.slane %v8967, %v9027
    %v9029 = vsel %vm517, %v9028, %v9024
    %v9030 = vlaneseq
    %v9031 = vshrl.u32 %v9030, 7
    %v9032 = vsub.s32 %v493, %v9031
    %v9033 = vrot.slane %v8970, %v9032
    %v9034 = vlaneseq
    %v9035 = vshrl.u32 %v9034, 7
    %v9036 = vsub.s32 %v498, %v9035
    %v9037 = vrot.slane %v8973, %v9036
    %v9038 = vsel %vm503, %v9037, %v9033
    %v9039 = vlaneseq
    %v9040 = vshrl.u32 %v9039, 7
    %v9041 = vsub.s32 %v505, %v9040
    %v9042 = vrot.slane %v8976, %v9041
    %v9043 = vsel %vm510, %v9042, %v9038
    %v9044 = vlaneseq
    %v9045 = vshrl.u32 %v9044, 7
    %v9046 = vsub.s32 %v512, %v9045
    %v9047 = vrot.slane %v8979, %v9046
    %v9048 = vsel %vm517, %v9047, %v9043
    %v9049 = vlaneseq
    %v9050 = vshrl.u32 %v9049, 7
    %v9051 = vsub.s32 %v493, %v9050
    %v9052 = vrot.slane %v8982, %v9051
    %v9053 = vlaneseq
    %v9054 = vshrl.u32 %v9053, 7
    %v9055 = vsub.s32 %v498, %v9054
    %v9056 = vrot.slane %v8985, %v9055
    %v9057 = vsel %vm503, %v9056, %v9052
    %v9058 = vlaneseq
    %v9059 = vshrl.u32 %v9058, 7
    %v9060 = vsub.s32 %v505, %v9059
    %v9061 = vrot.slane %v8988, %v9060
    %v9062 = vsel %vm510, %v9061, %v9057
    %v9063 = vlaneseq
    %v9064 = vshrl.u32 %v9063, 7
    %v9065 = vsub.s32 %v512, %v9064
    %v9066 = vrot.slane %v8991, %v9065
    %v9067 = vsel %vm517, %v9066, %v9062
    %v9068 = vsel %vm538, %v9029, %v9010
    %v9069 = vsel %vm803, %v9048, %v9068
    %v9070 = vsel %vm541, %v9067, %v9069
    %v9072 = vmul.f32 %v8926, %v9070
    %v9073 = vmul.f32 %v9072, 1.442695
    %v9074 = vpow.pop %v9073
    %v9075 = vsel %vm810, %v9074, 0.0
    %9076 = vadd.xlane.f32.xlu0 %v9075
    %v9077 = vpop.xlane.xlu0 %9076
    %v9078 = vrcp.pop %v9077
    %v9079 = vmul.f32 %v9074, %v9078
    %9081 = vset.pattern.permute.xlu0 17
    %9082 = vperm.xlu0 %9081, %v8599
    %v9083 = vpop.permute.xlu0 %9082
    %v9085 = vmul.f32 %v9083, %v9079
    %v9086 = vsub.f32 1.0, %v8599
    %9088 = vset.pattern.permute.xlu0 17
    %9089 = vperm.xlu0 %9088, %v9086
    %v9090 = vpop.permute.xlu0 %9089
    %v9092 = vmul.f32 %v9090, %v8023
    %v9093 = vadd.f32 %v9085, %v9092
    %v9095 = vsel %vm222, %v9093, 0
    %9097 = vmatprep.subr.mxu0 0.0
    %9098 = vmatpush1.msra.mxu0 %v94
    %9099 = vmatprep.subr.mxu0 0.0
    %9100 = vmatpush1.msra.mxu0 %v95
    %9101 = vmatprep.subr.mxu0 0.0
    %9102 = vmatpush1.msra.mxu0 %v96
    %9103 = vmatprep.subr.mxu0 0.0
    %9104 = vmatpush1.msra.mxu0 %v97
    %9105 = vmatprep.subr.mxu0 0.0
    %9106 = vmatpush1.msra.mxu0 0.0
    %9107 = vmatprep.subr.mxu0 0.0
    %9108 = vmatpush1.msra.mxu0 0.0
    %9109 = vmatprep.subr.mxu0 0.0
    %9110 = vmatpush1.msra.mxu0 0.0
    %9111 = vmatprep.subr.mxu0 0.0
    %9112 = vmatpush1.msra.mxu0 0.0
    %9113 = vmatprep.subr.mxu0 0.0
    %9114 = vmatpush1.msra.mxu0 0.0
    %9115 = vmatprep.subr.mxu0 0.0
    %9116 = vmatpush1.msra.mxu0 0.0
    %9117 = vmatprep.subr.mxu0 0.0
    %9118 = vmatpush1.msra.mxu0 0.0
    %9119 = vmatprep.subr.mxu0 0.0
    %9120 = vmatpush1.msra.mxu0 0.0
    %9121 = vmatprep.subr.mxu0 0.0
    %9122 = vmatpush1.msra.mxu0 0.0
    %9123 = vmatprep.subr.mxu0 0.0
    %9124 = vmatpush1.msra.mxu0 0.0
    %9125 = vmatprep.subr.mxu0 0.0
    %9126 = vmatpush1.msra.mxu0 0.0
    %9127 = vmatprep.subr.mxu0 0.0
    %9128 = vmatpush1.msra.mxu0 0.0
    %9129 = vmatprep.subr.mxu0 0.0
    %9130 = vmatpush1.msra.mxu0 0.0
    %9131 = vmatprep.subr.mxu0 0.0
    %9132 = vmatpush1.msra.mxu0 0.0
    %9133 = vmatprep.subr.mxu0 0.0
    %9134 = vmatpush1.msra.mxu0 0.0
    %9135 = vmatprep.subr.mxu0 0.0
    %9136 = vmatpush1.msra.mxu0 0.0
    %9137 = vmatprep.subr.mxu0 0.0
    %9138 = vmatpush1.msra.mxu0 0.0
    %9139 = vmatprep.subr.mxu0 0.0
    %9140 = vmatpush1.msra.mxu0 0.0
    %9141 = vmatprep.subr.mxu0 0.0
    %9142 = vmatpush1.msra.mxu0 0.0
    %9143 = vmatprep.subr.mxu0 0.0
    %9144 = vmatpush1.msra.mxu0 0.0
    %9145 = vmatprep.subr.mxu0 0.0
    %9146 = vmatpush1.msra.mxu0 0.0
    %9147 = vmatprep.subr.mxu0 0.0
    %9148 = vmatpush1.msra.mxu0 0.0
    %9149 = vmatprep.subr.mxu0 0.0
    %9150 = vmatpush1.msra.mxu0 0.0
    %9151 = vmatprep.subr.mxu0 0.0
    %9152 = vmatpush1.msra.mxu0 0.0
    %9153 = vmatprep.subr.mxu0 0.0
    %9154 = vmatpush1.msra.mxu0 0.0
    %9155 = vmatprep.subr.mxu0 0.0
    %9156 = vmatpush1.msra.mxu0 0.0
    %9157 = vmatprep.subr.mxu0 0.0
    %9158 = vmatpush1.msra.mxu0 0.0
    %9159 = vmatprep.subr.mxu0 0.0
    %9160 = vmatpush1.msra.mxu0 0.0
    %9161 = vmatprep.mubr.f32.mxu0 0.0
    %9162 = vmatmul.mubr.f32.gmra.mrb[0].mxu0 %v9095
    %v9163 = vpop.f32.mrb[0].mxu0
    %v9164 = vadd.f32 0.0, %v9163
    %v9165 = vpop.f32.mrb[0].mxu0
    %9166 = vdwg.mxu0
    %9168 = vset.pattern.permute.xlu0 18
    %9169 = vperm.xlu0 %9168, %v8614
    %v9170 = vpop.permute.xlu0 %9169
    %v9172 = vmul.f32 %v9170, %v9093
    %9173 = vset.pattern.permute.xlu0 19
    %9174 = vperm.xlu0 %9173, %v8614
    %v9175 = vpop.permute.xlu0 %9174
    %v9177 = vmul.f32 %v9175, %v9164
    %v9178 = vadd.f32 %v9172, %v9177
    %9179 = vset.pattern.permute.xlu0 20
    %9180 = vperm.xlu0 %9179, %v8614
    %v9181 = vpop.permute.xlu0 %9180
    %v9183 = vmul.f32 %v9181, %v9164
    %9185 = vrot.lane.b32.xlu0 %v9183, 96
    %v9186 = vpop.permute.xlu0 %9185
    %v9188 = vadd.f32 %v9178, %v9186
    %v9189 = vmax.f32 %v9188, 1e-30
    %v9190 = vlog2.pop %v9189
    %v9191 = vmul.f32 %v9190, 0.6931472
    %9192 = vset.pattern.permute.xlu0 21
    %9193 = vperm.xlu0 %9192, %v8595
    %v9194 = vpop.permute.xlu0 %9193
    %v9196 = vmul.f32 %v9194, %v9191
    %v9197 = vmul.f32 %v9196, 1.442695
    %v9198 = vpow.pop %v9197
    %v9199 = vsel %vm810, %v9198, 0.0
    %9200 = vadd.xlane.f32.xlu0 %v9199
    %v9201 = vpop.xlane.xlu0 %9200
    %v9202 = vrcp.pop %v9201
    %v9203 = vmul.f32 %v9198, %v9202
    %v9204 = vlaneseq
    %v9205 = vshrl.u32 %v9204, 7
    %v9206 = vsub.s32 0, %v9205
    %v9207 = vrot.slane %v9203, %v9206
    %9209 = vbcast.lane.b32.xlu0 %v9207, 256
    %v9210 = vpop.permute.xlu0 %9209
    %s9212 = sor.u32 256, 8
    %9213 = vbcast.lane.b32.xlu0 %v9207, %s9212
    %v9214 = vpop.permute.xlu0 %9213
    %s9216 = sor.u32 256, 16
    %9217 = vbcast.lane.b32.xlu0 %v9207, %s9216
    %v9218 = vpop.permute.xlu0 %9217
    %s9220 = sor.u32 256, 24
    %9221 = vbcast.lane.b32.xlu0 %v9207, %s9220
    %v9222 = vpop.permute.xlu0 %9221
    %v9223 = vlaneseq
    %v9224 = vshrl.u32 %v9223, 7
    %v9225 = vsub.s32 1, %v9224
    %v9226 = vrot.slane %v9203, %v9225
    %9228 = vbcast.lane.b32.xlu0 %v9226, 256
    %v9229 = vpop.permute.xlu0 %9228
    %s9231 = sor.u32 256, 8
    %9232 = vbcast.lane.b32.xlu0 %v9226, %s9231
    %v9233 = vpop.permute.xlu0 %9232
    %s9235 = sor.u32 256, 16
    %9236 = vbcast.lane.b32.xlu0 %v9226, %s9235
    %v9237 = vpop.permute.xlu0 %9236
    %s9239 = sor.u32 256, 24
    %9240 = vbcast.lane.b32.xlu0 %v9226, %s9239
    %v9241 = vpop.permute.xlu0 %9240
    %v9242 = vmul.f32 %v9210, %v8296
    %v9243 = vmul.f32 %v9214, %v8297
    %v9244 = vmul.f32 %v9218, %v8298
    %v9245 = vmul.f32 %v9222, %v8299
    %v9246 = vmul.f32 %v9229, %v8300
    %v9247 = vmul.f32 %v9233, %v8301
    %v9248 = vmul.f32 %v9237, %v8302
    %v9249 = vmul.f32 %v9241, %v8303
    %v9250 = vsel %vm398, %v9242, 0.0
    %v9251 = vsel %vm398, %v9243, 0.0
    %v9252 = vadd.f32 %v9250, %v9251
    %v9253 = vsel %vm398, %v9244, 0.0
    %v9254 = vadd.f32 %v9252, %v9253
    %v9255 = vsel %vm398, %v9245, 0.0
    %v9256 = vadd.f32 %v9254, %v9255
    %v9257 = vrot.slane %v9256, 4
    %v9258 = vadd.f32 %v9256, %v9257
    %v9259 = vrot.slane %v9258, 2
    %v9260 = vadd.f32 %v9258, %v9259
    %v9261 = vrot.slane %v9260, 1
    %v9262 = vadd.f32 %v9260, %v9261
    %v9263 = vsel %vm398, %v9246, 0.0
    %v9264 = vsel %vm398, %v9247, 0.0
    %v9265 = vadd.f32 %v9263, %v9264
    %v9266 = vsel %vm398, %v9248, 0.0
    %v9267 = vadd.f32 %v9265, %v9266
    %v9268 = vsel %vm398, %v9249, 0.0
    %v9269 = vadd.f32 %v9267, %v9268
    %v9270 = vrot.slane %v9269, 4
    %v9271 = vadd.f32 %v9269, %v9270
    %v9272 = vrot.slane %v9271, 2
    %v9273 = vadd.f32 %v9271, %v9272
    %v9274 = vrot.slane %v9273, 1
    %v9275 = vadd.f32 %v9273, %v9274
    %v9276 = vlaneseq
    %v9277 = vshrl.u32 %v9276, 7
    %v9278 = vsub.s32 2, %v9277
    %v9279 = vrot.slane %v9203, %v9278
    %9281 = vbcast.lane.b32.xlu0 %v9279, 256
    %v9282 = vpop.permute.xlu0 %9281
    %s9284 = sor.u32 256, 8
    %9285 = vbcast.lane.b32.xlu0 %v9279, %s9284
    %v9286 = vpop.permute.xlu0 %9285
    %s9288 = sor.u32 256, 16
    %9289 = vbcast.lane.b32.xlu0 %v9279, %s9288
    %v9290 = vpop.permute.xlu0 %9289
    %s9292 = sor.u32 256, 24
    %9293 = vbcast.lane.b32.xlu0 %v9279, %s9292
    %v9294 = vpop.permute.xlu0 %9293
    %v9295 = vlaneseq
    %v9296 = vshrl.u32 %v9295, 7
    %v9297 = vsub.s32 3, %v9296
    %v9298 = vrot.slane %v9203, %v9297
    %9300 = vbcast.lane.b32.xlu0 %v9298, 256
    %v9301 = vpop.permute.xlu0 %9300
    %s9303 = sor.u32 256, 8
    %9304 = vbcast.lane.b32.xlu0 %v9298, %s9303
    %v9305 = vpop.permute.xlu0 %9304
    %s9307 = sor.u32 256, 16
    %9308 = vbcast.lane.b32.xlu0 %v9298, %s9307
    %v9309 = vpop.permute.xlu0 %9308
    %s9311 = sor.u32 256, 24
    %9312 = vbcast.lane.b32.xlu0 %v9298, %s9311
    %v9313 = vpop.permute.xlu0 %9312
    %v9316 = vunpack.c.l.s4 1966171168
    %v9317 = vunpack.c.0.s8 %v9316
    %v9318 = vlaneseq
    %v9319 = vshrl.u32 %v9318, 7
    %v9320 = vsub.s32 %v9317, %v9319
    %v9321 = vrot.slane %v8584, %v9320
    %v9322 = vcombine.high %v9321, %v9321
    %v9324 = vunpack.c.l.s4 1966171168
    %v9325 = vunpack.c.0.s8 %v9324
    %v9326 = vlaneseq
    %v9327 = vshrl.u32 %v9326, 7
    %v9328 = vsub.s32 %v9325, %v9327
    %v9329 = vrot.slane %v9321, %v9328
    %v9331 = vunpack.c.l.s4 1966171168
    %v9332 = vunpack.c.0.s8 %v9331
    %v9333 = vlaneseq
    %v9334 = vshrl.u32 %v9333, 7
    %v9335 = vsub.s32 %v9332, %v9334
    %v9336 = vrot.slane %v9322, %v9335
    %v9337 = vlaneseq
    %v9338 = vshrl.u32 %v9337, 7
    %v9339 = vsub.s32 0, %v9338
    %v9340 = vrot.slane %v9329, %v9339
    %v9341 = vlaneseq
    %v9342 = vshrl.u32 %v9341, 7
    %v9343 = vsub.s32 0, %v9342
    %v9344 = vrot.slane %v9336, %v9343
    %v9347 = vmul.f32 %v9282, %v9340
    %v9348 = vmul.f32 %v9286, %v9340
    %v9349 = vmul.f32 %v9290, %v9340
    %v9350 = vmul.f32 %v9294, %v9340
    %v9351 = vmul.f32 %v9301, %v9344
    %v9352 = vmul.f32 %v9305, %v9344
    %v9353 = vmul.f32 %v9309, %v9344
    %v9354 = vmul.f32 %v9313, %v9344
    %v9355 = vsub.f32 1.0, %v9347
    %v9356 = vsub.f32 1.0, %v9348
    %v9357 = vsub.f32 1.0, %v9349
    %v9358 = vsub.f32 1.0, %v9350
    %v9359 = vsub.f32 1.0, %v9351
    %v9360 = vsub.f32 1.0, %v9352
    %v9361 = vsub.f32 1.0, %v9353
    %v9362 = vsub.f32 1.0, %v9354
    %9371 = vrot.lane.b32.xlu0 %v9355, 84
    %v9372 = vpop.permute.xlu0 %9371
    %9373 = vrot.lane.b32.xlu0 %v9356, 84
    %v9374 = vpop.permute.xlu0 %9373
    %9375 = vrot.lane.b32.xlu0 %v9357, 84
    %v9376 = vpop.permute.xlu0 %9375
    %9377 = vrot.lane.b32.xlu0 %v9358, 84
    %v9378 = vpop.permute.xlu0 %9377
    %9379 = vrot.lane.b32.xlu0 %v9359, 84
    %v9380 = vpop.permute.xlu0 %9379
    %9381 = vrot.lane.b32.xlu0 %v9360, 84
    %v9382 = vpop.permute.xlu0 %9381
    %9383 = vrot.lane.b32.xlu0 %v9361, 84
    %v9384 = vpop.permute.xlu0 %9383
    %9385 = vrot.lane.b32.xlu0 %v9362, 84
    %v9386 = vpop.permute.xlu0 %9385
    %v9395 = vmul.f32 %v8296, %v9372
    %v9396 = vmul.f32 %v8297, %v9374
    %v9397 = vmul.f32 %v8298, %v9376
    %v9398 = vmul.f32 %v8299, %v9378
    %v9399 = vmul.f32 %v8300, %v9380
    %v9400 = vmul.f32 %v8301, %v9382
    %v9401 = vmul.f32 %v8302, %v9384
    %v9402 = vmul.f32 %v8303, %v9386
    %v9405 = vunpack.c.l.s4 1966171168
    %v9406 = vunpack.c.0.s8 %v9405
    %v9407 = vlaneseq
    %v9408 = vshrl.u32 %v9407, 7
    %v9409 = vsub.s32 %v9406, %v9408
    %v9410 = vrot.slane %v8585, %v9409
    %v9411 = vcombine.high %v9410, %v9410
    %v9413 = vunpack.c.l.s4 1966171168
    %v9414 = vunpack.c.0.s8 %v9413
    %v9415 = vlaneseq
    %v9416 = vshrl.u32 %v9415, 7
    %v9417 = vsub.s32 %v9414, %v9416
    %v9418 = vrot.slane %v9410, %v9417
    %v9420 = vunpack.c.l.s4 1966171168
    %v9421 = vunpack.c.0.s8 %v9420
    %v9422 = vlaneseq
    %v9423 = vshrl.u32 %v9422, 7
    %v9424 = vsub.s32 %v9421, %v9423
    %v9425 = vrot.slane %v9411, %v9424
    %v9426 = vlaneseq
    %v9427 = vshrl.u32 %v9426, 7
    %v9428 = vsub.s32 0, %v9427
    %v9429 = vrot.slane %v9418, %v9428
    %v9430 = vlaneseq
    %v9431 = vshrl.u32 %v9430, 7
    %v9432 = vsub.s32 0, %v9431
    %v9433 = vrot.slane %v9425, %v9432
    %v9436 = vmul.f32 %v9282, %v9429
    %v9437 = vmul.f32 %v9286, %v9429
    %v9438 = vmul.f32 %v9290, %v9429
    %v9439 = vmul.f32 %v9294, %v9429
    %v9440 = vmul.f32 %v9301, %v9433
    %v9441 = vmul.f32 %v9305, %v9433
    %v9442 = vmul.f32 %v9309, %v9433
    %v9443 = vmul.f32 %v9313, %v9433
    %9452 = vrot.lane.b32.xlu0 %v9436, 68
    %v9453 = vpop.permute.xlu0 %9452
    %9454 = vrot.lane.b32.xlu0 %v9437, 68
    %v9455 = vpop.permute.xlu0 %9454
    %9456 = vrot.lane.b32.xlu0 %v9438, 68
    %v9457 = vpop.permute.xlu0 %9456
    %9458 = vrot.lane.b32.xlu0 %v9439, 68
    %v9459 = vpop.permute.xlu0 %9458
    %9460 = vrot.lane.b32.xlu0 %v9440, 68
    %v9461 = vpop.permute.xlu0 %9460
    %9462 = vrot.lane.b32.xlu0 %v9441, 68
    %v9463 = vpop.permute.xlu0 %9462
    %9464 = vrot.lane.b32.xlu0 %v9442, 68
    %v9465 = vpop.permute.xlu0 %9464
    %9466 = vrot.lane.b32.xlu0 %v9443, 68
    %v9467 = vpop.permute.xlu0 %9466
    %v9476 = vadd.f32 %v9395, %v9453
    %v9477 = vadd.f32 %v9396, %v9455
    %v9478 = vadd.f32 %v9397, %v9457
    %v9479 = vadd.f32 %v9398, %v9459
    %v9480 = vadd.f32 %v9399, %v9461
    %v9481 = vadd.f32 %v9400, %v9463
    %v9482 = vadd.f32 %v9401, %v9465
    %v9483 = vadd.f32 %v9402, %v9467
    %v9486 = vsel %vm538, %v9275, %v9262
    %v9487 = vsel %vm398, %v9486, 0
    %9489 = vmatprep.subr.mxu0 0.0
    %9490 = vmatpush1.msra.mxu0 %v109
    %9491 = vmatprep.subr.mxu0 0.0
    %9492 = vmatpush1.msra.mxu0 %v110
    %9493 = vmatprep.subr.mxu0 0.0
    %9494 = vmatpush1.msra.mxu0 0.0
    %9495 = vmatprep.subr.mxu0 0.0
    %9496 = vmatpush1.msra.mxu0 0.0
    %9497 = vmatprep.subr.mxu0 0.0
    %9498 = vmatpush1.msra.mxu0 0.0
    %9499 = vmatprep.subr.mxu0 0.0
    %9500 = vmatpush1.msra.mxu0 0.0
    %9501 = vmatprep.subr.mxu0 0.0
    %9502 = vmatpush1.msra.mxu0 0.0
    %9503 = vmatprep.subr.mxu0 0.0
    %9504 = vmatpush1.msra.mxu0 0.0
    %9505 = vmatprep.subr.mxu0 0.0
    %9506 = vmatpush1.msra.mxu0 0.0
    %9507 = vmatprep.subr.mxu0 0.0
    %9508 = vmatpush1.msra.mxu0 0.0
    %9509 = vmatprep.subr.mxu0 0.0
    %9510 = vmatpush1.msra.mxu0 0.0
    %9511 = vmatprep.subr.mxu0 0.0
    %9512 = vmatpush1.msra.mxu0 0.0
    %9513 = vmatprep.subr.mxu0 0.0
    %9514 = vmatpush1.msra.mxu0 0.0
    %9515 = vmatprep.subr.mxu0 0.0
    %9516 = vmatpush1.msra.mxu0 0.0
    %9517 = vmatprep.subr.mxu0 0.0
    %9518 = vmatpush1.msra.mxu0 0.0
    %9519 = vmatprep.subr.mxu0 0.0
    %9520 = vmatpush1.msra.mxu0 0.0
    %9521 = vmatprep.subr.mxu0 0.0
    %9522 = vmatpush1.msra.mxu0 0.0
    %9523 = vmatprep.subr.mxu0 0.0
    %9524 = vmatpush1.msra.mxu0 0.0
    %9525 = vmatprep.subr.mxu0 0.0
    %9526 = vmatpush1.msra.mxu0 0.0
    %9527 = vmatprep.subr.mxu0 0.0
    %9528 = vmatpush1.msra.mxu0 0.0
    %9529 = vmatprep.subr.mxu0 0.0
    %9530 = vmatpush1.msra.mxu0 0.0
    %9531 = vmatprep.subr.mxu0 0.0
    %9532 = vmatpush1.msra.mxu0 0.0
    %9533 = vmatprep.subr.mxu0 0.0
    %9534 = vmatpush1.msra.mxu0 0.0
    %9535 = vmatprep.subr.mxu0 0.0
    %9536 = vmatpush1.msra.mxu0 0.0
    %9537 = vmatprep.subr.mxu0 0.0
    %9538 = vmatpush1.msra.mxu0 0.0
    %9539 = vmatprep.subr.mxu0 0.0
    %9540 = vmatpush1.msra.mxu0 0.0
    %9541 = vmatprep.subr.mxu0 0.0
    %9542 = vmatpush1.msra.mxu0 0.0
    %9543 = vmatprep.subr.mxu0 0.0
    %9544 = vmatpush1.msra.mxu0 0.0
    %9545 = vmatprep.subr.mxu0 0.0
    %9546 = vmatpush1.msra.mxu0 0.0
    %9547 = vmatprep.subr.mxu0 0.0
    %9548 = vmatpush1.msra.mxu0 0.0
    %9549 = vmatprep.subr.mxu0 0.0
    %9550 = vmatpush1.msra.mxu0 0.0
    %9551 = vmatprep.subr.mxu0 0.0
    %9552 = vmatpush1.msra.mxu0 0.0
    %9553 = vmatprep.mubr.f32.mxu0 0.0
    %9554 = vmatmul.mubr.f32.gmra.mrb[0].mxu0 %v9487
    %v9555 = vpop.f32.mrb[0].mxu0
    %v9556 = vadd.f32 0.0, %v9555
    %v9557 = vpop.f32.mrb[0].mxu0
    %9558 = vdwg.mxu0
    %9560 = vrot.lane.b32.xlu0 %v9556, 76
    %v9561 = vpop.permute.xlu0 %9560
    %v9563 = vadd.f32 %v8572, %v9561
    %v9564 = vmax.f32 %v9563, -20.0
    %v9565 = vmin.f32 %v9564, 20.0
    %9567 = vrot.lane.b32.xlu0 %v9565, 52
    %v9568 = vpop.permute.xlu0 %9567
    %s9570 = scalar_lea.vmem [#allocation2], 14
    %9571 = vst.msk [vmem:[%s9570] sm:$0x3] %vm1310, %v9568
    %9573 = vrot.lane.b32.xlu0 %v8497, 64
    %v9574 = vpop.permute.xlu0 %9573
    %9576 = vrot.lane.b32.xlu0 %v9486, 32
    %v9577 = vpop.permute.xlu0 %9576
    %v9579 = vsel %vm222, %v9574, %v9577
    %vm9580 = vcmask 386048
    %9581 = vst.msk [vmem:[%s9] sm:$0x3] %vm9580, %v9579
    %v9584 = vunpack.c.l.s4 1983009808
    %v9585 = vunpack.c.0.s8 %v9584
    %v9586 = vlaneseq
    %v9587 = vshrl.u32 %v9586, 7
    %v9588 = vsub.s32 %v9585, %v9587
    %v9589 = vrot.slane %v8491, %v9588
    %9590 = vrot.lane.b32.xlu0 %v9589, 16
    %v9591 = vpop.permute.xlu0 %9590
    %vm9593 = vcmask 648576
    %9594 = vst.msk [vmem:[%s9] sm:$0x3] %vm9593, %v9591
    %v9597 = vunpack.c.l.s4 1983009808
    %v9598 = vunpack.c.0.s8 %v9597
    %v9599 = vlaneseq
    %v9600 = vshrl.u32 %v9599, 7
    %v9601 = vsub.s32 %v9598, %v9600
    %v9602 = vrot.slane %v9203, %v9601
    %9603 = vrot.lane.b32.xlu0 %v9602, 80
    %v9604 = vpop.permute.xlu0 %9603
    %vm9606 = vcmask 910976
    %9607 = vst.msk [vmem:[%s9] sm:$0x3] %vm9606, %v9604
    %v9608 = vcombine.high %v9602, %v9602
    %9609 = vrot.lane.b32.xlu0 %v9608, 112
    %v9610 = vpop.permute.xlu0 %9609
    %v9611 = vrot.slane %v9610, 6
    %vm9612 = vcmask 916480
    %v9613 = vsel %vm9612, %v9611, %v9610
    %vm9615 = vcmask 1042304
    %vm9616 = vcmask 125954
    %vm9617 = vmor %vm9616, %vm9615
    %9618 = vst.msk [vmem:[%s9] sm:$0xf] %vm9617, %v9613
    %9619 = vst.msk [vmem:[%s10] sm:$0xff] %vm398, %v9476
    %9620 = vst.msk [vmem:[%s10 + $0x8] sm:$0xff] %vm398, %v9477
    %9621 = vst.msk [vmem:[%s10 + $0x10] sm:$0xff] %vm398, %v9478
    %9622 = vst.msk [vmem:[%s10 + $0x18] sm:$0xff] %vm398, %v9479
    %9623 = vst.msk [vmem:[%s10 + $0x20] sm:$0xff] %vm398, %v9480
    %9624 = vst.msk [vmem:[%s10 + $0x28] sm:$0xff] %vm398, %v9481
    %9625 = vst.msk [vmem:[%s10 + $0x30] sm:$0xff] %vm398, %v9482
    %9626 = vst.msk [vmem:[%s10 + $0x38] sm:$0xff] %vm398, %v9483
    // Predicated region
    $region38: #{ntm_forward_sequence.1} parent=1 // pred_check
      _
    $region39: #{ntm_forward_sequence.1} parent=1 // pred_check_branch
      %9628 = sbr.rel (0) target = $region41
    $region40: #{ntm_forward_sequence.1} parent=1 // pred_region
      %s9630 = ssub.s32 256, 256
      %9631 = vsyncadd [#allocation3], %s9630
      %s9632 = sshll.u32 [#allocation2], 4
      %s9633 = int_to_ptr.vmem [resolvable:$true] %s9632
      %9638 = dma.vmem_to_hbm [thread:$0]  %s9633, 256, %s8, [#allocation3], 32, 32, 2
    $region41: #{ntm_forward_sequence.1} parent=1 // pred_fallthru
      _
    // Predicated region
    $region42: #{ntm_forward_sequence.1} parent=1 // pred_check
      _
    $region43: #{ntm_forward_sequence.1} parent=1 // pred_check_branch
      %9640 = sbr.rel (0) target = $region45
    $region44: #{ntm_forward_sequence.1} parent=1 // pred_region
      _
    $region45: #{ntm_forward_sequence.1} parent=1 // pred_fallthru
      _
    // Predicated region
    $region46: #{ntm_forward_sequence.1} parent=1 // pred_check
      _
    $region47: #{ntm_forward_sequence.1} parent=1 // pred_check_branch
      %9642 = sbr.rel (0) target = $region49
    $region48: #{ntm_forward_sequence.1} parent=1 // pred_region
      _
    $region49: #{ntm_forward_sequence.1} parent=1 // pred_fallthru
      _
    // Predicated region
    $region50: #{ntm_forward_sequence.1} parent=1 // pred_check
      _
    $region51: #{ntm_forward_sequence.1} parent=1 // pred_check_branch
      %9644 = sbr.rel (0) target = $region53
    $region52: #{ntm_forward_sequence.1} parent=1 // pred_region
      %9645 = dma.done [#allocation3], 256
    $region53: #{ntm_forward_sequence.1} parent=1 // pred_fallthru
      _
    // Predicated region
    $region54: #{ntm_forward_sequence.1} parent=1 // pred_check
      _
    $region55: #{ntm_forward_sequence.1} parent=1 // pred_check_branch
      %9647 = sbr.rel (0) target = $region57
    $region56: #{ntm_forward_sequence.1} parent=1 // pred_region
      _
    $region57: #{ntm_forward_sequence.1} parent=1 // pred_fallthru
      _
    // Predicated region
    $region58: #{ntm_forward_sequence.1} parent=1 // pred_check
      _
    $region59: #{ntm_forward_sequence.1} parent=1 // pred_check_branch
      %9649 = sbr.rel (0) target = $region61
    $region60: #{ntm_forward_sequence.1} parent=1 // pred_region
      _
    $region61: #{ntm_forward_sequence.1} parent=1 // pred_fallthru
      _
    %9650 = vsyncpa [#allocation3], 1

</llo_original>
